<compile_context>
chip_gen: v6e
topology: v6e:2x2x1
jax: 0.10.0
libtpu: 0.0.40
codegen_flags: <defaults>
</compile_context>

<pallas_src>
import jax
import jax.numpy as jnp
from jax.experimental import pallas as pl
from jax.experimental.pallas import tpu as pltpu


# ---------------------------------------------------------------------------
# Static geometry (all Python ints; shapes are static under jit)
# ---------------------------------------------------------------------------
def _ceil_to(x, m):
    return -(-x // m) * m


def _geometry(H, W, Cin, C, TM1=128):
    KH = KW = 3
    Wp = _ceil_to(W, 8)                       # width padded to sublane multiple
    Hout1, Wout1 = H - (KH - 1), W - (KW - 1)
    Hp1, Wp1 = Hout1 // 2, Wout1 // 2
    Hout2, Wout2 = Hp1 - (KH - 1), Wp1 - (KW - 1)
    Hp2, Wp2 = Hout2 // 2, Wout2 // 2

    M1 = (Hout1 - 1) * Wp + Wout1             # flat conv1 extent (row stride Wp)
    NT1 = -(-M1 // TM1)
    M1p = NT1 * TM1                           # conv1 rows actually computed

    M2 = (Hout2 - 1) * Wp1 + Wout2            # flat conv2 extent (row stride Wp1)
    M2p = _ceil_to(M2, 8)                     # conv2 rows actually computed

    conv2_tiles = []
    t0 = 0
    while t0 < M2p:                           # register tiles, <=144 rows each
        tm = min(144, M2p - t0)
        conv2_tiles.append((t0, tm))
        t0 += tm

    P1_VALID = Hp1 * Wp1
    P1_ROWS = max(_ceil_to(P1_VALID, 8),
                  _ceil_to(M2p + (KH - 1) * Wp1 + (KW - 1), 8))

    # Junk columns (w >= Wout, incl. width padding) must never be read by the
    # pools / conv2; fail loudly on other input sizes instead of reading junk.
    assert Hp2 == 1, "fc-weight folding assumes a single pooled row"
    assert 2 * Hp1 <= Hout1 and 2 * Wp1 <= Wout1
    assert 2 * Hp2 <= Hout2 and 2 * Wp2 <= Wout2
    assert (Hout1 - 1) * Wp + 2 * Wp1 - 1 < M1 <= M1p
    assert (Hout2 - 1) * Wp1 + 2 * Wp2 - 1 < M2 <= M2p
    assert M2p + (KH - 1) * Wp1 + (KW - 1) <= P1_ROWS
    assert TM1 % 8 == 0 and all(tm % 8 == 0 for _, tm in conv2_tiles)

    return dict(Wp=Wp, Hp1=Hp1, Wp1=Wp1, Wp2=Wp2, C=C, Cin=Cin,
                TM1=TM1, NT1=NT1, M1p=M1p, M2p=M2p,
                P1_VALID=P1_VALID, P1_ROWS=P1_ROWS,
                CONV2_TILES=tuple(conv2_tiles))


# ---------------------------------------------------------------------------
# Fused forward kernel (one pallas_call for the whole network, grid over batch)
# ---------------------------------------------------------------------------
def _make_fused_kernel(g):
    TM1, NT1 = g["TM1"], g["NT1"]
    Wp, Wp1, Hp1, Wp2 = g["Wp"], g["Wp1"], g["Hp1"], g["Wp2"]
    C = g["C"]
    P1_VALID, P1_ROWS = g["P1_VALID"], g["P1_ROWS"]
    CONV2_TILES = g["CONV2_TILES"]

    def kernel(xi_ref, w1_ref, w2_ref, t_ref, wfc_ref, bfc_ref, o_ref,
               act1_ref, pool1_ref, act2_ref):
        tv = t_ref[...]                       # (2, C): folded BN shifts
        t1row = tv[0:1, :]
        t2row = tv[1:2, :]

        # ---- conv1 (+folded BN shift + LeakyReLU): one K=36 MXU dot per
        #      128-row register tile, epilogue fused, single store per tile ---
        w1 = w1_ref[...]                      # (9*Cin, C), BN scale pre-folded
        for t in range(NT1):
            lhs = xi_ref[0, pl.ds(t * TM1, TM1), :]          # (TM1, 9*Cin)
            acc = jnp.dot(lhs, w1, preferred_element_type=jnp.float32)
            y = acc + t1row
            act1_ref[pl.ds(t * TM1, TM1), :] = jnp.where(y >= 0.0, y, 0.01 * y)

        # ---- maxpool1 2x2: stride-2 sublane reads of the flat conv1 map -----
        if P1_ROWS > P1_VALID:                # zero the padded tail once
            pool1_ref[pl.ds(P1_VALID, P1_ROWS - P1_VALID), :] = jnp.zeros(
                (P1_ROWS - P1_VALID, C), jnp.float32)
        for i in range(Hp1):
            r0 = (2 * i) * Wp
            r1 = (2 * i + 1) * Wp
            pool1_ref[pl.ds(i * Wp1, Wp1), :] = jnp.maximum(
                jnp.maximum(act1_ref[pl.ds(r0, Wp1, 2), :],
                            act1_ref[pl.ds(r0 + 1, Wp1, 2), :]),
                jnp.maximum(act1_ref[pl.ds(r1, Wp1, 2), :],
                            act1_ref[pl.ds(r1 + 1, Wp1, 2), :]))

        # ---- conv2 (+folded BN shift + LeakyReLU): 9 statically unrolled taps
        #      accumulated in registers per tile, single store per tile -------
        for t0, tm in CONV2_TILES:
            acc = jnp.dot(pool1_ref[pl.ds(t0, tm), :], w2_ref[0],
                          preferred_element_type=jnp.float32)
            for k in range(1, 9):
                kh, kw = divmod(k, 3)
                acc = acc + jnp.dot(
                    pool1_ref[pl.ds(t0 + kh * Wp1 + kw, tm), :], w2_ref[k],
                    preferred_element_type=jnp.float32)
            y = acc + t2row
            act2_ref[pl.ds(t0, tm), :] = jnp.where(y >= 0.0, y, 0.01 * y)

        # ---- maxpool2 2x2 -> (Wp2, C) kept as a value in vregs --------------
        pooled2 = jnp.maximum(
            jnp.maximum(act2_ref[pl.ds(0, Wp2, 2), :],
                        act2_ref[pl.ds(1, Wp2, 2), :]),
            jnp.maximum(act2_ref[pl.ds(Wp1, Wp2, 2), :],
                        act2_ref[pl.ds(Wp1 + 1, Wp2, 2), :]))

        # ---- fc1 (2 outputs) as f32 VPU reductions + log_softmax ------------
        p0 = jnp.sum(pooled2 * wfc_ref[0], axis=0, keepdims=True)      # (1, C)
        p1 = jnp.sum(pooled2 * wfc_ref[1], axis=0, keepdims=True)      # (1, C)
        partial = jnp.concatenate([p0, p1], axis=0)                    # (2, C)
        logits = jnp.sum(partial, axis=1, keepdims=True) + bfc_ref[...]  # (2,1)
        m = jnp.max(logits, axis=0, keepdims=True)
        z = logits - m
        lse = jnp.log(jnp.sum(jnp.exp(z), axis=0, keepdims=True))
        o_ref[0] = z - lse                                             # (2, 1)

    return kernel


def fused_cnn_forward(x_im2col, prep, g):
    B = x_im2col.shape[0]
    C, Cin = g["C"], g["Cin"]
    assert prep["wfc"].shape == (2, g["Wp2"], C), "fc1 size inconsistent"
    kernel = _make_fused_kernel(g)
    out = pl.pallas_call(
        kernel,
        out_shape=jax.ShapeDtypeStruct((B, 2, 1), jnp.float32),
        grid=(B,),
        in_specs=[
            pl.BlockSpec((1, g["M1p"], 9 * Cin), lambda b: (b, 0, 0)),  # im2col x
            pl.BlockSpec((9 * Cin, C), lambda b: (0, 0)),               # conv1 w
            pl.BlockSpec((9, C, C), lambda b: (0, 0, 0)),               # conv2 taps
            pl.BlockSpec((2, C), lambda b: (0, 0)),                     # BN shifts
            pl.BlockSpec((2, g["Wp2"], C), lambda b: (0, 0, 0)),        # fc weight
            pl.BlockSpec((2, 1), lambda b: (0, 0)),                     # fc bias
        ],
        out_specs=pl.BlockSpec((1, 2, 1), lambda b: (b, 0, 0)),
        scratch_shapes=[
            pltpu.VMEM((g["M1p"], C), jnp.float32),                     # conv1 act
            pltpu.VMEM((g["P1_ROWS"], C), jnp.float32),                 # pooled1
            pltpu.VMEM((g["M2p"], C), jnp.float32),                     # conv2 act
        ],
        compiler_params=pltpu.CompilerParams(
            dimension_semantics=("parallel",)),
    )(x_im2col, prep["w1"], prep["w2"], prep["t"], prep["wfc"], prep["bfc"])
    return out.reshape(B, 2)


def cnn_forward(x_nchw, prep):
    B, Cin, H, W = x_nchw.shape
    C = prep["w1"].shape[1]
    g = _geometry(H, W, Cin, C)
    # Layout plumbing only (cheap XLA glue, no compute): NCHW -> channels-last,
    # width padded to a sublane multiple, flattened, and 9-tap im2col'd so
    # conv1 is a single K=Cin*9 MXU dot per M-tile inside the kernel.
    x_cl = jnp.transpose(x_nchw, (0, 2, 3, 1)).astype(jnp.float32)   # (B,H,W,Cin)
    x_cl = jnp.pad(x_cl, ((0, 0), (0, 0), (0, g["Wp"] - W), (0, 0)))
    x_flat = x_cl.reshape(B, H * g["Wp"], Cin)
    need = g["M1p"] + 2 * g["Wp"] + 2
    if need > x_flat.shape[1]:
        x_flat = jnp.pad(x_flat, ((0, 0), (0, need - x_flat.shape[1]), (0, 0)))
    taps = [x_flat[:, kh * g["Wp"] + kw: kh * g["Wp"] + kw + g["M1p"], :]
            for kh in range(3) for kw in range(3)]
    x_im2col = jnp.concatenate(taps, axis=-1)                # (B, M1p, 9*Cin)
    return fused_cnn_forward(x_im2col, prep, g)


# ---------------------------------------------------------------------------
# Parameters (deterministic, PyTorch-convention shapes) + one-time prep
# ---------------------------------------------------------------------------
def init_params(key, in_channels):
    ks = jax.random.split(key, 6)
    p = {
        "conv1_w": 0.10 * jax.random.normal(ks[0], (50, in_channels, 3, 3),
                                            jnp.float32),      # OIHW
        "conv1_b": 0.10 * jax.random.normal(ks[1], (50,), jnp.float32),
        "conv2_w": 0.05 * jax.random.normal(ks[2], (50, 50, 3, 3), jnp.float32),
        "conv2_b": 0.05 * jax.random.normal(ks[3], (50,), jnp.float32),
        "fc1_w":   0.02 * jax.random.normal(ks[4], (2, 50 * 1 * 68),
                                            jnp.float32),      # (out, in)
        "fc1_b":   0.02 * jax.random.normal(ks[5], (2,), jnp.float32),
    }
    for i in (1, 2):     # BatchNorm2d at PyTorch init, eval mode
        p[f"bn{i}_gamma"] = jnp.ones((50,), jnp.float32)
        p[f"bn{i}_beta"] = jnp.zeros((50,), jnp.float32)
        p[f"bn{i}_mean"] = jnp.zeros((50,), jnp.float32)
        p[f"bn{i}_var"] = jnp.ones((50,), jnp.float32)
    return p


def _fold_bn(conv_b, gamma, beta, mean, var, eps=1e-5):
    scale = gamma / jnp.sqrt(var + eps)
    shift = beta + scale * (conv_b - mean)
    return scale, shift


def prepare_params(p):
    """One-time conversion to kernel layouts: OIHW conv weights -> tap-major
    (kh,kw,cin) rows with the BN scale folded in, BN shift+bias folded into a
    per-channel add, fc weight permuted from the PyTorch (C,H,W) flatten order
    to the kernel's (W,C) order."""
    C, cin = p["conv1_w"].shape[0], p["conv1_w"].shape[1]
    s1, t1 = _fold_bn(p["conv1_b"], p["bn1_gamma"], p["bn1_beta"],
                      p["bn1_mean"], p["bn1_var"])
    s2, t2 = _fold_bn(p["conv2_b"], p["bn2_gamma"], p["bn2_beta"],
                      p["bn2_mean"], p["bn2_var"])
    w1 = jnp.transpose(p["conv1_w"], (2, 3, 1, 0)).reshape(9 * cin, C) * s1[None, :]
    w2 = jnp.transpose(p["conv2_w"], (2, 3, 1, 0)).reshape(9, C, C) * s2[None, None, :]
    t = jnp.stack([t1, t2], axis=0)                            # (2, C)
    wp2 = p["fc1_w"].shape[1] // C                             # = 68
    wfc = p["fc1_w"].reshape(2, C, wp2).transpose(0, 2, 1)     # (2, W, C)
    bfc = p["fc1_b"].reshape(2, 1)
    return dict(w1=w1, w2=w2, t=t, wfc=wfc, bfc=bfc)


# ---------------------------------------------------------------------------
# Pure-JAX reference (NCHW, mirrors the PyTorch module in eval mode)
# ---------------------------------------------------------------------------
def reference_forward(x, p, eps=1e-5):
    def block(x, w, b, gamma, beta, mean, var):
        y = jax.lax.conv_general_dilated(
            x, w, window_strides=(1, 1), padding="VALID",
            dimension_numbers=("NCHW", "OIHW", "NCHW"),
            precision=jax.lax.Precision.HIGHEST)
        y = y + b[None, :, None, None]
        y = gamma[None, :, None, None] * (y - mean[None, :, None, None]) / \
            jnp.sqrt(var[None, :, None, None] + eps) + beta[None, :, None, None]
        y = jnp.where(y >= 0.0, y, 0.01 * y)
        B, C, H, W = y.shape
        y = y[:, :, :H // 2 * 2, :W // 2 * 2]
        return y.reshape(B, C, H // 2, 2, W // 2, 2).max(axis=(3, 5))

    h = block(x, p["conv1_w"], p["conv1_b"], p["bn1_gamma"], p["bn1_beta"],
              p["bn1_mean"], p["bn1_var"])
    h = block(h, p["conv2_w"], p["conv2_b"], p["bn2_gamma"], p["bn2_beta"],
              p["bn2_mean"], p["bn2_var"])
    h = h.reshape(h.shape[0], -1)
    logits = jnp.dot(h, p["fc1_w"].T,
                     precision=jax.lax.Precision.HIGHEST) + p["fc1_b"]
    return jax.nn.log_softmax(logits, axis=1)


if __name__ == "__main__":
    key = jax.random.PRNGKey(0)
    k_x, k_p = jax.random.split(key)

    # Input (B, C, H, W) = (2, 4, 10, 278): after two (conv3x3 -> maxpool2x2)
    # stages the map is (50, 1, 68), matching fc1's 50*1*68 = 3400 inputs.
    x = jax.random.normal(k_x, (2, 4, 10, 278), jnp.float32)
    params = init_params(k_p, in_channels=4)
    prep = prepare_params(params)          # one-time weight-layout conversion

    fwd = jax.jit(cnn_forward)
    out = jax.block_until_ready(fwd(x, prep))

    ref = reference_forward(x, params)
    assert out.shape == (2, 2), out.shape
    assert bool(jnp.all(jnp.isfinite(out)))
    assert bool(jnp.allclose(jnp.sum(jnp.exp(out), axis=1), 1.0, atol=1e-4))
    assert bool(jnp.allclose(out, ref, atol=2e-2, rtol=2e-2)), (out, ref)

    print("KERNEL_OK")
</pallas_src>

<mosaic_0001>
module attributes {stable_mosaic.version = 11 : i64} {
  func.func @kernel(%arg0: i32, %arg1: memref<1x2304x36xf32, #tpu.memory_space<vmem>>, %arg2: memref<36x50xf32, #tpu.memory_space<vmem>>, %arg3: memref<9x50x50xf32, #tpu.memory_space<vmem>>, %arg4: memref<2x50xf32, #tpu.memory_space<vmem>>, %arg5: memref<2x68x50xf32, #tpu.memory_space<vmem>>, %arg6: memref<2x1xf32, #tpu.memory_space<vmem>>, %arg7: memref<1x2x1xf32, #tpu.memory_space<vmem>>, %arg8: memref<2304x50xf32, #tpu.memory_space<vmem>>, %arg9: memref<560x50xf32, #tpu.memory_space<vmem>>, %arg10: memref<280x50xf32, #tpu.memory_space<vmem>>) attributes {dimension_semantics = [#tpu.dimension_semantics<parallel>], iteration_bounds = array<i64: 2>, scalar_prefetch = 0 : i64, scratch_operands = 3 : i64, tpu.core_type = #tpu.core_type<tc>, window_params = [{transform_indices = @transform_0, window_bounds = array<i64: 1, 2304, 36>}, {pipeline_mode = #tpu.pipeline_mode<synchronous>, transform_indices = @transform_1, window_bounds = array<i64: 36, 50>}, {pipeline_mode = #tpu.pipeline_mode<synchronous>, transform_indices = @transform_2, window_bounds = array<i64: 9, 50, 50>}, {pipeline_mode = #tpu.pipeline_mode<synchronous>, transform_indices = @transform_3, window_bounds = array<i64: 2, 50>}, {pipeline_mode = #tpu.pipeline_mode<synchronous>, transform_indices = @transform_4, window_bounds = array<i64: 2, 68, 50>}, {pipeline_mode = #tpu.pipeline_mode<synchronous>, transform_indices = @transform_5, window_bounds = array<i64: 2, 1>}, {transform_indices = @transform_6, window_bounds = array<i64: 1, 2, 1>}]} {
    %c0 = arith.constant 0 : index
    %c0_0 = arith.constant 0 : index
    %0 = vector.load %arg4[%c0, %c0_0] : memref<2x50xf32, #tpu.memory_space<vmem>>, vector<2x50xf32>
    %1 = vector.extract_strided_slice %0 {offsets = [0, 0], sizes = [1, 50], strides = [1, 1]} : vector<2x50xf32> to vector<1x50xf32>
    %2 = vector.extract_strided_slice %0 {offsets = [1, 0], sizes = [1, 50], strides = [1, 1]} : vector<2x50xf32> to vector<1x50xf32>
    %c0_1 = arith.constant 0 : index
    %c0_2 = arith.constant 0 : index
    %3 = vector.load %arg2[%c0_1, %c0_2] : memref<36x50xf32, #tpu.memory_space<vmem>>, vector<36x50xf32>
    %c0_3 = arith.constant 0 : index
    %c0_4 = arith.constant 0 : index
    %c0_5 = arith.constant 0 : index
    %4 = vector.load %arg1[%c0_3, %c0_4, %c0_5] : memref<1x2304x36xf32, #tpu.memory_space<vmem>>, vector<1x128x36xf32>
    %5 = vector.shape_cast %4 : vector<1x128x36xf32> to vector<128x36xf32>
    %cst = arith.constant dense<0.000000e+00> : vector<128x50xf32>
    %6 = tpu.matmul %5, %3, %cst {dimension_numbers = #tpu.dot_dimension_numbers<[1], [0], [0], [1], [0, 0, 1, 1], [], []>} : vector<128x36xf32>, vector<36x50xf32>, vector<128x50xf32> -> vector<128x50xf32>
    %7 = vector.broadcast %1 : vector<1x50xf32> to vector<128x50xf32>
    %8 = arith.addf %6, %7 : vector<128x50xf32>
    %cst_6 = arith.constant 0.000000e+00 : f32
    %9 = vector.broadcast %cst_6 : f32 to vector<128x50xf32>
    %10 = arith.cmpf oge, %8, %9 : vector<128x50xf32>
    %cst_7 = arith.constant 0.00999999977 : f32
    %11 = vector.broadcast %cst_7 : f32 to vector<128x50xf32>
    %12 = arith.mulf %11, %8 : vector<128x50xf32>
    %13 = arith.select %10, %8, %12 : vector<128x50xi1>, vector<128x50xf32>
    %c0_8 = arith.constant 0 : index
    %c0_9 = arith.constant 0 : index
    %14 = vector.load %arg8[%c0_8, %c0_9] : memref<2304x50xf32, #tpu.memory_space<vmem>>, vector<128x50xf32>
    tpu.vector_store %arg8[%c0_8, %c0_9], %13 {strides = array<i32>} : memref<2304x50xf32, #tpu.memory_space<vmem>>, vector<128x50xf32>,
    %c0_10 = arith.constant 0 : index
    %c128 = arith.constant 128 : index
    %c0_11 = arith.constant 0 : index
    %15 = vector.load %arg1[%c0_10, %c128, %c0_11] : memref<1x2304x36xf32, #tpu.memory_space<vmem>>, vector<1x128x36xf32>
    %16 = vector.shape_cast %15 : vector<1x128x36xf32> to vector<128x36xf32>
    %cst_12 = arith.constant dense<0.000000e+00> : vector<128x50xf32>
    %17 = tpu.matmul %16, %3, %cst_12 {dimension_numbers = #tpu.dot_dimension_numbers<[1], [0], [0], [1], [0, 0, 1, 1], [], []>} : vector<128x36xf32>, vector<36x50xf32>, vector<128x50xf32> -> vector<128x50xf32>
    %18 = vector.broadcast %1 : vector<1x50xf32> to vector<128x50xf32>
    %19 = arith.addf %17, %18 : vector<128x50xf32>
    %cst_13 = arith.constant 0.000000e+00 : f32
    %20 = vector.broadcast %cst_13 : f32 to vector<128x50xf32>
    %21 = arith.cmpf oge, %19, %20 : vector<128x50xf32>
    %cst_14 = arith.constant 0.00999999977 : f32
    %22 = vector.broadcast %cst_14 : f32 to vector<128x50xf32>
    %23 = arith.mulf %22, %19 : vector<128x50xf32>
    %24 = arith.select %21, %19, %23 : vector<128x50xi1>, vector<128x50xf32>
    %c128_15 = arith.constant 128 : index
    %c0_16 = arith.constant 0 : index
    %25 = vector.load %arg8[%c128_15, %c0_16] : memref<2304x50xf32, #tpu.memory_space<vmem>>, vector<128x50xf32>
    tpu.vector_store %arg8[%c128_15, %c0_16], %24 {strides = array<i32>} : memref<2304x50xf32, #tpu.memory_space<vmem>>, vector<128x50xf32>,
    %c0_17 = arith.constant 0 : index
    %c256 = arith.constant 256 : index
    %c0_18 = arith.constant 0 : index
    %26 = vector.load %arg1[%c0_17, %c256, %c0_18] : memref<1x2304x36xf32, #tpu.memory_space<vmem>>, vector<1x128x36xf32>
    %27 = vector.shape_cast %26 : vector<1x128x36xf32> to vector<128x36xf32>
    %cst_19 = arith.constant dense<0.000000e+00> : vector<128x50xf32>
    %28 = tpu.matmul %27, %3, %cst_19 {dimension_numbers = #tpu.dot_dimension_numbers<[1], [0], [0], [1], [0, 0, 1, 1], [], []>} : vector<128x36xf32>, vector<36x50xf32>, vector<128x50xf32> -> vector<128x50xf32>
    %29 = vector.broadcast %1 : vector<1x50xf32> to vector<128x50xf32>
    %30 = arith.addf %28, %29 : vector<128x50xf32>
    %cst_20 = arith.constant 0.000000e+00 : f32
    %31 = vector.broadcast %cst_20 : f32 to vector<128x50xf32>
    %32 = arith.cmpf oge, %30, %31 : vector<128x50xf32>
    %cst_21 = arith.constant 0.00999999977 : f32
    %33 = vector.broadcast %cst_21 : f32 to vector<128x50xf32>
    %34 = arith.mulf %33, %30 : vector<128x50xf32>
    %35 = arith.select %32, %30, %34 : vector<128x50xi1>, vector<128x50xf32>
    %c256_22 = arith.constant 256 : index
    %c0_23 = arith.constant 0 : index
    %36 = vector.load %arg8[%c256_22, %c0_23] : memref<2304x50xf32, #tpu.memory_space<vmem>>, vector<128x50xf32>
    tpu.vector_store %arg8[%c256_22, %c0_23], %35 {strides = array<i32>} : memref<2304x50xf32, #tpu.memory_space<vmem>>, vector<128x50xf32>,
    %c0_24 = arith.constant 0 : index
    %c384 = arith.constant 384 : index
    %c0_25 = arith.constant 0 : index
    %37 = vector.load %arg1[%c0_24, %c384, %c0_25] : memref<1x2304x36xf32, #tpu.memory_space<vmem>>, vector<1x128x36xf32>
    %38 = vector.shape_cast %37 : vector<1x128x36xf32> to vector<128x36xf32>
    %cst_26 = arith.constant dense<0.000000e+00> : vector<128x50xf32>
    %39 = tpu.matmul %38, %3, %cst_26 {dimension_numbers = #tpu.dot_dimension_numbers<[1], [0], [0], [1], [0, 0, 1, 1], [], []>} : vector<128x36xf32>, vector<36x50xf32>, vector<128x50xf32> -> vector<128x50xf32>
    %40 = vector.broadcast %1 : vector<1x50xf32> to vector<128x50xf32>
    %41 = arith.addf %39, %40 : vector<128x50xf32>
    %cst_27 = arith.constant 0.000000e+00 : f32
    %42 = vector.broadcast %cst_27 : f32 to vector<128x50xf32>
    %43 = arith.cmpf oge, %41, %42 : vector<128x50xf32>
    %cst_28 = arith.constant 0.00999999977 : f32
    %44 = vector.broadcast %cst_28 : f32 to vector<128x50xf32>
    %45 = arith.mulf %44, %41 : vector<128x50xf32>
    %46 = arith.select %43, %41, %45 : vector<128x50xi1>, vector<128x50xf32>
    %c384_29 = arith.constant 384 : index
    %c0_30 = arith.constant 0 : index
    %47 = vector.load %arg8[%c384_29, %c0_30] : memref<2304x50xf32, #tpu.memory_space<vmem>>, vector<128x50xf32>
    tpu.vector_store %arg8[%c384_29, %c0_30], %46 {strides = array<i32>} : memref<2304x50xf32, #tpu.memory_space<vmem>>, vector<128x50xf32>,
    %c0_31 = arith.constant 0 : index
    %c512 = arith.constant 512 : index
    %c0_32 = arith.constant 0 : index
    %48 = vector.load %arg1[%c0_31, %c512, %c0_32] : memref<1x2304x36xf32, #tpu.memory_space<vmem>>, vector<1x128x36xf32>
    %49 = vector.shape_cast %48 : vector<1x128x36xf32> to vector<128x36xf32>
    %cst_33 = arith.constant dense<0.000000e+00> : vector<128x50xf32>
    %50 = tpu.matmul %49, %3, %cst_33 {dimension_numbers = #tpu.dot_dimension_numbers<[1], [0], [0], [1], [0, 0, 1, 1], [], []>} : vector<128x36xf32>, vector<36x50xf32>, vector<128x50xf32> -> vector<128x50xf32>
    %51 = vector.broadcast %1 : vector<1x50xf32> to vector<128x50xf32>
    %52 = arith.addf %50, %51 : vector<128x50xf32>
    %cst_34 = arith.constant 0.000000e+00 : f32
    %53 = vector.broadcast %cst_34 : f32 to vector<128x50xf32>
    %54 = arith.cmpf oge, %52, %53 : vector<128x50xf32>
    %cst_35 = arith.constant 0.00999999977 : f32
    %55 = vector.broadcast %cst_35 : f32 to vector<128x50xf32>
    %56 = arith.mulf %55, %52 : vector<128x50xf32>
    %57 = arith.select %54, %52, %56 : vector<128x50xi1>, vector<128x50xf32>
    %c512_36 = arith.constant 512 : index
    %c0_37 = arith.constant 0 : index
    %58 = vector.load %arg8[%c512_36, %c0_37] : memref<2304x50xf32, #tpu.memory_space<vmem>>, vector<128x50xf32>
    tpu.vector_store %arg8[%c512_36, %c0_37], %57 {strides = array<i32>} : memref<2304x50xf32, #tpu.memory_space<vmem>>, vector<128x50xf32>,
    %c0_38 = arith.constant 0 : index
    %c640 = arith.constant 640 : index
    %c0_39 = arith.constant 0 : index
    %59 = vector.load %arg1[%c0_38, %c640, %c0_39] : memref<1x2304x36xf32, #tpu.memory_space<vmem>>, vector<1x128x36xf32>
    %60 = vector.shape_cast %59 : vector<1x128x36xf32> to vector<128x36xf32>
    %cst_40 = arith.constant dense<0.000000e+00> : vector<128x50xf32>
    %61 = tpu.matmul %60, %3, %cst_40 {dimension_numbers = #tpu.dot_dimension_numbers<[1], [0], [0], [1], [0, 0, 1, 1], [], []>} : vector<128x36xf32>, vector<36x50xf32>, vector<128x50xf32> -> vector<128x50xf32>
    %62 = vector.broadcast %1 : vector<1x50xf32> to vector<128x50xf32>
    %63 = arith.addf %61, %62 : vector<128x50xf32>
    %cst_41 = arith.constant 0.000000e+00 : f32
    %64 = vector.broadcast %cst_41 : f32 to vector<128x50xf32>
    %65 = arith.cmpf oge, %63, %64 : vector<128x50xf32>
    %cst_42 = arith.constant 0.00999999977 : f32
    %66 = vector.broadcast %cst_42 : f32 to vector<128x50xf32>
    %67 = arith.mulf %66, %63 : vector<128x50xf32>
    %68 = arith.select %65, %63, %67 : vector<128x50xi1>, vector<128x50xf32>
    %c640_43 = arith.constant 640 : index
    %c0_44 = arith.constant 0 : index
    %69 = vector.load %arg8[%c640_43, %c0_44] : memref<2304x50xf32, #tpu.memory_space<vmem>>, vector<128x50xf32>
    tpu.vector_store %arg8[%c640_43, %c0_44], %68 {strides = array<i32>} : memref<2304x50xf32, #tpu.memory_space<vmem>>, vector<128x50xf32>,
    %c0_45 = arith.constant 0 : index
    %c768 = arith.constant 768 : index
    %c0_46 = arith.constant 0 : index
    %70 = vector.load %arg1[%c0_45, %c768, %c0_46] : memref<1x2304x36xf32, #tpu.memory_space<vmem>>, vector<1x128x36xf32>
    %71 = vector.shape_cast %70 : vector<1x128x36xf32> to vector<128x36xf32>
    %cst_47 = arith.constant dense<0.000000e+00> : vector<128x50xf32>
    %72 = tpu.matmul %71, %3, %cst_47 {dimension_numbers = #tpu.dot_dimension_numbers<[1], [0], [0], [1], [0, 0, 1, 1], [], []>} : vector<128x36xf32>, vector<36x50xf32>, vector<128x50xf32> -> vector<128x50xf32>
    %73 = vector.broadcast %1 : vector<1x50xf32> to vector<128x50xf32>
    %74 = arith.addf %72, %73 : vector<128x50xf32>
    %cst_48 = arith.constant 0.000000e+00 : f32
    %75 = vector.broadcast %cst_48 : f32 to vector<128x50xf32>
    %76 = arith.cmpf oge, %74, %75 : vector<128x50xf32>
    %cst_49 = arith.constant 0.00999999977 : f32
    %77 = vector.broadcast %cst_49 : f32 to vector<128x50xf32>
    %78 = arith.mulf %77, %74 : vector<128x50xf32>
    %79 = arith.select %76, %74, %78 : vector<128x50xi1>, vector<128x50xf32>
    %c768_50 = arith.constant 768 : index
    %c0_51 = arith.constant 0 : index
    %80 = vector.load %arg8[%c768_50, %c0_51] : memref<2304x50xf32, #tpu.memory_space<vmem>>, vector<128x50xf32>
    tpu.vector_store %arg8[%c768_50, %c0_51], %79 {strides = array<i32>} : memref<2304x50xf32, #tpu.memory_space<vmem>>, vector<128x50xf32>,
    %c0_52 = arith.constant 0 : index
    %c896 = arith.constant 896 : index
    %c0_53 = arith.constant 0 : index
    %81 = vector.load %arg1[%c0_52, %c896, %c0_53] : memref<1x2304x36xf32, #tpu.memory_space<vmem>>, vector<1x128x36xf32>
    %82 = vector.shape_cast %81 : vector<1x128x36xf32> to vector<128x36xf32>
    %cst_54 = arith.constant dense<0.000000e+00> : vector<128x50xf32>
    %83 = tpu.matmul %82, %3, %cst_54 {dimension_numbers = #tpu.dot_dimension_numbers<[1], [0], [0], [1], [0, 0, 1, 1], [], []>} : vector<128x36xf32>, vector<36x50xf32>, vector<128x50xf32> -> vector<128x50xf32>
    %84 = vector.broadcast %1 : vector<1x50xf32> to vector<128x50xf32>
    %85 = arith.addf %83, %84 : vector<128x50xf32>
    %cst_55 = arith.constant 0.000000e+00 : f32
    %86 = vector.broadcast %cst_55 : f32 to vector<128x50xf32>
    %87 = arith.cmpf oge, %85, %86 : vector<128x50xf32>
    %cst_56 = arith.constant 0.00999999977 : f32
    %88 = vector.broadcast %cst_56 : f32 to vector<128x50xf32>
    %89 = arith.mulf %88, %85 : vector<128x50xf32>
    %90 = arith.select %87, %85, %89 : vector<128x50xi1>, vector<128x50xf32>
    %c896_57 = arith.constant 896 : index
    %c0_58 = arith.constant 0 : index
    %91 = vector.load %arg8[%c896_57, %c0_58] : memref<2304x50xf32, #tpu.memory_space<vmem>>, vector<128x50xf32>
    tpu.vector_store %arg8[%c896_57, %c0_58], %90 {strides = array<i32>} : memref<2304x50xf32, #tpu.memory_space<vmem>>, vector<128x50xf32>,
    %c0_59 = arith.constant 0 : index
    %c1024 = arith.constant 1024 : index
    %c0_60 = arith.constant 0 : index
    %92 = vector.load %arg1[%c0_59, %c1024, %c0_60] : memref<1x2304x36xf32, #tpu.memory_space<vmem>>, vector<1x128x36xf32>
    %93 = vector.shape_cast %92 : vector<1x128x36xf32> to vector<128x36xf32>
    %cst_61 = arith.constant dense<0.000000e+00> : vector<128x50xf32>
    %94 = tpu.matmul %93, %3, %cst_61 {dimension_numbers = #tpu.dot_dimension_numbers<[1], [0], [0], [1], [0, 0, 1, 1], [], []>} : vector<128x36xf32>, vector<36x50xf32>, vector<128x50xf32> -> vector<128x50xf32>
    %95 = vector.broadcast %1 : vector<1x50xf32> to vector<128x50xf32>
    %96 = arith.addf %94, %95 : vector<128x50xf32>
    %cst_62 = arith.constant 0.000000e+00 : f32
    %97 = vector.broadcast %cst_62 : f32 to vector<128x50xf32>
    %98 = arith.cmpf oge, %96, %97 : vector<128x50xf32>
    %cst_63 = arith.constant 0.00999999977 : f32
    %99 = vector.broadcast %cst_63 : f32 to vector<128x50xf32>
    %100 = arith.mulf %99, %96 : vector<128x50xf32>
    %101 = arith.select %98, %96, %100 : vector<128x50xi1>, vector<128x50xf32>
    %c1024_64 = arith.constant 1024 : index
    %c0_65 = arith.constant 0 : index
    %102 = vector.load %arg8[%c1024_64, %c0_65] : memref<2304x50xf32, #tpu.memory_space<vmem>>, vector<128x50xf32>
    tpu.vector_store %arg8[%c1024_64, %c0_65], %101 {strides = array<i32>} : memref<2304x50xf32, #tpu.memory_space<vmem>>, vector<128x50xf32>,
    %c0_66 = arith.constant 0 : index
    %c1152 = arith.constant 1152 : index
    %c0_67 = arith.constant 0 : index
    %103 = vector.load %arg1[%c0_66, %c1152, %c0_67] : memref<1x2304x36xf32, #tpu.memory_space<vmem>>, vector<1x128x36xf32>
    %104 = vector.shape_cast %103 : vector<1x128x36xf32> to vector<128x36xf32>
    %cst_68 = arith.constant dense<0.000000e+00> : vector<128x50xf32>
    %105 = tpu.matmul %104, %3, %cst_68 {dimension_numbers = #tpu.dot_dimension_numbers<[1], [0], [0], [1], [0, 0, 1, 1], [], []>} : vector<128x36xf32>, vector<36x50xf32>, vector<128x50xf32> -> vector<128x50xf32>
    %106 = vector.broadcast %1 : vector<1x50xf32> to vector<128x50xf32>
    %107 = arith.addf %105, %106 : vector<128x50xf32>
    %cst_69 = arith.constant 0.000000e+00 : f32
    %108 = vector.broadcast %cst_69 : f32 to vector<128x50xf32>
    %109 = arith.cmpf oge, %107, %108 : vector<128x50xf32>
    %cst_70 = arith.constant 0.00999999977 : f32
    %110 = vector.broadcast %cst_70 : f32 to vector<128x50xf32>
    %111 = arith.mulf %110, %107 : vector<128x50xf32>
    %112 = arith.select %109, %107, %111 : vector<128x50xi1>, vector<128x50xf32>
    %c1152_71 = arith.constant 1152 : index
    %c0_72 = arith.constant 0 : index
    %113 = vector.load %arg8[%c1152_71, %c0_72] : memref<2304x50xf32, #tpu.memory_space<vmem>>, vector<128x50xf32>
    tpu.vector_store %arg8[%c1152_71, %c0_72], %112 {strides = array<i32>} : memref<2304x50xf32, #tpu.memory_space<vmem>>, vector<128x50xf32>,
    %c0_73 = arith.constant 0 : index
    %c1280 = arith.constant 1280 : index
    %c0_74 = arith.constant 0 : index
    %114 = vector.load %arg1[%c0_73, %c1280, %c0_74] : memref<1x2304x36xf32, #tpu.memory_space<vmem>>, vector<1x128x36xf32>
    %115 = vector.shape_cast %114 : vector<1x128x36xf32> to vector<128x36xf32>
    %cst_75 = arith.constant dense<0.000000e+00> : vector<128x50xf32>
    %116 = tpu.matmul %115, %3, %cst_75 {dimension_numbers = #tpu.dot_dimension_numbers<[1], [0], [0], [1], [0, 0, 1, 1], [], []>} : vector<128x36xf32>, vector<36x50xf32>, vector<128x50xf32> -> vector<128x50xf32>
    %117 = vector.broadcast %1 : vector<1x50xf32> to vector<128x50xf32>
    %118 = arith.addf %116, %117 : vector<128x50xf32>
    %cst_76 = arith.constant 0.000000e+00 : f32
    %119 = vector.broadcast %cst_76 : f32 to vector<128x50xf32>
    %120 = arith.cmpf oge, %118, %119 : vector<128x50xf32>
    %cst_77 = arith.constant 0.00999999977 : f32
    %121 = vector.broadcast %cst_77 : f32 to vector<128x50xf32>
    %122 = arith.mulf %121, %118 : vector<128x50xf32>
    %123 = arith.select %120, %118, %122 : vector<128x50xi1>, vector<128x50xf32>
    %c1280_78 = arith.constant 1280 : index
    %c0_79 = arith.constant 0 : index
    %124 = vector.load %arg8[%c1280_78, %c0_79] : memref<2304x50xf32, #tpu.memory_space<vmem>>, vector<128x50xf32>
    tpu.vector_store %arg8[%c1280_78, %c0_79], %123 {strides = array<i32>} : memref<2304x50xf32, #tpu.memory_space<vmem>>, vector<128x50xf32>,
    %c0_80 = arith.constant 0 : index
    %c1408 = arith.constant 1408 : index
    %c0_81 = arith.constant 0 : index
    %125 = vector.load %arg1[%c0_80, %c1408, %c0_81] : memref<1x2304x36xf32, #tpu.memory_space<vmem>>, vector<1x128x36xf32>
    %126 = vector.shape_cast %125 : vector<1x128x36xf32> to vector<128x36xf32>
    %cst_82 = arith.constant dense<0.000000e+00> : vector<128x50xf32>
    %127 = tpu.matmul %126, %3, %cst_82 {dimension_numbers = #tpu.dot_dimension_numbers<[1], [0], [0], [1], [0, 0, 1, 1], [], []>} : vector<128x36xf32>, vector<36x50xf32>, vector<128x50xf32> -> vector<128x50xf32>
    %128 = vector.broadcast %1 : vector<1x50xf32> to vector<128x50xf32>
    %129 = arith.addf %127, %128 : vector<128x50xf32>
    %cst_83 = arith.constant 0.000000e+00 : f32
    %130 = vector.broadcast %cst_83 : f32 to vector<128x50xf32>
    %131 = arith.cmpf oge, %129, %130 : vector<128x50xf32>
    %cst_84 = arith.constant 0.00999999977 : f32
    %132 = vector.broadcast %cst_84 : f32 to vector<128x50xf32>
    %133 = arith.mulf %132, %129 : vector<128x50xf32>
    %134 = arith.select %131, %129, %133 : vector<128x50xi1>, vector<128x50xf32>
    %c1408_85 = arith.constant 1408 : index
    %c0_86 = arith.constant 0 : index
    %135 = vector.load %arg8[%c1408_85, %c0_86] : memref<2304x50xf32, #tpu.memory_space<vmem>>, vector<128x50xf32>
    tpu.vector_store %arg8[%c1408_85, %c0_86], %134 {strides = array<i32>} : memref<2304x50xf32, #tpu.memory_space<vmem>>, vector<128x50xf32>,
    %c0_87 = arith.constant 0 : index
    %c1536 = arith.constant 1536 : index
    %c0_88 = arith.constant 0 : index
    %136 = vector.load %arg1[%c0_87, %c1536, %c0_88] : memref<1x2304x36xf32, #tpu.memory_space<vmem>>, vector<1x128x36xf32>
    %137 = vector.shape_cast %136 : vector<1x128x36xf32> to vector<128x36xf32>
    %cst_89 = arith.constant dense<0.000000e+00> : vector<128x50xf32>
    %138 = tpu.matmul %137, %3, %cst_89 {dimension_numbers = #tpu.dot_dimension_numbers<[1], [0], [0], [1], [0, 0, 1, 1], [], []>} : vector<128x36xf32>, vector<36x50xf32>, vector<128x50xf32> -> vector<128x50xf32>
    %139 = vector.broadcast %1 : vector<1x50xf32> to vector<128x50xf32>
    %140 = arith.addf %138, %139 : vector<128x50xf32>
    %cst_90 = arith.constant 0.000000e+00 : f32
    %141 = vector.broadcast %cst_90 : f32 to vector<128x50xf32>
    %142 = arith.cmpf oge, %140, %141 : vector<128x50xf32>
    %cst_91 = arith.constant 0.00999999977 : f32
    %143 = vector.broadcast %cst_91 : f32 to vector<128x50xf32>
    %144 = arith.mulf %143, %140 : vector<128x50xf32>
    %145 = arith.select %142, %140, %144 : vector<128x50xi1>, vector<128x50xf32>
    %c1536_92 = arith.constant 1536 : index
    %c0_93 = arith.constant 0 : index
    %146 = vector.load %arg8[%c1536_92, %c0_93] : memref<2304x50xf32, #tpu.memory_space<vmem>>, vector<128x50xf32>
    tpu.vector_store %arg8[%c1536_92, %c0_93], %145 {strides = array<i32>} : memref<2304x50xf32, #tpu.memory_space<vmem>>, vector<128x50xf32>,
    %c0_94 = arith.constant 0 : index
    %c1664 = arith.constant 1664 : index
    %c0_95 = arith.constant 0 : index
    %147 = vector.load %arg1[%c0_94, %c1664, %c0_95] : memref<1x2304x36xf32, #tpu.memory_space<vmem>>, vector<1x128x36xf32>
    %148 = vector.shape_cast %147 : vector<1x128x36xf32> to vector<128x36xf32>
    %cst_96 = arith.constant dense<0.000000e+00> : vector<128x50xf32>
    %149 = tpu.matmul %148, %3, %cst_96 {dimension_numbers = #tpu.dot_dimension_numbers<[1], [0], [0], [1], [0, 0, 1, 1], [], []>} : vector<128x36xf32>, vector<36x50xf32>, vector<128x50xf32> -> vector<128x50xf32>
    %150 = vector.broadcast %1 : vector<1x50xf32> to vector<128x50xf32>
    %151 = arith.addf %149, %150 : vector<128x50xf32>
    %cst_97 = arith.constant 0.000000e+00 : f32
    %152 = vector.broadcast %cst_97 : f32 to vector<128x50xf32>
    %153 = arith.cmpf oge, %151, %152 : vector<128x50xf32>
    %cst_98 = arith.constant 0.00999999977 : f32
    %154 = vector.broadcast %cst_98 : f32 to vector<128x50xf32>
    %155 = arith.mulf %154, %151 : vector<128x50xf32>
    %156 = arith.select %153, %151, %155 : vector<128x50xi1>, vector<128x50xf32>
    %c1664_99 = arith.constant 1664 : index
    %c0_100 = arith.constant 0 : index
    %157 = vector.load %arg8[%c1664_99, %c0_100] : memref<2304x50xf32, #tpu.memory_space<vmem>>, vector<128x50xf32>
    tpu.vector_store %arg8[%c1664_99, %c0_100], %156 {strides = array<i32>} : memref<2304x50xf32, #tpu.memory_space<vmem>>, vector<128x50xf32>,
    %c0_101 = arith.constant 0 : index
    %c1792 = arith.constant 1792 : index
    %c0_102 = arith.constant 0 : index
    %158 = vector.load %arg1[%c0_101, %c1792, %c0_102] : memref<1x2304x36xf32, #tpu.memory_space<vmem>>, vector<1x128x36xf32>
    %159 = vector.shape_cast %158 : vector<1x128x36xf32> to vector<128x36xf32>
    %cst_103 = arith.constant dense<0.000000e+00> : vector<128x50xf32>
    %160 = tpu.matmul %159, %3, %cst_103 {dimension_numbers = #tpu.dot_dimension_numbers<[1], [0], [0], [1], [0, 0, 1, 1], [], []>} : vector<128x36xf32>, vector<36x50xf32>, vector<128x50xf32> -> vector<128x50xf32>
    %161 = vector.broadcast %1 : vector<1x50xf32> to vector<128x50xf32>
    %162 = arith.addf %160, %161 : vector<128x50xf32>
    %cst_104 = arith.constant 0.000000e+00 : f32
    %163 = vector.broadcast %cst_104 : f32 to vector<128x50xf32>
    %164 = arith.cmpf oge, %162, %163 : vector<128x50xf32>
    %cst_105 = arith.constant 0.00999999977 : f32
    %165 = vector.broadcast %cst_105 : f32 to vector<128x50xf32>
    %166 = arith.mulf %165, %162 : vector<128x50xf32>
    %167 = arith.select %164, %162, %166 : vector<128x50xi1>, vector<128x50xf32>
    %c1792_106 = arith.constant 1792 : index
    %c0_107 = arith.constant 0 : index
    %168 = vector.load %arg8[%c1792_106, %c0_107] : memref<2304x50xf32, #tpu.memory_space<vmem>>, vector<128x50xf32>
    tpu.vector_store %arg8[%c1792_106, %c0_107], %167 {strides = array<i32>} : memref<2304x50xf32, #tpu.memory_space<vmem>>, vector<128x50xf32>,
    %c0_108 = arith.constant 0 : index
    %c1920 = arith.constant 1920 : index
    %c0_109 = arith.constant 0 : index
    %169 = vector.load %arg1[%c0_108, %c1920, %c0_109] : memref<1x2304x36xf32, #tpu.memory_space<vmem>>, vector<1x128x36xf32>
    %170 = vector.shape_cast %169 : vector<1x128x36xf32> to vector<128x36xf32>
    %cst_110 = arith.constant dense<0.000000e+00> : vector<128x50xf32>
    %171 = tpu.matmul %170, %3, %cst_110 {dimension_numbers = #tpu.dot_dimension_numbers<[1], [0], [0], [1], [0, 0, 1, 1], [], []>} : vector<128x36xf32>, vector<36x50xf32>, vector<128x50xf32> -> vector<128x50xf32>
    %172 = vector.broadcast %1 : vector<1x50xf32> to vector<128x50xf32>
    %173 = arith.addf %171, %172 : vector<128x50xf32>
    %cst_111 = arith.constant 0.000000e+00 : f32
    %174 = vector.broadcast %cst_111 : f32 to vector<128x50xf32>
    %175 = arith.cmpf oge, %173, %174 : vector<128x50xf32>
    %cst_112 = arith.constant 0.00999999977 : f32
    %176 = vector.broadcast %cst_112 : f32 to vector<128x50xf32>
    %177 = arith.mulf %176, %173 : vector<128x50xf32>
    %178 = arith.select %175, %173, %177 : vector<128x50xi1>, vector<128x50xf32>
    %c1920_113 = arith.constant 1920 : index
    %c0_114 = arith.constant 0 : index
    %179 = vector.load %arg8[%c1920_113, %c0_114] : memref<2304x50xf32, #tpu.memory_space<vmem>>, vector<128x50xf32>
    tpu.vector_store %arg8[%c1920_113, %c0_114], %178 {strides = array<i32>} : memref<2304x50xf32, #tpu.memory_space<vmem>>, vector<128x50xf32>,
    %c0_115 = arith.constant 0 : index
    %c2048 = arith.constant 2048 : index
    %c0_116 = arith.constant 0 : index
    %180 = vector.load %arg1[%c0_115, %c2048, %c0_116] : memref<1x2304x36xf32, #tpu.memory_space<vmem>>, vector<1x128x36xf32>
    %181 = vector.shape_cast %180 : vector<1x128x36xf32> to vector<128x36xf32>
    %cst_117 = arith.constant dense<0.000000e+00> : vector<128x50xf32>
    %182 = tpu.matmul %181, %3, %cst_117 {dimension_numbers = #tpu.dot_dimension_numbers<[1], [0], [0], [1], [0, 0, 1, 1], [], []>} : vector<128x36xf32>, vector<36x50xf32>, vector<128x50xf32> -> vector<128x50xf32>
    %183 = vector.broadcast %1 : vector<1x50xf32> to vector<128x50xf32>
    %184 = arith.addf %182, %183 : vector<128x50xf32>
    %cst_118 = arith.constant 0.000000e+00 : f32
    %185 = vector.broadcast %cst_118 : f32 to vector<128x50xf32>
    %186 = arith.cmpf oge, %184, %185 : vector<128x50xf32>
    %cst_119 = arith.constant 0.00999999977 : f32
    %187 = vector.broadcast %cst_119 : f32 to vector<128x50xf32>
    %188 = arith.mulf %187, %184 : vector<128x50xf32>
    %189 = arith.select %186, %184, %188 : vector<128x50xi1>, vector<128x50xf32>
    %c2048_120 = arith.constant 2048 : index
    %c0_121 = arith.constant 0 : index
    %190 = vector.load %arg8[%c2048_120, %c0_121] : memref<2304x50xf32, #tpu.memory_space<vmem>>, vector<128x50xf32>
    tpu.vector_store %arg8[%c2048_120, %c0_121], %189 {strides = array<i32>} : memref<2304x50xf32, #tpu.memory_space<vmem>>, vector<128x50xf32>,
    %c0_122 = arith.constant 0 : index
    %c2176 = arith.constant 2176 : index
    %c0_123 = arith.constant 0 : index
    %191 = vector.load %arg1[%c0_122, %c2176, %c0_123] : memref<1x2304x36xf32, #tpu.memory_space<vmem>>, vector<1x128x36xf32>
    %192 = vector.shape_cast %191 : vector<1x128x36xf32> to vector<128x36xf32>
    %cst_124 = arith.constant dense<0.000000e+00> : vector<128x50xf32>
    %193 = tpu.matmul %192, %3, %cst_124 {dimension_numbers = #tpu.dot_dimension_numbers<[1], [0], [0], [1], [0, 0, 1, 1], [], []>} : vector<128x36xf32>, vector<36x50xf32>, vector<128x50xf32> -> vector<128x50xf32>
    %194 = vector.broadcast %1 : vector<1x50xf32> to vector<128x50xf32>
    %195 = arith.addf %193, %194 : vector<128x50xf32>
    %cst_125 = arith.constant 0.000000e+00 : f32
    %196 = vector.broadcast %cst_125 : f32 to vector<128x50xf32>
    %197 = arith.cmpf oge, %195, %196 : vector<128x50xf32>
    %cst_126 = arith.constant 0.00999999977 : f32
    %198 = vector.broadcast %cst_126 : f32 to vector<128x50xf32>
    %199 = arith.mulf %198, %195 : vector<128x50xf32>
    %200 = arith.select %197, %195, %199 : vector<128x50xi1>, vector<128x50xf32>
    %c2176_127 = arith.constant 2176 : index
    %c0_128 = arith.constant 0 : index
    %201 = vector.load %arg8[%c2176_127, %c0_128] : memref<2304x50xf32, #tpu.memory_space<vmem>>, vector<128x50xf32>
    tpu.vector_store %arg8[%c2176_127, %c0_128], %200 {strides = array<i32>} : memref<2304x50xf32, #tpu.memory_space<vmem>>, vector<128x50xf32>,
    %cst_129 = arith.constant 0.000000e+00 : f32
    %202 = vector.broadcast %cst_129 : f32 to vector<8x50xf32>
    %c552 = arith.constant 552 : index
    %c0_130 = arith.constant 0 : index
    %203 = vector.load %arg9[%c552, %c0_130] : memref<560x50xf32, #tpu.memory_space<vmem>>, vector<8x50xf32>
    tpu.vector_store %arg9[%c552, %c0_130], %202 {strides = array<i32>} : memref<560x50xf32, #tpu.memory_space<vmem>>, vector<8x50xf32>,
    %c0_131 = arith.constant 0 : index
    %c0_132 = arith.constant 0 : index
    %204 = tpu.strided_load %arg8[%c0_131, %c0_132] {strides = array<i32: 2, 1>} : memref<2304x50xf32, #tpu.memory_space<vmem>>, vector<138x50xf32>
    %c1 = arith.constant 1 : index
    %c0_133 = arith.constant 0 : index
    %205 = tpu.strided_load %arg8[%c1, %c0_133] {strides = array<i32: 2, 1>} : memref<2304x50xf32, #tpu.memory_space<vmem>>, vector<138x50xf32>
    %206 = arith.maximumf %204, %205 : vector<138x50xf32>
    %c280 = arith.constant 280 : index
    %c0_134 = arith.constant 0 : index
    %207 = tpu.strided_load %arg8[%c280, %c0_134] {strides = array<i32: 2, 1>} : memref<2304x50xf32, #tpu.memory_space<vmem>>, vector<138x50xf32>
    %c281 = arith.constant 281 : index
    %c0_135 = arith.constant 0 : index
    %208 = tpu.strided_load %arg8[%c281, %c0_135] {strides = array<i32: 2, 1>} : memref<2304x50xf32, #tpu.memory_space<vmem>>, vector<138x50xf32>
    %209 = arith.maximumf %207, %208 : vector<138x50xf32>
    %210 = arith.maximumf %206, %209 : vector<138x50xf32>
    %c0_136 = arith.constant 0 : index
    %c0_137 = arith.constant 0 : index
    %211 = vector.load %arg9[%c0_136, %c0_137] : memref<560x50xf32, #tpu.memory_space<vmem>>, vector<138x50xf32>
    tpu.vector_store %arg9[%c0_136, %c0_137], %210 {strides = array<i32>} : memref<560x50xf32, #tpu.memory_space<vmem>>, vector<138x50xf32>,
    %c560 = arith.constant 560 : index
    %c0_138 = arith.constant 0 : index
    %212 = tpu.strided_load %arg8[%c560, %c0_138] {strides = array<i32: 2, 1>} : memref<2304x50xf32, #tpu.memory_space<vmem>>, vector<138x50xf32>
    %c561 = arith.constant 561 : index
    %c0_139 = arith.constant 0 : index
    %213 = tpu.strided_load %arg8[%c561, %c0_139] {strides = array<i32: 2, 1>} : memref<2304x50xf32, #tpu.memory_space<vmem>>, vector<138x50xf32>
    %214 = arith.maximumf %212, %213 : vector<138x50xf32>
    %c840 = arith.constant 840 : index
    %c0_140 = arith.constant 0 : index
    %215 = tpu.strided_load %arg8[%c840, %c0_140] {strides = array<i32: 2, 1>} : memref<2304x50xf32, #tpu.memory_space<vmem>>, vector<138x50xf32>
    %c841 = arith.constant 841 : index
    %c0_141 = arith.constant 0 : index
    %216 = tpu.strided_load %arg8[%c841, %c0_141] {strides = array<i32: 2, 1>} : memref<2304x50xf32, #tpu.memory_space<vmem>>, vector<138x50xf32>
    %217 = arith.maximumf %215, %216 : vector<138x50xf32>
    %218 = arith.maximumf %214, %217 : vector<138x50xf32>
    %c138 = arith.constant 138 : index
    %c0_142 = arith.constant 0 : index
    %219 = vector.load %arg9[%c138, %c0_142] : memref<560x50xf32, #tpu.memory_space<vmem>>, vector<138x50xf32>
    tpu.vector_store %arg9[%c138, %c0_142], %218 {strides = array<i32>} : memref<560x50xf32, #tpu.memory_space<vmem>>, vector<138x50xf32>,
    %c1120 = arith.constant 1120 : index
    %c0_143 = arith.constant 0 : index
    %220 = tpu.strided_load %arg8[%c1120, %c0_143] {strides = array<i32: 2, 1>} : memref<2304x50xf32, #tpu.memory_space<vmem>>, vector<138x50xf32>
    %c1121 = arith.constant 1121 : index
    %c0_144 = arith.constant 0 : index
    %221 = tpu.strided_load %arg8[%c1121, %c0_144] {strides = array<i32: 2, 1>} : memref<2304x50xf32, #tpu.memory_space<vmem>>, vector<138x50xf32>
    %222 = arith.maximumf %220, %221 : vector<138x50xf32>
    %c1400 = arith.constant 1400 : index
    %c0_145 = arith.constant 0 : index
    %223 = tpu.strided_load %arg8[%c1400, %c0_145] {strides = array<i32: 2, 1>} : memref<2304x50xf32, #tpu.memory_space<vmem>>, vector<138x50xf32>
    %c1401 = arith.constant 1401 : index
    %c0_146 = arith.constant 0 : index
    %224 = tpu.strided_load %arg8[%c1401, %c0_146] {strides = array<i32: 2, 1>} : memref<2304x50xf32, #tpu.memory_space<vmem>>, vector<138x50xf32>
    %225 = arith.maximumf %223, %224 : vector<138x50xf32>
    %226 = arith.maximumf %222, %225 : vector<138x50xf32>
    %c276 = arith.constant 276 : index
    %c0_147 = arith.constant 0 : index
    %227 = vector.load %arg9[%c276, %c0_147] : memref<560x50xf32, #tpu.memory_space<vmem>>, vector<138x50xf32>
    tpu.vector_store %arg9[%c276, %c0_147], %226 {strides = array<i32>} : memref<560x50xf32, #tpu.memory_space<vmem>>, vector<138x50xf32>,
    %c1680 = arith.constant 1680 : index
    %c0_148 = arith.constant 0 : index
    %228 = tpu.strided_load %arg8[%c1680, %c0_148] {strides = array<i32: 2, 1>} : memref<2304x50xf32, #tpu.memory_space<vmem>>, vector<138x50xf32>
    %c1681 = arith.constant 1681 : index
    %c0_149 = arith.constant 0 : index
    %229 = tpu.strided_load %arg8[%c1681, %c0_149] {strides = array<i32: 2, 1>} : memref<2304x50xf32, #tpu.memory_space<vmem>>, vector<138x50xf32>
    %230 = arith.maximumf %228, %229 : vector<138x50xf32>
    %c1960 = arith.constant 1960 : index
    %c0_150 = arith.constant 0 : index
    %231 = tpu.strided_load %arg8[%c1960, %c0_150] {strides = array<i32: 2, 1>} : memref<2304x50xf32, #tpu.memory_space<vmem>>, vector<138x50xf32>
    %c1961 = arith.constant 1961 : index
    %c0_151 = arith.constant 0 : index
    %232 = tpu.strided_load %arg8[%c1961, %c0_151] {strides = array<i32: 2, 1>} : memref<2304x50xf32, #tpu.memory_space<vmem>>, vector<138x50xf32>
    %233 = arith.maximumf %231, %232 : vector<138x50xf32>
    %234 = arith.maximumf %230, %233 : vector<138x50xf32>
    %c414 = arith.constant 414 : index
    %c0_152 = arith.constant 0 : index
    %235 = vector.load %arg9[%c414, %c0_152] : memref<560x50xf32, #tpu.memory_space<vmem>>, vector<138x50xf32>
    tpu.vector_store %arg9[%c414, %c0_152], %234 {strides = array<i32>} : memref<560x50xf32, #tpu.memory_space<vmem>>, vector<138x50xf32>,
    %c0_153 = arith.constant 0 : index
    %c0_154 = arith.constant 0 : index
    %236 = vector.load %arg9[%c0_153, %c0_154] : memref<560x50xf32, #tpu.memory_space<vmem>>, vector<144x50xf32>
    %c0_155 = arith.constant 0 : index
    %c0_156 = arith.constant 0 : index
    %c0_157 = arith.constant 0 : index
    %237 = vector.load %arg3[%c0_155, %c0_156, %c0_157] : memref<9x50x50xf32, #tpu.memory_space<vmem>>, vector<1x50x50xf32>
    %238 = vector.shape_cast %237 : vector<1x50x50xf32> to vector<50x50xf32>
    %cst_158 = arith.constant dense<0.000000e+00> : vector<144x50xf32>
    %239 = tpu.matmul %236, %238, %cst_158 {dimension_numbers = #tpu.dot_dimension_numbers<[1], [0], [0], [1], [0, 0, 1, 1], [], []>} : vector<144x50xf32>, vector<50x50xf32>, vector<144x50xf32> -> vector<144x50xf32>
    %c1_159 = arith.constant 1 : index
    %c0_160 = arith.constant 0 : index
    %240 = vector.load %arg9[%c1_159, %c0_160] : memref<560x50xf32, #tpu.memory_space<vmem>>, vector<144x50xf32>
    %c1_161 = arith.constant 1 : index
    %c0_162 = arith.constant 0 : index
    %c0_163 = arith.constant 0 : index
    %241 = vector.load %arg3[%c1_161, %c0_162, %c0_163] : memref<9x50x50xf32, #tpu.memory_space<vmem>>, vector<1x50x50xf32>
    %242 = vector.shape_cast %241 : vector<1x50x50xf32> to vector<50x50xf32>
    %cst_164 = arith.constant dense<0.000000e+00> : vector<144x50xf32>
    %243 = tpu.matmul %240, %242, %cst_164 {dimension_numbers = #tpu.dot_dimension_numbers<[1], [0], [0], [1], [0, 0, 1, 1], [], []>} : vector<144x50xf32>, vector<50x50xf32>, vector<144x50xf32> -> vector<144x50xf32>
    %244 = arith.addf %239, %243 : vector<144x50xf32>
    %c2 = arith.constant 2 : index
    %c0_165 = arith.constant 0 : index
    %245 = vector.load %arg9[%c2, %c0_165] : memref<560x50xf32, #tpu.memory_space<vmem>>, vector<144x50xf32>
    %c2_166 = arith.constant 2 : index
    %c0_167 = arith.constant 0 : index
    %c0_168 = arith.constant 0 : index
    %246 = vector.load %arg3[%c2_166, %c0_167, %c0_168] : memref<9x50x50xf32, #tpu.memory_space<vmem>>, vector<1x50x50xf32>
    %247 = vector.shape_cast %246 : vector<1x50x50xf32> to vector<50x50xf32>
    %cst_169 = arith.constant dense<0.000000e+00> : vector<144x50xf32>
    %248 = tpu.matmul %245, %247, %cst_169 {dimension_numbers = #tpu.dot_dimension_numbers<[1], [0], [0], [1], [0, 0, 1, 1], [], []>} : vector<144x50xf32>, vector<50x50xf32>, vector<144x50xf32> -> vector<144x50xf32>
    %249 = arith.addf %244, %248 : vector<144x50xf32>
    %c138_170 = arith.constant 138 : index
    %c0_171 = arith.constant 0 : index
    %250 = vector.load %arg9[%c138_170, %c0_171] : memref<560x50xf32, #tpu.memory_space<vmem>>, vector<144x50xf32>
    %c3 = arith.constant 3 : index
    %c0_172 = arith.constant 0 : index
    %c0_173 = arith.constant 0 : index
    %251 = vector.load %arg3[%c3, %c0_172, %c0_173] : memref<9x50x50xf32, #tpu.memory_space<vmem>>, vector<1x50x50xf32>
    %252 = vector.shape_cast %251 : vector<1x50x50xf32> to vector<50x50xf32>
    %cst_174 = arith.constant dense<0.000000e+00> : vector<144x50xf32>
    %253 = tpu.matmul %250, %252, %cst_174 {dimension_numbers = #tpu.dot_dimension_numbers<[1], [0], [0], [1], [0, 0, 1, 1], [], []>} : vector<144x50xf32>, vector<50x50xf32>, vector<144x50xf32> -> vector<144x50xf32>
    %254 = arith.addf %249, %253 : vector<144x50xf32>
    %c139 = arith.constant 139 : index
    %c0_175 = arith.constant 0 : index
    %255 = vector.load %arg9[%c139, %c0_175] : memref<560x50xf32, #tpu.memory_space<vmem>>, vector<144x50xf32>
    %c4 = arith.constant 4 : index
    %c0_176 = arith.constant 0 : index
    %c0_177 = arith.constant 0 : index
    %256 = vector.load %arg3[%c4, %c0_176, %c0_177] : memref<9x50x50xf32, #tpu.memory_space<vmem>>, vector<1x50x50xf32>
    %257 = vector.shape_cast %256 : vector<1x50x50xf32> to vector<50x50xf32>
    %cst_178 = arith.constant dense<0.000000e+00> : vector<144x50xf32>
    %258 = tpu.matmul %255, %257, %cst_178 {dimension_numbers = #tpu.dot_dimension_numbers<[1], [0], [0], [1], [0, 0, 1, 1], [], []>} : vector<144x50xf32>, vector<50x50xf32>, vector<144x50xf32> -> vector<144x50xf32>
    %259 = arith.addf %254, %258 : vector<144x50xf32>
    %c140 = arith.constant 140 : index
    %c0_179 = arith.constant 0 : index
    %260 = vector.load %arg9[%c140, %c0_179] : memref<560x50xf32, #tpu.memory_space<vmem>>, vector<144x50xf32>
    %c5 = arith.constant 5 : index
    %c0_180 = arith.constant 0 : index
    %c0_181 = arith.constant 0 : index
    %261 = vector.load %arg3[%c5, %c0_180, %c0_181] : memref<9x50x50xf32, #tpu.memory_space<vmem>>, vector<1x50x50xf32>
    %262 = vector.shape_cast %261 : vector<1x50x50xf32> to vector<50x50xf32>
    %cst_182 = arith.constant dense<0.000000e+00> : vector<144x50xf32>
    %263 = tpu.matmul %260, %262, %cst_182 {dimension_numbers = #tpu.dot_dimension_numbers<[1], [0], [0], [1], [0, 0, 1, 1], [], []>} : vector<144x50xf32>, vector<50x50xf32>, vector<144x50xf32> -> vector<144x50xf32>
    %264 = arith.addf %259, %263 : vector<144x50xf32>
    %c276_183 = arith.constant 276 : index
    %c0_184 = arith.constant 0 : index
    %265 = vector.load %arg9[%c276_183, %c0_184] : memref<560x50xf32, #tpu.memory_space<vmem>>, vector<144x50xf32>
    %c6 = arith.constant 6 : index
    %c0_185 = arith.constant 0 : index
    %c0_186 = arith.constant 0 : index
    %266 = vector.load %arg3[%c6, %c0_185, %c0_186] : memref<9x50x50xf32, #tpu.memory_space<vmem>>, vector<1x50x50xf32>
    %267 = vector.shape_cast %266 : vector<1x50x50xf32> to vector<50x50xf32>
    %cst_187 = arith.constant dense<0.000000e+00> : vector<144x50xf32>
    %268 = tpu.matmul %265, %267, %cst_187 {dimension_numbers = #tpu.dot_dimension_numbers<[1], [0], [0], [1], [0, 0, 1, 1], [], []>} : vector<144x50xf32>, vector<50x50xf32>, vector<144x50xf32> -> vector<144x50xf32>
    %269 = arith.addf %264, %268 : vector<144x50xf32>
    %c277 = arith.constant 277 : index
    %c0_188 = arith.constant 0 : index
    %270 = vector.load %arg9[%c277, %c0_188] : memref<560x50xf32, #tpu.memory_space<vmem>>, vector<144x50xf32>
    %c7 = arith.constant 7 : index
    %c0_189 = arith.constant 0 : index
    %c0_190 = arith.constant 0 : index
    %271 = vector.load %arg3[%c7, %c0_189, %c0_190] : memref<9x50x50xf32, #tpu.memory_space<vmem>>, vector<1x50x50xf32>
    %272 = vector.shape_cast %271 : vector<1x50x50xf32> to vector<50x50xf32>
    %cst_191 = arith.constant dense<0.000000e+00> : vector<144x50xf32>
    %273 = tpu.matmul %270, %272, %cst_191 {dimension_numbers = #tpu.dot_dimension_numbers<[1], [0], [0], [1], [0, 0, 1, 1], [], []>} : vector<144x50xf32>, vector<50x50xf32>, vector<144x50xf32> -> vector<144x50xf32>
    %274 = arith.addf %269, %273 : vector<144x50xf32>
    %c278 = arith.constant 278 : index
    %c0_192 = arith.constant 0 : index
    %275 = vector.load %arg9[%c278, %c0_192] : memref<560x50xf32, #tpu.memory_space<vmem>>, vector<144x50xf32>
    %c8 = arith.constant 8 : index
    %c0_193 = arith.constant 0 : index
    %c0_194 = arith.constant 0 : index
    %276 = vector.load %arg3[%c8, %c0_193, %c0_194] : memref<9x50x50xf32, #tpu.memory_space<vmem>>, vector<1x50x50xf32>
    %277 = vector.shape_cast %276 : vector<1x50x50xf32> to vector<50x50xf32>
    %cst_195 = arith.constant dense<0.000000e+00> : vector<144x50xf32>
    %278 = tpu.matmul %275, %277, %cst_195 {dimension_numbers = #tpu.dot_dimension_numbers<[1], [0], [0], [1], [0, 0, 1, 1], [], []>} : vector<144x50xf32>, vector<50x50xf32>, vector<144x50xf32> -> vector<144x50xf32>
    %279 = arith.addf %274, %278 : vector<144x50xf32>
    %280 = vector.broadcast %2 : vector<1x50xf32> to vector<144x50xf32>
    %281 = arith.addf %279, %280 : vector<144x50xf32>
    %cst_196 = arith.constant 0.000000e+00 : f32
    %282 = vector.broadcast %cst_196 : f32 to vector<144x50xf32>
    %283 = arith.cmpf oge, %281, %282 : vector<144x50xf32>
    %cst_197 = arith.constant 0.00999999977 : f32
    %284 = vector.broadcast %cst_197 : f32 to vector<144x50xf32>
    %285 = arith.mulf %284, %281 : vector<144x50xf32>
    %286 = arith.select %283, %281, %285 : vector<144x50xi1>, vector<144x50xf32>
    %c0_198 = arith.constant 0 : index
    %c0_199 = arith.constant 0 : index
    %287 = vector.load %arg10[%c0_198, %c0_199] : memref<280x50xf32, #tpu.memory_space<vmem>>, vector<144x50xf32>
    tpu.vector_store %arg10[%c0_198, %c0_199], %286 {strides = array<i32>} : memref<280x50xf32, #tpu.memory_space<vmem>>, vector<144x50xf32>,
    %c144 = arith.constant 144 : index
    %c0_200 = arith.constant 0 : index
    %288 = vector.load %arg9[%c144, %c0_200] : memref<560x50xf32, #tpu.memory_space<vmem>>, vector<136x50xf32>
    %c0_201 = arith.constant 0 : index
    %c0_202 = arith.constant 0 : index
    %c0_203 = arith.constant 0 : index
    %289 = vector.load %arg3[%c0_201, %c0_202, %c0_203] : memref<9x50x50xf32, #tpu.memory_space<vmem>>, vector<1x50x50xf32>
    %290 = vector.shape_cast %289 : vector<1x50x50xf32> to vector<50x50xf32>
    %cst_204 = arith.constant dense<0.000000e+00> : vector<136x50xf32>
    %291 = tpu.matmul %288, %290, %cst_204 {dimension_numbers = #tpu.dot_dimension_numbers<[1], [0], [0], [1], [0, 0, 1, 1], [], []>} : vector<136x50xf32>, vector<50x50xf32>, vector<136x50xf32> -> vector<136x50xf32>
    %c145 = arith.constant 145 : index
    %c0_205 = arith.constant 0 : index
    %292 = vector.load %arg9[%c145, %c0_205] : memref<560x50xf32, #tpu.memory_space<vmem>>, vector<136x50xf32>
    %c1_206 = arith.constant 1 : index
    %c0_207 = arith.constant 0 : index
    %c0_208 = arith.constant 0 : index
    %293 = vector.load %arg3[%c1_206, %c0_207, %c0_208] : memref<9x50x50xf32, #tpu.memory_space<vmem>>, vector<1x50x50xf32>
    %294 = vector.shape_cast %293 : vector<1x50x50xf32> to vector<50x50xf32>
    %cst_209 = arith.constant dense<0.000000e+00> : vector<136x50xf32>
    %295 = tpu.matmul %292, %294, %cst_209 {dimension_numbers = #tpu.dot_dimension_numbers<[1], [0], [0], [1], [0, 0, 1, 1], [], []>} : vector<136x50xf32>, vector<50x50xf32>, vector<136x50xf32> -> vector<136x50xf32>
    %296 = arith.addf %291, %295 : vector<136x50xf32>
    %c146 = arith.constant 146 : index
    %c0_210 = arith.constant 0 : index
    %297 = vector.load %arg9[%c146, %c0_210] : memref<560x50xf32, #tpu.memory_space<vmem>>, vector<136x50xf32>
    %c2_211 = arith.constant 2 : index
    %c0_212 = arith.constant 0 : index
    %c0_213 = arith.constant 0 : index
    %298 = vector.load %arg3[%c2_211, %c0_212, %c0_213] : memref<9x50x50xf32, #tpu.memory_space<vmem>>, vector<1x50x50xf32>
    %299 = vector.shape_cast %298 : vector<1x50x50xf32> to vector<50x50xf32>
    %cst_214 = arith.constant dense<0.000000e+00> : vector<136x50xf32>
    %300 = tpu.matmul %297, %299, %cst_214 {dimension_numbers = #tpu.dot_dimension_numbers<[1], [0], [0], [1], [0, 0, 1, 1], [], []>} : vector<136x50xf32>, vector<50x50xf32>, vector<136x50xf32> -> vector<136x50xf32>
    %301 = arith.addf %296, %300 : vector<136x50xf32>
    %c282 = arith.constant 282 : index
    %c0_215 = arith.constant 0 : index
    %302 = vector.load %arg9[%c282, %c0_215] : memref<560x50xf32, #tpu.memory_space<vmem>>, vector<136x50xf32>
    %c3_216 = arith.constant 3 : index
    %c0_217 = arith.constant 0 : index
    %c0_218 = arith.constant 0 : index
    %303 = vector.load %arg3[%c3_216, %c0_217, %c0_218] : memref<9x50x50xf32, #tpu.memory_space<vmem>>, vector<1x50x50xf32>
    %304 = vector.shape_cast %303 : vector<1x50x50xf32> to vector<50x50xf32>
    %cst_219 = arith.constant dense<0.000000e+00> : vector<136x50xf32>
    %305 = tpu.matmul %302, %304, %cst_219 {dimension_numbers = #tpu.dot_dimension_numbers<[1], [0], [0], [1], [0, 0, 1, 1], [], []>} : vector<136x50xf32>, vector<50x50xf32>, vector<136x50xf32> -> vector<136x50xf32>
    %306 = arith.addf %301, %305 : vector<136x50xf32>
    %c283 = arith.constant 283 : index
    %c0_220 = arith.constant 0 : index
    %307 = vector.load %arg9[%c283, %c0_220] : memref<560x50xf32, #tpu.memory_space<vmem>>, vector<136x50xf32>
    %c4_221 = arith.constant 4 : index
    %c0_222 = arith.constant 0 : index
    %c0_223 = arith.constant 0 : index
    %308 = vector.load %arg3[%c4_221, %c0_222, %c0_223] : memref<9x50x50xf32, #tpu.memory_space<vmem>>, vector<1x50x50xf32>
    %309 = vector.shape_cast %308 : vector<1x50x50xf32> to vector<50x50xf32>
    %cst_224 = arith.constant dense<0.000000e+00> : vector<136x50xf32>
    %310 = tpu.matmul %307, %309, %cst_224 {dimension_numbers = #tpu.dot_dimension_numbers<[1], [0], [0], [1], [0, 0, 1, 1], [], []>} : vector<136x50xf32>, vector<50x50xf32>, vector<136x50xf32> -> vector<136x50xf32>
    %311 = arith.addf %306, %310 : vector<136x50xf32>
    %c284 = arith.constant 284 : index
    %c0_225 = arith.constant 0 : index
    %312 = vector.load %arg9[%c284, %c0_225] : memref<560x50xf32, #tpu.memory_space<vmem>>, vector<136x50xf32>
    %c5_226 = arith.constant 5 : index
    %c0_227 = arith.constant 0 : index
    %c0_228 = arith.constant 0 : index
    %313 = vector.load %arg3[%c5_226, %c0_227, %c0_228] : memref<9x50x50xf32, #tpu.memory_space<vmem>>, vector<1x50x50xf32>
    %314 = vector.shape_cast %313 : vector<1x50x50xf32> to vector<50x50xf32>
    %cst_229 = arith.constant dense<0.000000e+00> : vector<136x50xf32>
    %315 = tpu.matmul %312, %314, %cst_229 {dimension_numbers = #tpu.dot_dimension_numbers<[1], [0], [0], [1], [0, 0, 1, 1], [], []>} : vector<136x50xf32>, vector<50x50xf32>, vector<136x50xf32> -> vector<136x50xf32>
    %316 = arith.addf %311, %315 : vector<136x50xf32>
    %c420 = arith.constant 420 : index
    %c0_230 = arith.constant 0 : index
    %317 = vector.load %arg9[%c420, %c0_230] : memref<560x50xf32, #tpu.memory_space<vmem>>, vector<136x50xf32>
    %c6_231 = arith.constant 6 : index
    %c0_232 = arith.constant 0 : index
    %c0_233 = arith.constant 0 : index
    %318 = vector.load %arg3[%c6_231, %c0_232, %c0_233] : memref<9x50x50xf32, #tpu.memory_space<vmem>>, vector<1x50x50xf32>
    %319 = vector.shape_cast %318 : vector<1x50x50xf32> to vector<50x50xf32>
    %cst_234 = arith.constant dense<0.000000e+00> : vector<136x50xf32>
    %320 = tpu.matmul %317, %319, %cst_234 {dimension_numbers = #tpu.dot_dimension_numbers<[1], [0], [0], [1], [0, 0, 1, 1], [], []>} : vector<136x50xf32>, vector<50x50xf32>, vector<136x50xf32> -> vector<136x50xf32>
    %321 = arith.addf %316, %320 : vector<136x50xf32>
    %c421 = arith.constant 421 : index
    %c0_235 = arith.constant 0 : index
    %322 = vector.load %arg9[%c421, %c0_235] : memref<560x50xf32, #tpu.memory_space<vmem>>, vector<136x50xf32>
    %c7_236 = arith.constant 7 : index
    %c0_237 = arith.constant 0 : index
    %c0_238 = arith.constant 0 : index
    %323 = vector.load %arg3[%c7_236, %c0_237, %c0_238] : memref<9x50x50xf32, #tpu.memory_space<vmem>>, vector<1x50x50xf32>
    %324 = vector.shape_cast %323 : vector<1x50x50xf32> to vector<50x50xf32>
    %cst_239 = arith.constant dense<0.000000e+00> : vector<136x50xf32>
    %325 = tpu.matmul %322, %324, %cst_239 {dimension_numbers = #tpu.dot_dimension_numbers<[1], [0], [0], [1], [0, 0, 1, 1], [], []>} : vector<136x50xf32>, vector<50x50xf32>, vector<136x50xf32> -> vector<136x50xf32>
    %326 = arith.addf %321, %325 : vector<136x50xf32>
    %c422 = arith.constant 422 : index
    %c0_240 = arith.constant 0 : index
    %327 = vector.load %arg9[%c422, %c0_240] : memref<560x50xf32, #tpu.memory_space<vmem>>, vector<136x50xf32>
    %c8_241 = arith.constant 8 : index
    %c0_242 = arith.constant 0 : index
    %c0_243 = arith.constant 0 : index
    %328 = vector.load %arg3[%c8_241, %c0_242, %c0_243] : memref<9x50x50xf32, #tpu.memory_space<vmem>>, vector<1x50x50xf32>
    %329 = vector.shape_cast %328 : vector<1x50x50xf32> to vector<50x50xf32>
    %cst_244 = arith.constant dense<0.000000e+00> : vector<136x50xf32>
    %330 = tpu.matmul %327, %329, %cst_244 {dimension_numbers = #tpu.dot_dimension_numbers<[1], [0], [0], [1], [0, 0, 1, 1], [], []>} : vector<136x50xf32>, vector<50x50xf32>, vector<136x50xf32> -> vector<136x50xf32>
    %331 = arith.addf %326, %330 : vector<136x50xf32>
    %332 = vector.broadcast %2 : vector<1x50xf32> to vector<136x50xf32>
    %333 = arith.addf %331, %332 : vector<136x50xf32>
    %cst_245 = arith.constant 0.000000e+00 : f32
    %334 = vector.broadcast %cst_245 : f32 to vector<136x50xf32>
    %335 = arith.cmpf oge, %333, %334 : vector<136x50xf32>
    %cst_246 = arith.constant 0.00999999977 : f32
    %336 = vector.broadcast %cst_246 : f32 to vector<136x50xf32>
    %337 = arith.mulf %336, %333 : vector<136x50xf32>
    %338 = arith.select %335, %333, %337 : vector<136x50xi1>, vector<136x50xf32>
    %c144_247 = arith.constant 144 : index
    %c0_248 = arith.constant 0 : index
    %339 = vector.load %arg10[%c144_247, %c0_248] : memref<280x50xf32, #tpu.memory_space<vmem>>, vector<136x50xf32>
    tpu.vector_store %arg10[%c144_247, %c0_248], %338 {strides = array<i32>} : memref<280x50xf32, #tpu.memory_space<vmem>>, vector<136x50xf32>,
    %c0_249 = arith.constant 0 : index
    %c0_250 = arith.constant 0 : index
    %340 = tpu.strided_load %arg10[%c0_249, %c0_250] {strides = array<i32: 2, 1>} : memref<280x50xf32, #tpu.memory_space<vmem>>, vector<68x50xf32>
    %c1_251 = arith.constant 1 : index
    %c0_252 = arith.constant 0 : index
    %341 = tpu.strided_load %arg10[%c1_251, %c0_252] {strides = array<i32: 2, 1>} : memref<280x50xf32, #tpu.memory_space<vmem>>, vector<68x50xf32>
    %342 = arith.maximumf %340, %341 : vector<68x50xf32>
    %c138_253 = arith.constant 138 : index
    %c0_254 = arith.constant 0 : index
    %343 = tpu.strided_load %arg10[%c138_253, %c0_254] {strides = array<i32: 2, 1>} : memref<280x50xf32, #tpu.memory_space<vmem>>, vector<68x50xf32>
    %c139_255 = arith.constant 139 : index
    %c0_256 = arith.constant 0 : index
    %344 = tpu.strided_load %arg10[%c139_255, %c0_256] {strides = array<i32: 2, 1>} : memref<280x50xf32, #tpu.memory_space<vmem>>, vector<68x50xf32>
    %345 = arith.maximumf %343, %344 : vector<68x50xf32>
    %346 = arith.maximumf %342, %345 : vector<68x50xf32>
    %c0_257 = arith.constant 0 : index
    %c0_258 = arith.constant 0 : index
    %c0_259 = arith.constant 0 : index
    %347 = vector.load %arg5[%c0_257, %c0_258, %c0_259] : memref<2x68x50xf32, #tpu.memory_space<vmem>>, vector<1x68x50xf32>
    %348 = vector.shape_cast %347 : vector<1x68x50xf32> to vector<68x50xf32>
    %349 = arith.mulf %346, %348 : vector<68x50xf32>
    %cst_260 = arith.constant dense<0.000000e+00> : vector<50xf32>
    %350 = vector.multi_reduction <add>, %349, %cst_260 [0] : vector<68x50xf32> to vector<50xf32>
    %351 = vector.shape_cast %350 : vector<50xf32> to vector<1x50xf32>
    %c1_261 = arith.constant 1 : index
    %c0_262 = arith.constant 0 : index
    %c0_263 = arith.constant 0 : index
    %352 = vector.load %arg5[%c1_261, %c0_262, %c0_263] : memref<2x68x50xf32, #tpu.memory_space<vmem>>, vector<1x68x50xf32>
    %353 = vector.shape_cast %352 : vector<1x68x50xf32> to vector<68x50xf32>
    %354 = arith.mulf %346, %353 : vector<68x50xf32>
    %cst_264 = arith.constant dense<0.000000e+00> : vector<50xf32>
    %355 = vector.multi_reduction <add>, %354, %cst_264 [0] : vector<68x50xf32> to vector<50xf32>
    %356 = vector.shape_cast %355 : vector<50xf32> to vector<1x50xf32>
    %357 = tpu.concatenate %351, %356 in 0 : vector<1x50xf32>, vector<1x50xf32> -> vector<2x50xf32>
    %cst_265 = arith.constant dense<0.000000e+00> : vector<2xf32>
    %358 = vector.multi_reduction <add>, %357, %cst_265 [1] : vector<2x50xf32> to vector<2xf32>
    %359 = vector.shape_cast %358 : vector<2xf32> to vector<2x1xf32>
    %c0_266 = arith.constant 0 : index
    %c0_267 = arith.constant 0 : index
    %360 = vector.load %arg6[%c0_266, %c0_267] : memref<2x1xf32, #tpu.memory_space<vmem>>, vector<2x1xf32>
    %361 = arith.addf %359, %360 : vector<2x1xf32>
    %cst_268 = arith.constant dense<0xFF800000> : vector<1xf32>
    %362 = vector.multi_reduction <maximumf>, %361, %cst_268 [0] : vector<2x1xf32> to vector<1xf32>
    %363 = vector.shape_cast %362 : vector<1xf32> to vector<1x1xf32>
    %364 = vector.broadcast %363 : vector<1x1xf32> to vector<2x1xf32>
    %365 = arith.subf %361, %364 : vector<2x1xf32>
    %366 = math.exp %365 : vector<2x1xf32>
    %cst_269 = arith.constant dense<0.000000e+00> : vector<1xf32>
    %367 = vector.multi_reduction <add>, %366, %cst_269 [0] : vector<2x1xf32> to vector<1xf32>
    %368 = vector.shape_cast %367 : vector<1xf32> to vector<1x1xf32>
    %369 = math.log %368 : vector<1x1xf32>
    %370 = vector.broadcast %369 : vector<1x1xf32> to vector<2x1xf32>
    %371 = arith.subf %365, %370 : vector<2x1xf32>
    %c0_270 = arith.constant 0 : index
    %c0_271 = arith.constant 0 : index
    %c0_272 = arith.constant 0 : index
    %372 = vector.load %arg7[%c0_270, %c0_271, %c0_272] : memref<1x2x1xf32, #tpu.memory_space<vmem>>, vector<1x2x1xf32>
    %373 = vector.shape_cast %372 : vector<1x2x1xf32> to vector<2x1xf32>
    %374 = vector.shape_cast %371 : vector<2x1xf32> to vector<1x2x1xf32>
    tpu.vector_store %arg7[%c0_270, %c0_271, %c0_272], %374 {strides = array<i32>} : memref<1x2x1xf32, #tpu.memory_space<vmem>>, vector<1x2x1xf32>,
    return
  }
  func.func @transform_0(%arg0: i32) -> (i32, i32, i32) {
    %c0_i32 = arith.constant 0 : i32
    %c0_i32_0 = arith.constant 0 : i32
    %c0_i32_1 = arith.constant 0 : i32
    return %arg0, %c0_i32, %c0_i32_0 : i32, i32, i32
  }
  func.func @transform_1(%arg0: i32) -> (i32, i32) {
    %c0_i32 = arith.constant 0 : i32
    %c0_i32_0 = arith.constant 0 : i32
    %c0_i32_1 = arith.constant 0 : i32
    return %c0_i32, %c0_i32_0 : i32, i32
  }
  func.func @transform_2(%arg0: i32) -> (i32, i32, i32) {
    %c0_i32 = arith.constant 0 : i32
    %c0_i32_0 = arith.constant 0 : i32
    %c0_i32_1 = arith.constant 0 : i32
    %c0_i32_2 = arith.constant 0 : i32
    return %c0_i32, %c0_i32_0, %c0_i32_1 : i32, i32, i32
  }
  func.func @transform_3(%arg0: i32) -> (i32, i32) {
    %c0_i32 = arith.constant 0 : i32
    %c0_i32_0 = arith.constant 0 : i32
    %c0_i32_1 = arith.constant 0 : i32
    return %c0_i32, %c0_i32_0 : i32, i32
  }
  func.func @transform_4(%arg0: i32) -> (i32, i32, i32) {
    %c0_i32 = arith.constant 0 : i32
    %c0_i32_0 = arith.constant 0 : i32
    %c0_i32_1 = arith.constant 0 : i32
    %c0_i32_2 = arith.constant 0 : i32
    return %c0_i32, %c0_i32_0, %c0_i32_1 : i32, i32, i32
  }
  func.func @transform_5(%arg0: i32) -> (i32, i32) {
    %c0_i32 = arith.constant 0 : i32
    %c0_i32_0 = arith.constant 0 : i32
    %c0_i32_1 = arith.constant 0 : i32
    return %c0_i32, %c0_i32_0 : i32, i32
  }
  func.func @transform_6(%arg0: i32) -> (i32, i32, i32) {
    %c0_i32 = arith.constant 0 : i32
    %c0_i32_0 = arith.constant 0 : i32
    %c0_i32_1 = arith.constant 0 : i32
    return %arg0, %c0_i32, %c0_i32_0 : i32, i32, i32
  }
}

</mosaic_0001>

<llo_original>
// kernel: cnn_forward.1
$region0: #{cnn_forward.1}
  #allocation0 [shape = 'u32[]', space=smem, size = 0x4, offset = 0x4, fixed_abs, tag = 'smem constant byte address 0x4 - core index']
  #allocation1 [shape = 'u32[144,128]{1,0:T(1,128)}', space=vmem, size = 0x12000, scoped, tag = 'internal scratch']
  #allocation2 [shape = 'f32[2304,50]{1,0:T(8,128)}', space=vmem, size = 0x120000, scoped, tag = 'scratch operand']
  #allocation3 [shape = 'f32[560,50]{1,0:T(8,128)}', space=vmem, size = 0x46000, scoped, tag = 'scratch operand']
  #allocation4 [shape = 'f32[280,50]{1,0:T(8,128)}', space=vmem, size = 0x23000, scoped, tag = 'scratch operand']
  %s0 = inlined_call_operand.vmem [shape: f32[2,2304,36], index: 0, kind: input, shape index: {}]
  %s1 = inlined_call_operand.vmem [shape: f32[36,50], index: 1, kind: input, shape index: {}]
  %s2 = inlined_call_operand.vmem [shape: f32[9,50,50], index: 2, kind: input, shape index: {}]
  %s3 = inlined_call_operand.vmem [shape: f32[2,50], index: 3, kind: input, shape index: {}]
  %s4 = inlined_call_operand.vmem [shape: f32[2,68,50], index: 4, kind: input, shape index: {}]
  %s5 = inlined_call_operand.vmem [shape: f32[2,1], index: 5, kind: input, shape index: {}]
  %s6 = inlined_call_operand.vmem [shape: f32[2,2,1], index: 6, kind: output, shape index: {}]
  %s7 = sld [smem:[#allocation0]]
  $region57: #{cnn_forward.1} parent=0
    _
  %s9 = ssub.s32 1, %s7
  %s10 = scalar_select 0, %s9, %s7
  loop: start=0, step=1, limit=4
  $region2: #{cnn_forward.1} parent=0 // loop_pre_header
    _
  $region3: #{cnn_forward.1} parent=0 // loop_header
    %s12 = sphi 0, %s16
    %p13 = scmp.ge.s32.totalorder %s12, 4
    %s22 = sphi 0, %s24
    %s25 = sphi 0, %s22
    %s26 = sphi 0, %s25
    %s42 = sphi 0, %s26
    %s46 = sphi 0, %s46
    %s48 = sphi 0, %s46
    %s49 = sphi 0, %s48
    %s63 = sphi 0, %s49
    %s67 = sphi 0, %s67
    %s69 = sphi 0, %s67
    %s70 = sphi 0, %s69
    %s84 = sphi 0, %s70
    %s88 = sphi 0, %s88
    %s90 = sphi 0, %s88
    %s91 = sphi 0, %s90
    %s105 = sphi 0, %s91
    %s109 = sphi 0, %s109
    %s111 = sphi 0, %s109
    %s112 = sphi 0, %s111
    %s126 = sphi 0, %s112
    %s130 = sphi 0, %s130
    %s132 = sphi 0, %s130
    %s133 = sphi 0, %s132
    %s147 = sphi 0, %s133
    %s153 = sphi 0, %s155
    %s156 = sphi 0, %s153
    %s157 = sphi 0, %s156
    %s173 = sphi 0, %s157
  $region4: #{cnn_forward.1} parent=0 // loop_header_branch
    %15 = sbr.rel (%p13) target = $region8
  $region5: #{cnn_forward.1} parent=0 // loop_body
    %s17 = ssub.s32 %s12, 1
    %s18 = ssub.s32 %s12, 2
    %s19 = sadd.s32 %s12, 1
    %s20 = ssub.s32 %s12, %s19
    %p21 = scmp.eq.s32.totalorder %s20, 0
    %s23 = sadd.s32 %s22, 1
    %s24 = scalar_select %p21, %s22, %s23
    %p27 = pneg %p21
    %p28 = scmp.eq.s32.totalorder %s12, 1
    %p29 = por %p27, %p28
    %p30 = scmp.ne.s32.totalorder %s22, %s25
    %p31 = scmp.eq.s32.totalorder %s12, 0
    %p32 = por %p30, %p31
    %p33 = scmp.ne.s32.totalorder %s22, %s25
    %p34 = scmp.eq.s32.totalorder %s17, 1
    %p35 = por %p33, %p34
    %p36 = scmp.ne.s32.totalorder %s25, %s26
    %p37 = scmp.eq.s32.totalorder %s17, 0
    %p38 = por %p36, %p37
    %p39 = scmp.ne.s32.totalorder %s25, %s26
    %p40 = scmp.eq.s32.totalorder %s18, 1
    %p41 = por %p39, %p40
    %p43 = scmp.ne.s32.totalorder %s26, %s42
    %p44 = scmp.eq.s32.totalorder %s18, 0
    %p45 = por %p43, %p44
    %s47 = sadd.s32 %s46, 1
    %p50 = scmp.eq.s32.totalorder %s12, 1
    %p51 = scmp.ne.s32.totalorder %s46, %s48
    %p52 = scmp.eq.s32.totalorder %s12, 0
    %p53 = por %p51, %p52
    %p54 = scmp.ne.s32.totalorder %s46, %s48
    %p55 = scmp.eq.s32.totalorder %s17, 1
    %p56 = por %p54, %p55
    %p57 = scmp.ne.s32.totalorder %s48, %s49
    %p58 = scmp.eq.s32.totalorder %s17, 0
    %p59 = por %p57, %p58
    %p60 = scmp.ne.s32.totalorder %s48, %s49
    %p61 = scmp.eq.s32.totalorder %s18, 1
    %p62 = por %p60, %p61
    %p64 = scmp.ne.s32.totalorder %s49, %s63
    %p65 = scmp.eq.s32.totalorder %s18, 0
    %p66 = por %p64, %p65
    %s68 = sadd.s32 %s67, 1
    %p71 = scmp.eq.s32.totalorder %s12, 1
    %p72 = scmp.ne.s32.totalorder %s67, %s69
    %p73 = scmp.eq.s32.totalorder %s12, 0
    %p74 = por %p72, %p73
    %p75 = scmp.ne.s32.totalorder %s67, %s69
    %p76 = scmp.eq.s32.totalorder %s17, 1
    %p77 = por %p75, %p76
    %p78 = scmp.ne.s32.totalorder %s69, %s70
    %p79 = scmp.eq.s32.totalorder %s17, 0
    %p80 = por %p78, %p79
    %p81 = scmp.ne.s32.totalorder %s69, %s70
    %p82 = scmp.eq.s32.totalorder %s18, 1
    %p83 = por %p81, %p82
    %p85 = scmp.ne.s32.totalorder %s70, %s84
    %p86 = scmp.eq.s32.totalorder %s18, 0
    %p87 = por %p85, %p86
    %s89 = sadd.s32 %s88, 1
    %p92 = scmp.eq.s32.totalorder %s12, 1
    %p93 = scmp.ne.s32.totalorder %s88, %s90
    %p94 = scmp.eq.s32.totalorder %s12, 0
    %p95 = por %p93, %p94
    %p96 = scmp.ne.s32.totalorder %s88, %s90
    %p97 = scmp.eq.s32.totalorder %s17, 1
    %p98 = por %p96, %p97
    %p99 = scmp.ne.s32.totalorder %s90, %s91
    %p100 = scmp.eq.s32.totalorder %s17, 0
    %p101 = por %p99, %p100
    %p102 = scmp.ne.s32.totalorder %s90, %s91
    %p103 = scmp.eq.s32.totalorder %s18, 1
    %p104 = por %p102, %p103
    %p106 = scmp.ne.s32.totalorder %s91, %s105
    %p107 = scmp.eq.s32.totalorder %s18, 0
    %p108 = por %p106, %p107
    %s110 = sadd.s32 %s109, 1
    %p113 = scmp.eq.s32.totalorder %s12, 1
    %p114 = scmp.ne.s32.totalorder %s109, %s111
    %p115 = scmp.eq.s32.totalorder %s12, 0
    %p116 = por %p114, %p115
    %p117 = scmp.ne.s32.totalorder %s109, %s111
    %p118 = scmp.eq.s32.totalorder %s17, 1
    %p119 = por %p117, %p118
    %p120 = scmp.ne.s32.totalorder %s111, %s112
    %p121 = scmp.eq.s32.totalorder %s17, 0
    %p122 = por %p120, %p121
    %p123 = scmp.ne.s32.totalorder %s111, %s112
    %p124 = scmp.eq.s32.totalorder %s18, 1
    %p125 = por %p123, %p124
    %p127 = scmp.ne.s32.totalorder %s112, %s126
    %p128 = scmp.eq.s32.totalorder %s18, 0
    %p129 = por %p127, %p128
    %s131 = sadd.s32 %s130, 1
    %p134 = scmp.eq.s32.totalorder %s12, 1
    %p135 = scmp.ne.s32.totalorder %s130, %s132
    %p136 = scmp.eq.s32.totalorder %s12, 0
    %p137 = por %p135, %p136
    %p138 = scmp.ne.s32.totalorder %s130, %s132
    %p139 = scmp.eq.s32.totalorder %s17, 1
    %p140 = por %p138, %p139
    %p141 = scmp.ne.s32.totalorder %s132, %s133
    %p142 = scmp.eq.s32.totalorder %s17, 0
    %p143 = por %p141, %p142
    %p144 = scmp.ne.s32.totalorder %s132, %s133
    %p145 = scmp.eq.s32.totalorder %s18, 1
    %p146 = por %p144, %p145
    %p148 = scmp.ne.s32.totalorder %s133, %s147
    %p149 = scmp.eq.s32.totalorder %s18, 0
    %p150 = por %p148, %p149
    %s151 = ssub.s32 %s12, %s19
    %p152 = scmp.eq.s32.totalorder %s151, 0
    %s154 = sadd.s32 %s153, 1
    %s155 = scalar_select %p152, %s153, %s154
    %p158 = pneg %p152
    %p159 = scmp.eq.s32.totalorder %s12, 1
    %p160 = por %p158, %p159
    %p161 = scmp.ne.s32.totalorder %s153, %s156
    %p162 = scmp.eq.s32.totalorder %s12, 0
    %p163 = por %p161, %p162
    %p164 = scmp.ne.s32.totalorder %s153, %s156
    %p165 = scmp.eq.s32.totalorder %s17, 1
    %p166 = por %p164, %p165
    %p167 = scmp.ne.s32.totalorder %s156, %s157
    %p168 = scmp.eq.s32.totalorder %s17, 0
    %p169 = por %p167, %p168
    %p170 = scmp.ne.s32.totalorder %s156, %s157
    %p171 = scmp.eq.s32.totalorder %s18, 1
    %p172 = por %p170, %p171
    %p174 = scmp.ne.s32.totalorder %s157, %s173
    %p175 = scmp.eq.s32.totalorder %s18, 0
    %p176 = por %p174, %p175
    %p177 = scmp.le.s32.totalorder 1, %s12
    %p178 = scmp.lt.s32.totalorder %s12, 3
    %p179 = pnand %p177, %p178
    %p180 = pneg %p179
    // Predicated region
    $region9: #{cnn_forward.1} parent=5 // pred_check
      _
    $region10: #{cnn_forward.1} parent=5 // pred_check_branch
      %182 = sbr.rel (%p179) target = $region12
    $region11: #{cnn_forward.1} parent=5 // pred_region
      %s183 = ssub.s32 %s12, 1
      // Predicated region
      $region13: #{cnn_forward.1} parent=11 // pred_check
        %p184 = pneg %p59
      $region14: #{cnn_forward.1} parent=11 // pred_check_branch
        %186 = sbr.rel (%p184) target = $region16
      $region15: #{cnn_forward.1} parent=11 // pred_region
        _
      $region16: #{cnn_forward.1} parent=11 // pred_fallthru
        _
      // Predicated region
      $region17: #{cnn_forward.1} parent=11 // pred_check
        %p187 = pneg %p80
      $region18: #{cnn_forward.1} parent=11 // pred_check_branch
        %189 = sbr.rel (%p187) target = $region20
      $region19: #{cnn_forward.1} parent=11 // pred_region
        _
      $region20: #{cnn_forward.1} parent=11 // pred_fallthru
        _
      // Predicated region
      $region21: #{cnn_forward.1} parent=11 // pred_check
        %p190 = pneg %p101
      $region22: #{cnn_forward.1} parent=11 // pred_check_branch
        %192 = sbr.rel (%p190) target = $region24
      $region23: #{cnn_forward.1} parent=11 // pred_region
        _
      $region24: #{cnn_forward.1} parent=11 // pred_fallthru
        _
      // Predicated region
      $region25: #{cnn_forward.1} parent=11 // pred_check
        %p193 = pneg %p122
      $region26: #{cnn_forward.1} parent=11 // pred_check_branch
        %195 = sbr.rel (%p193) target = $region28
      $region27: #{cnn_forward.1} parent=11 // pred_region
        _
      $region28: #{cnn_forward.1} parent=11 // pred_fallthru
        _
      // Predicated region
      $region29: #{cnn_forward.1} parent=11 // pred_check
        %p196 = pneg %p143
      $region30: #{cnn_forward.1} parent=11 // pred_check_branch
        %198 = sbr.rel (%p196) target = $region32
      $region31: #{cnn_forward.1} parent=11 // pred_region
        _
      $region32: #{cnn_forward.1} parent=11 // pred_fallthru
        _
    $region12: #{cnn_forward.1} parent=5 // pred_fallthru
      _
    %p199 = scmp.lt.s32.totalorder %s12, 2
    // Predicated region
    $region33: #{cnn_forward.1} parent=5 // pred_check
      %p200 = pneg %p199
    $region34: #{cnn_forward.1} parent=5 // pred_check_branch
      %202 = sbr.rel (%p200) target = $region36
    $region35: #{cnn_forward.1} parent=5 // pred_region
      // Predicated region
      $region37: #{cnn_forward.1} parent=35 // pred_check
        %p203 = pneg %p32
      $region38: #{cnn_forward.1} parent=35 // pred_check_branch
        %205 = sbr.rel (%p203) target = $region40
      $region39: #{cnn_forward.1} parent=35 // pred_region
        %p206 = scmp.lt.s32.totalorder %s12, 1
        %s207 = scalar_select %p206, %s12, 1
        %s208 = smul.addr %s207, 288
        %s209 = smul.addr %s208, 8
        %s210 = scalar_lea.vmem %s0, %s209
      $region40: #{cnn_forward.1} parent=35 // pred_fallthru
        _
    $region36: #{cnn_forward.1} parent=5 // pred_fallthru
      _
    %p211 = scmp.le.s32.totalorder 1, %s12
    %p212 = scmp.lt.s32.totalorder %s12, 3
    %p213 = pnand %p211, %p212
    %p214 = pneg %p213
    // Predicated region
    $region41: #{cnn_forward.1} parent=5 // pred_check
      _
    $region42: #{cnn_forward.1} parent=5 // pred_check_branch
      %216 = sbr.rel (%p213) target = $region44
    $region43: #{cnn_forward.1} parent=5 // pred_region
      %s217 = ssub.s32 %s12, 1
      %p218 = scmp.lt.s32.totalorder %s17, 1
      %s219 = scalar_select %p218, %s17, 1
      %s220 = smul.addr %s219, 288
      %s221 = smul.addr %s220, 8
      %s222 = scalar_lea.vmem %s0, %s221
      %p223 = pneg %p38
      %p224 = pneg %p35
      %p225 = pneg %p59
      %p226 = pneg %p56
      %p227 = pneg %p80
      %p228 = pneg %p77
      %p229 = pneg %p101
      %p230 = pneg %p98
      %p231 = pneg %p122
      %p232 = pneg %p119
      %p233 = pneg %p143
      %p234 = pneg %p140
      %p235 = pneg %p169
      %p236 = pneg %p166
      %p237 = scmp.lt.s32.totalorder %s17, 1
      %s238 = scalar_select %p237, %s17, 1
      %s239 = smul.addr %s238, 2
      %s240 = scalar_lea.vmem %s6, %s239
      %p241 = scmp.lt.s32.totalorder %s17, 1
      %s242 = scalar_select %p241, %s17, 1
      %s243 = smul.addr %s242, 288
      %s244 = smul.addr %s243, 8
      %s245 = scalar_lea.vmem %s0, %s244
      %p246 = scmp.lt.s32.totalorder %s17, 1
      %s247 = scalar_select %p246, %s17, 1
      %s248 = smul.addr %s247, 2
      %s249 = scalar_lea.vmem %s6, %s248
      %v250 = vld [vmem:[%s3] sm:$0x3]
      %v251 = vld [vmem:[%s1] sm:$0xff]
      %v252 = vld [vmem:[%s1 + $0x8] sm:$0xff]
      %v253 = vld [vmem:[%s1 + $0x10] sm:$0xff]
      %v254 = vld [vmem:[%s1 + $0x18] sm:$0xff]
      %v255 = vld [vmem:[%s1 + $0x20] sm:$0xf]
      %v256 = vld [vmem:[%s245] sm:$0xff]
      %v257 = vld [vmem:[%s245 + $0x8] sm:$0xff]
      %v258 = vld [vmem:[%s245 + $0x10] sm:$0xff]
      %v259 = vld [vmem:[%s245 + $0x18] sm:$0xff]
      %v260 = vld [vmem:[%s245 + $0x20] sm:$0xff]
      %v261 = vld [vmem:[%s245 + $0x28] sm:$0xff]
      %v262 = vld [vmem:[%s245 + $0x30] sm:$0xff]
      %v263 = vld [vmem:[%s245 + $0x38] sm:$0xff]
      %v264 = vld [vmem:[%s245 + $0x40] sm:$0xff]
      %v265 = vld [vmem:[%s245 + $0x48] sm:$0xff]
      %v266 = vld [vmem:[%s245 + $0x50] sm:$0xff]
      %v267 = vld [vmem:[%s245 + $0x58] sm:$0xff]
      %v268 = vld [vmem:[%s245 + $0x60] sm:$0xff]
      %v269 = vld [vmem:[%s245 + $0x68] sm:$0xff]
      %v270 = vld [vmem:[%s245 + $0x70] sm:$0xff]
      %v271 = vld [vmem:[%s245 + $0x78] sm:$0xff]
      %v272 = vlaneseq
      %v273 = vshrl.u32 %v272, 7
      %v274 = vsub.s32 0, %v273
      %v275 = vrot.slane %v250, %v274
      %vm276 = vcmask 293888
      %v278 = vsel %vm276, %v256, 0
      %v281 = vsel %vm276, %v257, 0
      %v284 = vsel %vm276, %v258, 0
      %v287 = vsel %vm276, %v259, 0
      %v290 = vsel %vm276, %v260, 0
      %v293 = vsel %vm276, %v261, 0
      %v296 = vsel %vm276, %v262, 0
      %v299 = vsel %vm276, %v263, 0
      %v302 = vsel %vm276, %v264, 0
      %v305 = vsel %vm276, %v265, 0
      %v308 = vsel %vm276, %v266, 0
      %v311 = vsel %vm276, %v267, 0
      %v314 = vsel %vm276, %v268, 0
      %v317 = vsel %vm276, %v269, 0
      %v320 = vsel %vm276, %v270, 0
      %v323 = vsel %vm276, %v271, 0
      %vm325 = vcmask 1043456
      %v327 = vsel %vm325, %v255, 0
      %329 = vmatprep.subr.mxu0 0.0
      %330 = vmatpush1.msra.mxu0 0.0
      %331 = vmatprep.subr.mxu0 0.0
      %332 = vmatpush1.msra.mxu0 0.0
      %333 = vmatprep.subr.mxu0 0.0
      %334 = vmatpush1.msra.mxu0 0.0
      %335 = vmatprep.subr.mxu0 0.0
      %336 = vmatpush1.msra.mxu0 0.0
      %337 = vmatprep.subr.mxu0 0.0
      %338 = vmatpush1.msra.mxu0 0.0
      %339 = vmatprep.subr.mxu0 0.0
      %340 = vmatpush1.msra.mxu0 0.0
      %341 = vmatprep.subr.mxu0 0.0
      %342 = vmatpush1.msra.mxu0 0.0
      %343 = vmatprep.subr.mxu0 0.0
      %344 = vmatpush1.msra.mxu0 0.0
      %345 = vmatprep.subr.mxu0 0.0
      %346 = vmatpush1.msra.mxu0 0.0
      %347 = vmatprep.subr.mxu0 0.0
      %348 = vmatpush1.msra.mxu0 0.0
      %349 = vmatprep.subr.mxu0 0.0
      %350 = vmatpush1.msra.mxu0 0.0
      %351 = vmatprep.subr.mxu0 0.0
      %352 = vmatpush1.msra.mxu0 %v327
      %353 = vmatprep.subr.mxu0 0.0
      %354 = vmatpush1.msra.mxu0 %v254
      %355 = vmatprep.subr.mxu0 0.0
      %356 = vmatpush1.msra.mxu0 %v253
      %357 = vmatprep.subr.mxu0 0.0
      %358 = vmatpush1.msra.mxu0 %v252
      %359 = vmatprep.subr.mxu0 0.0
      %360 = vmatpush1.msra.mxu0 %v251
      %361 = vmatprep.subr.mxu0 0.0
      %362 = vmatpush2.msra.mxu0 0.0
      %363 = vmatprep.subr.mxu0 0.0
      %364 = vmatpush2.msra.mxu0 0.0
      %365 = vmatprep.subr.mxu0 0.0
      %366 = vmatpush2.msra.mxu0 0.0
      %367 = vmatprep.subr.mxu0 0.0
      %368 = vmatpush2.msra.mxu0 0.0
      %369 = vmatprep.subr.mxu0 0.0
      %370 = vmatpush2.msra.mxu0 0.0
      %371 = vmatprep.subr.mxu0 0.0
      %372 = vmatpush2.msra.mxu0 0.0
      %373 = vmatprep.subr.mxu0 0.0
      %374 = vmatpush2.msra.mxu0 0.0
      %375 = vmatprep.subr.mxu0 0.0
      %376 = vmatpush2.msra.mxu0 0.0
      %377 = vmatprep.subr.mxu0 0.0
      %378 = vmatpush2.msra.mxu0 0.0
      %379 = vmatprep.subr.mxu0 0.0
      %380 = vmatpush2.msra.mxu0 0.0
      %381 = vmatprep.subr.mxu0 0.0
      %382 = vmatpush2.msra.mxu0 0.0
      %383 = vmatprep.subr.mxu0 0.0
      %384 = vmatpush2.msra.mxu0 0.0
      %385 = vmatprep.subr.mxu0 0.0
      %386 = vmatpush2.msra.mxu0 0.0
      %387 = vmatprep.subr.mxu0 0.0
      %388 = vmatpush2.msra.mxu0 0.0
      %389 = vmatprep.subr.mxu0 0.0
      %390 = vmatpush2.msra.mxu0 0.0
      %391 = vmatprep.subr.mxu0 0.0
      %392 = vmatpush2.msra.mxu0 0.0
      %393 = vmatprep.mubr.f32.mxu0 0.0
      %394 = vmatmul.mubr.f32.gmra.mxu0 %v278
      %v395 = vpop.f32.mrf.mxu0
      %v396 = vadd.f32 %v275, %v395
      %v397 = vpop.f32.mrf.mxu0
      %398 = vmatprep.mubr.f32.mxu0 0.0
      %399 = vmatmul.mubr.f32.gmra.mxu0 %v281
      %v400 = vpop.f32.mrf.mxu0
      %v401 = vadd.f32 %v275, %v400
      %v402 = vpop.f32.mrf.mxu0
      %403 = vmatprep.mubr.f32.mxu0 0.0
      %404 = vmatmul.mubr.f32.gmra.mxu0 %v284
      %v405 = vpop.f32.mrf.mxu0
      %v406 = vadd.f32 %v275, %v405
      %v407 = vpop.f32.mrf.mxu0
      %408 = vmatprep.mubr.f32.mxu0 0.0
      %409 = vmatmul.mubr.f32.gmra.mxu0 %v287
      %v410 = vpop.f32.mrf.mxu0
      %v411 = vadd.f32 %v275, %v410
      %v412 = vpop.f32.mrf.mxu0
      %413 = vmatprep.mubr.f32.mxu0 0.0
      %414 = vmatmul.mubr.f32.gmra.mxu0 %v290
      %v415 = vpop.f32.mrf.mxu0
      %v416 = vadd.f32 %v275, %v415
      %v417 = vpop.f32.mrf.mxu0
      %418 = vmatprep.mubr.f32.mxu0 0.0
      %419 = vmatmul.mubr.f32.gmra.mxu0 %v293
      %v420 = vpop.f32.mrf.mxu0
      %v421 = vadd.f32 %v275, %v420
      %v422 = vpop.f32.mrf.mxu0
      %423 = vmatprep.mubr.f32.mxu0 0.0
      %424 = vmatmul.mubr.f32.gmra.mxu0 %v296
      %v425 = vpop.f32.mrf.mxu0
      %v426 = vadd.f32 %v275, %v425
      %v427 = vpop.f32.mrf.mxu0
      %428 = vmatprep.mubr.f32.mxu0 0.0
      %429 = vmatmul.mubr.f32.gmra.mxu0 %v299
      %v430 = vpop.f32.mrf.mxu0
      %v431 = vadd.f32 %v275, %v430
      %v432 = vpop.f32.mrf.mxu0
      %433 = vmatprep.mubr.f32.mxu0 0.0
      %434 = vmatmul.mubr.f32.gmra.mxu0 %v302
      %v435 = vpop.f32.mrf.mxu0
      %v436 = vadd.f32 %v275, %v435
      %v437 = vpop.f32.mrf.mxu0
      %438 = vmatprep.mubr.f32.mxu0 0.0
      %439 = vmatmul.mubr.f32.gmra.mxu0 %v305
      %v440 = vpop.f32.mrf.mxu0
      %v441 = vadd.f32 %v275, %v440
      %v442 = vpop.f32.mrf.mxu0
      %443 = vmatprep.mubr.f32.mxu0 0.0
      %444 = vmatmul.mubr.f32.gmra.mxu0 %v308
      %v445 = vpop.f32.mrf.mxu0
      %v446 = vadd.f32 %v275, %v445
      %v447 = vpop.f32.mrf.mxu0
      %448 = vmatprep.mubr.f32.mxu0 0.0
      %449 = vmatmul.mubr.f32.gmra.mxu0 %v311
      %v450 = vpop.f32.mrf.mxu0
      %v451 = vadd.f32 %v275, %v450
      %v452 = vpop.f32.mrf.mxu0
      %453 = vmatprep.mubr.f32.mxu0 0.0
      %454 = vmatmul.mubr.f32.gmra.mxu0 %v314
      %v455 = vpop.f32.mrf.mxu0
      %v456 = vadd.f32 %v275, %v455
      %v457 = vpop.f32.mrf.mxu0
      %458 = vmatprep.mubr.f32.mxu0 0.0
      %459 = vmatmul.mubr.f32.gmra.mxu0 %v317
      %v460 = vpop.f32.mrf.mxu0
      %v461 = vadd.f32 %v275, %v460
      %v462 = vpop.f32.mrf.mxu0
      %463 = vmatprep.mubr.f32.mxu0 0.0
      %464 = vmatmul.mubr.f32.gmra.mxu0 %v320
      %v465 = vpop.f32.mrf.mxu0
      %v466 = vadd.f32 %v275, %v465
      %v467 = vpop.f32.mrf.mxu0
      %468 = vmatprep.mubr.f32.mxu0 0.0
      %469 = vmatmul.mubr.f32.gmra.mxu0 %v323
      %v470 = vpop.f32.mrf.mxu0
      %v471 = vadd.f32 %v275, %v470
      %v472 = vpop.f32.mrf.mxu0
      %473 = vdwg.mxu0
      %vm474 = vcmp.ge.f32.partialorder %v396, 0.0
      %vm475 = vcmp.ge.f32.partialorder %v401, 0.0
      %vm476 = vcmp.ge.f32.partialorder %v406, 0.0
      %vm477 = vcmp.ge.f32.partialorder %v411, 0.0
      %vm478 = vcmp.ge.f32.partialorder %v416, 0.0
      %vm479 = vcmp.ge.f32.partialorder %v421, 0.0
      %vm480 = vcmp.ge.f32.partialorder %v426, 0.0
      %vm481 = vcmp.ge.f32.partialorder %v431, 0.0
      %vm482 = vcmp.ge.f32.partialorder %v436, 0.0
      %vm483 = vcmp.ge.f32.partialorder %v441, 0.0
      %vm484 = vcmp.ge.f32.partialorder %v446, 0.0
      %vm485 = vcmp.ge.f32.partialorder %v451, 0.0
      %vm486 = vcmp.ge.f32.partialorder %v456, 0.0
      %vm487 = vcmp.ge.f32.partialorder %v461, 0.0
      %vm488 = vcmp.ge.f32.partialorder %v466, 0.0
      %vm489 = vcmp.ge.f32.partialorder %v471, 0.0
      %v490 = vmul.f32 %v396, 0.01
      %v491 = vmul.f32 %v401, 0.01
      %v492 = vmul.f32 %v406, 0.01
      %v493 = vmul.f32 %v411, 0.01
      %v494 = vmul.f32 %v416, 0.01
      %v495 = vmul.f32 %v421, 0.01
      %v496 = vmul.f32 %v426, 0.01
      %v497 = vmul.f32 %v431, 0.01
      %v498 = vmul.f32 %v436, 0.01
      %v499 = vmul.f32 %v441, 0.01
      %v500 = vmul.f32 %v446, 0.01
      %v501 = vmul.f32 %v451, 0.01
      %v502 = vmul.f32 %v456, 0.01
      %v503 = vmul.f32 %v461, 0.01
      %v504 = vmul.f32 %v466, 0.01
      %v505 = vmul.f32 %v471, 0.01
      %v506 = vsel %vm474, %v396, %v490
      %v507 = vsel %vm475, %v401, %v491
      %v508 = vsel %vm476, %v406, %v492
      %v509 = vsel %vm477, %v411, %v493
      %v510 = vsel %vm478, %v416, %v494
      %v511 = vsel %vm479, %v421, %v495
      %v512 = vsel %vm480, %v426, %v496
      %v513 = vsel %vm481, %v431, %v497
      %v514 = vsel %vm482, %v436, %v498
      %v515 = vsel %vm483, %v441, %v499
      %v516 = vsel %vm484, %v446, %v500
      %v517 = vsel %vm485, %v451, %v501
      %v518 = vsel %vm486, %v456, %v502
      %v519 = vsel %vm487, %v461, %v503
      %v520 = vsel %vm488, %v466, %v504
      %v521 = vsel %vm489, %v471, %v505
      %vm522 = vcmask 408576
      %523 = vst.msk [vmem:[#allocation2] sm:$0xff] %vm522, %v506
      %524 = vst.msk [vmem:[#allocation2 + $0x8] sm:$0xff] %vm522, %v507
      %525 = vst.msk [vmem:[#allocation2 + $0x10] sm:$0xff] %vm522, %v508
      %526 = vst.msk [vmem:[#allocation2 + $0x18] sm:$0xff] %vm522, %v509
      %527 = vst.msk [vmem:[#allocation2 + $0x20] sm:$0xff] %vm522, %v510
      %528 = vst.msk [vmem:[#allocation2 + $0x28] sm:$0xff] %vm522, %v511
      %529 = vst.msk [vmem:[#allocation2 + $0x30] sm:$0xff] %vm522, %v512
      %530 = vst.msk [vmem:[#allocation2 + $0x38] sm:$0xff] %vm522, %v513
      %531 = vst.msk [vmem:[#allocation2 + $0x40] sm:$0xff] %vm522, %v514
      %532 = vst.msk [vmem:[#allocation2 + $0x48] sm:$0xff] %vm522, %v515
      %533 = vst.msk [vmem:[#allocation2 + $0x50] sm:$0xff] %vm522, %v516
      %534 = vst.msk [vmem:[#allocation2 + $0x58] sm:$0xff] %vm522, %v517
      %535 = vst.msk [vmem:[#allocation2 + $0x60] sm:$0xff] %vm522, %v518
      %536 = vst.msk [vmem:[#allocation2 + $0x68] sm:$0xff] %vm522, %v519
      %537 = vst.msk [vmem:[#allocation2 + $0x70] sm:$0xff] %vm522, %v520
      %538 = vst.msk [vmem:[#allocation2 + $0x78] sm:$0xff] %vm522, %v521
      %v539 = vld [vmem:[%s245 + $0x80] sm:$0xff]
      %v540 = vld [vmem:[%s245 + $0x88] sm:$0xff]
      %v541 = vld [vmem:[%s245 + $0x90] sm:$0xff]
      %v542 = vld [vmem:[%s245 + $0x98] sm:$0xff]
      %v543 = vld [vmem:[%s245 + $0xa0] sm:$0xff]
      %v544 = vld [vmem:[%s245 + $0xa8] sm:$0xff]
      %v545 = vld [vmem:[%s245 + $0xb0] sm:$0xff]
      %v546 = vld [vmem:[%s245 + $0xb8] sm:$0xff]
      %v547 = vld [vmem:[%s245 + $0xc0] sm:$0xff]
      %v548 = vld [vmem:[%s245 + $0xc8] sm:$0xff]
      %v549 = vld [vmem:[%s245 + $0xd0] sm:$0xff]
      %v550 = vld [vmem:[%s245 + $0xd8] sm:$0xff]
      %v551 = vld [vmem:[%s245 + $0xe0] sm:$0xff]
      %v552 = vld [vmem:[%s245 + $0xe8] sm:$0xff]
      %v553 = vld [vmem:[%s245 + $0xf0] sm:$0xff]
      %v554 = vld [vmem:[%s245 + $0xf8] sm:$0xff]
      %v556 = vsel %vm276, %v539, 0
      %v559 = vsel %vm276, %v540, 0
      %v562 = vsel %vm276, %v541, 0
      %v565 = vsel %vm276, %v542, 0
      %v568 = vsel %vm276, %v543, 0
      %v571 = vsel %vm276, %v544, 0
      %v574 = vsel %vm276, %v545, 0
      %v577 = vsel %vm276, %v546, 0
      %v580 = vsel %vm276, %v547, 0
      %v583 = vsel %vm276, %v548, 0
      %v586 = vsel %vm276, %v549, 0
      %v589 = vsel %vm276, %v550, 0
      %v592 = vsel %vm276, %v551, 0
      %v595 = vsel %vm276, %v552, 0
      %v598 = vsel %vm276, %v553, 0
      %v601 = vsel %vm276, %v554, 0
      %603 = vmatprep.subr.mxu0 0.0
      %604 = vmatpush1.msra.mxu0 0.0
      %605 = vmatprep.subr.mxu0 0.0
      %606 = vmatpush1.msra.mxu0 0.0
      %607 = vmatprep.subr.mxu0 0.0
      %608 = vmatpush1.msra.mxu0 0.0
      %609 = vmatprep.subr.mxu0 0.0
      %610 = vmatpush1.msra.mxu0 0.0
      %611 = vmatprep.subr.mxu0 0.0
      %612 = vmatpush1.msra.mxu0 0.0
      %613 = vmatprep.subr.mxu0 0.0
      %614 = vmatpush1.msra.mxu0 0.0
      %615 = vmatprep.subr.mxu0 0.0
      %616 = vmatpush1.msra.mxu0 0.0
      %617 = vmatprep.subr.mxu0 0.0
      %618 = vmatpush1.msra.mxu0 0.0
      %619 = vmatprep.subr.mxu0 0.0
      %620 = vmatpush1.msra.mxu0 0.0
      %621 = vmatprep.subr.mxu0 0.0
      %622 = vmatpush1.msra.mxu0 0.0
      %623 = vmatprep.subr.mxu0 0.0
      %624 = vmatpush1.msra.mxu0 0.0
      %625 = vmatprep.subr.mxu0 0.0
      %626 = vmatpush1.msra.mxu0 %v327
      %627 = vmatprep.subr.mxu0 0.0
      %628 = vmatpush1.msra.mxu0 %v254
      %629 = vmatprep.subr.mxu0 0.0
      %630 = vmatpush1.msra.mxu0 %v253
      %631 = vmatprep.subr.mxu0 0.0
      %632 = vmatpush1.msra.mxu0 %v252
      %633 = vmatprep.subr.mxu0 0.0
      %634 = vmatpush1.msra.mxu0 %v251
      %635 = vmatprep.subr.mxu0 0.0
      %636 = vmatpush2.msra.mxu0 0.0
      %637 = vmatprep.subr.mxu0 0.0
      %638 = vmatpush2.msra.mxu0 0.0
      %639 = vmatprep.subr.mxu0 0.0
      %640 = vmatpush2.msra.mxu0 0.0
      %641 = vmatprep.subr.mxu0 0.0
      %642 = vmatpush2.msra.mxu0 0.0
      %643 = vmatprep.subr.mxu0 0.0
      %644 = vmatpush2.msra.mxu0 0.0
      %645 = vmatprep.subr.mxu0 0.0
      %646 = vmatpush2.msra.mxu0 0.0
      %647 = vmatprep.subr.mxu0 0.0
      %648 = vmatpush2.msra.mxu0 0.0
      %649 = vmatprep.subr.mxu0 0.0
      %650 = vmatpush2.msra.mxu0 0.0
      %651 = vmatprep.subr.mxu0 0.0
      %652 = vmatpush2.msra.mxu0 0.0
      %653 = vmatprep.subr.mxu0 0.0
      %654 = vmatpush2.msra.mxu0 0.0
      %655 = vmatprep.subr.mxu0 0.0
      %656 = vmatpush2.msra.mxu0 0.0
      %657 = vmatprep.subr.mxu0 0.0
      %658 = vmatpush2.msra.mxu0 0.0
      %659 = vmatprep.subr.mxu0 0.0
      %660 = vmatpush2.msra.mxu0 0.0
      %661 = vmatprep.subr.mxu0 0.0
      %662 = vmatpush2.msra.mxu0 0.0
      %663 = vmatprep.subr.mxu0 0.0
      %664 = vmatpush2.msra.mxu0 0.0
      %665 = vmatprep.subr.mxu0 0.0
      %666 = vmatpush2.msra.mxu0 0.0
      %667 = vmatprep.mubr.f32.mxu0 0.0
      %668 = vmatmul.mubr.f32.gmra.mxu0 %v556
      %v669 = vpop.f32.mrf.mxu0
      %v670 = vadd.f32 %v275, %v669
      %v671 = vpop.f32.mrf.mxu0
      %672 = vmatprep.mubr.f32.mxu0 0.0
      %673 = vmatmul.mubr.f32.gmra.mxu0 %v559
      %v674 = vpop.f32.mrf.mxu0
      %v675 = vadd.f32 %v275, %v674
      %v676 = vpop.f32.mrf.mxu0
      %677 = vmatprep.mubr.f32.mxu0 0.0
      %678 = vmatmul.mubr.f32.gmra.mxu0 %v562
      %v679 = vpop.f32.mrf.mxu0
      %v680 = vadd.f32 %v275, %v679
      %v681 = vpop.f32.mrf.mxu0
      %682 = vmatprep.mubr.f32.mxu0 0.0
      %683 = vmatmul.mubr.f32.gmra.mxu0 %v565
      %v684 = vpop.f32.mrf.mxu0
      %v685 = vadd.f32 %v275, %v684
      %v686 = vpop.f32.mrf.mxu0
      %687 = vmatprep.mubr.f32.mxu0 0.0
      %688 = vmatmul.mubr.f32.gmra.mxu0 %v568
      %v689 = vpop.f32.mrf.mxu0
      %v690 = vadd.f32 %v275, %v689
      %v691 = vpop.f32.mrf.mxu0
      %692 = vmatprep.mubr.f32.mxu0 0.0
      %693 = vmatmul.mubr.f32.gmra.mxu0 %v571
      %v694 = vpop.f32.mrf.mxu0
      %v695 = vadd.f32 %v275, %v694
      %v696 = vpop.f32.mrf.mxu0
      %697 = vmatprep.mubr.f32.mxu0 0.0
      %698 = vmatmul.mubr.f32.gmra.mxu0 %v574
      %v699 = vpop.f32.mrf.mxu0
      %v700 = vadd.f32 %v275, %v699
      %v701 = vpop.f32.mrf.mxu0
      %702 = vmatprep.mubr.f32.mxu0 0.0
      %703 = vmatmul.mubr.f32.gmra.mxu0 %v577
      %v704 = vpop.f32.mrf.mxu0
      %v705 = vadd.f32 %v275, %v704
      %v706 = vpop.f32.mrf.mxu0
      %707 = vmatprep.mubr.f32.mxu0 0.0
      %708 = vmatmul.mubr.f32.gmra.mxu0 %v580
      %v709 = vpop.f32.mrf.mxu0
      %v710 = vadd.f32 %v275, %v709
      %v711 = vpop.f32.mrf.mxu0
      %712 = vmatprep.mubr.f32.mxu0 0.0
      %713 = vmatmul.mubr.f32.gmra.mxu0 %v583
      %v714 = vpop.f32.mrf.mxu0
      %v715 = vadd.f32 %v275, %v714
      %v716 = vpop.f32.mrf.mxu0
      %717 = vmatprep.mubr.f32.mxu0 0.0
      %718 = vmatmul.mubr.f32.gmra.mxu0 %v586
      %v719 = vpop.f32.mrf.mxu0
      %v720 = vadd.f32 %v275, %v719
      %v721 = vpop.f32.mrf.mxu0
      %722 = vmatprep.mubr.f32.mxu0 0.0
      %723 = vmatmul.mubr.f32.gmra.mxu0 %v589
      %v724 = vpop.f32.mrf.mxu0
      %v725 = vadd.f32 %v275, %v724
      %v726 = vpop.f32.mrf.mxu0
      %727 = vmatprep.mubr.f32.mxu0 0.0
      %728 = vmatmul.mubr.f32.gmra.mxu0 %v592
      %v729 = vpop.f32.mrf.mxu0
      %v730 = vadd.f32 %v275, %v729
      %v731 = vpop.f32.mrf.mxu0
      %732 = vmatprep.mubr.f32.mxu0 0.0
      %733 = vmatmul.mubr.f32.gmra.mxu0 %v595
      %v734 = vpop.f32.mrf.mxu0
      %v735 = vadd.f32 %v275, %v734
      %v736 = vpop.f32.mrf.mxu0
      %737 = vmatprep.mubr.f32.mxu0 0.0
      %738 = vmatmul.mubr.f32.gmra.mxu0 %v598
      %v739 = vpop.f32.mrf.mxu0
      %v740 = vadd.f32 %v275, %v739
      %v741 = vpop.f32.mrf.mxu0
      %742 = vmatprep.mubr.f32.mxu0 0.0
      %743 = vmatmul.mubr.f32.gmra.mxu0 %v601
      %v744 = vpop.f32.mrf.mxu0
      %v745 = vadd.f32 %v275, %v744
      %v746 = vpop.f32.mrf.mxu0
      %747 = vdwg.mxu0
      %vm748 = vcmp.ge.f32.partialorder %v670, 0.0
      %vm749 = vcmp.ge.f32.partialorder %v675, 0.0
      %vm750 = vcmp.ge.f32.partialorder %v680, 0.0
      %vm751 = vcmp.ge.f32.partialorder %v685, 0.0
      %vm752 = vcmp.ge.f32.partialorder %v690, 0.0
      %vm753 = vcmp.ge.f32.partialorder %v695, 0.0
      %vm754 = vcmp.ge.f32.partialorder %v700, 0.0
      %vm755 = vcmp.ge.f32.partialorder %v705, 0.0
      %vm756 = vcmp.ge.f32.partialorder %v710, 0.0
      %vm757 = vcmp.ge.f32.partialorder %v715, 0.0
      %vm758 = vcmp.ge.f32.partialorder %v720, 0.0
      %vm759 = vcmp.ge.f32.partialorder %v725, 0.0
      %vm760 = vcmp.ge.f32.partialorder %v730, 0.0
      %vm761 = vcmp.ge.f32.partialorder %v735, 0.0
      %vm762 = vcmp.ge.f32.partialorder %v740, 0.0
      %vm763 = vcmp.ge.f32.partialorder %v745, 0.0
      %v764 = vmul.f32 %v670, 0.01
      %v765 = vmul.f32 %v675, 0.01
      %v766 = vmul.f32 %v680, 0.01
      %v767 = vmul.f32 %v685, 0.01
      %v768 = vmul.f32 %v690, 0.01
      %v769 = vmul.f32 %v695, 0.01
      %v770 = vmul.f32 %v700, 0.01
      %v771 = vmul.f32 %v705, 0.01
      %v772 = vmul.f32 %v710, 0.01
      %v773 = vmul.f32 %v715, 0.01
      %v774 = vmul.f32 %v720, 0.01
      %v775 = vmul.f32 %v725, 0.01
      %v776 = vmul.f32 %v730, 0.01
      %v777 = vmul.f32 %v735, 0.01
      %v778 = vmul.f32 %v740, 0.01
      %v779 = vmul.f32 %v745, 0.01
      %v780 = vsel %vm748, %v670, %v764
      %v781 = vsel %vm749, %v675, %v765
      %v782 = vsel %vm750, %v680, %v766
      %v783 = vsel %vm751, %v685, %v767
      %v784 = vsel %vm752, %v690, %v768
      %v785 = vsel %vm753, %v695, %v769
      %v786 = vsel %vm754, %v700, %v770
      %v787 = vsel %vm755, %v705, %v771
      %v788 = vsel %vm756, %v710, %v772
      %v789 = vsel %vm757, %v715, %v773
      %v790 = vsel %vm758, %v720, %v774
      %v791 = vsel %vm759, %v725, %v775
      %v792 = vsel %vm760, %v730, %v776
      %v793 = vsel %vm761, %v735, %v777
      %v794 = vsel %vm762, %v740, %v778
      %v795 = vsel %vm763, %v745, %v779
      %796 = vst.msk [vmem:[#allocation2 + $0x80] sm:$0xff] %vm522, %v780
      %797 = vst.msk [vmem:[#allocation2 + $0x88] sm:$0xff] %vm522, %v781
      %798 = vst.msk [vmem:[#allocation2 + $0x90] sm:$0xff] %vm522, %v782
      %799 = vst.msk [vmem:[#allocation2 + $0x98] sm:$0xff] %vm522, %v783
      %800 = vst.msk [vmem:[#allocation2 + $0xa0] sm:$0xff] %vm522, %v784
      %801 = vst.msk [vmem:[#allocation2 + $0xa8] sm:$0xff] %vm522, %v785
      %802 = vst.msk [vmem:[#allocation2 + $0xb0] sm:$0xff] %vm522, %v786
      %803 = vst.msk [vmem:[#allocation2 + $0xb8] sm:$0xff] %vm522, %v787
      %804 = vst.msk [vmem:[#allocation2 + $0xc0] sm:$0xff] %vm522, %v788
      %805 = vst.msk [vmem:[#allocation2 + $0xc8] sm:$0xff] %vm522, %v789
      %806 = vst.msk [vmem:[#allocation2 + $0xd0] sm:$0xff] %vm522, %v790
      %807 = vst.msk [vmem:[#allocation2 + $0xd8] sm:$0xff] %vm522, %v791
      %808 = vst.msk [vmem:[#allocation2 + $0xe0] sm:$0xff] %vm522, %v792
      %809 = vst.msk [vmem:[#allocation2 + $0xe8] sm:$0xff] %vm522, %v793
      %810 = vst.msk [vmem:[#allocation2 + $0xf0] sm:$0xff] %vm522, %v794
      %811 = vst.msk [vmem:[#allocation2 + $0xf8] sm:$0xff] %vm522, %v795
      %v812 = vld [vmem:[%s245 + $0x100] sm:$0xff]
      %v813 = vld [vmem:[%s245 + $0x108] sm:$0xff]
      %v814 = vld [vmem:[%s245 + $0x110] sm:$0xff]
      %v815 = vld [vmem:[%s245 + $0x118] sm:$0xff]
      %v816 = vld [vmem:[%s245 + $0x120] sm:$0xff]
      %v817 = vld [vmem:[%s245 + $0x128] sm:$0xff]
      %v818 = vld [vmem:[%s245 + $0x130] sm:$0xff]
      %v819 = vld [vmem:[%s245 + $0x138] sm:$0xff]
      %v820 = vld [vmem:[%s245 + $0x140] sm:$0xff]
      %v821 = vld [vmem:[%s245 + $0x148] sm:$0xff]
      %v822 = vld [vmem:[%s245 + $0x150] sm:$0xff]
      %v823 = vld [vmem:[%s245 + $0x158] sm:$0xff]
      %v824 = vld [vmem:[%s245 + $0x160] sm:$0xff]
      %v825 = vld [vmem:[%s245 + $0x168] sm:$0xff]
      %v826 = vld [vmem:[%s245 + $0x170] sm:$0xff]
      %v827 = vld [vmem:[%s245 + $0x178] sm:$0xff]
      %v829 = vsel %vm276, %v812, 0
      %v832 = vsel %vm276, %v813, 0
      %v835 = vsel %vm276, %v814, 0
      %v838 = vsel %vm276, %v815, 0
      %v841 = vsel %vm276, %v816, 0
      %v844 = vsel %vm276, %v817, 0
      %v847 = vsel %vm276, %v818, 0
      %v850 = vsel %vm276, %v819, 0
      %v853 = vsel %vm276, %v820, 0
      %v856 = vsel %vm276, %v821, 0
      %v859 = vsel %vm276, %v822, 0
      %v862 = vsel %vm276, %v823, 0
      %v865 = vsel %vm276, %v824, 0
      %v868 = vsel %vm276, %v825, 0
      %v871 = vsel %vm276, %v826, 0
      %v874 = vsel %vm276, %v827, 0
      %876 = vmatprep.subr.mxu0 0.0
      %877 = vmatpush1.msra.mxu0 0.0
      %878 = vmatprep.subr.mxu0 0.0
      %879 = vmatpush1.msra.mxu0 0.0
      %880 = vmatprep.subr.mxu0 0.0
      %881 = vmatpush1.msra.mxu0 0.0
      %882 = vmatprep.subr.mxu0 0.0
      %883 = vmatpush1.msra.mxu0 0.0
      %884 = vmatprep.subr.mxu0 0.0
      %885 = vmatpush1.msra.mxu0 0.0
      %886 = vmatprep.subr.mxu0 0.0
      %887 = vmatpush1.msra.mxu0 0.0
      %888 = vmatprep.subr.mxu0 0.0
      %889 = vmatpush1.msra.mxu0 0.0
      %890 = vmatprep.subr.mxu0 0.0
      %891 = vmatpush1.msra.mxu0 0.0
      %892 = vmatprep.subr.mxu0 0.0
      %893 = vmatpush1.msra.mxu0 0.0
      %894 = vmatprep.subr.mxu0 0.0
      %895 = vmatpush1.msra.mxu0 0.0
      %896 = vmatprep.subr.mxu0 0.0
      %897 = vmatpush1.msra.mxu0 0.0
      %898 = vmatprep.subr.mxu0 0.0
      %899 = vmatpush1.msra.mxu0 %v327
      %900 = vmatprep.subr.mxu0 0.0
      %901 = vmatpush1.msra.mxu0 %v254
      %902 = vmatprep.subr.mxu0 0.0
      %903 = vmatpush1.msra.mxu0 %v253
      %904 = vmatprep.subr.mxu0 0.0
      %905 = vmatpush1.msra.mxu0 %v252
      %906 = vmatprep.subr.mxu0 0.0
      %907 = vmatpush1.msra.mxu0 %v251
      %908 = vmatprep.subr.mxu0 0.0
      %909 = vmatpush2.msra.mxu0 0.0
      %910 = vmatprep.subr.mxu0 0.0
      %911 = vmatpush2.msra.mxu0 0.0
      %912 = vmatprep.subr.mxu0 0.0
      %913 = vmatpush2.msra.mxu0 0.0
      %914 = vmatprep.subr.mxu0 0.0
      %915 = vmatpush2.msra.mxu0 0.0
      %916 = vmatprep.subr.mxu0 0.0
      %917 = vmatpush2.msra.mxu0 0.0
      %918 = vmatprep.subr.mxu0 0.0
      %919 = vmatpush2.msra.mxu0 0.0
      %920 = vmatprep.subr.mxu0 0.0
      %921 = vmatpush2.msra.mxu0 0.0
      %922 = vmatprep.subr.mxu0 0.0
      %923 = vmatpush2.msra.mxu0 0.0
      %924 = vmatprep.subr.mxu0 0.0
      %925 = vmatpush2.msra.mxu0 0.0
      %926 = vmatprep.subr.mxu0 0.0
      %927 = vmatpush2.msra.mxu0 0.0
      %928 = vmatprep.subr.mxu0 0.0
      %929 = vmatpush2.msra.mxu0 0.0
      %930 = vmatprep.subr.mxu0 0.0
      %931 = vmatpush2.msra.mxu0 0.0
      %932 = vmatprep.subr.mxu0 0.0
      %933 = vmatpush2.msra.mxu0 0.0
      %934 = vmatprep.subr.mxu0 0.0
      %935 = vmatpush2.msra.mxu0 0.0
      %936 = vmatprep.subr.mxu0 0.0
      %937 = vmatpush2.msra.mxu0 0.0
      %938 = vmatprep.subr.mxu0 0.0
      %939 = vmatpush2.msra.mxu0 0.0
      %940 = vmatprep.mubr.f32.mxu0 0.0
      %941 = vmatmul.mubr.f32.gmra.mxu0 %v829
      %v942 = vpop.f32.mrf.mxu0
      %v943 = vadd.f32 %v275, %v942
      %v944 = vpop.f32.mrf.mxu0
      %945 = vmatprep.mubr.f32.mxu0 0.0
      %946 = vmatmul.mubr.f32.gmra.mxu0 %v832
      %v947 = vpop.f32.mrf.mxu0
      %v948 = vadd.f32 %v275, %v947
      %v949 = vpop.f32.mrf.mxu0
      %950 = vmatprep.mubr.f32.mxu0 0.0
      %951 = vmatmul.mubr.f32.gmra.mxu0 %v835
      %v952 = vpop.f32.mrf.mxu0
      %v953 = vadd.f32 %v275, %v952
      %v954 = vpop.f32.mrf.mxu0
      %955 = vmatprep.mubr.f32.mxu0 0.0
      %956 = vmatmul.mubr.f32.gmra.mxu0 %v838
      %v957 = vpop.f32.mrf.mxu0
      %v958 = vadd.f32 %v275, %v957
      %v959 = vpop.f32.mrf.mxu0
      %960 = vmatprep.mubr.f32.mxu0 0.0
      %961 = vmatmul.mubr.f32.gmra.mxu0 %v841
      %v962 = vpop.f32.mrf.mxu0
      %v963 = vadd.f32 %v275, %v962
      %v964 = vpop.f32.mrf.mxu0
      %965 = vmatprep.mubr.f32.mxu0 0.0
      %966 = vmatmul.mubr.f32.gmra.mxu0 %v844
      %v967 = vpop.f32.mrf.mxu0
      %v968 = vadd.f32 %v275, %v967
      %v969 = vpop.f32.mrf.mxu0
      %970 = vmatprep.mubr.f32.mxu0 0.0
      %971 = vmatmul.mubr.f32.gmra.mxu0 %v847
      %v972 = vpop.f32.mrf.mxu0
      %v973 = vadd.f32 %v275, %v972
      %v974 = vpop.f32.mrf.mxu0
      %975 = vmatprep.mubr.f32.mxu0 0.0
      %976 = vmatmul.mubr.f32.gmra.mxu0 %v850
      %v977 = vpop.f32.mrf.mxu0
      %v978 = vadd.f32 %v275, %v977
      %v979 = vpop.f32.mrf.mxu0
      %980 = vmatprep.mubr.f32.mxu0 0.0
      %981 = vmatmul.mubr.f32.gmra.mxu0 %v853
      %v982 = vpop.f32.mrf.mxu0
      %v983 = vadd.f32 %v275, %v982
      %v984 = vpop.f32.mrf.mxu0
      %985 = vmatprep.mubr.f32.mxu0 0.0
      %986 = vmatmul.mubr.f32.gmra.mxu0 %v856
      %v987 = vpop.f32.mrf.mxu0
      %v988 = vadd.f32 %v275, %v987
      %v989 = vpop.f32.mrf.mxu0
      %990 = vmatprep.mubr.f32.mxu0 0.0
      %991 = vmatmul.mubr.f32.gmra.mxu0 %v859
      %v992 = vpop.f32.mrf.mxu0
      %v993 = vadd.f32 %v275, %v992
      %v994 = vpop.f32.mrf.mxu0
      %995 = vmatprep.mubr.f32.mxu0 0.0
      %996 = vmatmul.mubr.f32.gmra.mxu0 %v862
      %v997 = vpop.f32.mrf.mxu0
      %v998 = vadd.f32 %v275, %v997
      %v999 = vpop.f32.mrf.mxu0
      %1000 = vmatprep.mubr.f32.mxu0 0.0
      %1001 = vmatmul.mubr.f32.gmra.mxu0 %v865
      %v1002 = vpop.f32.mrf.mxu0
      %v1003 = vadd.f32 %v275, %v1002
      %v1004 = vpop.f32.mrf.mxu0
      %1005 = vmatprep.mubr.f32.mxu0 0.0
      %1006 = vmatmul.mubr.f32.gmra.mxu0 %v868
      %v1007 = vpop.f32.mrf.mxu0
      %v1008 = vadd.f32 %v275, %v1007
      %v1009 = vpop.f32.mrf.mxu0
      %1010 = vmatprep.mubr.f32.mxu0 0.0
      %1011 = vmatmul.mubr.f32.gmra.mxu0 %v871
      %v1012 = vpop.f32.mrf.mxu0
      %v1013 = vadd.f32 %v275, %v1012
      %v1014 = vpop.f32.mrf.mxu0
      %1015 = vmatprep.mubr.f32.mxu0 0.0
      %1016 = vmatmul.mubr.f32.gmra.mxu0 %v874
      %v1017 = vpop.f32.mrf.mxu0
      %v1018 = vadd.f32 %v275, %v1017
      %v1019 = vpop.f32.mrf.mxu0
      %1020 = vdwg.mxu0
      %vm1021 = vcmp.ge.f32.partialorder %v943, 0.0
      %vm1022 = vcmp.ge.f32.partialorder %v948, 0.0
      %vm1023 = vcmp.ge.f32.partialorder %v953, 0.0
      %vm1024 = vcmp.ge.f32.partialorder %v958, 0.0
      %vm1025 = vcmp.ge.f32.partialorder %v963, 0.0
      %vm1026 = vcmp.ge.f32.partialorder %v968, 0.0
      %vm1027 = vcmp.ge.f32.partialorder %v973, 0.0
      %vm1028 = vcmp.ge.f32.partialorder %v978, 0.0
      %vm1029 = vcmp.ge.f32.partialorder %v983, 0.0
      %vm1030 = vcmp.ge.f32.partialorder %v988, 0.0
      %vm1031 = vcmp.ge.f32.partialorder %v993, 0.0
      %vm1032 = vcmp.ge.f32.partialorder %v998, 0.0
      %vm1033 = vcmp.ge.f32.partialorder %v1003, 0.0
      %vm1034 = vcmp.ge.f32.partialorder %v1008, 0.0
      %vm1035 = vcmp.ge.f32.partialorder %v1013, 0.0
      %vm1036 = vcmp.ge.f32.partialorder %v1018, 0.0
      %v1037 = vmul.f32 %v943, 0.01
      %v1038 = vmul.f32 %v948, 0.01
      %v1039 = vmul.f32 %v953, 0.01
      %v1040 = vmul.f32 %v958, 0.01
      %v1041 = vmul.f32 %v963, 0.01
      %v1042 = vmul.f32 %v968, 0.01
      %v1043 = vmul.f32 %v973, 0.01
      %v1044 = vmul.f32 %v978, 0.01
      %v1045 = vmul.f32 %v983, 0.01
      %v1046 = vmul.f32 %v988, 0.01
      %v1047 = vmul.f32 %v993, 0.01
      %v1048 = vmul.f32 %v998, 0.01
      %v1049 = vmul.f32 %v1003, 0.01
      %v1050 = vmul.f32 %v1008, 0.01
      %v1051 = vmul.f32 %v1013, 0.01
      %v1052 = vmul.f32 %v1018, 0.01
      %v1053 = vsel %vm1021, %v943, %v1037
      %v1054 = vsel %vm1022, %v948, %v1038
      %v1055 = vsel %vm1023, %v953, %v1039
      %v1056 = vsel %vm1024, %v958, %v1040
      %v1057 = vsel %vm1025, %v963, %v1041
      %v1058 = vsel %vm1026, %v968, %v1042
      %v1059 = vsel %vm1027, %v973, %v1043
      %v1060 = vsel %vm1028, %v978, %v1044
      %v1061 = vsel %vm1029, %v983, %v1045
      %v1062 = vsel %vm1030, %v988, %v1046
      %v1063 = vsel %vm1031, %v993, %v1047
      %v1064 = vsel %vm1032, %v998, %v1048
      %v1065 = vsel %vm1033, %v1003, %v1049
      %v1066 = vsel %vm1034, %v1008, %v1050
      %v1067 = vsel %vm1035, %v1013, %v1051
      %v1068 = vsel %vm1036, %v1018, %v1052
      %1069 = vst.msk [vmem:[#allocation2 + $0x100] sm:$0xff] %vm522, %v1053
      %1070 = vst.msk [vmem:[#allocation2 + $0x108] sm:$0xff] %vm522, %v1054
      %1071 = vst.msk [vmem:[#allocation2 + $0x110] sm:$0xff] %vm522, %v1055
      %1072 = vst.msk [vmem:[#allocation2 + $0x118] sm:$0xff] %vm522, %v1056
      %1073 = vst.msk [vmem:[#allocation2 + $0x120] sm:$0xff] %vm522, %v1057
      %1074 = vst.msk [vmem:[#allocation2 + $0x128] sm:$0xff] %vm522, %v1058
      %1075 = vst.msk [vmem:[#allocation2 + $0x130] sm:$0xff] %vm522, %v1059
      %1076 = vst.msk [vmem:[#allocation2 + $0x138] sm:$0xff] %vm522, %v1060
      %1077 = vst.msk [vmem:[#allocation2 + $0x140] sm:$0xff] %vm522, %v1061
      %1078 = vst.msk [vmem:[#allocation2 + $0x148] sm:$0xff] %vm522, %v1062
      %1079 = vst.msk [vmem:[#allocation2 + $0x150] sm:$0xff] %vm522, %v1063
      %1080 = vst.msk [vmem:[#allocation2 + $0x158] sm:$0xff] %vm522, %v1064
      %1081 = vst.msk [vmem:[#allocation2 + $0x160] sm:$0xff] %vm522, %v1065
      %1082 = vst.msk [vmem:[#allocation2 + $0x168] sm:$0xff] %vm522, %v1066
      %1083 = vst.msk [vmem:[#allocation2 + $0x170] sm:$0xff] %vm522, %v1067
      %1084 = vst.msk [vmem:[#allocation2 + $0x178] sm:$0xff] %vm522, %v1068
      %v1085 = vld [vmem:[%s245 + $0x180] sm:$0xff]
      %v1086 = vld [vmem:[%s245 + $0x188] sm:$0xff]
      %v1087 = vld [vmem:[%s245 + $0x190] sm:$0xff]
      %v1088 = vld [vmem:[%s245 + $0x198] sm:$0xff]
      %v1089 = vld [vmem:[%s245 + $0x1a0] sm:$0xff]
      %v1090 = vld [vmem:[%s245 + $0x1a8] sm:$0xff]
      %v1091 = vld [vmem:[%s245 + $0x1b0] sm:$0xff]
      %v1092 = vld [vmem:[%s245 + $0x1b8] sm:$0xff]
      %v1093 = vld [vmem:[%s245 + $0x1c0] sm:$0xff]
      %v1094 = vld [vmem:[%s245 + $0x1c8] sm:$0xff]
      %v1095 = vld [vmem:[%s245 + $0x1d0] sm:$0xff]
      %v1096 = vld [vmem:[%s245 + $0x1d8] sm:$0xff]
      %v1097 = vld [vmem:[%s245 + $0x1e0] sm:$0xff]
      %v1098 = vld [vmem:[%s245 + $0x1e8] sm:$0xff]
      %v1099 = vld [vmem:[%s245 + $0x1f0] sm:$0xff]
      %v1100 = vld [vmem:[%s245 + $0x1f8] sm:$0xff]
      %v1102 = vsel %vm276, %v1085, 0
      %v1105 = vsel %vm276, %v1086, 0
      %v1108 = vsel %vm276, %v1087, 0
      %v1111 = vsel %vm276, %v1088, 0
      %v1114 = vsel %vm276, %v1089, 0
      %v1117 = vsel %vm276, %v1090, 0
      %v1120 = vsel %vm276, %v1091, 0
      %v1123 = vsel %vm276, %v1092, 0
      %v1126 = vsel %vm276, %v1093, 0
      %v1129 = vsel %vm276, %v1094, 0
      %v1132 = vsel %vm276, %v1095, 0
      %v1135 = vsel %vm276, %v1096, 0
      %v1138 = vsel %vm276, %v1097, 0
      %v1141 = vsel %vm276, %v1098, 0
      %v1144 = vsel %vm276, %v1099, 0
      %v1147 = vsel %vm276, %v1100, 0
      %1149 = vmatprep.subr.mxu0 0.0
      %1150 = vmatpush1.msra.mxu0 0.0
      %1151 = vmatprep.subr.mxu0 0.0
      %1152 = vmatpush1.msra.mxu0 0.0
      %1153 = vmatprep.subr.mxu0 0.0
      %1154 = vmatpush1.msra.mxu0 0.0
      %1155 = vmatprep.subr.mxu0 0.0
      %1156 = vmatpush1.msra.mxu0 0.0
      %1157 = vmatprep.subr.mxu0 0.0
      %1158 = vmatpush1.msra.mxu0 0.0
      %1159 = vmatprep.subr.mxu0 0.0
      %1160 = vmatpush1.msra.mxu0 0.0
      %1161 = vmatprep.subr.mxu0 0.0
      %1162 = vmatpush1.msra.mxu0 0.0
      %1163 = vmatprep.subr.mxu0 0.0
      %1164 = vmatpush1.msra.mxu0 0.0
      %1165 = vmatprep.subr.mxu0 0.0
      %1166 = vmatpush1.msra.mxu0 0.0
      %1167 = vmatprep.subr.mxu0 0.0
      %1168 = vmatpush1.msra.mxu0 0.0
      %1169 = vmatprep.subr.mxu0 0.0
      %1170 = vmatpush1.msra.mxu0 0.0
      %1171 = vmatprep.subr.mxu0 0.0
      %1172 = vmatpush1.msra.mxu0 %v327
      %1173 = vmatprep.subr.mxu0 0.0
      %1174 = vmatpush1.msra.mxu0 %v254
      %1175 = vmatprep.subr.mxu0 0.0
      %1176 = vmatpush1.msra.mxu0 %v253
      %1177 = vmatprep.subr.mxu0 0.0
      %1178 = vmatpush1.msra.mxu0 %v252
      %1179 = vmatprep.subr.mxu0 0.0
      %1180 = vmatpush1.msra.mxu0 %v251
      %1181 = vmatprep.subr.mxu0 0.0
      %1182 = vmatpush2.msra.mxu0 0.0
      %1183 = vmatprep.subr.mxu0 0.0
      %1184 = vmatpush2.msra.mxu0 0.0
      %1185 = vmatprep.subr.mxu0 0.0
      %1186 = vmatpush2.msra.mxu0 0.0
      %1187 = vmatprep.subr.mxu0 0.0
      %1188 = vmatpush2.msra.mxu0 0.0
      %1189 = vmatprep.subr.mxu0 0.0
      %1190 = vmatpush2.msra.mxu0 0.0
      %1191 = vmatprep.subr.mxu0 0.0
      %1192 = vmatpush2.msra.mxu0 0.0
      %1193 = vmatprep.subr.mxu0 0.0
      %1194 = vmatpush2.msra.mxu0 0.0
      %1195 = vmatprep.subr.mxu0 0.0
      %1196 = vmatpush2.msra.mxu0 0.0
      %1197 = vmatprep.subr.mxu0 0.0
      %1198 = vmatpush2.msra.mxu0 0.0
      %1199 = vmatprep.subr.mxu0 0.0
      %1200 = vmatpush2.msra.mxu0 0.0
      %1201 = vmatprep.subr.mxu0 0.0
      %1202 = vmatpush2.msra.mxu0 0.0
      %1203 = vmatprep.subr.mxu0 0.0
      %1204 = vmatpush2.msra.mxu0 0.0
      %1205 = vmatprep.subr.mxu0 0.0
      %1206 = vmatpush2.msra.mxu0 0.0
      %1207 = vmatprep.subr.mxu0 0.0
      %1208 = vmatpush2.msra.mxu0 0.0
      %1209 = vmatprep.subr.mxu0 0.0
      %1210 = vmatpush2.msra.mxu0 0.0
      %1211 = vmatprep.subr.mxu0 0.0
      %1212 = vmatpush2.msra.mxu0 0.0
      %1213 = vmatprep.mubr.f32.mxu0 0.0
      %1214 = vmatmul.mubr.f32.gmra.mxu0 %v1102
      %v1215 = vpop.f32.mrf.mxu0
      %v1216 = vadd.f32 %v275, %v1215
      %v1217 = vpop.f32.mrf.mxu0
      %1218 = vmatprep.mubr.f32.mxu0 0.0
      %1219 = vmatmul.mubr.f32.gmra.mxu0 %v1105
      %v1220 = vpop.f32.mrf.mxu0
      %v1221 = vadd.f32 %v275, %v1220
      %v1222 = vpop.f32.mrf.mxu0
      %1223 = vmatprep.mubr.f32.mxu0 0.0
      %1224 = vmatmul.mubr.f32.gmra.mxu0 %v1108
      %v1225 = vpop.f32.mrf.mxu0
      %v1226 = vadd.f32 %v275, %v1225
      %v1227 = vpop.f32.mrf.mxu0
      %1228 = vmatprep.mubr.f32.mxu0 0.0
      %1229 = vmatmul.mubr.f32.gmra.mxu0 %v1111
      %v1230 = vpop.f32.mrf.mxu0
      %v1231 = vadd.f32 %v275, %v1230
      %v1232 = vpop.f32.mrf.mxu0
      %1233 = vmatprep.mubr.f32.mxu0 0.0
      %1234 = vmatmul.mubr.f32.gmra.mxu0 %v1114
      %v1235 = vpop.f32.mrf.mxu0
      %v1236 = vadd.f32 %v275, %v1235
      %v1237 = vpop.f32.mrf.mxu0
      %1238 = vmatprep.mubr.f32.mxu0 0.0
      %1239 = vmatmul.mubr.f32.gmra.mxu0 %v1117
      %v1240 = vpop.f32.mrf.mxu0
      %v1241 = vadd.f32 %v275, %v1240
      %v1242 = vpop.f32.mrf.mxu0
      %1243 = vmatprep.mubr.f32.mxu0 0.0
      %1244 = vmatmul.mubr.f32.gmra.mxu0 %v1120
      %v1245 = vpop.f32.mrf.mxu0
      %v1246 = vadd.f32 %v275, %v1245
      %v1247 = vpop.f32.mrf.mxu0
      %1248 = vmatprep.mubr.f32.mxu0 0.0
      %1249 = vmatmul.mubr.f32.gmra.mxu0 %v1123
      %v1250 = vpop.f32.mrf.mxu0
      %v1251 = vadd.f32 %v275, %v1250
      %v1252 = vpop.f32.mrf.mxu0
      %1253 = vmatprep.mubr.f32.mxu0 0.0
      %1254 = vmatmul.mubr.f32.gmra.mxu0 %v1126
      %v1255 = vpop.f32.mrf.mxu0
      %v1256 = vadd.f32 %v275, %v1255
      %v1257 = vpop.f32.mrf.mxu0
      %1258 = vmatprep.mubr.f32.mxu0 0.0
      %1259 = vmatmul.mubr.f32.gmra.mxu0 %v1129
      %v1260 = vpop.f32.mrf.mxu0
      %v1261 = vadd.f32 %v275, %v1260
      %v1262 = vpop.f32.mrf.mxu0
      %1263 = vmatprep.mubr.f32.mxu0 0.0
      %1264 = vmatmul.mubr.f32.gmra.mxu0 %v1132
      %v1265 = vpop.f32.mrf.mxu0
      %v1266 = vadd.f32 %v275, %v1265
      %v1267 = vpop.f32.mrf.mxu0
      %1268 = vmatprep.mubr.f32.mxu0 0.0
      %1269 = vmatmul.mubr.f32.gmra.mxu0 %v1135
      %v1270 = vpop.f32.mrf.mxu0
      %v1271 = vadd.f32 %v275, %v1270
      %v1272 = vpop.f32.mrf.mxu0
      %1273 = vmatprep.mubr.f32.mxu0 0.0
      %1274 = vmatmul.mubr.f32.gmra.mxu0 %v1138
      %v1275 = vpop.f32.mrf.mxu0
      %v1276 = vadd.f32 %v275, %v1275
      %v1277 = vpop.f32.mrf.mxu0
      %1278 = vmatprep.mubr.f32.mxu0 0.0
      %1279 = vmatmul.mubr.f32.gmra.mxu0 %v1141
      %v1280 = vpop.f32.mrf.mxu0
      %v1281 = vadd.f32 %v275, %v1280
      %v1282 = vpop.f32.mrf.mxu0
      %1283 = vmatprep.mubr.f32.mxu0 0.0
      %1284 = vmatmul.mubr.f32.gmra.mxu0 %v1144
      %v1285 = vpop.f32.mrf.mxu0
      %v1286 = vadd.f32 %v275, %v1285
      %v1287 = vpop.f32.mrf.mxu0
      %1288 = vmatprep.mubr.f32.mxu0 0.0
      %1289 = vmatmul.mubr.f32.gmra.mxu0 %v1147
      %v1290 = vpop.f32.mrf.mxu0
      %v1291 = vadd.f32 %v275, %v1290
      %v1292 = vpop.f32.mrf.mxu0
      %1293 = vdwg.mxu0
      %vm1294 = vcmp.ge.f32.partialorder %v1216, 0.0
      %vm1295 = vcmp.ge.f32.partialorder %v1221, 0.0
      %vm1296 = vcmp.ge.f32.partialorder %v1226, 0.0
      %vm1297 = vcmp.ge.f32.partialorder %v1231, 0.0
      %vm1298 = vcmp.ge.f32.partialorder %v1236, 0.0
      %vm1299 = vcmp.ge.f32.partialorder %v1241, 0.0
      %vm1300 = vcmp.ge.f32.partialorder %v1246, 0.0
      %vm1301 = vcmp.ge.f32.partialorder %v1251, 0.0
      %vm1302 = vcmp.ge.f32.partialorder %v1256, 0.0
      %vm1303 = vcmp.ge.f32.partialorder %v1261, 0.0
      %vm1304 = vcmp.ge.f32.partialorder %v1266, 0.0
      %vm1305 = vcmp.ge.f32.partialorder %v1271, 0.0
      %vm1306 = vcmp.ge.f32.partialorder %v1276, 0.0
      %vm1307 = vcmp.ge.f32.partialorder %v1281, 0.0
      %vm1308 = vcmp.ge.f32.partialorder %v1286, 0.0
      %vm1309 = vcmp.ge.f32.partialorder %v1291, 0.0
      %v1310 = vmul.f32 %v1216, 0.01
      %v1311 = vmul.f32 %v1221, 0.01
      %v1312 = vmul.f32 %v1226, 0.01
      %v1313 = vmul.f32 %v1231, 0.01
      %v1314 = vmul.f32 %v1236, 0.01
      %v1315 = vmul.f32 %v1241, 0.01
      %v1316 = vmul.f32 %v1246, 0.01
      %v1317 = vmul.f32 %v1251, 0.01
      %v1318 = vmul.f32 %v1256, 0.01
      %v1319 = vmul.f32 %v1261, 0.01
      %v1320 = vmul.f32 %v1266, 0.01
      %v1321 = vmul.f32 %v1271, 0.01
      %v1322 = vmul.f32 %v1276, 0.01
      %v1323 = vmul.f32 %v1281, 0.01
      %v1324 = vmul.f32 %v1286, 0.01
      %v1325 = vmul.f32 %v1291, 0.01
      %v1326 = vsel %vm1294, %v1216, %v1310
      %v1327 = vsel %vm1295, %v1221, %v1311
      %v1328 = vsel %vm1296, %v1226, %v1312
      %v1329 = vsel %vm1297, %v1231, %v1313
      %v1330 = vsel %vm1298, %v1236, %v1314
      %v1331 = vsel %vm1299, %v1241, %v1315
      %v1332 = vsel %vm1300, %v1246, %v1316
      %v1333 = vsel %vm1301, %v1251, %v1317
      %v1334 = vsel %vm1302, %v1256, %v1318
      %v1335 = vsel %vm1303, %v1261, %v1319
      %v1336 = vsel %vm1304, %v1266, %v1320
      %v1337 = vsel %vm1305, %v1271, %v1321
      %v1338 = vsel %vm1306, %v1276, %v1322
      %v1339 = vsel %vm1307, %v1281, %v1323
      %v1340 = vsel %vm1308, %v1286, %v1324
      %v1341 = vsel %vm1309, %v1291, %v1325
      %1342 = vst.msk [vmem:[#allocation2 + $0x180] sm:$0xff] %vm522, %v1326
      %1343 = vst.msk [vmem:[#allocation2 + $0x188] sm:$0xff] %vm522, %v1327
      %1344 = vst.msk [vmem:[#allocation2 + $0x190] sm:$0xff] %vm522, %v1328
      %1345 = vst.msk [vmem:[#allocation2 + $0x198] sm:$0xff] %vm522, %v1329
      %1346 = vst.msk [vmem:[#allocation2 + $0x1a0] sm:$0xff] %vm522, %v1330
      %1347 = vst.msk [vmem:[#allocation2 + $0x1a8] sm:$0xff] %vm522, %v1331
      %1348 = vst.msk [vmem:[#allocation2 + $0x1b0] sm:$0xff] %vm522, %v1332
      %1349 = vst.msk [vmem:[#allocation2 + $0x1b8] sm:$0xff] %vm522, %v1333
      %1350 = vst.msk [vmem:[#allocation2 + $0x1c0] sm:$0xff] %vm522, %v1334
      %1351 = vst.msk [vmem:[#allocation2 + $0x1c8] sm:$0xff] %vm522, %v1335
      %1352 = vst.msk [vmem:[#allocation2 + $0x1d0] sm:$0xff] %vm522, %v1336
      %1353 = vst.msk [vmem:[#allocation2 + $0x1d8] sm:$0xff] %vm522, %v1337
      %1354 = vst.msk [vmem:[#allocation2 + $0x1e0] sm:$0xff] %vm522, %v1338
      %1355 = vst.msk [vmem:[#allocation2 + $0x1e8] sm:$0xff] %vm522, %v1339
      %1356 = vst.msk [vmem:[#allocation2 + $0x1f0] sm:$0xff] %vm522, %v1340
      %1357 = vst.msk [vmem:[#allocation2 + $0x1f8] sm:$0xff] %vm522, %v1341
      %v1358 = vld [vmem:[%s245 + $0x200] sm:$0xff]
      %v1359 = vld [vmem:[%s245 + $0x208] sm:$0xff]
      %v1360 = vld [vmem:[%s245 + $0x210] sm:$0xff]
      %v1361 = vld [vmem:[%s245 + $0x218] sm:$0xff]
      %v1362 = vld [vmem:[%s245 + $0x220] sm:$0xff]
      %v1363 = vld [vmem:[%s245 + $0x228] sm:$0xff]
      %v1364 = vld [vmem:[%s245 + $0x230] sm:$0xff]
      %v1365 = vld [vmem:[%s245 + $0x238] sm:$0xff]
      %v1366 = vld [vmem:[%s245 + $0x240] sm:$0xff]
      %v1367 = vld [vmem:[%s245 + $0x248] sm:$0xff]
      %v1368 = vld [vmem:[%s245 + $0x250] sm:$0xff]
      %v1369 = vld [vmem:[%s245 + $0x258] sm:$0xff]
      %v1370 = vld [vmem:[%s245 + $0x260] sm:$0xff]
      %v1371 = vld [vmem:[%s245 + $0x268] sm:$0xff]
      %v1372 = vld [vmem:[%s245 + $0x270] sm:$0xff]
      %v1373 = vld [vmem:[%s245 + $0x278] sm:$0xff]
      %v1375 = vsel %vm276, %v1358, 0
      %v1378 = vsel %vm276, %v1359, 0
      %v1381 = vsel %vm276, %v1360, 0
      %v1384 = vsel %vm276, %v1361, 0
      %v1387 = vsel %vm276, %v1362, 0
      %v1390 = vsel %vm276, %v1363, 0
      %v1393 = vsel %vm276, %v1364, 0
      %v1396 = vsel %vm276, %v1365, 0
      %v1399 = vsel %vm276, %v1366, 0
      %v1402 = vsel %vm276, %v1367, 0
      %v1405 = vsel %vm276, %v1368, 0
      %v1408 = vsel %vm276, %v1369, 0
      %v1411 = vsel %vm276, %v1370, 0
      %v1414 = vsel %vm276, %v1371, 0
      %v1417 = vsel %vm276, %v1372, 0
      %v1420 = vsel %vm276, %v1373, 0
      %1422 = vmatprep.subr.mxu0 0.0
      %1423 = vmatpush1.msra.mxu0 0.0
      %1424 = vmatprep.subr.mxu0 0.0
      %1425 = vmatpush1.msra.mxu0 0.0
      %1426 = vmatprep.subr.mxu0 0.0
      %1427 = vmatpush1.msra.mxu0 0.0
      %1428 = vmatprep.subr.mxu0 0.0
      %1429 = vmatpush1.msra.mxu0 0.0
      %1430 = vmatprep.subr.mxu0 0.0
      %1431 = vmatpush1.msra.mxu0 0.0
      %1432 = vmatprep.subr.mxu0 0.0
      %1433 = vmatpush1.msra.mxu0 0.0
      %1434 = vmatprep.subr.mxu0 0.0
      %1435 = vmatpush1.msra.mxu0 0.0
      %1436 = vmatprep.subr.mxu0 0.0
      %1437 = vmatpush1.msra.mxu0 0.0
      %1438 = vmatprep.subr.mxu0 0.0
      %1439 = vmatpush1.msra.mxu0 0.0
      %1440 = vmatprep.subr.mxu0 0.0
      %1441 = vmatpush1.msra.mxu0 0.0
      %1442 = vmatprep.subr.mxu0 0.0
      %1443 = vmatpush1.msra.mxu0 0.0
      %1444 = vmatprep.subr.mxu0 0.0
      %1445 = vmatpush1.msra.mxu0 %v327
      %1446 = vmatprep.subr.mxu0 0.0
      %1447 = vmatpush1.msra.mxu0 %v254
      %1448 = vmatprep.subr.mxu0 0.0
      %1449 = vmatpush1.msra.mxu0 %v253
      %1450 = vmatprep.subr.mxu0 0.0
      %1451 = vmatpush1.msra.mxu0 %v252
      %1452 = vmatprep.subr.mxu0 0.0
      %1453 = vmatpush1.msra.mxu0 %v251
      %1454 = vmatprep.subr.mxu0 0.0
      %1455 = vmatpush2.msra.mxu0 0.0
      %1456 = vmatprep.subr.mxu0 0.0
      %1457 = vmatpush2.msra.mxu0 0.0
      %1458 = vmatprep.subr.mxu0 0.0
      %1459 = vmatpush2.msra.mxu0 0.0
      %1460 = vmatprep.subr.mxu0 0.0
      %1461 = vmatpush2.msra.mxu0 0.0
      %1462 = vmatprep.subr.mxu0 0.0
      %1463 = vmatpush2.msra.mxu0 0.0
      %1464 = vmatprep.subr.mxu0 0.0
      %1465 = vmatpush2.msra.mxu0 0.0
      %1466 = vmatprep.subr.mxu0 0.0
      %1467 = vmatpush2.msra.mxu0 0.0
      %1468 = vmatprep.subr.mxu0 0.0
      %1469 = vmatpush2.msra.mxu0 0.0
      %1470 = vmatprep.subr.mxu0 0.0
      %1471 = vmatpush2.msra.mxu0 0.0
      %1472 = vmatprep.subr.mxu0 0.0
      %1473 = vmatpush2.msra.mxu0 0.0
      %1474 = vmatprep.subr.mxu0 0.0
      %1475 = vmatpush2.msra.mxu0 0.0
      %1476 = vmatprep.subr.mxu0 0.0
      %1477 = vmatpush2.msra.mxu0 0.0
      %1478 = vmatprep.subr.mxu0 0.0
      %1479 = vmatpush2.msra.mxu0 0.0
      %1480 = vmatprep.subr.mxu0 0.0
      %1481 = vmatpush2.msra.mxu0 0.0
      %1482 = vmatprep.subr.mxu0 0.0
      %1483 = vmatpush2.msra.mxu0 0.0
      %1484 = vmatprep.subr.mxu0 0.0
      %1485 = vmatpush2.msra.mxu0 0.0
      %1486 = vmatprep.mubr.f32.mxu0 0.0
      %1487 = vmatmul.mubr.f32.gmra.mxu0 %v1375
      %v1488 = vpop.f32.mrf.mxu0
      %v1489 = vadd.f32 %v275, %v1488
      %v1490 = vpop.f32.mrf.mxu0
      %1491 = vmatprep.mubr.f32.mxu0 0.0
      %1492 = vmatmul.mubr.f32.gmra.mxu0 %v1378
      %v1493 = vpop.f32.mrf.mxu0
      %v1494 = vadd.f32 %v275, %v1493
      %v1495 = vpop.f32.mrf.mxu0
      %1496 = vmatprep.mubr.f32.mxu0 0.0
      %1497 = vmatmul.mubr.f32.gmra.mxu0 %v1381
      %v1498 = vpop.f32.mrf.mxu0
      %v1499 = vadd.f32 %v275, %v1498
      %v1500 = vpop.f32.mrf.mxu0
      %1501 = vmatprep.mubr.f32.mxu0 0.0
      %1502 = vmatmul.mubr.f32.gmra.mxu0 %v1384
      %v1503 = vpop.f32.mrf.mxu0
      %v1504 = vadd.f32 %v275, %v1503
      %v1505 = vpop.f32.mrf.mxu0
      %1506 = vmatprep.mubr.f32.mxu0 0.0
      %1507 = vmatmul.mubr.f32.gmra.mxu0 %v1387
      %v1508 = vpop.f32.mrf.mxu0
      %v1509 = vadd.f32 %v275, %v1508
      %v1510 = vpop.f32.mrf.mxu0
      %1511 = vmatprep.mubr.f32.mxu0 0.0
      %1512 = vmatmul.mubr.f32.gmra.mxu0 %v1390
      %v1513 = vpop.f32.mrf.mxu0
      %v1514 = vadd.f32 %v275, %v1513
      %v1515 = vpop.f32.mrf.mxu0
      %1516 = vmatprep.mubr.f32.mxu0 0.0
      %1517 = vmatmul.mubr.f32.gmra.mxu0 %v1393
      %v1518 = vpop.f32.mrf.mxu0
      %v1519 = vadd.f32 %v275, %v1518
      %v1520 = vpop.f32.mrf.mxu0
      %1521 = vmatprep.mubr.f32.mxu0 0.0
      %1522 = vmatmul.mubr.f32.gmra.mxu0 %v1396
      %v1523 = vpop.f32.mrf.mxu0
      %v1524 = vadd.f32 %v275, %v1523
      %v1525 = vpop.f32.mrf.mxu0
      %1526 = vmatprep.mubr.f32.mxu0 0.0
      %1527 = vmatmul.mubr.f32.gmra.mxu0 %v1399
      %v1528 = vpop.f32.mrf.mxu0
      %v1529 = vadd.f32 %v275, %v1528
      %v1530 = vpop.f32.mrf.mxu0
      %1531 = vmatprep.mubr.f32.mxu0 0.0
      %1532 = vmatmul.mubr.f32.gmra.mxu0 %v1402
      %v1533 = vpop.f32.mrf.mxu0
      %v1534 = vadd.f32 %v275, %v1533
      %v1535 = vpop.f32.mrf.mxu0
      %1536 = vmatprep.mubr.f32.mxu0 0.0
      %1537 = vmatmul.mubr.f32.gmra.mxu0 %v1405
      %v1538 = vpop.f32.mrf.mxu0
      %v1539 = vadd.f32 %v275, %v1538
      %v1540 = vpop.f32.mrf.mxu0
      %1541 = vmatprep.mubr.f32.mxu0 0.0
      %1542 = vmatmul.mubr.f32.gmra.mxu0 %v1408
      %v1543 = vpop.f32.mrf.mxu0
      %v1544 = vadd.f32 %v275, %v1543
      %v1545 = vpop.f32.mrf.mxu0
      %1546 = vmatprep.mubr.f32.mxu0 0.0
      %1547 = vmatmul.mubr.f32.gmra.mxu0 %v1411
      %v1548 = vpop.f32.mrf.mxu0
      %v1549 = vadd.f32 %v275, %v1548
      %v1550 = vpop.f32.mrf.mxu0
      %1551 = vmatprep.mubr.f32.mxu0 0.0
      %1552 = vmatmul.mubr.f32.gmra.mxu0 %v1414
      %v1553 = vpop.f32.mrf.mxu0
      %v1554 = vadd.f32 %v275, %v1553
      %v1555 = vpop.f32.mrf.mxu0
      %1556 = vmatprep.mubr.f32.mxu0 0.0
      %1557 = vmatmul.mubr.f32.gmra.mxu0 %v1417
      %v1558 = vpop.f32.mrf.mxu0
      %v1559 = vadd.f32 %v275, %v1558
      %v1560 = vpop.f32.mrf.mxu0
      %1561 = vmatprep.mubr.f32.mxu0 0.0
      %1562 = vmatmul.mubr.f32.gmra.mxu0 %v1420
      %v1563 = vpop.f32.mrf.mxu0
      %v1564 = vadd.f32 %v275, %v1563
      %v1565 = vpop.f32.mrf.mxu0
      %1566 = vdwg.mxu0
      %vm1567 = vcmp.ge.f32.partialorder %v1489, 0.0
      %vm1568 = vcmp.ge.f32.partialorder %v1494, 0.0
      %vm1569 = vcmp.ge.f32.partialorder %v1499, 0.0
      %vm1570 = vcmp.ge.f32.partialorder %v1504, 0.0
      %vm1571 = vcmp.ge.f32.partialorder %v1509, 0.0
      %vm1572 = vcmp.ge.f32.partialorder %v1514, 0.0
      %vm1573 = vcmp.ge.f32.partialorder %v1519, 0.0
      %vm1574 = vcmp.ge.f32.partialorder %v1524, 0.0
      %vm1575 = vcmp.ge.f32.partialorder %v1529, 0.0
      %vm1576 = vcmp.ge.f32.partialorder %v1534, 0.0
      %vm1577 = vcmp.ge.f32.partialorder %v1539, 0.0
      %vm1578 = vcmp.ge.f32.partialorder %v1544, 0.0
      %vm1579 = vcmp.ge.f32.partialorder %v1549, 0.0
      %vm1580 = vcmp.ge.f32.partialorder %v1554, 0.0
      %vm1581 = vcmp.ge.f32.partialorder %v1559, 0.0
      %vm1582 = vcmp.ge.f32.partialorder %v1564, 0.0
      %v1583 = vmul.f32 %v1489, 0.01
      %v1584 = vmul.f32 %v1494, 0.01
      %v1585 = vmul.f32 %v1499, 0.01
      %v1586 = vmul.f32 %v1504, 0.01
      %v1587 = vmul.f32 %v1509, 0.01
      %v1588 = vmul.f32 %v1514, 0.01
      %v1589 = vmul.f32 %v1519, 0.01
      %v1590 = vmul.f32 %v1524, 0.01
      %v1591 = vmul.f32 %v1529, 0.01
      %v1592 = vmul.f32 %v1534, 0.01
      %v1593 = vmul.f32 %v1539, 0.01
      %v1594 = vmul.f32 %v1544, 0.01
      %v1595 = vmul.f32 %v1549, 0.01
      %v1596 = vmul.f32 %v1554, 0.01
      %v1597 = vmul.f32 %v1559, 0.01
      %v1598 = vmul.f32 %v1564, 0.01
      %v1599 = vsel %vm1567, %v1489, %v1583
      %v1600 = vsel %vm1568, %v1494, %v1584
      %v1601 = vsel %vm1569, %v1499, %v1585
      %v1602 = vsel %vm1570, %v1504, %v1586
      %v1603 = vsel %vm1571, %v1509, %v1587
      %v1604 = vsel %vm1572, %v1514, %v1588
      %v1605 = vsel %vm1573, %v1519, %v1589
      %v1606 = vsel %vm1574, %v1524, %v1590
      %v1607 = vsel %vm1575, %v1529, %v1591
      %v1608 = vsel %vm1576, %v1534, %v1592
      %v1609 = vsel %vm1577, %v1539, %v1593
      %v1610 = vsel %vm1578, %v1544, %v1594
      %v1611 = vsel %vm1579, %v1549, %v1595
      %v1612 = vsel %vm1580, %v1554, %v1596
      %v1613 = vsel %vm1581, %v1559, %v1597
      %v1614 = vsel %vm1582, %v1564, %v1598
      %1615 = vst.msk [vmem:[#allocation2 + $0x200] sm:$0xff] %vm522, %v1599
      %1616 = vst.msk [vmem:[#allocation2 + $0x208] sm:$0xff] %vm522, %v1600
      %1617 = vst.msk [vmem:[#allocation2 + $0x210] sm:$0xff] %vm522, %v1601
      %1618 = vst.msk [vmem:[#allocation2 + $0x218] sm:$0xff] %vm522, %v1602
      %1619 = vst.msk [vmem:[#allocation2 + $0x220] sm:$0xff] %vm522, %v1603
      %1620 = vst.msk [vmem:[#allocation2 + $0x228] sm:$0xff] %vm522, %v1604
      %1621 = vst.msk [vmem:[#allocation2 + $0x230] sm:$0xff] %vm522, %v1605
      %1622 = vst.msk [vmem:[#allocation2 + $0x238] sm:$0xff] %vm522, %v1606
      %1623 = vst.msk [vmem:[#allocation2 + $0x240] sm:$0xff] %vm522, %v1607
      %1624 = vst.msk [vmem:[#allocation2 + $0x248] sm:$0xff] %vm522, %v1608
      %1625 = vst.msk [vmem:[#allocation2 + $0x250] sm:$0xff] %vm522, %v1609
      %1626 = vst.msk [vmem:[#allocation2 + $0x258] sm:$0xff] %vm522, %v1610
      %1627 = vst.msk [vmem:[#allocation2 + $0x260] sm:$0xff] %vm522, %v1611
      %1628 = vst.msk [vmem:[#allocation2 + $0x268] sm:$0xff] %vm522, %v1612
      %1629 = vst.msk [vmem:[#allocation2 + $0x270] sm:$0xff] %vm522, %v1613
      %1630 = vst.msk [vmem:[#allocation2 + $0x278] sm:$0xff] %vm522, %v1614
      %v1631 = vld [vmem:[%s245 + $0x280] sm:$0xff]
      %v1632 = vld [vmem:[%s245 + $0x288] sm:$0xff]
      %v1633 = vld [vmem:[%s245 + $0x290] sm:$0xff]
      %v1634 = vld [vmem:[%s245 + $0x298] sm:$0xff]
      %v1635 = vld [vmem:[%s245 + $0x2a0] sm:$0xff]
      %v1636 = vld [vmem:[%s245 + $0x2a8] sm:$0xff]
      %v1637 = vld [vmem:[%s245 + $0x2b0] sm:$0xff]
      %v1638 = vld [vmem:[%s245 + $0x2b8] sm:$0xff]
      %v1639 = vld [vmem:[%s245 + $0x2c0] sm:$0xff]
      %v1640 = vld [vmem:[%s245 + $0x2c8] sm:$0xff]
      %v1641 = vld [vmem:[%s245 + $0x2d0] sm:$0xff]
      %v1642 = vld [vmem:[%s245 + $0x2d8] sm:$0xff]
      %v1643 = vld [vmem:[%s245 + $0x2e0] sm:$0xff]
      %v1644 = vld [vmem:[%s245 + $0x2e8] sm:$0xff]
      %v1645 = vld [vmem:[%s245 + $0x2f0] sm:$0xff]
      %v1646 = vld [vmem:[%s245 + $0x2f8] sm:$0xff]
      %v1648 = vsel %vm276, %v1631, 0
      %v1651 = vsel %vm276, %v1632, 0
      %v1654 = vsel %vm276, %v1633, 0
      %v1657 = vsel %vm276, %v1634, 0
      %v1660 = vsel %vm276, %v1635, 0
      %v1663 = vsel %vm276, %v1636, 0
      %v1666 = vsel %vm276, %v1637, 0
      %v1669 = vsel %vm276, %v1638, 0
      %v1672 = vsel %vm276, %v1639, 0
      %v1675 = vsel %vm276, %v1640, 0
      %v1678 = vsel %vm276, %v1641, 0
      %v1681 = vsel %vm276, %v1642, 0
      %v1684 = vsel %vm276, %v1643, 0
      %v1687 = vsel %vm276, %v1644, 0
      %v1690 = vsel %vm276, %v1645, 0
      %v1693 = vsel %vm276, %v1646, 0
      %1695 = vmatprep.subr.mxu0 0.0
      %1696 = vmatpush1.msra.mxu0 0.0
      %1697 = vmatprep.subr.mxu0 0.0
      %1698 = vmatpush1.msra.mxu0 0.0
      %1699 = vmatprep.subr.mxu0 0.0
      %1700 = vmatpush1.msra.mxu0 0.0
      %1701 = vmatprep.subr.mxu0 0.0
      %1702 = vmatpush1.msra.mxu0 0.0
      %1703 = vmatprep.subr.mxu0 0.0
      %1704 = vmatpush1.msra.mxu0 0.0
      %1705 = vmatprep.subr.mxu0 0.0
      %1706 = vmatpush1.msra.mxu0 0.0
      %1707 = vmatprep.subr.mxu0 0.0
      %1708 = vmatpush1.msra.mxu0 0.0
      %1709 = vmatprep.subr.mxu0 0.0
      %1710 = vmatpush1.msra.mxu0 0.0
      %1711 = vmatprep.subr.mxu0 0.0
      %1712 = vmatpush1.msra.mxu0 0.0
      %1713 = vmatprep.subr.mxu0 0.0
      %1714 = vmatpush1.msra.mxu0 0.0
      %1715 = vmatprep.subr.mxu0 0.0
      %1716 = vmatpush1.msra.mxu0 0.0
      %1717 = vmatprep.subr.mxu0 0.0
      %1718 = vmatpush1.msra.mxu0 %v327
      %1719 = vmatprep.subr.mxu0 0.0
      %1720 = vmatpush1.msra.mxu0 %v254
      %1721 = vmatprep.subr.mxu0 0.0
      %1722 = vmatpush1.msra.mxu0 %v253
      %1723 = vmatprep.subr.mxu0 0.0
      %1724 = vmatpush1.msra.mxu0 %v252
      %1725 = vmatprep.subr.mxu0 0.0
      %1726 = vmatpush1.msra.mxu0 %v251
      %1727 = vmatprep.subr.mxu0 0.0
      %1728 = vmatpush2.msra.mxu0 0.0
      %1729 = vmatprep.subr.mxu0 0.0
      %1730 = vmatpush2.msra.mxu0 0.0
      %1731 = vmatprep.subr.mxu0 0.0
      %1732 = vmatpush2.msra.mxu0 0.0
      %1733 = vmatprep.subr.mxu0 0.0
      %1734 = vmatpush2.msra.mxu0 0.0
      %1735 = vmatprep.subr.mxu0 0.0
      %1736 = vmatpush2.msra.mxu0 0.0
      %1737 = vmatprep.subr.mxu0 0.0
      %1738 = vmatpush2.msra.mxu0 0.0
      %1739 = vmatprep.subr.mxu0 0.0
      %1740 = vmatpush2.msra.mxu0 0.0
      %1741 = vmatprep.subr.mxu0 0.0
      %1742 = vmatpush2.msra.mxu0 0.0
      %1743 = vmatprep.subr.mxu0 0.0
      %1744 = vmatpush2.msra.mxu0 0.0
      %1745 = vmatprep.subr.mxu0 0.0
      %1746 = vmatpush2.msra.mxu0 0.0
      %1747 = vmatprep.subr.mxu0 0.0
      %1748 = vmatpush2.msra.mxu0 0.0
      %1749 = vmatprep.subr.mxu0 0.0
      %1750 = vmatpush2.msra.mxu0 0.0
      %1751 = vmatprep.subr.mxu0 0.0
      %1752 = vmatpush2.msra.mxu0 0.0
      %1753 = vmatprep.subr.mxu0 0.0
      %1754 = vmatpush2.msra.mxu0 0.0
      %1755 = vmatprep.subr.mxu0 0.0
      %1756 = vmatpush2.msra.mxu0 0.0
      %1757 = vmatprep.subr.mxu0 0.0
      %1758 = vmatpush2.msra.mxu0 0.0
      %1759 = vmatprep.mubr.f32.mxu0 0.0
      %1760 = vmatmul.mubr.f32.gmra.mxu0 %v1648
      %v1761 = vpop.f32.mrf.mxu0
      %v1762 = vadd.f32 %v275, %v1761
      %v1763 = vpop.f32.mrf.mxu0
      %1764 = vmatprep.mubr.f32.mxu0 0.0
      %1765 = vmatmul.mubr.f32.gmra.mxu0 %v1651
      %v1766 = vpop.f32.mrf.mxu0
      %v1767 = vadd.f32 %v275, %v1766
      %v1768 = vpop.f32.mrf.mxu0
      %1769 = vmatprep.mubr.f32.mxu0 0.0
      %1770 = vmatmul.mubr.f32.gmra.mxu0 %v1654
      %v1771 = vpop.f32.mrf.mxu0
      %v1772 = vadd.f32 %v275, %v1771
      %v1773 = vpop.f32.mrf.mxu0
      %1774 = vmatprep.mubr.f32.mxu0 0.0
      %1775 = vmatmul.mubr.f32.gmra.mxu0 %v1657
      %v1776 = vpop.f32.mrf.mxu0
      %v1777 = vadd.f32 %v275, %v1776
      %v1778 = vpop.f32.mrf.mxu0
      %1779 = vmatprep.mubr.f32.mxu0 0.0
      %1780 = vmatmul.mubr.f32.gmra.mxu0 %v1660
      %v1781 = vpop.f32.mrf.mxu0
      %v1782 = vadd.f32 %v275, %v1781
      %v1783 = vpop.f32.mrf.mxu0
      %1784 = vmatprep.mubr.f32.mxu0 0.0
      %1785 = vmatmul.mubr.f32.gmra.mxu0 %v1663
      %v1786 = vpop.f32.mrf.mxu0
      %v1787 = vadd.f32 %v275, %v1786
      %v1788 = vpop.f32.mrf.mxu0
      %1789 = vmatprep.mubr.f32.mxu0 0.0
      %1790 = vmatmul.mubr.f32.gmra.mxu0 %v1666
      %v1791 = vpop.f32.mrf.mxu0
      %v1792 = vadd.f32 %v275, %v1791
      %v1793 = vpop.f32.mrf.mxu0
      %1794 = vmatprep.mubr.f32.mxu0 0.0
      %1795 = vmatmul.mubr.f32.gmra.mxu0 %v1669
      %v1796 = vpop.f32.mrf.mxu0
      %v1797 = vadd.f32 %v275, %v1796
      %v1798 = vpop.f32.mrf.mxu0
      %1799 = vmatprep.mubr.f32.mxu0 0.0
      %1800 = vmatmul.mubr.f32.gmra.mxu0 %v1672
      %v1801 = vpop.f32.mrf.mxu0
      %v1802 = vadd.f32 %v275, %v1801
      %v1803 = vpop.f32.mrf.mxu0
      %1804 = vmatprep.mubr.f32.mxu0 0.0
      %1805 = vmatmul.mubr.f32.gmra.mxu0 %v1675
      %v1806 = vpop.f32.mrf.mxu0
      %v1807 = vadd.f32 %v275, %v1806
      %v1808 = vpop.f32.mrf.mxu0
      %1809 = vmatprep.mubr.f32.mxu0 0.0
      %1810 = vmatmul.mubr.f32.gmra.mxu0 %v1678
      %v1811 = vpop.f32.mrf.mxu0
      %v1812 = vadd.f32 %v275, %v1811
      %v1813 = vpop.f32.mrf.mxu0
      %1814 = vmatprep.mubr.f32.mxu0 0.0
      %1815 = vmatmul.mubr.f32.gmra.mxu0 %v1681
      %v1816 = vpop.f32.mrf.mxu0
      %v1817 = vadd.f32 %v275, %v1816
      %v1818 = vpop.f32.mrf.mxu0
      %1819 = vmatprep.mubr.f32.mxu0 0.0
      %1820 = vmatmul.mubr.f32.gmra.mxu0 %v1684
      %v1821 = vpop.f32.mrf.mxu0
      %v1822 = vadd.f32 %v275, %v1821
      %v1823 = vpop.f32.mrf.mxu0
      %1824 = vmatprep.mubr.f32.mxu0 0.0
      %1825 = vmatmul.mubr.f32.gmra.mxu0 %v1687
      %v1826 = vpop.f32.mrf.mxu0
      %v1827 = vadd.f32 %v275, %v1826
      %v1828 = vpop.f32.mrf.mxu0
      %1829 = vmatprep.mubr.f32.mxu0 0.0
      %1830 = vmatmul.mubr.f32.gmra.mxu0 %v1690
      %v1831 = vpop.f32.mrf.mxu0
      %v1832 = vadd.f32 %v275, %v1831
      %v1833 = vpop.f32.mrf.mxu0
      %1834 = vmatprep.mubr.f32.mxu0 0.0
      %1835 = vmatmul.mubr.f32.gmra.mxu0 %v1693
      %v1836 = vpop.f32.mrf.mxu0
      %v1837 = vadd.f32 %v275, %v1836
      %v1838 = vpop.f32.mrf.mxu0
      %1839 = vdwg.mxu0
      %vm1840 = vcmp.ge.f32.partialorder %v1762, 0.0
      %vm1841 = vcmp.ge.f32.partialorder %v1767, 0.0
      %vm1842 = vcmp.ge.f32.partialorder %v1772, 0.0
      %vm1843 = vcmp.ge.f32.partialorder %v1777, 0.0
      %vm1844 = vcmp.ge.f32.partialorder %v1782, 0.0
      %vm1845 = vcmp.ge.f32.partialorder %v1787, 0.0
      %vm1846 = vcmp.ge.f32.partialorder %v1792, 0.0
      %vm1847 = vcmp.ge.f32.partialorder %v1797, 0.0
      %vm1848 = vcmp.ge.f32.partialorder %v1802, 0.0
      %vm1849 = vcmp.ge.f32.partialorder %v1807, 0.0
      %vm1850 = vcmp.ge.f32.partialorder %v1812, 0.0
      %vm1851 = vcmp.ge.f32.partialorder %v1817, 0.0
      %vm1852 = vcmp.ge.f32.partialorder %v1822, 0.0
      %vm1853 = vcmp.ge.f32.partialorder %v1827, 0.0
      %vm1854 = vcmp.ge.f32.partialorder %v1832, 0.0
      %vm1855 = vcmp.ge.f32.partialorder %v1837, 0.0
      %v1856 = vmul.f32 %v1762, 0.01
      %v1857 = vmul.f32 %v1767, 0.01
      %v1858 = vmul.f32 %v1772, 0.01
      %v1859 = vmul.f32 %v1777, 0.01
      %v1860 = vmul.f32 %v1782, 0.01
      %v1861 = vmul.f32 %v1787, 0.01
      %v1862 = vmul.f32 %v1792, 0.01
      %v1863 = vmul.f32 %v1797, 0.01
      %v1864 = vmul.f32 %v1802, 0.01
      %v1865 = vmul.f32 %v1807, 0.01
      %v1866 = vmul.f32 %v1812, 0.01
      %v1867 = vmul.f32 %v1817, 0.01
      %v1868 = vmul.f32 %v1822, 0.01
      %v1869 = vmul.f32 %v1827, 0.01
      %v1870 = vmul.f32 %v1832, 0.01
      %v1871 = vmul.f32 %v1837, 0.01
      %v1872 = vsel %vm1840, %v1762, %v1856
      %v1873 = vsel %vm1841, %v1767, %v1857
      %v1874 = vsel %vm1842, %v1772, %v1858
      %v1875 = vsel %vm1843, %v1777, %v1859
      %v1876 = vsel %vm1844, %v1782, %v1860
      %v1877 = vsel %vm1845, %v1787, %v1861
      %v1878 = vsel %vm1846, %v1792, %v1862
      %v1879 = vsel %vm1847, %v1797, %v1863
      %v1880 = vsel %vm1848, %v1802, %v1864
      %v1881 = vsel %vm1849, %v1807, %v1865
      %v1882 = vsel %vm1850, %v1812, %v1866
      %v1883 = vsel %vm1851, %v1817, %v1867
      %v1884 = vsel %vm1852, %v1822, %v1868
      %v1885 = vsel %vm1853, %v1827, %v1869
      %v1886 = vsel %vm1854, %v1832, %v1870
      %v1887 = vsel %vm1855, %v1837, %v1871
      %1888 = vst.msk [vmem:[#allocation2 + $0x280] sm:$0xff] %vm522, %v1872
      %1889 = vst.msk [vmem:[#allocation2 + $0x288] sm:$0xff] %vm522, %v1873
      %1890 = vst.msk [vmem:[#allocation2 + $0x290] sm:$0xff] %vm522, %v1874
      %1891 = vst.msk [vmem:[#allocation2 + $0x298] sm:$0xff] %vm522, %v1875
      %1892 = vst.msk [vmem:[#allocation2 + $0x2a0] sm:$0xff] %vm522, %v1876
      %1893 = vst.msk [vmem:[#allocation2 + $0x2a8] sm:$0xff] %vm522, %v1877
      %1894 = vst.msk [vmem:[#allocation2 + $0x2b0] sm:$0xff] %vm522, %v1878
      %1895 = vst.msk [vmem:[#allocation2 + $0x2b8] sm:$0xff] %vm522, %v1879
      %1896 = vst.msk [vmem:[#allocation2 + $0x2c0] sm:$0xff] %vm522, %v1880
      %1897 = vst.msk [vmem:[#allocation2 + $0x2c8] sm:$0xff] %vm522, %v1881
      %1898 = vst.msk [vmem:[#allocation2 + $0x2d0] sm:$0xff] %vm522, %v1882
      %1899 = vst.msk [vmem:[#allocation2 + $0x2d8] sm:$0xff] %vm522, %v1883
      %1900 = vst.msk [vmem:[#allocation2 + $0x2e0] sm:$0xff] %vm522, %v1884
      %1901 = vst.msk [vmem:[#allocation2 + $0x2e8] sm:$0xff] %vm522, %v1885
      %1902 = vst.msk [vmem:[#allocation2 + $0x2f0] sm:$0xff] %vm522, %v1886
      %1903 = vst.msk [vmem:[#allocation2 + $0x2f8] sm:$0xff] %vm522, %v1887
      %v1904 = vld [vmem:[%s245 + $0x300] sm:$0xff]
      %v1905 = vld [vmem:[%s245 + $0x308] sm:$0xff]
      %v1906 = vld [vmem:[%s245 + $0x310] sm:$0xff]
      %v1907 = vld [vmem:[%s245 + $0x318] sm:$0xff]
      %v1908 = vld [vmem:[%s245 + $0x320] sm:$0xff]
      %v1909 = vld [vmem:[%s245 + $0x328] sm:$0xff]
      %v1910 = vld [vmem:[%s245 + $0x330] sm:$0xff]
      %v1911 = vld [vmem:[%s245 + $0x338] sm:$0xff]
      %v1912 = vld [vmem:[%s245 + $0x340] sm:$0xff]
      %v1913 = vld [vmem:[%s245 + $0x348] sm:$0xff]
      %v1914 = vld [vmem:[%s245 + $0x350] sm:$0xff]
      %v1915 = vld [vmem:[%s245 + $0x358] sm:$0xff]
      %v1916 = vld [vmem:[%s245 + $0x360] sm:$0xff]
      %v1917 = vld [vmem:[%s245 + $0x368] sm:$0xff]
      %v1918 = vld [vmem:[%s245 + $0x370] sm:$0xff]
      %v1919 = vld [vmem:[%s245 + $0x378] sm:$0xff]
      %v1921 = vsel %vm276, %v1904, 0
      %v1924 = vsel %vm276, %v1905, 0
      %v1927 = vsel %vm276, %v1906, 0
      %v1930 = vsel %vm276, %v1907, 0
      %v1933 = vsel %vm276, %v1908, 0
      %v1936 = vsel %vm276, %v1909, 0
      %v1939 = vsel %vm276, %v1910, 0
      %v1942 = vsel %vm276, %v1911, 0
      %v1945 = vsel %vm276, %v1912, 0
      %v1948 = vsel %vm276, %v1913, 0
      %v1951 = vsel %vm276, %v1914, 0
      %v1954 = vsel %vm276, %v1915, 0
      %v1957 = vsel %vm276, %v1916, 0
      %v1960 = vsel %vm276, %v1917, 0
      %v1963 = vsel %vm276, %v1918, 0
      %v1966 = vsel %vm276, %v1919, 0
      %1968 = vmatprep.subr.mxu0 0.0
      %1969 = vmatpush1.msra.mxu0 0.0
      %1970 = vmatprep.subr.mxu0 0.0
      %1971 = vmatpush1.msra.mxu0 0.0
      %1972 = vmatprep.subr.mxu0 0.0
      %1973 = vmatpush1.msra.mxu0 0.0
      %1974 = vmatprep.subr.mxu0 0.0
      %1975 = vmatpush1.msra.mxu0 0.0
      %1976 = vmatprep.subr.mxu0 0.0
      %1977 = vmatpush1.msra.mxu0 0.0
      %1978 = vmatprep.subr.mxu0 0.0
      %1979 = vmatpush1.msra.mxu0 0.0
      %1980 = vmatprep.subr.mxu0 0.0
      %1981 = vmatpush1.msra.mxu0 0.0
      %1982 = vmatprep.subr.mxu0 0.0
      %1983 = vmatpush1.msra.mxu0 0.0
      %1984 = vmatprep.subr.mxu0 0.0
      %1985 = vmatpush1.msra.mxu0 0.0
      %1986 = vmatprep.subr.mxu0 0.0
      %1987 = vmatpush1.msra.mxu0 0.0
      %1988 = vmatprep.subr.mxu0 0.0
      %1989 = vmatpush1.msra.mxu0 0.0
      %1990 = vmatprep.subr.mxu0 0.0
      %1991 = vmatpush1.msra.mxu0 %v327
      %1992 = vmatprep.subr.mxu0 0.0
      %1993 = vmatpush1.msra.mxu0 %v254
      %1994 = vmatprep.subr.mxu0 0.0
      %1995 = vmatpush1.msra.mxu0 %v253
      %1996 = vmatprep.subr.mxu0 0.0
      %1997 = vmatpush1.msra.mxu0 %v252
      %1998 = vmatprep.subr.mxu0 0.0
      %1999 = vmatpush1.msra.mxu0 %v251
      %2000 = vmatprep.subr.mxu0 0.0
      %2001 = vmatpush2.msra.mxu0 0.0
      %2002 = vmatprep.subr.mxu0 0.0
      %2003 = vmatpush2.msra.mxu0 0.0
      %2004 = vmatprep.subr.mxu0 0.0
      %2005 = vmatpush2.msra.mxu0 0.0
      %2006 = vmatprep.subr.mxu0 0.0
      %2007 = vmatpush2.msra.mxu0 0.0
      %2008 = vmatprep.subr.mxu0 0.0
      %2009 = vmatpush2.msra.mxu0 0.0
      %2010 = vmatprep.subr.mxu0 0.0
      %2011 = vmatpush2.msra.mxu0 0.0
      %2012 = vmatprep.subr.mxu0 0.0
      %2013 = vmatpush2.msra.mxu0 0.0
      %2014 = vmatprep.subr.mxu0 0.0
      %2015 = vmatpush2.msra.mxu0 0.0
      %2016 = vmatprep.subr.mxu0 0.0
      %2017 = vmatpush2.msra.mxu0 0.0
      %2018 = vmatprep.subr.mxu0 0.0
      %2019 = vmatpush2.msra.mxu0 0.0
      %2020 = vmatprep.subr.mxu0 0.0
      %2021 = vmatpush2.msra.mxu0 0.0
      %2022 = vmatprep.subr.mxu0 0.0
      %2023 = vmatpush2.msra.mxu0 0.0
      %2024 = vmatprep.subr.mxu0 0.0
      %2025 = vmatpush2.msra.mxu0 0.0
      %2026 = vmatprep.subr.mxu0 0.0
      %2027 = vmatpush2.msra.mxu0 0.0
      %2028 = vmatprep.subr.mxu0 0.0
      %2029 = vmatpush2.msra.mxu0 0.0
      %2030 = vmatprep.subr.mxu0 0.0
      %2031 = vmatpush2.msra.mxu0 0.0
      %2032 = vmatprep.mubr.f32.mxu0 0.0
      %2033 = vmatmul.mubr.f32.gmra.mxu0 %v1921
      %v2034 = vpop.f32.mrf.mxu0
      %v2035 = vadd.f32 %v275, %v2034
      %v2036 = vpop.f32.mrf.mxu0
      %2037 = vmatprep.mubr.f32.mxu0 0.0
      %2038 = vmatmul.mubr.f32.gmra.mxu0 %v1924
      %v2039 = vpop.f32.mrf.mxu0
      %v2040 = vadd.f32 %v275, %v2039
      %v2041 = vpop.f32.mrf.mxu0
      %2042 = vmatprep.mubr.f32.mxu0 0.0
      %2043 = vmatmul.mubr.f32.gmra.mxu0 %v1927
      %v2044 = vpop.f32.mrf.mxu0
      %v2045 = vadd.f32 %v275, %v2044
      %v2046 = vpop.f32.mrf.mxu0
      %2047 = vmatprep.mubr.f32.mxu0 0.0
      %2048 = vmatmul.mubr.f32.gmra.mxu0 %v1930
      %v2049 = vpop.f32.mrf.mxu0
      %v2050 = vadd.f32 %v275, %v2049
      %v2051 = vpop.f32.mrf.mxu0
      %2052 = vmatprep.mubr.f32.mxu0 0.0
      %2053 = vmatmul.mubr.f32.gmra.mxu0 %v1933
      %v2054 = vpop.f32.mrf.mxu0
      %v2055 = vadd.f32 %v275, %v2054
      %v2056 = vpop.f32.mrf.mxu0
      %2057 = vmatprep.mubr.f32.mxu0 0.0
      %2058 = vmatmul.mubr.f32.gmra.mxu0 %v1936
      %v2059 = vpop.f32.mrf.mxu0
      %v2060 = vadd.f32 %v275, %v2059
      %v2061 = vpop.f32.mrf.mxu0
      %2062 = vmatprep.mubr.f32.mxu0 0.0
      %2063 = vmatmul.mubr.f32.gmra.mxu0 %v1939
      %v2064 = vpop.f32.mrf.mxu0
      %v2065 = vadd.f32 %v275, %v2064
      %v2066 = vpop.f32.mrf.mxu0
      %2067 = vmatprep.mubr.f32.mxu0 0.0
      %2068 = vmatmul.mubr.f32.gmra.mxu0 %v1942
      %v2069 = vpop.f32.mrf.mxu0
      %v2070 = vadd.f32 %v275, %v2069
      %v2071 = vpop.f32.mrf.mxu0
      %2072 = vmatprep.mubr.f32.mxu0 0.0
      %2073 = vmatmul.mubr.f32.gmra.mxu0 %v1945
      %v2074 = vpop.f32.mrf.mxu0
      %v2075 = vadd.f32 %v275, %v2074
      %v2076 = vpop.f32.mrf.mxu0
      %2077 = vmatprep.mubr.f32.mxu0 0.0
      %2078 = vmatmul.mubr.f32.gmra.mxu0 %v1948
      %v2079 = vpop.f32.mrf.mxu0
      %v2080 = vadd.f32 %v275, %v2079
      %v2081 = vpop.f32.mrf.mxu0
      %2082 = vmatprep.mubr.f32.mxu0 0.0
      %2083 = vmatmul.mubr.f32.gmra.mxu0 %v1951
      %v2084 = vpop.f32.mrf.mxu0
      %v2085 = vadd.f32 %v275, %v2084
      %v2086 = vpop.f32.mrf.mxu0
      %2087 = vmatprep.mubr.f32.mxu0 0.0
      %2088 = vmatmul.mubr.f32.gmra.mxu0 %v1954
      %v2089 = vpop.f32.mrf.mxu0
      %v2090 = vadd.f32 %v275, %v2089
      %v2091 = vpop.f32.mrf.mxu0
      %2092 = vmatprep.mubr.f32.mxu0 0.0
      %2093 = vmatmul.mubr.f32.gmra.mxu0 %v1957
      %v2094 = vpop.f32.mrf.mxu0
      %v2095 = vadd.f32 %v275, %v2094
      %v2096 = vpop.f32.mrf.mxu0
      %2097 = vmatprep.mubr.f32.mxu0 0.0
      %2098 = vmatmul.mubr.f32.gmra.mxu0 %v1960
      %v2099 = vpop.f32.mrf.mxu0
      %v2100 = vadd.f32 %v275, %v2099
      %v2101 = vpop.f32.mrf.mxu0
      %2102 = vmatprep.mubr.f32.mxu0 0.0
      %2103 = vmatmul.mubr.f32.gmra.mxu0 %v1963
      %v2104 = vpop.f32.mrf.mxu0
      %v2105 = vadd.f32 %v275, %v2104
      %v2106 = vpop.f32.mrf.mxu0
      %2107 = vmatprep.mubr.f32.mxu0 0.0
      %2108 = vmatmul.mubr.f32.gmra.mxu0 %v1966
      %v2109 = vpop.f32.mrf.mxu0
      %v2110 = vadd.f32 %v275, %v2109
      %v2111 = vpop.f32.mrf.mxu0
      %2112 = vdwg.mxu0
      %vm2113 = vcmp.ge.f32.partialorder %v2035, 0.0
      %vm2114 = vcmp.ge.f32.partialorder %v2040, 0.0
      %vm2115 = vcmp.ge.f32.partialorder %v2045, 0.0
      %vm2116 = vcmp.ge.f32.partialorder %v2050, 0.0
      %vm2117 = vcmp.ge.f32.partialorder %v2055, 0.0
      %vm2118 = vcmp.ge.f32.partialorder %v2060, 0.0
      %vm2119 = vcmp.ge.f32.partialorder %v2065, 0.0
      %vm2120 = vcmp.ge.f32.partialorder %v2070, 0.0
      %vm2121 = vcmp.ge.f32.partialorder %v2075, 0.0
      %vm2122 = vcmp.ge.f32.partialorder %v2080, 0.0
      %vm2123 = vcmp.ge.f32.partialorder %v2085, 0.0
      %vm2124 = vcmp.ge.f32.partialorder %v2090, 0.0
      %vm2125 = vcmp.ge.f32.partialorder %v2095, 0.0
      %vm2126 = vcmp.ge.f32.partialorder %v2100, 0.0
      %vm2127 = vcmp.ge.f32.partialorder %v2105, 0.0
      %vm2128 = vcmp.ge.f32.partialorder %v2110, 0.0
      %v2129 = vmul.f32 %v2035, 0.01
      %v2130 = vmul.f32 %v2040, 0.01
      %v2131 = vmul.f32 %v2045, 0.01
      %v2132 = vmul.f32 %v2050, 0.01
      %v2133 = vmul.f32 %v2055, 0.01
      %v2134 = vmul.f32 %v2060, 0.01
      %v2135 = vmul.f32 %v2065, 0.01
      %v2136 = vmul.f32 %v2070, 0.01
      %v2137 = vmul.f32 %v2075, 0.01
      %v2138 = vmul.f32 %v2080, 0.01
      %v2139 = vmul.f32 %v2085, 0.01
      %v2140 = vmul.f32 %v2090, 0.01
      %v2141 = vmul.f32 %v2095, 0.01
      %v2142 = vmul.f32 %v2100, 0.01
      %v2143 = vmul.f32 %v2105, 0.01
      %v2144 = vmul.f32 %v2110, 0.01
      %v2145 = vsel %vm2113, %v2035, %v2129
      %v2146 = vsel %vm2114, %v2040, %v2130
      %v2147 = vsel %vm2115, %v2045, %v2131
      %v2148 = vsel %vm2116, %v2050, %v2132
      %v2149 = vsel %vm2117, %v2055, %v2133
      %v2150 = vsel %vm2118, %v2060, %v2134
      %v2151 = vsel %vm2119, %v2065, %v2135
      %v2152 = vsel %vm2120, %v2070, %v2136
      %v2153 = vsel %vm2121, %v2075, %v2137
      %v2154 = vsel %vm2122, %v2080, %v2138
      %v2155 = vsel %vm2123, %v2085, %v2139
      %v2156 = vsel %vm2124, %v2090, %v2140
      %v2157 = vsel %vm2125, %v2095, %v2141
      %v2158 = vsel %vm2126, %v2100, %v2142
      %v2159 = vsel %vm2127, %v2105, %v2143
      %v2160 = vsel %vm2128, %v2110, %v2144
      %2161 = vst.msk [vmem:[#allocation2 + $0x300] sm:$0xff] %vm522, %v2145
      %2162 = vst.msk [vmem:[#allocation2 + $0x308] sm:$0xff] %vm522, %v2146
      %2163 = vst.msk [vmem:[#allocation2 + $0x310] sm:$0xff] %vm522, %v2147
      %2164 = vst.msk [vmem:[#allocation2 + $0x318] sm:$0xff] %vm522, %v2148
      %2165 = vst.msk [vmem:[#allocation2 + $0x320] sm:$0xff] %vm522, %v2149
      %2166 = vst.msk [vmem:[#allocation2 + $0x328] sm:$0xff] %vm522, %v2150
      %2167 = vst.msk [vmem:[#allocation2 + $0x330] sm:$0xff] %vm522, %v2151
      %2168 = vst.msk [vmem:[#allocation2 + $0x338] sm:$0xff] %vm522, %v2152
      %2169 = vst.msk [vmem:[#allocation2 + $0x340] sm:$0xff] %vm522, %v2153
      %2170 = vst.msk [vmem:[#allocation2 + $0x348] sm:$0xff] %vm522, %v2154
      %2171 = vst.msk [vmem:[#allocation2 + $0x350] sm:$0xff] %vm522, %v2155
      %2172 = vst.msk [vmem:[#allocation2 + $0x358] sm:$0xff] %vm522, %v2156
      %2173 = vst.msk [vmem:[#allocation2 + $0x360] sm:$0xff] %vm522, %v2157
      %2174 = vst.msk [vmem:[#allocation2 + $0x368] sm:$0xff] %vm522, %v2158
      %2175 = vst.msk [vmem:[#allocation2 + $0x370] sm:$0xff] %vm522, %v2159
      %2176 = vst.msk [vmem:[#allocation2 + $0x378] sm:$0xff] %vm522, %v2160
      %v2177 = vld [vmem:[%s245 + $0x380] sm:$0xff]
      %v2178 = vld [vmem:[%s245 + $0x388] sm:$0xff]
      %v2179 = vld [vmem:[%s245 + $0x390] sm:$0xff]
      %v2180 = vld [vmem:[%s245 + $0x398] sm:$0xff]
      %v2181 = vld [vmem:[%s245 + $0x3a0] sm:$0xff]
      %v2182 = vld [vmem:[%s245 + $0x3a8] sm:$0xff]
      %v2183 = vld [vmem:[%s245 + $0x3b0] sm:$0xff]
      %v2184 = vld [vmem:[%s245 + $0x3b8] sm:$0xff]
      %v2185 = vld [vmem:[%s245 + $0x3c0] sm:$0xff]
      %v2186 = vld [vmem:[%s245 + $0x3c8] sm:$0xff]
      %v2187 = vld [vmem:[%s245 + $0x3d0] sm:$0xff]
      %v2188 = vld [vmem:[%s245 + $0x3d8] sm:$0xff]
      %v2189 = vld [vmem:[%s245 + $0x3e0] sm:$0xff]
      %v2190 = vld [vmem:[%s245 + $0x3e8] sm:$0xff]
      %v2191 = vld [vmem:[%s245 + $0x3f0] sm:$0xff]
      %v2192 = vld [vmem:[%s245 + $0x3f8] sm:$0xff]
      %v2194 = vsel %vm276, %v2177, 0
      %v2197 = vsel %vm276, %v2178, 0
      %v2200 = vsel %vm276, %v2179, 0
      %v2203 = vsel %vm276, %v2180, 0
      %v2206 = vsel %vm276, %v2181, 0
      %v2209 = vsel %vm276, %v2182, 0
      %v2212 = vsel %vm276, %v2183, 0
      %v2215 = vsel %vm276, %v2184, 0
      %v2218 = vsel %vm276, %v2185, 0
      %v2221 = vsel %vm276, %v2186, 0
      %v2224 = vsel %vm276, %v2187, 0
      %v2227 = vsel %vm276, %v2188, 0
      %v2230 = vsel %vm276, %v2189, 0
      %v2233 = vsel %vm276, %v2190, 0
      %v2236 = vsel %vm276, %v2191, 0
      %v2239 = vsel %vm276, %v2192, 0
      %2241 = vmatprep.subr.mxu0 0.0
      %2242 = vmatpush1.msra.mxu0 0.0
      %2243 = vmatprep.subr.mxu0 0.0
      %2244 = vmatpush1.msra.mxu0 0.0
      %2245 = vmatprep.subr.mxu0 0.0
      %2246 = vmatpush1.msra.mxu0 0.0
      %2247 = vmatprep.subr.mxu0 0.0
      %2248 = vmatpush1.msra.mxu0 0.0
      %2249 = vmatprep.subr.mxu0 0.0
      %2250 = vmatpush1.msra.mxu0 0.0
      %2251 = vmatprep.subr.mxu0 0.0
      %2252 = vmatpush1.msra.mxu0 0.0
      %2253 = vmatprep.subr.mxu0 0.0
      %2254 = vmatpush1.msra.mxu0 0.0
      %2255 = vmatprep.subr.mxu0 0.0
      %2256 = vmatpush1.msra.mxu0 0.0
      %2257 = vmatprep.subr.mxu0 0.0
      %2258 = vmatpush1.msra.mxu0 0.0
      %2259 = vmatprep.subr.mxu0 0.0
      %2260 = vmatpush1.msra.mxu0 0.0
      %2261 = vmatprep.subr.mxu0 0.0
      %2262 = vmatpush1.msra.mxu0 0.0
      %2263 = vmatprep.subr.mxu0 0.0
      %2264 = vmatpush1.msra.mxu0 %v327
      %2265 = vmatprep.subr.mxu0 0.0
      %2266 = vmatpush1.msra.mxu0 %v254
      %2267 = vmatprep.subr.mxu0 0.0
      %2268 = vmatpush1.msra.mxu0 %v253
      %2269 = vmatprep.subr.mxu0 0.0
      %2270 = vmatpush1.msra.mxu0 %v252
      %2271 = vmatprep.subr.mxu0 0.0
      %2272 = vmatpush1.msra.mxu0 %v251
      %2273 = vmatprep.subr.mxu0 0.0
      %2274 = vmatpush2.msra.mxu0 0.0
      %2275 = vmatprep.subr.mxu0 0.0
      %2276 = vmatpush2.msra.mxu0 0.0
      %2277 = vmatprep.subr.mxu0 0.0
      %2278 = vmatpush2.msra.mxu0 0.0
      %2279 = vmatprep.subr.mxu0 0.0
      %2280 = vmatpush2.msra.mxu0 0.0
      %2281 = vmatprep.subr.mxu0 0.0
      %2282 = vmatpush2.msra.mxu0 0.0
      %2283 = vmatprep.subr.mxu0 0.0
      %2284 = vmatpush2.msra.mxu0 0.0
      %2285 = vmatprep.subr.mxu0 0.0
      %2286 = vmatpush2.msra.mxu0 0.0
      %2287 = vmatprep.subr.mxu0 0.0
      %2288 = vmatpush2.msra.mxu0 0.0
      %2289 = vmatprep.subr.mxu0 0.0
      %2290 = vmatpush2.msra.mxu0 0.0
      %2291 = vmatprep.subr.mxu0 0.0
      %2292 = vmatpush2.msra.mxu0 0.0
      %2293 = vmatprep.subr.mxu0 0.0
      %2294 = vmatpush2.msra.mxu0 0.0
      %2295 = vmatprep.subr.mxu0 0.0
      %2296 = vmatpush2.msra.mxu0 0.0
      %2297 = vmatprep.subr.mxu0 0.0
      %2298 = vmatpush2.msra.mxu0 0.0
      %2299 = vmatprep.subr.mxu0 0.0
      %2300 = vmatpush2.msra.mxu0 0.0
      %2301 = vmatprep.subr.mxu0 0.0
      %2302 = vmatpush2.msra.mxu0 0.0
      %2303 = vmatprep.subr.mxu0 0.0
      %2304 = vmatpush2.msra.mxu0 0.0
      %2305 = vmatprep.mubr.f32.mxu0 0.0
      %2306 = vmatmul.mubr.f32.gmra.mxu0 %v2194
      %v2307 = vpop.f32.mrf.mxu0
      %v2308 = vadd.f32 %v275, %v2307
      %v2309 = vpop.f32.mrf.mxu0
      %2310 = vmatprep.mubr.f32.mxu0 0.0
      %2311 = vmatmul.mubr.f32.gmra.mxu0 %v2197
      %v2312 = vpop.f32.mrf.mxu0
      %v2313 = vadd.f32 %v275, %v2312
      %v2314 = vpop.f32.mrf.mxu0
      %2315 = vmatprep.mubr.f32.mxu0 0.0
      %2316 = vmatmul.mubr.f32.gmra.mxu0 %v2200
      %v2317 = vpop.f32.mrf.mxu0
      %v2318 = vadd.f32 %v275, %v2317
      %v2319 = vpop.f32.mrf.mxu0
      %2320 = vmatprep.mubr.f32.mxu0 0.0
      %2321 = vmatmul.mubr.f32.gmra.mxu0 %v2203
      %v2322 = vpop.f32.mrf.mxu0
      %v2323 = vadd.f32 %v275, %v2322
      %v2324 = vpop.f32.mrf.mxu0
      %2325 = vmatprep.mubr.f32.mxu0 0.0
      %2326 = vmatmul.mubr.f32.gmra.mxu0 %v2206
      %v2327 = vpop.f32.mrf.mxu0
      %v2328 = vadd.f32 %v275, %v2327
      %v2329 = vpop.f32.mrf.mxu0
      %2330 = vmatprep.mubr.f32.mxu0 0.0
      %2331 = vmatmul.mubr.f32.gmra.mxu0 %v2209
      %v2332 = vpop.f32.mrf.mxu0
      %v2333 = vadd.f32 %v275, %v2332
      %v2334 = vpop.f32.mrf.mxu0
      %2335 = vmatprep.mubr.f32.mxu0 0.0
      %2336 = vmatmul.mubr.f32.gmra.mxu0 %v2212
      %v2337 = vpop.f32.mrf.mxu0
      %v2338 = vadd.f32 %v275, %v2337
      %v2339 = vpop.f32.mrf.mxu0
      %2340 = vmatprep.mubr.f32.mxu0 0.0
      %2341 = vmatmul.mubr.f32.gmra.mxu0 %v2215
      %v2342 = vpop.f32.mrf.mxu0
      %v2343 = vadd.f32 %v275, %v2342
      %v2344 = vpop.f32.mrf.mxu0
      %2345 = vmatprep.mubr.f32.mxu0 0.0
      %2346 = vmatmul.mubr.f32.gmra.mxu0 %v2218
      %v2347 = vpop.f32.mrf.mxu0
      %v2348 = vadd.f32 %v275, %v2347
      %v2349 = vpop.f32.mrf.mxu0
      %2350 = vmatprep.mubr.f32.mxu0 0.0
      %2351 = vmatmul.mubr.f32.gmra.mxu0 %v2221
      %v2352 = vpop.f32.mrf.mxu0
      %v2353 = vadd.f32 %v275, %v2352
      %v2354 = vpop.f32.mrf.mxu0
      %2355 = vmatprep.mubr.f32.mxu0 0.0
      %2356 = vmatmul.mubr.f32.gmra.mxu0 %v2224
      %v2357 = vpop.f32.mrf.mxu0
      %v2358 = vadd.f32 %v275, %v2357
      %v2359 = vpop.f32.mrf.mxu0
      %2360 = vmatprep.mubr.f32.mxu0 0.0
      %2361 = vmatmul.mubr.f32.gmra.mxu0 %v2227
      %v2362 = vpop.f32.mrf.mxu0
      %v2363 = vadd.f32 %v275, %v2362
      %v2364 = vpop.f32.mrf.mxu0
      %2365 = vmatprep.mubr.f32.mxu0 0.0
      %2366 = vmatmul.mubr.f32.gmra.mxu0 %v2230
      %v2367 = vpop.f32.mrf.mxu0
      %v2368 = vadd.f32 %v275, %v2367
      %v2369 = vpop.f32.mrf.mxu0
      %2370 = vmatprep.mubr.f32.mxu0 0.0
      %2371 = vmatmul.mubr.f32.gmra.mxu0 %v2233
      %v2372 = vpop.f32.mrf.mxu0
      %v2373 = vadd.f32 %v275, %v2372
      %v2374 = vpop.f32.mrf.mxu0
      %2375 = vmatprep.mubr.f32.mxu0 0.0
      %2376 = vmatmul.mubr.f32.gmra.mxu0 %v2236
      %v2377 = vpop.f32.mrf.mxu0
      %v2378 = vadd.f32 %v275, %v2377
      %v2379 = vpop.f32.mrf.mxu0
      %2380 = vmatprep.mubr.f32.mxu0 0.0
      %2381 = vmatmul.mubr.f32.gmra.mxu0 %v2239
      %v2382 = vpop.f32.mrf.mxu0
      %v2383 = vadd.f32 %v275, %v2382
      %v2384 = vpop.f32.mrf.mxu0
      %2385 = vdwg.mxu0
      %vm2386 = vcmp.ge.f32.partialorder %v2308, 0.0
      %vm2387 = vcmp.ge.f32.partialorder %v2313, 0.0
      %vm2388 = vcmp.ge.f32.partialorder %v2318, 0.0
      %vm2389 = vcmp.ge.f32.partialorder %v2323, 0.0
      %vm2390 = vcmp.ge.f32.partialorder %v2328, 0.0
      %vm2391 = vcmp.ge.f32.partialorder %v2333, 0.0
      %vm2392 = vcmp.ge.f32.partialorder %v2338, 0.0
      %vm2393 = vcmp.ge.f32.partialorder %v2343, 0.0
      %vm2394 = vcmp.ge.f32.partialorder %v2348, 0.0
      %vm2395 = vcmp.ge.f32.partialorder %v2353, 0.0
      %vm2396 = vcmp.ge.f32.partialorder %v2358, 0.0
      %vm2397 = vcmp.ge.f32.partialorder %v2363, 0.0
      %vm2398 = vcmp.ge.f32.partialorder %v2368, 0.0
      %vm2399 = vcmp.ge.f32.partialorder %v2373, 0.0
      %vm2400 = vcmp.ge.f32.partialorder %v2378, 0.0
      %vm2401 = vcmp.ge.f32.partialorder %v2383, 0.0
      %v2402 = vmul.f32 %v2308, 0.01
      %v2403 = vmul.f32 %v2313, 0.01
      %v2404 = vmul.f32 %v2318, 0.01
      %v2405 = vmul.f32 %v2323, 0.01
      %v2406 = vmul.f32 %v2328, 0.01
      %v2407 = vmul.f32 %v2333, 0.01
      %v2408 = vmul.f32 %v2338, 0.01
      %v2409 = vmul.f32 %v2343, 0.01
      %v2410 = vmul.f32 %v2348, 0.01
      %v2411 = vmul.f32 %v2353, 0.01
      %v2412 = vmul.f32 %v2358, 0.01
      %v2413 = vmul.f32 %v2363, 0.01
      %v2414 = vmul.f32 %v2368, 0.01
      %v2415 = vmul.f32 %v2373, 0.01
      %v2416 = vmul.f32 %v2378, 0.01
      %v2417 = vmul.f32 %v2383, 0.01
      %v2418 = vsel %vm2386, %v2308, %v2402
      %v2419 = vsel %vm2387, %v2313, %v2403
      %v2420 = vsel %vm2388, %v2318, %v2404
      %v2421 = vsel %vm2389, %v2323, %v2405
      %v2422 = vsel %vm2390, %v2328, %v2406
      %v2423 = vsel %vm2391, %v2333, %v2407
      %v2424 = vsel %vm2392, %v2338, %v2408
      %v2425 = vsel %vm2393, %v2343, %v2409
      %v2426 = vsel %vm2394, %v2348, %v2410
      %v2427 = vsel %vm2395, %v2353, %v2411
      %v2428 = vsel %vm2396, %v2358, %v2412
      %v2429 = vsel %vm2397, %v2363, %v2413
      %v2430 = vsel %vm2398, %v2368, %v2414
      %v2431 = vsel %vm2399, %v2373, %v2415
      %v2432 = vsel %vm2400, %v2378, %v2416
      %v2433 = vsel %vm2401, %v2383, %v2417
      %2434 = vst.msk [vmem:[#allocation2 + $0x380] sm:$0xff] %vm522, %v2418
      %2435 = vst.msk [vmem:[#allocation2 + $0x388] sm:$0xff] %vm522, %v2419
      %2436 = vst.msk [vmem:[#allocation2 + $0x390] sm:$0xff] %vm522, %v2420
      %2437 = vst.msk [vmem:[#allocation2 + $0x398] sm:$0xff] %vm522, %v2421
      %2438 = vst.msk [vmem:[#allocation2 + $0x3a0] sm:$0xff] %vm522, %v2422
      %2439 = vst.msk [vmem:[#allocation2 + $0x3a8] sm:$0xff] %vm522, %v2423
      %2440 = vst.msk [vmem:[#allocation2 + $0x3b0] sm:$0xff] %vm522, %v2424
      %2441 = vst.msk [vmem:[#allocation2 + $0x3b8] sm:$0xff] %vm522, %v2425
      %2442 = vst.msk [vmem:[#allocation2 + $0x3c0] sm:$0xff] %vm522, %v2426
      %2443 = vst.msk [vmem:[#allocation2 + $0x3c8] sm:$0xff] %vm522, %v2427
      %2444 = vst.msk [vmem:[#allocation2 + $0x3d0] sm:$0xff] %vm522, %v2428
      %2445 = vst.msk [vmem:[#allocation2 + $0x3d8] sm:$0xff] %vm522, %v2429
      %2446 = vst.msk [vmem:[#allocation2 + $0x3e0] sm:$0xff] %vm522, %v2430
      %2447 = vst.msk [vmem:[#allocation2 + $0x3e8] sm:$0xff] %vm522, %v2431
      %2448 = vst.msk [vmem:[#allocation2 + $0x3f0] sm:$0xff] %vm522, %v2432
      %2449 = vst.msk [vmem:[#allocation2 + $0x3f8] sm:$0xff] %vm522, %v2433
      %v2450 = vld [vmem:[%s245 + $0x400] sm:$0xff]
      %v2451 = vld [vmem:[%s245 + $0x408] sm:$0xff]
      %v2452 = vld [vmem:[%s245 + $0x410] sm:$0xff]
      %v2453 = vld [vmem:[%s245 + $0x418] sm:$0xff]
      %v2454 = vld [vmem:[%s245 + $0x420] sm:$0xff]
      %v2455 = vld [vmem:[%s245 + $0x428] sm:$0xff]
      %v2456 = vld [vmem:[%s245 + $0x430] sm:$0xff]
      %v2457 = vld [vmem:[%s245 + $0x438] sm:$0xff]
      %v2458 = vld [vmem:[%s245 + $0x440] sm:$0xff]
      %v2459 = vld [vmem:[%s245 + $0x448] sm:$0xff]
      %v2460 = vld [vmem:[%s245 + $0x450] sm:$0xff]
      %v2461 = vld [vmem:[%s245 + $0x458] sm:$0xff]
      %v2462 = vld [vmem:[%s245 + $0x460] sm:$0xff]
      %v2463 = vld [vmem:[%s245 + $0x468] sm:$0xff]
      %v2464 = vld [vmem:[%s245 + $0x470] sm:$0xff]
      %v2465 = vld [vmem:[%s245 + $0x478] sm:$0xff]
      %v2467 = vsel %vm276, %v2450, 0
      %v2470 = vsel %vm276, %v2451, 0
      %v2473 = vsel %vm276, %v2452, 0
      %v2476 = vsel %vm276, %v2453, 0
      %v2479 = vsel %vm276, %v2454, 0
      %v2482 = vsel %vm276, %v2455, 0
      %v2485 = vsel %vm276, %v2456, 0
      %v2488 = vsel %vm276, %v2457, 0
      %v2491 = vsel %vm276, %v2458, 0
      %v2494 = vsel %vm276, %v2459, 0
      %v2497 = vsel %vm276, %v2460, 0
      %v2500 = vsel %vm276, %v2461, 0
      %v2503 = vsel %vm276, %v2462, 0
      %v2506 = vsel %vm276, %v2463, 0
      %v2509 = vsel %vm276, %v2464, 0
      %v2512 = vsel %vm276, %v2465, 0
      %2514 = vmatprep.subr.mxu0 0.0
      %2515 = vmatpush1.msra.mxu0 0.0
      %2516 = vmatprep.subr.mxu0 0.0
      %2517 = vmatpush1.msra.mxu0 0.0
      %2518 = vmatprep.subr.mxu0 0.0
      %2519 = vmatpush1.msra.mxu0 0.0
      %2520 = vmatprep.subr.mxu0 0.0
      %2521 = vmatpush1.msra.mxu0 0.0
      %2522 = vmatprep.subr.mxu0 0.0
      %2523 = vmatpush1.msra.mxu0 0.0
      %2524 = vmatprep.subr.mxu0 0.0
      %2525 = vmatpush1.msra.mxu0 0.0
      %2526 = vmatprep.subr.mxu0 0.0
      %2527 = vmatpush1.msra.mxu0 0.0
      %2528 = vmatprep.subr.mxu0 0.0
      %2529 = vmatpush1.msra.mxu0 0.0
      %2530 = vmatprep.subr.mxu0 0.0
      %2531 = vmatpush1.msra.mxu0 0.0
      %2532 = vmatprep.subr.mxu0 0.0
      %2533 = vmatpush1.msra.mxu0 0.0
      %2534 = vmatprep.subr.mxu0 0.0
      %2535 = vmatpush1.msra.mxu0 0.0
      %2536 = vmatprep.subr.mxu0 0.0
      %2537 = vmatpush1.msra.mxu0 %v327
      %2538 = vmatprep.subr.mxu0 0.0
      %2539 = vmatpush1.msra.mxu0 %v254
      %2540 = vmatprep.subr.mxu0 0.0
      %2541 = vmatpush1.msra.mxu0 %v253
      %2542 = vmatprep.subr.mxu0 0.0
      %2543 = vmatpush1.msra.mxu0 %v252
      %2544 = vmatprep.subr.mxu0 0.0
      %2545 = vmatpush1.msra.mxu0 %v251
      %2546 = vmatprep.subr.mxu0 0.0
      %2547 = vmatpush2.msra.mxu0 0.0
      %2548 = vmatprep.subr.mxu0 0.0
      %2549 = vmatpush2.msra.mxu0 0.0
      %2550 = vmatprep.subr.mxu0 0.0
      %2551 = vmatpush2.msra.mxu0 0.0
      %2552 = vmatprep.subr.mxu0 0.0
      %2553 = vmatpush2.msra.mxu0 0.0
      %2554 = vmatprep.subr.mxu0 0.0
      %2555 = vmatpush2.msra.mxu0 0.0
      %2556 = vmatprep.subr.mxu0 0.0
      %2557 = vmatpush2.msra.mxu0 0.0
      %2558 = vmatprep.subr.mxu0 0.0
      %2559 = vmatpush2.msra.mxu0 0.0
      %2560 = vmatprep.subr.mxu0 0.0
      %2561 = vmatpush2.msra.mxu0 0.0
      %2562 = vmatprep.subr.mxu0 0.0
      %2563 = vmatpush2.msra.mxu0 0.0
      %2564 = vmatprep.subr.mxu0 0.0
      %2565 = vmatpush2.msra.mxu0 0.0
      %2566 = vmatprep.subr.mxu0 0.0
      %2567 = vmatpush2.msra.mxu0 0.0
      %2568 = vmatprep.subr.mxu0 0.0
      %2569 = vmatpush2.msra.mxu0 0.0
      %2570 = vmatprep.subr.mxu0 0.0
      %2571 = vmatpush2.msra.mxu0 0.0
      %2572 = vmatprep.subr.mxu0 0.0
      %2573 = vmatpush2.msra.mxu0 0.0
      %2574 = vmatprep.subr.mxu0 0.0
      %2575 = vmatpush2.msra.mxu0 0.0
      %2576 = vmatprep.subr.mxu0 0.0
      %2577 = vmatpush2.msra.mxu0 0.0
      %2578 = vmatprep.mubr.f32.mxu0 0.0
      %2579 = vmatmul.mubr.f32.gmra.mxu0 %v2467
      %v2580 = vpop.f32.mrf.mxu0
      %v2581 = vadd.f32 %v275, %v2580
      %v2582 = vpop.f32.mrf.mxu0
      %2583 = vmatprep.mubr.f32.mxu0 0.0
      %2584 = vmatmul.mubr.f32.gmra.mxu0 %v2470
      %v2585 = vpop.f32.mrf.mxu0
      %v2586 = vadd.f32 %v275, %v2585
      %v2587 = vpop.f32.mrf.mxu0
      %2588 = vmatprep.mubr.f32.mxu0 0.0
      %2589 = vmatmul.mubr.f32.gmra.mxu0 %v2473
      %v2590 = vpop.f32.mrf.mxu0
      %v2591 = vadd.f32 %v275, %v2590
      %v2592 = vpop.f32.mrf.mxu0
      %2593 = vmatprep.mubr.f32.mxu0 0.0
      %2594 = vmatmul.mubr.f32.gmra.mxu0 %v2476
      %v2595 = vpop.f32.mrf.mxu0
      %v2596 = vadd.f32 %v275, %v2595
      %v2597 = vpop.f32.mrf.mxu0
      %2598 = vmatprep.mubr.f32.mxu0 0.0
      %2599 = vmatmul.mubr.f32.gmra.mxu0 %v2479
      %v2600 = vpop.f32.mrf.mxu0
      %v2601 = vadd.f32 %v275, %v2600
      %v2602 = vpop.f32.mrf.mxu0
      %2603 = vmatprep.mubr.f32.mxu0 0.0
      %2604 = vmatmul.mubr.f32.gmra.mxu0 %v2482
      %v2605 = vpop.f32.mrf.mxu0
      %v2606 = vadd.f32 %v275, %v2605
      %v2607 = vpop.f32.mrf.mxu0
      %2608 = vmatprep.mubr.f32.mxu0 0.0
      %2609 = vmatmul.mubr.f32.gmra.mxu0 %v2485
      %v2610 = vpop.f32.mrf.mxu0
      %v2611 = vadd.f32 %v275, %v2610
      %v2612 = vpop.f32.mrf.mxu0
      %2613 = vmatprep.mubr.f32.mxu0 0.0
      %2614 = vmatmul.mubr.f32.gmra.mxu0 %v2488
      %v2615 = vpop.f32.mrf.mxu0
      %v2616 = vadd.f32 %v275, %v2615
      %v2617 = vpop.f32.mrf.mxu0
      %2618 = vmatprep.mubr.f32.mxu0 0.0
      %2619 = vmatmul.mubr.f32.gmra.mxu0 %v2491
      %v2620 = vpop.f32.mrf.mxu0
      %v2621 = vadd.f32 %v275, %v2620
      %v2622 = vpop.f32.mrf.mxu0
      %2623 = vmatprep.mubr.f32.mxu0 0.0
      %2624 = vmatmul.mubr.f32.gmra.mxu0 %v2494
      %v2625 = vpop.f32.mrf.mxu0
      %v2626 = vadd.f32 %v275, %v2625
      %v2627 = vpop.f32.mrf.mxu0
      %2628 = vmatprep.mubr.f32.mxu0 0.0
      %2629 = vmatmul.mubr.f32.gmra.mxu0 %v2497
      %v2630 = vpop.f32.mrf.mxu0
      %v2631 = vadd.f32 %v275, %v2630
      %v2632 = vpop.f32.mrf.mxu0
      %2633 = vmatprep.mubr.f32.mxu0 0.0
      %2634 = vmatmul.mubr.f32.gmra.mxu0 %v2500
      %v2635 = vpop.f32.mrf.mxu0
      %v2636 = vadd.f32 %v275, %v2635
      %v2637 = vpop.f32.mrf.mxu0
      %2638 = vmatprep.mubr.f32.mxu0 0.0
      %2639 = vmatmul.mubr.f32.gmra.mxu0 %v2503
      %v2640 = vpop.f32.mrf.mxu0
      %v2641 = vadd.f32 %v275, %v2640
      %v2642 = vpop.f32.mrf.mxu0
      %2643 = vmatprep.mubr.f32.mxu0 0.0
      %2644 = vmatmul.mubr.f32.gmra.mxu0 %v2506
      %v2645 = vpop.f32.mrf.mxu0
      %v2646 = vadd.f32 %v275, %v2645
      %v2647 = vpop.f32.mrf.mxu0
      %2648 = vmatprep.mubr.f32.mxu0 0.0
      %2649 = vmatmul.mubr.f32.gmra.mxu0 %v2509
      %v2650 = vpop.f32.mrf.mxu0
      %v2651 = vadd.f32 %v275, %v2650
      %v2652 = vpop.f32.mrf.mxu0
      %2653 = vmatprep.mubr.f32.mxu0 0.0
      %2654 = vmatmul.mubr.f32.gmra.mxu0 %v2512
      %v2655 = vpop.f32.mrf.mxu0
      %v2656 = vadd.f32 %v275, %v2655
      %v2657 = vpop.f32.mrf.mxu0
      %2658 = vdwg.mxu0
      %vm2659 = vcmp.ge.f32.partialorder %v2581, 0.0
      %vm2660 = vcmp.ge.f32.partialorder %v2586, 0.0
      %vm2661 = vcmp.ge.f32.partialorder %v2591, 0.0
      %vm2662 = vcmp.ge.f32.partialorder %v2596, 0.0
      %vm2663 = vcmp.ge.f32.partialorder %v2601, 0.0
      %vm2664 = vcmp.ge.f32.partialorder %v2606, 0.0
      %vm2665 = vcmp.ge.f32.partialorder %v2611, 0.0
      %vm2666 = vcmp.ge.f32.partialorder %v2616, 0.0
      %vm2667 = vcmp.ge.f32.partialorder %v2621, 0.0
      %vm2668 = vcmp.ge.f32.partialorder %v2626, 0.0
      %vm2669 = vcmp.ge.f32.partialorder %v2631, 0.0
      %vm2670 = vcmp.ge.f32.partialorder %v2636, 0.0
      %vm2671 = vcmp.ge.f32.partialorder %v2641, 0.0
      %vm2672 = vcmp.ge.f32.partialorder %v2646, 0.0
      %vm2673 = vcmp.ge.f32.partialorder %v2651, 0.0
      %vm2674 = vcmp.ge.f32.partialorder %v2656, 0.0
      %v2675 = vmul.f32 %v2581, 0.01
      %v2676 = vmul.f32 %v2586, 0.01
      %v2677 = vmul.f32 %v2591, 0.01
      %v2678 = vmul.f32 %v2596, 0.01
      %v2679 = vmul.f32 %v2601, 0.01
      %v2680 = vmul.f32 %v2606, 0.01
      %v2681 = vmul.f32 %v2611, 0.01
      %v2682 = vmul.f32 %v2616, 0.01
      %v2683 = vmul.f32 %v2621, 0.01
      %v2684 = vmul.f32 %v2626, 0.01
      %v2685 = vmul.f32 %v2631, 0.01
      %v2686 = vmul.f32 %v2636, 0.01
      %v2687 = vmul.f32 %v2641, 0.01
      %v2688 = vmul.f32 %v2646, 0.01
      %v2689 = vmul.f32 %v2651, 0.01
      %v2690 = vmul.f32 %v2656, 0.01
      %v2691 = vsel %vm2659, %v2581, %v2675
      %v2692 = vsel %vm2660, %v2586, %v2676
      %v2693 = vsel %vm2661, %v2591, %v2677
      %v2694 = vsel %vm2662, %v2596, %v2678
      %v2695 = vsel %vm2663, %v2601, %v2679
      %v2696 = vsel %vm2664, %v2606, %v2680
      %v2697 = vsel %vm2665, %v2611, %v2681
      %v2698 = vsel %vm2666, %v2616, %v2682
      %v2699 = vsel %vm2667, %v2621, %v2683
      %v2700 = vsel %vm2668, %v2626, %v2684
      %v2701 = vsel %vm2669, %v2631, %v2685
      %v2702 = vsel %vm2670, %v2636, %v2686
      %v2703 = vsel %vm2671, %v2641, %v2687
      %v2704 = vsel %vm2672, %v2646, %v2688
      %v2705 = vsel %vm2673, %v2651, %v2689
      %v2706 = vsel %vm2674, %v2656, %v2690
      %2707 = vst.msk [vmem:[#allocation2 + $0x400] sm:$0xff] %vm522, %v2691
      %2708 = vst.msk [vmem:[#allocation2 + $0x408] sm:$0xff] %vm522, %v2692
      %2709 = vst.msk [vmem:[#allocation2 + $0x410] sm:$0xff] %vm522, %v2693
      %2710 = vst.msk [vmem:[#allocation2 + $0x418] sm:$0xff] %vm522, %v2694
      %2711 = vst.msk [vmem:[#allocation2 + $0x420] sm:$0xff] %vm522, %v2695
      %2712 = vst.msk [vmem:[#allocation2 + $0x428] sm:$0xff] %vm522, %v2696
      %2713 = vst.msk [vmem:[#allocation2 + $0x430] sm:$0xff] %vm522, %v2697
      %2714 = vst.msk [vmem:[#allocation2 + $0x438] sm:$0xff] %vm522, %v2698
      %2715 = vst.msk [vmem:[#allocation2 + $0x440] sm:$0xff] %vm522, %v2699
      %2716 = vst.msk [vmem:[#allocation2 + $0x448] sm:$0xff] %vm522, %v2700
      %2717 = vst.msk [vmem:[#allocation2 + $0x450] sm:$0xff] %vm522, %v2701
      %2718 = vst.msk [vmem:[#allocation2 + $0x458] sm:$0xff] %vm522, %v2702
      %2719 = vst.msk [vmem:[#allocation2 + $0x460] sm:$0xff] %vm522, %v2703
      %2720 = vst.msk [vmem:[#allocation2 + $0x468] sm:$0xff] %vm522, %v2704
      %2721 = vst.msk [vmem:[#allocation2 + $0x470] sm:$0xff] %vm522, %v2705
      %2722 = vst.msk [vmem:[#allocation2 + $0x478] sm:$0xff] %vm522, %v2706
      %v2723 = vld [vmem:[%s245 + $0x480] sm:$0xff]
      %v2724 = vld [vmem:[%s245 + $0x488] sm:$0xff]
      %v2725 = vld [vmem:[%s245 + $0x490] sm:$0xff]
      %v2726 = vld [vmem:[%s245 + $0x498] sm:$0xff]
      %v2727 = vld [vmem:[%s245 + $0x4a0] sm:$0xff]
      %v2728 = vld [vmem:[%s245 + $0x4a8] sm:$0xff]
      %v2729 = vld [vmem:[%s245 + $0x4b0] sm:$0xff]
      %v2730 = vld [vmem:[%s245 + $0x4b8] sm:$0xff]
      %v2731 = vld [vmem:[%s245 + $0x4c0] sm:$0xff]
      %v2732 = vld [vmem:[%s245 + $0x4c8] sm:$0xff]
      %v2733 = vld [vmem:[%s245 + $0x4d0] sm:$0xff]
      %v2734 = vld [vmem:[%s245 + $0x4d8] sm:$0xff]
      %v2735 = vld [vmem:[%s245 + $0x4e0] sm:$0xff]
      %v2736 = vld [vmem:[%s245 + $0x4e8] sm:$0xff]
      %v2737 = vld [vmem:[%s245 + $0x4f0] sm:$0xff]
      %v2738 = vld [vmem:[%s245 + $0x4f8] sm:$0xff]
      %v2740 = vsel %vm276, %v2723, 0
      %v2743 = vsel %vm276, %v2724, 0
      %v2746 = vsel %vm276, %v2725, 0
      %v2749 = vsel %vm276, %v2726, 0
      %v2752 = vsel %vm276, %v2727, 0
      %v2755 = vsel %vm276, %v2728, 0
      %v2758 = vsel %vm276, %v2729, 0
      %v2761 = vsel %vm276, %v2730, 0
      %v2764 = vsel %vm276, %v2731, 0
      %v2767 = vsel %vm276, %v2732, 0
      %v2770 = vsel %vm276, %v2733, 0
      %v2773 = vsel %vm276, %v2734, 0
      %v2776 = vsel %vm276, %v2735, 0
      %v2779 = vsel %vm276, %v2736, 0
      %v2782 = vsel %vm276, %v2737, 0
      %v2785 = vsel %vm276, %v2738, 0
      %2787 = vmatprep.subr.mxu0 0.0
      %2788 = vmatpush1.msra.mxu0 0.0
      %2789 = vmatprep.subr.mxu0 0.0
      %2790 = vmatpush1.msra.mxu0 0.0
      %2791 = vmatprep.subr.mxu0 0.0
      %2792 = vmatpush1.msra.mxu0 0.0
      %2793 = vmatprep.subr.mxu0 0.0
      %2794 = vmatpush1.msra.mxu0 0.0
      %2795 = vmatprep.subr.mxu0 0.0
      %2796 = vmatpush1.msra.mxu0 0.0
      %2797 = vmatprep.subr.mxu0 0.0
      %2798 = vmatpush1.msra.mxu0 0.0
      %2799 = vmatprep.subr.mxu0 0.0
      %2800 = vmatpush1.msra.mxu0 0.0
      %2801 = vmatprep.subr.mxu0 0.0
      %2802 = vmatpush1.msra.mxu0 0.0
      %2803 = vmatprep.subr.mxu0 0.0
      %2804 = vmatpush1.msra.mxu0 0.0
      %2805 = vmatprep.subr.mxu0 0.0
      %2806 = vmatpush1.msra.mxu0 0.0
      %2807 = vmatprep.subr.mxu0 0.0
      %2808 = vmatpush1.msra.mxu0 0.0
      %2809 = vmatprep.subr.mxu0 0.0
      %2810 = vmatpush1.msra.mxu0 %v327
      %2811 = vmatprep.subr.mxu0 0.0
      %2812 = vmatpush1.msra.mxu0 %v254
      %2813 = vmatprep.subr.mxu0 0.0
      %2814 = vmatpush1.msra.mxu0 %v253
      %2815 = vmatprep.subr.mxu0 0.0
      %2816 = vmatpush1.msra.mxu0 %v252
      %2817 = vmatprep.subr.mxu0 0.0
      %2818 = vmatpush1.msra.mxu0 %v251
      %2819 = vmatprep.subr.mxu0 0.0
      %2820 = vmatpush2.msra.mxu0 0.0
      %2821 = vmatprep.subr.mxu0 0.0
      %2822 = vmatpush2.msra.mxu0 0.0
      %2823 = vmatprep.subr.mxu0 0.0
      %2824 = vmatpush2.msra.mxu0 0.0
      %2825 = vmatprep.subr.mxu0 0.0
      %2826 = vmatpush2.msra.mxu0 0.0
      %2827 = vmatprep.subr.mxu0 0.0
      %2828 = vmatpush2.msra.mxu0 0.0
      %2829 = vmatprep.subr.mxu0 0.0
      %2830 = vmatpush2.msra.mxu0 0.0
      %2831 = vmatprep.subr.mxu0 0.0
      %2832 = vmatpush2.msra.mxu0 0.0
      %2833 = vmatprep.subr.mxu0 0.0
      %2834 = vmatpush2.msra.mxu0 0.0
      %2835 = vmatprep.subr.mxu0 0.0
      %2836 = vmatpush2.msra.mxu0 0.0
      %2837 = vmatprep.subr.mxu0 0.0
      %2838 = vmatpush2.msra.mxu0 0.0
      %2839 = vmatprep.subr.mxu0 0.0
      %2840 = vmatpush2.msra.mxu0 0.0
      %2841 = vmatprep.subr.mxu0 0.0
      %2842 = vmatpush2.msra.mxu0 0.0
      %2843 = vmatprep.subr.mxu0 0.0
      %2844 = vmatpush2.msra.mxu0 0.0
      %2845 = vmatprep.subr.mxu0 0.0
      %2846 = vmatpush2.msra.mxu0 0.0
      %2847 = vmatprep.subr.mxu0 0.0
      %2848 = vmatpush2.msra.mxu0 0.0
      %2849 = vmatprep.subr.mxu0 0.0
      %2850 = vmatpush2.msra.mxu0 0.0
      %2851 = vmatprep.mubr.f32.mxu0 0.0
      %2852 = vmatmul.mubr.f32.gmra.mxu0 %v2740
      %v2853 = vpop.f32.mrf.mxu0
      %v2854 = vadd.f32 %v275, %v2853
      %v2855 = vpop.f32.mrf.mxu0
      %2856 = vmatprep.mubr.f32.mxu0 0.0
      %2857 = vmatmul.mubr.f32.gmra.mxu0 %v2743
      %v2858 = vpop.f32.mrf.mxu0
      %v2859 = vadd.f32 %v275, %v2858
      %v2860 = vpop.f32.mrf.mxu0
      %2861 = vmatprep.mubr.f32.mxu0 0.0
      %2862 = vmatmul.mubr.f32.gmra.mxu0 %v2746
      %v2863 = vpop.f32.mrf.mxu0
      %v2864 = vadd.f32 %v275, %v2863
      %v2865 = vpop.f32.mrf.mxu0
      %2866 = vmatprep.mubr.f32.mxu0 0.0
      %2867 = vmatmul.mubr.f32.gmra.mxu0 %v2749
      %v2868 = vpop.f32.mrf.mxu0
      %v2869 = vadd.f32 %v275, %v2868
      %v2870 = vpop.f32.mrf.mxu0
      %2871 = vmatprep.mubr.f32.mxu0 0.0
      %2872 = vmatmul.mubr.f32.gmra.mxu0 %v2752
      %v2873 = vpop.f32.mrf.mxu0
      %v2874 = vadd.f32 %v275, %v2873
      %v2875 = vpop.f32.mrf.mxu0
      %2876 = vmatprep.mubr.f32.mxu0 0.0
      %2877 = vmatmul.mubr.f32.gmra.mxu0 %v2755
      %v2878 = vpop.f32.mrf.mxu0
      %v2879 = vadd.f32 %v275, %v2878
      %v2880 = vpop.f32.mrf.mxu0
      %2881 = vmatprep.mubr.f32.mxu0 0.0
      %2882 = vmatmul.mubr.f32.gmra.mxu0 %v2758
      %v2883 = vpop.f32.mrf.mxu0
      %v2884 = vadd.f32 %v275, %v2883
      %v2885 = vpop.f32.mrf.mxu0
      %2886 = vmatprep.mubr.f32.mxu0 0.0
      %2887 = vmatmul.mubr.f32.gmra.mxu0 %v2761
      %v2888 = vpop.f32.mrf.mxu0
      %v2889 = vadd.f32 %v275, %v2888
      %v2890 = vpop.f32.mrf.mxu0
      %2891 = vmatprep.mubr.f32.mxu0 0.0
      %2892 = vmatmul.mubr.f32.gmra.mxu0 %v2764
      %v2893 = vpop.f32.mrf.mxu0
      %v2894 = vadd.f32 %v275, %v2893
      %v2895 = vpop.f32.mrf.mxu0
      %2896 = vmatprep.mubr.f32.mxu0 0.0
      %2897 = vmatmul.mubr.f32.gmra.mxu0 %v2767
      %v2898 = vpop.f32.mrf.mxu0
      %v2899 = vadd.f32 %v275, %v2898
      %v2900 = vpop.f32.mrf.mxu0
      %2901 = vmatprep.mubr.f32.mxu0 0.0
      %2902 = vmatmul.mubr.f32.gmra.mxu0 %v2770
      %v2903 = vpop.f32.mrf.mxu0
      %v2904 = vadd.f32 %v275, %v2903
      %v2905 = vpop.f32.mrf.mxu0
      %2906 = vmatprep.mubr.f32.mxu0 0.0
      %2907 = vmatmul.mubr.f32.gmra.mxu0 %v2773
      %v2908 = vpop.f32.mrf.mxu0
      %v2909 = vadd.f32 %v275, %v2908
      %v2910 = vpop.f32.mrf.mxu0
      %2911 = vmatprep.mubr.f32.mxu0 0.0
      %2912 = vmatmul.mubr.f32.gmra.mxu0 %v2776
      %v2913 = vpop.f32.mrf.mxu0
      %v2914 = vadd.f32 %v275, %v2913
      %v2915 = vpop.f32.mrf.mxu0
      %2916 = vmatprep.mubr.f32.mxu0 0.0
      %2917 = vmatmul.mubr.f32.gmra.mxu0 %v2779
      %v2918 = vpop.f32.mrf.mxu0
      %v2919 = vadd.f32 %v275, %v2918
      %v2920 = vpop.f32.mrf.mxu0
      %2921 = vmatprep.mubr.f32.mxu0 0.0
      %2922 = vmatmul.mubr.f32.gmra.mxu0 %v2782
      %v2923 = vpop.f32.mrf.mxu0
      %v2924 = vadd.f32 %v275, %v2923
      %v2925 = vpop.f32.mrf.mxu0
      %2926 = vmatprep.mubr.f32.mxu0 0.0
      %2927 = vmatmul.mubr.f32.gmra.mxu0 %v2785
      %v2928 = vpop.f32.mrf.mxu0
      %v2929 = vadd.f32 %v275, %v2928
      %v2930 = vpop.f32.mrf.mxu0
      %2931 = vdwg.mxu0
      %vm2932 = vcmp.ge.f32.partialorder %v2854, 0.0
      %vm2933 = vcmp.ge.f32.partialorder %v2859, 0.0
      %vm2934 = vcmp.ge.f32.partialorder %v2864, 0.0
      %vm2935 = vcmp.ge.f32.partialorder %v2869, 0.0
      %vm2936 = vcmp.ge.f32.partialorder %v2874, 0.0
      %vm2937 = vcmp.ge.f32.partialorder %v2879, 0.0
      %vm2938 = vcmp.ge.f32.partialorder %v2884, 0.0
      %vm2939 = vcmp.ge.f32.partialorder %v2889, 0.0
      %vm2940 = vcmp.ge.f32.partialorder %v2894, 0.0
      %vm2941 = vcmp.ge.f32.partialorder %v2899, 0.0
      %vm2942 = vcmp.ge.f32.partialorder %v2904, 0.0
      %vm2943 = vcmp.ge.f32.partialorder %v2909, 0.0
      %vm2944 = vcmp.ge.f32.partialorder %v2914, 0.0
      %vm2945 = vcmp.ge.f32.partialorder %v2919, 0.0
      %vm2946 = vcmp.ge.f32.partialorder %v2924, 0.0
      %vm2947 = vcmp.ge.f32.partialorder %v2929, 0.0
      %v2948 = vmul.f32 %v2854, 0.01
      %v2949 = vmul.f32 %v2859, 0.01
      %v2950 = vmul.f32 %v2864, 0.01
      %v2951 = vmul.f32 %v2869, 0.01
      %v2952 = vmul.f32 %v2874, 0.01
      %v2953 = vmul.f32 %v2879, 0.01
      %v2954 = vmul.f32 %v2884, 0.01
      %v2955 = vmul.f32 %v2889, 0.01
      %v2956 = vmul.f32 %v2894, 0.01
      %v2957 = vmul.f32 %v2899, 0.01
      %v2958 = vmul.f32 %v2904, 0.01
      %v2959 = vmul.f32 %v2909, 0.01
      %v2960 = vmul.f32 %v2914, 0.01
      %v2961 = vmul.f32 %v2919, 0.01
      %v2962 = vmul.f32 %v2924, 0.01
      %v2963 = vmul.f32 %v2929, 0.01
      %v2964 = vsel %vm2932, %v2854, %v2948
      %v2965 = vsel %vm2933, %v2859, %v2949
      %v2966 = vsel %vm2934, %v2864, %v2950
      %v2967 = vsel %vm2935, %v2869, %v2951
      %v2968 = vsel %vm2936, %v2874, %v2952
      %v2969 = vsel %vm2937, %v2879, %v2953
      %v2970 = vsel %vm2938, %v2884, %v2954
      %v2971 = vsel %vm2939, %v2889, %v2955
      %v2972 = vsel %vm2940, %v2894, %v2956
      %v2973 = vsel %vm2941, %v2899, %v2957
      %v2974 = vsel %vm2942, %v2904, %v2958
      %v2975 = vsel %vm2943, %v2909, %v2959
      %v2976 = vsel %vm2944, %v2914, %v2960
      %v2977 = vsel %vm2945, %v2919, %v2961
      %v2978 = vsel %vm2946, %v2924, %v2962
      %v2979 = vsel %vm2947, %v2929, %v2963
      %2980 = vst.msk [vmem:[#allocation2 + $0x480] sm:$0xff] %vm522, %v2964
      %2981 = vst.msk [vmem:[#allocation2 + $0x488] sm:$0xff] %vm522, %v2965
      %2982 = vst.msk [vmem:[#allocation2 + $0x490] sm:$0xff] %vm522, %v2966
      %2983 = vst.msk [vmem:[#allocation2 + $0x498] sm:$0xff] %vm522, %v2967
      %2984 = vst.msk [vmem:[#allocation2 + $0x4a0] sm:$0xff] %vm522, %v2968
      %2985 = vst.msk [vmem:[#allocation2 + $0x4a8] sm:$0xff] %vm522, %v2969
      %2986 = vst.msk [vmem:[#allocation2 + $0x4b0] sm:$0xff] %vm522, %v2970
      %2987 = vst.msk [vmem:[#allocation2 + $0x4b8] sm:$0xff] %vm522, %v2971
      %2988 = vst.msk [vmem:[#allocation2 + $0x4c0] sm:$0xff] %vm522, %v2972
      %2989 = vst.msk [vmem:[#allocation2 + $0x4c8] sm:$0xff] %vm522, %v2973
      %2990 = vst.msk [vmem:[#allocation2 + $0x4d0] sm:$0xff] %vm522, %v2974
      %2991 = vst.msk [vmem:[#allocation2 + $0x4d8] sm:$0xff] %vm522, %v2975
      %2992 = vst.msk [vmem:[#allocation2 + $0x4e0] sm:$0xff] %vm522, %v2976
      %2993 = vst.msk [vmem:[#allocation2 + $0x4e8] sm:$0xff] %vm522, %v2977
      %2994 = vst.msk [vmem:[#allocation2 + $0x4f0] sm:$0xff] %vm522, %v2978
      %2995 = vst.msk [vmem:[#allocation2 + $0x4f8] sm:$0xff] %vm522, %v2979
      %v2996 = vld [vmem:[%s245 + $0x500] sm:$0xff]
      %v2997 = vld [vmem:[%s245 + $0x508] sm:$0xff]
      %v2998 = vld [vmem:[%s245 + $0x510] sm:$0xff]
      %v2999 = vld [vmem:[%s245 + $0x518] sm:$0xff]
      %v3000 = vld [vmem:[%s245 + $0x520] sm:$0xff]
      %v3001 = vld [vmem:[%s245 + $0x528] sm:$0xff]
      %v3002 = vld [vmem:[%s245 + $0x530] sm:$0xff]
      %v3003 = vld [vmem:[%s245 + $0x538] sm:$0xff]
      %v3004 = vld [vmem:[%s245 + $0x540] sm:$0xff]
      %v3005 = vld [vmem:[%s245 + $0x548] sm:$0xff]
      %v3006 = vld [vmem:[%s245 + $0x550] sm:$0xff]
      %v3007 = vld [vmem:[%s245 + $0x558] sm:$0xff]
      %v3008 = vld [vmem:[%s245 + $0x560] sm:$0xff]
      %v3009 = vld [vmem:[%s245 + $0x568] sm:$0xff]
      %v3010 = vld [vmem:[%s245 + $0x570] sm:$0xff]
      %v3011 = vld [vmem:[%s245 + $0x578] sm:$0xff]
      %v3013 = vsel %vm276, %v2996, 0
      %v3016 = vsel %vm276, %v2997, 0
      %v3019 = vsel %vm276, %v2998, 0
      %v3022 = vsel %vm276, %v2999, 0
      %v3025 = vsel %vm276, %v3000, 0
      %v3028 = vsel %vm276, %v3001, 0
      %v3031 = vsel %vm276, %v3002, 0
      %v3034 = vsel %vm276, %v3003, 0
      %v3037 = vsel %vm276, %v3004, 0
      %v3040 = vsel %vm276, %v3005, 0
      %v3043 = vsel %vm276, %v3006, 0
      %v3046 = vsel %vm276, %v3007, 0
      %v3049 = vsel %vm276, %v3008, 0
      %v3052 = vsel %vm276, %v3009, 0
      %v3055 = vsel %vm276, %v3010, 0
      %v3058 = vsel %vm276, %v3011, 0
      %3060 = vmatprep.subr.mxu0 0.0
      %3061 = vmatpush1.msra.mxu0 0.0
      %3062 = vmatprep.subr.mxu0 0.0
      %3063 = vmatpush1.msra.mxu0 0.0
      %3064 = vmatprep.subr.mxu0 0.0
      %3065 = vmatpush1.msra.mxu0 0.0
      %3066 = vmatprep.subr.mxu0 0.0
      %3067 = vmatpush1.msra.mxu0 0.0
      %3068 = vmatprep.subr.mxu0 0.0
      %3069 = vmatpush1.msra.mxu0 0.0
      %3070 = vmatprep.subr.mxu0 0.0
      %3071 = vmatpush1.msra.mxu0 0.0
      %3072 = vmatprep.subr.mxu0 0.0
      %3073 = vmatpush1.msra.mxu0 0.0
      %3074 = vmatprep.subr.mxu0 0.0
      %3075 = vmatpush1.msra.mxu0 0.0
      %3076 = vmatprep.subr.mxu0 0.0
      %3077 = vmatpush1.msra.mxu0 0.0
      %3078 = vmatprep.subr.mxu0 0.0
      %3079 = vmatpush1.msra.mxu0 0.0
      %3080 = vmatprep.subr.mxu0 0.0
      %3081 = vmatpush1.msra.mxu0 0.0
      %3082 = vmatprep.subr.mxu0 0.0
      %3083 = vmatpush1.msra.mxu0 %v327
      %3084 = vmatprep.subr.mxu0 0.0
      %3085 = vmatpush1.msra.mxu0 %v254
      %3086 = vmatprep.subr.mxu0 0.0
      %3087 = vmatpush1.msra.mxu0 %v253
      %3088 = vmatprep.subr.mxu0 0.0
      %3089 = vmatpush1.msra.mxu0 %v252
      %3090 = vmatprep.subr.mxu0 0.0
      %3091 = vmatpush1.msra.mxu0 %v251
      %3092 = vmatprep.subr.mxu0 0.0
      %3093 = vmatpush2.msra.mxu0 0.0
      %3094 = vmatprep.subr.mxu0 0.0
      %3095 = vmatpush2.msra.mxu0 0.0
      %3096 = vmatprep.subr.mxu0 0.0
      %3097 = vmatpush2.msra.mxu0 0.0
      %3098 = vmatprep.subr.mxu0 0.0
      %3099 = vmatpush2.msra.mxu0 0.0
      %3100 = vmatprep.subr.mxu0 0.0
      %3101 = vmatpush2.msra.mxu0 0.0
      %3102 = vmatprep.subr.mxu0 0.0
      %3103 = vmatpush2.msra.mxu0 0.0
      %3104 = vmatprep.subr.mxu0 0.0
      %3105 = vmatpush2.msra.mxu0 0.0
      %3106 = vmatprep.subr.mxu0 0.0
      %3107 = vmatpush2.msra.mxu0 0.0
      %3108 = vmatprep.subr.mxu0 0.0
      %3109 = vmatpush2.msra.mxu0 0.0
      %3110 = vmatprep.subr.mxu0 0.0
      %3111 = vmatpush2.msra.mxu0 0.0
      %3112 = vmatprep.subr.mxu0 0.0
      %3113 = vmatpush2.msra.mxu0 0.0
      %3114 = vmatprep.subr.mxu0 0.0
      %3115 = vmatpush2.msra.mxu0 0.0
      %3116 = vmatprep.subr.mxu0 0.0
      %3117 = vmatpush2.msra.mxu0 0.0
      %3118 = vmatprep.subr.mxu0 0.0
      %3119 = vmatpush2.msra.mxu0 0.0
      %3120 = vmatprep.subr.mxu0 0.0
      %3121 = vmatpush2.msra.mxu0 0.0
      %3122 = vmatprep.subr.mxu0 0.0
      %3123 = vmatpush2.msra.mxu0 0.0
      %3124 = vmatprep.mubr.f32.mxu0 0.0
      %3125 = vmatmul.mubr.f32.gmra.mxu0 %v3013
      %v3126 = vpop.f32.mrf.mxu0
      %v3127 = vadd.f32 %v275, %v3126
      %v3128 = vpop.f32.mrf.mxu0
      %3129 = vmatprep.mubr.f32.mxu0 0.0
      %3130 = vmatmul.mubr.f32.gmra.mxu0 %v3016
      %v3131 = vpop.f32.mrf.mxu0
      %v3132 = vadd.f32 %v275, %v3131
      %v3133 = vpop.f32.mrf.mxu0
      %3134 = vmatprep.mubr.f32.mxu0 0.0
      %3135 = vmatmul.mubr.f32.gmra.mxu0 %v3019
      %v3136 = vpop.f32.mrf.mxu0
      %v3137 = vadd.f32 %v275, %v3136
      %v3138 = vpop.f32.mrf.mxu0
      %3139 = vmatprep.mubr.f32.mxu0 0.0
      %3140 = vmatmul.mubr.f32.gmra.mxu0 %v3022
      %v3141 = vpop.f32.mrf.mxu0
      %v3142 = vadd.f32 %v275, %v3141
      %v3143 = vpop.f32.mrf.mxu0
      %3144 = vmatprep.mubr.f32.mxu0 0.0
      %3145 = vmatmul.mubr.f32.gmra.mxu0 %v3025
      %v3146 = vpop.f32.mrf.mxu0
      %v3147 = vadd.f32 %v275, %v3146
      %v3148 = vpop.f32.mrf.mxu0
      %3149 = vmatprep.mubr.f32.mxu0 0.0
      %3150 = vmatmul.mubr.f32.gmra.mxu0 %v3028
      %v3151 = vpop.f32.mrf.mxu0
      %v3152 = vadd.f32 %v275, %v3151
      %v3153 = vpop.f32.mrf.mxu0
      %3154 = vmatprep.mubr.f32.mxu0 0.0
      %3155 = vmatmul.mubr.f32.gmra.mxu0 %v3031
      %v3156 = vpop.f32.mrf.mxu0
      %v3157 = vadd.f32 %v275, %v3156
      %v3158 = vpop.f32.mrf.mxu0
      %3159 = vmatprep.mubr.f32.mxu0 0.0
      %3160 = vmatmul.mubr.f32.gmra.mxu0 %v3034
      %v3161 = vpop.f32.mrf.mxu0
      %v3162 = vadd.f32 %v275, %v3161
      %v3163 = vpop.f32.mrf.mxu0
      %3164 = vmatprep.mubr.f32.mxu0 0.0
      %3165 = vmatmul.mubr.f32.gmra.mxu0 %v3037
      %v3166 = vpop.f32.mrf.mxu0
      %v3167 = vadd.f32 %v275, %v3166
      %v3168 = vpop.f32.mrf.mxu0
      %3169 = vmatprep.mubr.f32.mxu0 0.0
      %3170 = vmatmul.mubr.f32.gmra.mxu0 %v3040
      %v3171 = vpop.f32.mrf.mxu0
      %v3172 = vadd.f32 %v275, %v3171
      %v3173 = vpop.f32.mrf.mxu0
      %3174 = vmatprep.mubr.f32.mxu0 0.0
      %3175 = vmatmul.mubr.f32.gmra.mxu0 %v3043
      %v3176 = vpop.f32.mrf.mxu0
      %v3177 = vadd.f32 %v275, %v3176
      %v3178 = vpop.f32.mrf.mxu0
      %3179 = vmatprep.mubr.f32.mxu0 0.0
      %3180 = vmatmul.mubr.f32.gmra.mxu0 %v3046
      %v3181 = vpop.f32.mrf.mxu0
      %v3182 = vadd.f32 %v275, %v3181
      %v3183 = vpop.f32.mrf.mxu0
      %3184 = vmatprep.mubr.f32.mxu0 0.0
      %3185 = vmatmul.mubr.f32.gmra.mxu0 %v3049
      %v3186 = vpop.f32.mrf.mxu0
      %v3187 = vadd.f32 %v275, %v3186
      %v3188 = vpop.f32.mrf.mxu0
      %3189 = vmatprep.mubr.f32.mxu0 0.0
      %3190 = vmatmul.mubr.f32.gmra.mxu0 %v3052
      %v3191 = vpop.f32.mrf.mxu0
      %v3192 = vadd.f32 %v275, %v3191
      %v3193 = vpop.f32.mrf.mxu0
      %3194 = vmatprep.mubr.f32.mxu0 0.0
      %3195 = vmatmul.mubr.f32.gmra.mxu0 %v3055
      %v3196 = vpop.f32.mrf.mxu0
      %v3197 = vadd.f32 %v275, %v3196
      %v3198 = vpop.f32.mrf.mxu0
      %3199 = vmatprep.mubr.f32.mxu0 0.0
      %3200 = vmatmul.mubr.f32.gmra.mxu0 %v3058
      %v3201 = vpop.f32.mrf.mxu0
      %v3202 = vadd.f32 %v275, %v3201
      %v3203 = vpop.f32.mrf.mxu0
      %3204 = vdwg.mxu0
      %vm3205 = vcmp.ge.f32.partialorder %v3127, 0.0
      %vm3206 = vcmp.ge.f32.partialorder %v3132, 0.0
      %vm3207 = vcmp.ge.f32.partialorder %v3137, 0.0
      %vm3208 = vcmp.ge.f32.partialorder %v3142, 0.0
      %vm3209 = vcmp.ge.f32.partialorder %v3147, 0.0
      %vm3210 = vcmp.ge.f32.partialorder %v3152, 0.0
      %vm3211 = vcmp.ge.f32.partialorder %v3157, 0.0
      %vm3212 = vcmp.ge.f32.partialorder %v3162, 0.0
      %vm3213 = vcmp.ge.f32.partialorder %v3167, 0.0
      %vm3214 = vcmp.ge.f32.partialorder %v3172, 0.0
      %vm3215 = vcmp.ge.f32.partialorder %v3177, 0.0
      %vm3216 = vcmp.ge.f32.partialorder %v3182, 0.0
      %vm3217 = vcmp.ge.f32.partialorder %v3187, 0.0
      %vm3218 = vcmp.ge.f32.partialorder %v3192, 0.0
      %vm3219 = vcmp.ge.f32.partialorder %v3197, 0.0
      %vm3220 = vcmp.ge.f32.partialorder %v3202, 0.0
      %v3221 = vmul.f32 %v3127, 0.01
      %v3222 = vmul.f32 %v3132, 0.01
      %v3223 = vmul.f32 %v3137, 0.01
      %v3224 = vmul.f32 %v3142, 0.01
      %v3225 = vmul.f32 %v3147, 0.01
      %v3226 = vmul.f32 %v3152, 0.01
      %v3227 = vmul.f32 %v3157, 0.01
      %v3228 = vmul.f32 %v3162, 0.01
      %v3229 = vmul.f32 %v3167, 0.01
      %v3230 = vmul.f32 %v3172, 0.01
      %v3231 = vmul.f32 %v3177, 0.01
      %v3232 = vmul.f32 %v3182, 0.01
      %v3233 = vmul.f32 %v3187, 0.01
      %v3234 = vmul.f32 %v3192, 0.01
      %v3235 = vmul.f32 %v3197, 0.01
      %v3236 = vmul.f32 %v3202, 0.01
      %v3237 = vsel %vm3205, %v3127, %v3221
      %v3238 = vsel %vm3206, %v3132, %v3222
      %v3239 = vsel %vm3207, %v3137, %v3223
      %v3240 = vsel %vm3208, %v3142, %v3224
      %v3241 = vsel %vm3209, %v3147, %v3225
      %v3242 = vsel %vm3210, %v3152, %v3226
      %v3243 = vsel %vm3211, %v3157, %v3227
      %v3244 = vsel %vm3212, %v3162, %v3228
      %v3245 = vsel %vm3213, %v3167, %v3229
      %v3246 = vsel %vm3214, %v3172, %v3230
      %v3247 = vsel %vm3215, %v3177, %v3231
      %v3248 = vsel %vm3216, %v3182, %v3232
      %v3249 = vsel %vm3217, %v3187, %v3233
      %v3250 = vsel %vm3218, %v3192, %v3234
      %v3251 = vsel %vm3219, %v3197, %v3235
      %v3252 = vsel %vm3220, %v3202, %v3236
      %3253 = vst.msk [vmem:[#allocation2 + $0x500] sm:$0xff] %vm522, %v3237
      %3254 = vst.msk [vmem:[#allocation2 + $0x508] sm:$0xff] %vm522, %v3238
      %3255 = vst.msk [vmem:[#allocation2 + $0x510] sm:$0xff] %vm522, %v3239
      %3256 = vst.msk [vmem:[#allocation2 + $0x518] sm:$0xff] %vm522, %v3240
      %3257 = vst.msk [vmem:[#allocation2 + $0x520] sm:$0xff] %vm522, %v3241
      %3258 = vst.msk [vmem:[#allocation2 + $0x528] sm:$0xff] %vm522, %v3242
      %3259 = vst.msk [vmem:[#allocation2 + $0x530] sm:$0xff] %vm522, %v3243
      %3260 = vst.msk [vmem:[#allocation2 + $0x538] sm:$0xff] %vm522, %v3244
      %3261 = vst.msk [vmem:[#allocation2 + $0x540] sm:$0xff] %vm522, %v3245
      %3262 = vst.msk [vmem:[#allocation2 + $0x548] sm:$0xff] %vm522, %v3246
      %3263 = vst.msk [vmem:[#allocation2 + $0x550] sm:$0xff] %vm522, %v3247
      %3264 = vst.msk [vmem:[#allocation2 + $0x558] sm:$0xff] %vm522, %v3248
      %3265 = vst.msk [vmem:[#allocation2 + $0x560] sm:$0xff] %vm522, %v3249
      %3266 = vst.msk [vmem:[#allocation2 + $0x568] sm:$0xff] %vm522, %v3250
      %3267 = vst.msk [vmem:[#allocation2 + $0x570] sm:$0xff] %vm522, %v3251
      %3268 = vst.msk [vmem:[#allocation2 + $0x578] sm:$0xff] %vm522, %v3252
      %v3269 = vld [vmem:[%s245 + $0x580] sm:$0xff]
      %v3270 = vld [vmem:[%s245 + $0x588] sm:$0xff]
      %v3271 = vld [vmem:[%s245 + $0x590] sm:$0xff]
      %v3272 = vld [vmem:[%s245 + $0x598] sm:$0xff]
      %v3273 = vld [vmem:[%s245 + $0x5a0] sm:$0xff]
      %v3274 = vld [vmem:[%s245 + $0x5a8] sm:$0xff]
      %v3275 = vld [vmem:[%s245 + $0x5b0] sm:$0xff]
      %v3276 = vld [vmem:[%s245 + $0x5b8] sm:$0xff]
      %v3277 = vld [vmem:[%s245 + $0x5c0] sm:$0xff]
      %v3278 = vld [vmem:[%s245 + $0x5c8] sm:$0xff]
      %v3279 = vld [vmem:[%s245 + $0x5d0] sm:$0xff]
      %v3280 = vld [vmem:[%s245 + $0x5d8] sm:$0xff]
      %v3281 = vld [vmem:[%s245 + $0x5e0] sm:$0xff]
      %v3282 = vld [vmem:[%s245 + $0x5e8] sm:$0xff]
      %v3283 = vld [vmem:[%s245 + $0x5f0] sm:$0xff]
      %v3284 = vld [vmem:[%s245 + $0x5f8] sm:$0xff]
      %v3286 = vsel %vm276, %v3269, 0
      %v3289 = vsel %vm276, %v3270, 0
      %v3292 = vsel %vm276, %v3271, 0
      %v3295 = vsel %vm276, %v3272, 0
      %v3298 = vsel %vm276, %v3273, 0
      %v3301 = vsel %vm276, %v3274, 0
      %v3304 = vsel %vm276, %v3275, 0
      %v3307 = vsel %vm276, %v3276, 0
      %v3310 = vsel %vm276, %v3277, 0
      %v3313 = vsel %vm276, %v3278, 0
      %v3316 = vsel %vm276, %v3279, 0
      %v3319 = vsel %vm276, %v3280, 0
      %v3322 = vsel %vm276, %v3281, 0
      %v3325 = vsel %vm276, %v3282, 0
      %v3328 = vsel %vm276, %v3283, 0
      %v3331 = vsel %vm276, %v3284, 0
      %3333 = vmatprep.subr.mxu0 0.0
      %3334 = vmatpush1.msra.mxu0 0.0
      %3335 = vmatprep.subr.mxu0 0.0
      %3336 = vmatpush1.msra.mxu0 0.0
      %3337 = vmatprep.subr.mxu0 0.0
      %3338 = vmatpush1.msra.mxu0 0.0
      %3339 = vmatprep.subr.mxu0 0.0
      %3340 = vmatpush1.msra.mxu0 0.0
      %3341 = vmatprep.subr.mxu0 0.0
      %3342 = vmatpush1.msra.mxu0 0.0
      %3343 = vmatprep.subr.mxu0 0.0
      %3344 = vmatpush1.msra.mxu0 0.0
      %3345 = vmatprep.subr.mxu0 0.0
      %3346 = vmatpush1.msra.mxu0 0.0
      %3347 = vmatprep.subr.mxu0 0.0
      %3348 = vmatpush1.msra.mxu0 0.0
      %3349 = vmatprep.subr.mxu0 0.0
      %3350 = vmatpush1.msra.mxu0 0.0
      %3351 = vmatprep.subr.mxu0 0.0
      %3352 = vmatpush1.msra.mxu0 0.0
      %3353 = vmatprep.subr.mxu0 0.0
      %3354 = vmatpush1.msra.mxu0 0.0
      %3355 = vmatprep.subr.mxu0 0.0
      %3356 = vmatpush1.msra.mxu0 %v327
      %3357 = vmatprep.subr.mxu0 0.0
      %3358 = vmatpush1.msra.mxu0 %v254
      %3359 = vmatprep.subr.mxu0 0.0
      %3360 = vmatpush1.msra.mxu0 %v253
      %3361 = vmatprep.subr.mxu0 0.0
      %3362 = vmatpush1.msra.mxu0 %v252
      %3363 = vmatprep.subr.mxu0 0.0
      %3364 = vmatpush1.msra.mxu0 %v251
      %3365 = vmatprep.subr.mxu0 0.0
      %3366 = vmatpush2.msra.mxu0 0.0
      %3367 = vmatprep.subr.mxu0 0.0
      %3368 = vmatpush2.msra.mxu0 0.0
      %3369 = vmatprep.subr.mxu0 0.0
      %3370 = vmatpush2.msra.mxu0 0.0
      %3371 = vmatprep.subr.mxu0 0.0
      %3372 = vmatpush2.msra.mxu0 0.0
      %3373 = vmatprep.subr.mxu0 0.0
      %3374 = vmatpush2.msra.mxu0 0.0
      %3375 = vmatprep.subr.mxu0 0.0
      %3376 = vmatpush2.msra.mxu0 0.0
      %3377 = vmatprep.subr.mxu0 0.0
      %3378 = vmatpush2.msra.mxu0 0.0
      %3379 = vmatprep.subr.mxu0 0.0
      %3380 = vmatpush2.msra.mxu0 0.0
      %3381 = vmatprep.subr.mxu0 0.0
      %3382 = vmatpush2.msra.mxu0 0.0
      %3383 = vmatprep.subr.mxu0 0.0
      %3384 = vmatpush2.msra.mxu0 0.0
      %3385 = vmatprep.subr.mxu0 0.0
      %3386 = vmatpush2.msra.mxu0 0.0
      %3387 = vmatprep.subr.mxu0 0.0
      %3388 = vmatpush2.msra.mxu0 0.0
      %3389 = vmatprep.subr.mxu0 0.0
      %3390 = vmatpush2.msra.mxu0 0.0
      %3391 = vmatprep.subr.mxu0 0.0
      %3392 = vmatpush2.msra.mxu0 0.0
      %3393 = vmatprep.subr.mxu0 0.0
      %3394 = vmatpush2.msra.mxu0 0.0
      %3395 = vmatprep.subr.mxu0 0.0
      %3396 = vmatpush2.msra.mxu0 0.0
      %3397 = vmatprep.mubr.f32.mxu0 0.0
      %3398 = vmatmul.mubr.f32.gmra.mxu0 %v3286
      %v3399 = vpop.f32.mrf.mxu0
      %v3400 = vadd.f32 %v275, %v3399
      %v3401 = vpop.f32.mrf.mxu0
      %3402 = vmatprep.mubr.f32.mxu0 0.0
      %3403 = vmatmul.mubr.f32.gmra.mxu0 %v3289
      %v3404 = vpop.f32.mrf.mxu0
      %v3405 = vadd.f32 %v275, %v3404
      %v3406 = vpop.f32.mrf.mxu0
      %3407 = vmatprep.mubr.f32.mxu0 0.0
      %3408 = vmatmul.mubr.f32.gmra.mxu0 %v3292
      %v3409 = vpop.f32.mrf.mxu0
      %v3410 = vadd.f32 %v275, %v3409
      %v3411 = vpop.f32.mrf.mxu0
      %3412 = vmatprep.mubr.f32.mxu0 0.0
      %3413 = vmatmul.mubr.f32.gmra.mxu0 %v3295
      %v3414 = vpop.f32.mrf.mxu0
      %v3415 = vadd.f32 %v275, %v3414
      %v3416 = vpop.f32.mrf.mxu0
      %3417 = vmatprep.mubr.f32.mxu0 0.0
      %3418 = vmatmul.mubr.f32.gmra.mxu0 %v3298
      %v3419 = vpop.f32.mrf.mxu0
      %v3420 = vadd.f32 %v275, %v3419
      %v3421 = vpop.f32.mrf.mxu0
      %3422 = vmatprep.mubr.f32.mxu0 0.0
      %3423 = vmatmul.mubr.f32.gmra.mxu0 %v3301
      %v3424 = vpop.f32.mrf.mxu0
      %v3425 = vadd.f32 %v275, %v3424
      %v3426 = vpop.f32.mrf.mxu0
      %3427 = vmatprep.mubr.f32.mxu0 0.0
      %3428 = vmatmul.mubr.f32.gmra.mxu0 %v3304
      %v3429 = vpop.f32.mrf.mxu0
      %v3430 = vadd.f32 %v275, %v3429
      %v3431 = vpop.f32.mrf.mxu0
      %3432 = vmatprep.mubr.f32.mxu0 0.0
      %3433 = vmatmul.mubr.f32.gmra.mxu0 %v3307
      %v3434 = vpop.f32.mrf.mxu0
      %v3435 = vadd.f32 %v275, %v3434
      %v3436 = vpop.f32.mrf.mxu0
      %3437 = vmatprep.mubr.f32.mxu0 0.0
      %3438 = vmatmul.mubr.f32.gmra.mxu0 %v3310
      %v3439 = vpop.f32.mrf.mxu0
      %v3440 = vadd.f32 %v275, %v3439
      %v3441 = vpop.f32.mrf.mxu0
      %3442 = vmatprep.mubr.f32.mxu0 0.0
      %3443 = vmatmul.mubr.f32.gmra.mxu0 %v3313
      %v3444 = vpop.f32.mrf.mxu0
      %v3445 = vadd.f32 %v275, %v3444
      %v3446 = vpop.f32.mrf.mxu0
      %3447 = vmatprep.mubr.f32.mxu0 0.0
      %3448 = vmatmul.mubr.f32.gmra.mxu0 %v3316
      %v3449 = vpop.f32.mrf.mxu0
      %v3450 = vadd.f32 %v275, %v3449
      %v3451 = vpop.f32.mrf.mxu0
      %3452 = vmatprep.mubr.f32.mxu0 0.0
      %3453 = vmatmul.mubr.f32.gmra.mxu0 %v3319
      %v3454 = vpop.f32.mrf.mxu0
      %v3455 = vadd.f32 %v275, %v3454
      %v3456 = vpop.f32.mrf.mxu0
      %3457 = vmatprep.mubr.f32.mxu0 0.0
      %3458 = vmatmul.mubr.f32.gmra.mxu0 %v3322
      %v3459 = vpop.f32.mrf.mxu0
      %v3460 = vadd.f32 %v275, %v3459
      %v3461 = vpop.f32.mrf.mxu0
      %3462 = vmatprep.mubr.f32.mxu0 0.0
      %3463 = vmatmul.mubr.f32.gmra.mxu0 %v3325
      %v3464 = vpop.f32.mrf.mxu0
      %v3465 = vadd.f32 %v275, %v3464
      %v3466 = vpop.f32.mrf.mxu0
      %3467 = vmatprep.mubr.f32.mxu0 0.0
      %3468 = vmatmul.mubr.f32.gmra.mxu0 %v3328
      %v3469 = vpop.f32.mrf.mxu0
      %v3470 = vadd.f32 %v275, %v3469
      %v3471 = vpop.f32.mrf.mxu0
      %3472 = vmatprep.mubr.f32.mxu0 0.0
      %3473 = vmatmul.mubr.f32.gmra.mxu0 %v3331
      %v3474 = vpop.f32.mrf.mxu0
      %v3475 = vadd.f32 %v275, %v3474
      %v3476 = vpop.f32.mrf.mxu0
      %3477 = vdwg.mxu0
      %vm3478 = vcmp.ge.f32.partialorder %v3400, 0.0
      %vm3479 = vcmp.ge.f32.partialorder %v3405, 0.0
      %vm3480 = vcmp.ge.f32.partialorder %v3410, 0.0
      %vm3481 = vcmp.ge.f32.partialorder %v3415, 0.0
      %vm3482 = vcmp.ge.f32.partialorder %v3420, 0.0
      %vm3483 = vcmp.ge.f32.partialorder %v3425, 0.0
      %vm3484 = vcmp.ge.f32.partialorder %v3430, 0.0
      %vm3485 = vcmp.ge.f32.partialorder %v3435, 0.0
      %vm3486 = vcmp.ge.f32.partialorder %v3440, 0.0
      %vm3487 = vcmp.ge.f32.partialorder %v3445, 0.0
      %vm3488 = vcmp.ge.f32.partialorder %v3450, 0.0
      %vm3489 = vcmp.ge.f32.partialorder %v3455, 0.0
      %vm3490 = vcmp.ge.f32.partialorder %v3460, 0.0
      %vm3491 = vcmp.ge.f32.partialorder %v3465, 0.0
      %vm3492 = vcmp.ge.f32.partialorder %v3470, 0.0
      %vm3493 = vcmp.ge.f32.partialorder %v3475, 0.0
      %v3494 = vmul.f32 %v3400, 0.01
      %v3495 = vmul.f32 %v3405, 0.01
      %v3496 = vmul.f32 %v3410, 0.01
      %v3497 = vmul.f32 %v3415, 0.01
      %v3498 = vmul.f32 %v3420, 0.01
      %v3499 = vmul.f32 %v3425, 0.01
      %v3500 = vmul.f32 %v3430, 0.01
      %v3501 = vmul.f32 %v3435, 0.01
      %v3502 = vmul.f32 %v3440, 0.01
      %v3503 = vmul.f32 %v3445, 0.01
      %v3504 = vmul.f32 %v3450, 0.01
      %v3505 = vmul.f32 %v3455, 0.01
      %v3506 = vmul.f32 %v3460, 0.01
      %v3507 = vmul.f32 %v3465, 0.01
      %v3508 = vmul.f32 %v3470, 0.01
      %v3509 = vmul.f32 %v3475, 0.01
      %v3510 = vsel %vm3478, %v3400, %v3494
      %v3511 = vsel %vm3479, %v3405, %v3495
      %v3512 = vsel %vm3480, %v3410, %v3496
      %v3513 = vsel %vm3481, %v3415, %v3497
      %v3514 = vsel %vm3482, %v3420, %v3498
      %v3515 = vsel %vm3483, %v3425, %v3499
      %v3516 = vsel %vm3484, %v3430, %v3500
      %v3517 = vsel %vm3485, %v3435, %v3501
      %v3518 = vsel %vm3486, %v3440, %v3502
      %v3519 = vsel %vm3487, %v3445, %v3503
      %v3520 = vsel %vm3488, %v3450, %v3504
      %v3521 = vsel %vm3489, %v3455, %v3505
      %v3522 = vsel %vm3490, %v3460, %v3506
      %v3523 = vsel %vm3491, %v3465, %v3507
      %v3524 = vsel %vm3492, %v3470, %v3508
      %v3525 = vsel %vm3493, %v3475, %v3509
      %3526 = vst.msk [vmem:[#allocation2 + $0x580] sm:$0xff] %vm522, %v3510
      %3527 = vst.msk [vmem:[#allocation2 + $0x588] sm:$0xff] %vm522, %v3511
      %3528 = vst.msk [vmem:[#allocation2 + $0x590] sm:$0xff] %vm522, %v3512
      %3529 = vst.msk [vmem:[#allocation2 + $0x598] sm:$0xff] %vm522, %v3513
      %3530 = vst.msk [vmem:[#allocation2 + $0x5a0] sm:$0xff] %vm522, %v3514
      %3531 = vst.msk [vmem:[#allocation2 + $0x5a8] sm:$0xff] %vm522, %v3515
      %3532 = vst.msk [vmem:[#allocation2 + $0x5b0] sm:$0xff] %vm522, %v3516
      %3533 = vst.msk [vmem:[#allocation2 + $0x5b8] sm:$0xff] %vm522, %v3517
      %3534 = vst.msk [vmem:[#allocation2 + $0x5c0] sm:$0xff] %vm522, %v3518
      %3535 = vst.msk [vmem:[#allocation2 + $0x5c8] sm:$0xff] %vm522, %v3519
      %3536 = vst.msk [vmem:[#allocation2 + $0x5d0] sm:$0xff] %vm522, %v3520
      %3537 = vst.msk [vmem:[#allocation2 + $0x5d8] sm:$0xff] %vm522, %v3521
      %3538 = vst.msk [vmem:[#allocation2 + $0x5e0] sm:$0xff] %vm522, %v3522
      %3539 = vst.msk [vmem:[#allocation2 + $0x5e8] sm:$0xff] %vm522, %v3523
      %3540 = vst.msk [vmem:[#allocation2 + $0x5f0] sm:$0xff] %vm522, %v3524
      %3541 = vst.msk [vmem:[#allocation2 + $0x5f8] sm:$0xff] %vm522, %v3525
      %v3542 = vld [vmem:[%s245 + $0x600] sm:$0xff]
      %v3543 = vld [vmem:[%s245 + $0x608] sm:$0xff]
      %v3544 = vld [vmem:[%s245 + $0x610] sm:$0xff]
      %v3545 = vld [vmem:[%s245 + $0x618] sm:$0xff]
      %v3546 = vld [vmem:[%s245 + $0x620] sm:$0xff]
      %v3547 = vld [vmem:[%s245 + $0x628] sm:$0xff]
      %v3548 = vld [vmem:[%s245 + $0x630] sm:$0xff]
      %v3549 = vld [vmem:[%s245 + $0x638] sm:$0xff]
      %v3550 = vld [vmem:[%s245 + $0x640] sm:$0xff]
      %v3551 = vld [vmem:[%s245 + $0x648] sm:$0xff]
      %v3552 = vld [vmem:[%s245 + $0x650] sm:$0xff]
      %v3553 = vld [vmem:[%s245 + $0x658] sm:$0xff]
      %v3554 = vld [vmem:[%s245 + $0x660] sm:$0xff]
      %v3555 = vld [vmem:[%s245 + $0x668] sm:$0xff]
      %v3556 = vld [vmem:[%s245 + $0x670] sm:$0xff]
      %v3557 = vld [vmem:[%s245 + $0x678] sm:$0xff]
      %v3559 = vsel %vm276, %v3542, 0
      %v3562 = vsel %vm276, %v3543, 0
      %v3565 = vsel %vm276, %v3544, 0
      %v3568 = vsel %vm276, %v3545, 0
      %v3571 = vsel %vm276, %v3546, 0
      %v3574 = vsel %vm276, %v3547, 0
      %v3577 = vsel %vm276, %v3548, 0
      %v3580 = vsel %vm276, %v3549, 0
      %v3583 = vsel %vm276, %v3550, 0
      %v3586 = vsel %vm276, %v3551, 0
      %v3589 = vsel %vm276, %v3552, 0
      %v3592 = vsel %vm276, %v3553, 0
      %v3595 = vsel %vm276, %v3554, 0
      %v3598 = vsel %vm276, %v3555, 0
      %v3601 = vsel %vm276, %v3556, 0
      %v3604 = vsel %vm276, %v3557, 0
      %3606 = vmatprep.subr.mxu0 0.0
      %3607 = vmatpush1.msra.mxu0 0.0
      %3608 = vmatprep.subr.mxu0 0.0
      %3609 = vmatpush1.msra.mxu0 0.0
      %3610 = vmatprep.subr.mxu0 0.0
      %3611 = vmatpush1.msra.mxu0 0.0
      %3612 = vmatprep.subr.mxu0 0.0
      %3613 = vmatpush1.msra.mxu0 0.0
      %3614 = vmatprep.subr.mxu0 0.0
      %3615 = vmatpush1.msra.mxu0 0.0
      %3616 = vmatprep.subr.mxu0 0.0
      %3617 = vmatpush1.msra.mxu0 0.0
      %3618 = vmatprep.subr.mxu0 0.0
      %3619 = vmatpush1.msra.mxu0 0.0
      %3620 = vmatprep.subr.mxu0 0.0
      %3621 = vmatpush1.msra.mxu0 0.0
      %3622 = vmatprep.subr.mxu0 0.0
      %3623 = vmatpush1.msra.mxu0 0.0
      %3624 = vmatprep.subr.mxu0 0.0
      %3625 = vmatpush1.msra.mxu0 0.0
      %3626 = vmatprep.subr.mxu0 0.0
      %3627 = vmatpush1.msra.mxu0 0.0
      %3628 = vmatprep.subr.mxu0 0.0
      %3629 = vmatpush1.msra.mxu0 %v327
      %3630 = vmatprep.subr.mxu0 0.0
      %3631 = vmatpush1.msra.mxu0 %v254
      %3632 = vmatprep.subr.mxu0 0.0
      %3633 = vmatpush1.msra.mxu0 %v253
      %3634 = vmatprep.subr.mxu0 0.0
      %3635 = vmatpush1.msra.mxu0 %v252
      %3636 = vmatprep.subr.mxu0 0.0
      %3637 = vmatpush1.msra.mxu0 %v251
      %3638 = vmatprep.subr.mxu0 0.0
      %3639 = vmatpush2.msra.mxu0 0.0
      %3640 = vmatprep.subr.mxu0 0.0
      %3641 = vmatpush2.msra.mxu0 0.0
      %3642 = vmatprep.subr.mxu0 0.0
      %3643 = vmatpush2.msra.mxu0 0.0
      %3644 = vmatprep.subr.mxu0 0.0
      %3645 = vmatpush2.msra.mxu0 0.0
      %3646 = vmatprep.subr.mxu0 0.0
      %3647 = vmatpush2.msra.mxu0 0.0
      %3648 = vmatprep.subr.mxu0 0.0
      %3649 = vmatpush2.msra.mxu0 0.0
      %3650 = vmatprep.subr.mxu0 0.0
      %3651 = vmatpush2.msra.mxu0 0.0
      %3652 = vmatprep.subr.mxu0 0.0
      %3653 = vmatpush2.msra.mxu0 0.0
      %3654 = vmatprep.subr.mxu0 0.0
      %3655 = vmatpush2.msra.mxu0 0.0
      %3656 = vmatprep.subr.mxu0 0.0
      %3657 = vmatpush2.msra.mxu0 0.0
      %3658 = vmatprep.subr.mxu0 0.0
      %3659 = vmatpush2.msra.mxu0 0.0
      %3660 = vmatprep.subr.mxu0 0.0
      %3661 = vmatpush2.msra.mxu0 0.0
      %3662 = vmatprep.subr.mxu0 0.0
      %3663 = vmatpush2.msra.mxu0 0.0
      %3664 = vmatprep.subr.mxu0 0.0
      %3665 = vmatpush2.msra.mxu0 0.0
      %3666 = vmatprep.subr.mxu0 0.0
      %3667 = vmatpush2.msra.mxu0 0.0
      %3668 = vmatprep.subr.mxu0 0.0
      %3669 = vmatpush2.msra.mxu0 0.0
      %3670 = vmatprep.mubr.f32.mxu0 0.0
      %3671 = vmatmul.mubr.f32.gmra.mxu0 %v3559
      %v3672 = vpop.f32.mrf.mxu0
      %v3673 = vadd.f32 %v275, %v3672
      %v3674 = vpop.f32.mrf.mxu0
      %3675 = vmatprep.mubr.f32.mxu0 0.0
      %3676 = vmatmul.mubr.f32.gmra.mxu0 %v3562
      %v3677 = vpop.f32.mrf.mxu0
      %v3678 = vadd.f32 %v275, %v3677
      %v3679 = vpop.f32.mrf.mxu0
      %3680 = vmatprep.mubr.f32.mxu0 0.0
      %3681 = vmatmul.mubr.f32.gmra.mxu0 %v3565
      %v3682 = vpop.f32.mrf.mxu0
      %v3683 = vadd.f32 %v275, %v3682
      %v3684 = vpop.f32.mrf.mxu0
      %3685 = vmatprep.mubr.f32.mxu0 0.0
      %3686 = vmatmul.mubr.f32.gmra.mxu0 %v3568
      %v3687 = vpop.f32.mrf.mxu0
      %v3688 = vadd.f32 %v275, %v3687
      %v3689 = vpop.f32.mrf.mxu0
      %3690 = vmatprep.mubr.f32.mxu0 0.0
      %3691 = vmatmul.mubr.f32.gmra.mxu0 %v3571
      %v3692 = vpop.f32.mrf.mxu0
      %v3693 = vadd.f32 %v275, %v3692
      %v3694 = vpop.f32.mrf.mxu0
      %3695 = vmatprep.mubr.f32.mxu0 0.0
      %3696 = vmatmul.mubr.f32.gmra.mxu0 %v3574
      %v3697 = vpop.f32.mrf.mxu0
      %v3698 = vadd.f32 %v275, %v3697
      %v3699 = vpop.f32.mrf.mxu0
      %3700 = vmatprep.mubr.f32.mxu0 0.0
      %3701 = vmatmul.mubr.f32.gmra.mxu0 %v3577
      %v3702 = vpop.f32.mrf.mxu0
      %v3703 = vadd.f32 %v275, %v3702
      %v3704 = vpop.f32.mrf.mxu0
      %3705 = vmatprep.mubr.f32.mxu0 0.0
      %3706 = vmatmul.mubr.f32.gmra.mxu0 %v3580
      %v3707 = vpop.f32.mrf.mxu0
      %v3708 = vadd.f32 %v275, %v3707
      %v3709 = vpop.f32.mrf.mxu0
      %3710 = vmatprep.mubr.f32.mxu0 0.0
      %3711 = vmatmul.mubr.f32.gmra.mxu0 %v3583
      %v3712 = vpop.f32.mrf.mxu0
      %v3713 = vadd.f32 %v275, %v3712
      %v3714 = vpop.f32.mrf.mxu0
      %3715 = vmatprep.mubr.f32.mxu0 0.0
      %3716 = vmatmul.mubr.f32.gmra.mxu0 %v3586
      %v3717 = vpop.f32.mrf.mxu0
      %v3718 = vadd.f32 %v275, %v3717
      %v3719 = vpop.f32.mrf.mxu0
      %3720 = vmatprep.mubr.f32.mxu0 0.0
      %3721 = vmatmul.mubr.f32.gmra.mxu0 %v3589
      %v3722 = vpop.f32.mrf.mxu0
      %v3723 = vadd.f32 %v275, %v3722
      %v3724 = vpop.f32.mrf.mxu0
      %3725 = vmatprep.mubr.f32.mxu0 0.0
      %3726 = vmatmul.mubr.f32.gmra.mxu0 %v3592
      %v3727 = vpop.f32.mrf.mxu0
      %v3728 = vadd.f32 %v275, %v3727
      %v3729 = vpop.f32.mrf.mxu0
      %3730 = vmatprep.mubr.f32.mxu0 0.0
      %3731 = vmatmul.mubr.f32.gmra.mxu0 %v3595
      %v3732 = vpop.f32.mrf.mxu0
      %v3733 = vadd.f32 %v275, %v3732
      %v3734 = vpop.f32.mrf.mxu0
      %3735 = vmatprep.mubr.f32.mxu0 0.0
      %3736 = vmatmul.mubr.f32.gmra.mxu0 %v3598
      %v3737 = vpop.f32.mrf.mxu0
      %v3738 = vadd.f32 %v275, %v3737
      %v3739 = vpop.f32.mrf.mxu0
      %3740 = vmatprep.mubr.f32.mxu0 0.0
      %3741 = vmatmul.mubr.f32.gmra.mxu0 %v3601
      %v3742 = vpop.f32.mrf.mxu0
      %v3743 = vadd.f32 %v275, %v3742
      %v3744 = vpop.f32.mrf.mxu0
      %3745 = vmatprep.mubr.f32.mxu0 0.0
      %3746 = vmatmul.mubr.f32.gmra.mxu0 %v3604
      %v3747 = vpop.f32.mrf.mxu0
      %v3748 = vadd.f32 %v275, %v3747
      %v3749 = vpop.f32.mrf.mxu0
      %3750 = vdwg.mxu0
      %vm3751 = vcmp.ge.f32.partialorder %v3673, 0.0
      %vm3752 = vcmp.ge.f32.partialorder %v3678, 0.0
      %vm3753 = vcmp.ge.f32.partialorder %v3683, 0.0
      %vm3754 = vcmp.ge.f32.partialorder %v3688, 0.0
      %vm3755 = vcmp.ge.f32.partialorder %v3693, 0.0
      %vm3756 = vcmp.ge.f32.partialorder %v3698, 0.0
      %vm3757 = vcmp.ge.f32.partialorder %v3703, 0.0
      %vm3758 = vcmp.ge.f32.partialorder %v3708, 0.0
      %vm3759 = vcmp.ge.f32.partialorder %v3713, 0.0
      %vm3760 = vcmp.ge.f32.partialorder %v3718, 0.0
      %vm3761 = vcmp.ge.f32.partialorder %v3723, 0.0
      %vm3762 = vcmp.ge.f32.partialorder %v3728, 0.0
      %vm3763 = vcmp.ge.f32.partialorder %v3733, 0.0
      %vm3764 = vcmp.ge.f32.partialorder %v3738, 0.0
      %vm3765 = vcmp.ge.f32.partialorder %v3743, 0.0
      %vm3766 = vcmp.ge.f32.partialorder %v3748, 0.0
      %v3767 = vmul.f32 %v3673, 0.01
      %v3768 = vmul.f32 %v3678, 0.01
      %v3769 = vmul.f32 %v3683, 0.01
      %v3770 = vmul.f32 %v3688, 0.01
      %v3771 = vmul.f32 %v3693, 0.01
      %v3772 = vmul.f32 %v3698, 0.01
      %v3773 = vmul.f32 %v3703, 0.01
      %v3774 = vmul.f32 %v3708, 0.01
      %v3775 = vmul.f32 %v3713, 0.01
      %v3776 = vmul.f32 %v3718, 0.01
      %v3777 = vmul.f32 %v3723, 0.01
      %v3778 = vmul.f32 %v3728, 0.01
      %v3779 = vmul.f32 %v3733, 0.01
      %v3780 = vmul.f32 %v3738, 0.01
      %v3781 = vmul.f32 %v3743, 0.01
      %v3782 = vmul.f32 %v3748, 0.01
      %v3783 = vsel %vm3751, %v3673, %v3767
      %v3784 = vsel %vm3752, %v3678, %v3768
      %v3785 = vsel %vm3753, %v3683, %v3769
      %v3786 = vsel %vm3754, %v3688, %v3770
      %v3787 = vsel %vm3755, %v3693, %v3771
      %v3788 = vsel %vm3756, %v3698, %v3772
      %v3789 = vsel %vm3757, %v3703, %v3773
      %v3790 = vsel %vm3758, %v3708, %v3774
      %v3791 = vsel %vm3759, %v3713, %v3775
      %v3792 = vsel %vm3760, %v3718, %v3776
      %v3793 = vsel %vm3761, %v3723, %v3777
      %v3794 = vsel %vm3762, %v3728, %v3778
      %v3795 = vsel %vm3763, %v3733, %v3779
      %v3796 = vsel %vm3764, %v3738, %v3780
      %v3797 = vsel %vm3765, %v3743, %v3781
      %v3798 = vsel %vm3766, %v3748, %v3782
      %3799 = vst.msk [vmem:[#allocation2 + $0x600] sm:$0xff] %vm522, %v3783
      %3800 = vst.msk [vmem:[#allocation2 + $0x608] sm:$0xff] %vm522, %v3784
      %3801 = vst.msk [vmem:[#allocation2 + $0x610] sm:$0xff] %vm522, %v3785
      %3802 = vst.msk [vmem:[#allocation2 + $0x618] sm:$0xff] %vm522, %v3786
      %3803 = vst.msk [vmem:[#allocation2 + $0x620] sm:$0xff] %vm522, %v3787
      %3804 = vst.msk [vmem:[#allocation2 + $0x628] sm:$0xff] %vm522, %v3788
      %3805 = vst.msk [vmem:[#allocation2 + $0x630] sm:$0xff] %vm522, %v3789
      %3806 = vst.msk [vmem:[#allocation2 + $0x638] sm:$0xff] %vm522, %v3790
      %3807 = vst.msk [vmem:[#allocation2 + $0x640] sm:$0xff] %vm522, %v3791
      %3808 = vst.msk [vmem:[#allocation2 + $0x648] sm:$0xff] %vm522, %v3792
      %3809 = vst.msk [vmem:[#allocation2 + $0x650] sm:$0xff] %vm522, %v3793
      %3810 = vst.msk [vmem:[#allocation2 + $0x658] sm:$0xff] %vm522, %v3794
      %3811 = vst.msk [vmem:[#allocation2 + $0x660] sm:$0xff] %vm522, %v3795
      %3812 = vst.msk [vmem:[#allocation2 + $0x668] sm:$0xff] %vm522, %v3796
      %3813 = vst.msk [vmem:[#allocation2 + $0x670] sm:$0xff] %vm522, %v3797
      %3814 = vst.msk [vmem:[#allocation2 + $0x678] sm:$0xff] %vm522, %v3798
      %v3815 = vld [vmem:[%s245 + $0x680] sm:$0xff]
      %v3816 = vld [vmem:[%s245 + $0x688] sm:$0xff]
      %v3817 = vld [vmem:[%s245 + $0x690] sm:$0xff]
      %v3818 = vld [vmem:[%s245 + $0x698] sm:$0xff]
      %v3819 = vld [vmem:[%s245 + $0x6a0] sm:$0xff]
      %v3820 = vld [vmem:[%s245 + $0x6a8] sm:$0xff]
      %v3821 = vld [vmem:[%s245 + $0x6b0] sm:$0xff]
      %v3822 = vld [vmem:[%s245 + $0x6b8] sm:$0xff]
      %v3823 = vld [vmem:[%s245 + $0x6c0] sm:$0xff]
      %v3824 = vld [vmem:[%s245 + $0x6c8] sm:$0xff]
      %v3825 = vld [vmem:[%s245 + $0x6d0] sm:$0xff]
      %v3826 = vld [vmem:[%s245 + $0x6d8] sm:$0xff]
      %v3827 = vld [vmem:[%s245 + $0x6e0] sm:$0xff]
      %v3828 = vld [vmem:[%s245 + $0x6e8] sm:$0xff]
      %v3829 = vld [vmem:[%s245 + $0x6f0] sm:$0xff]
      %v3830 = vld [vmem:[%s245 + $0x6f8] sm:$0xff]
      %v3832 = vsel %vm276, %v3815, 0
      %v3835 = vsel %vm276, %v3816, 0
      %v3838 = vsel %vm276, %v3817, 0
      %v3841 = vsel %vm276, %v3818, 0
      %v3844 = vsel %vm276, %v3819, 0
      %v3847 = vsel %vm276, %v3820, 0
      %v3850 = vsel %vm276, %v3821, 0
      %v3853 = vsel %vm276, %v3822, 0
      %v3856 = vsel %vm276, %v3823, 0
      %v3859 = vsel %vm276, %v3824, 0
      %v3862 = vsel %vm276, %v3825, 0
      %v3865 = vsel %vm276, %v3826, 0
      %v3868 = vsel %vm276, %v3827, 0
      %v3871 = vsel %vm276, %v3828, 0
      %v3874 = vsel %vm276, %v3829, 0
      %v3877 = vsel %vm276, %v3830, 0
      %3879 = vmatprep.subr.mxu0 0.0
      %3880 = vmatpush1.msra.mxu0 0.0
      %3881 = vmatprep.subr.mxu0 0.0
      %3882 = vmatpush1.msra.mxu0 0.0
      %3883 = vmatprep.subr.mxu0 0.0
      %3884 = vmatpush1.msra.mxu0 0.0
      %3885 = vmatprep.subr.mxu0 0.0
      %3886 = vmatpush1.msra.mxu0 0.0
      %3887 = vmatprep.subr.mxu0 0.0
      %3888 = vmatpush1.msra.mxu0 0.0
      %3889 = vmatprep.subr.mxu0 0.0
      %3890 = vmatpush1.msra.mxu0 0.0
      %3891 = vmatprep.subr.mxu0 0.0
      %3892 = vmatpush1.msra.mxu0 0.0
      %3893 = vmatprep.subr.mxu0 0.0
      %3894 = vmatpush1.msra.mxu0 0.0
      %3895 = vmatprep.subr.mxu0 0.0
      %3896 = vmatpush1.msra.mxu0 0.0
      %3897 = vmatprep.subr.mxu0 0.0
      %3898 = vmatpush1.msra.mxu0 0.0
      %3899 = vmatprep.subr.mxu0 0.0
      %3900 = vmatpush1.msra.mxu0 0.0
      %3901 = vmatprep.subr.mxu0 0.0
      %3902 = vmatpush1.msra.mxu0 %v327
      %3903 = vmatprep.subr.mxu0 0.0
      %3904 = vmatpush1.msra.mxu0 %v254
      %3905 = vmatprep.subr.mxu0 0.0
      %3906 = vmatpush1.msra.mxu0 %v253
      %3907 = vmatprep.subr.mxu0 0.0
      %3908 = vmatpush1.msra.mxu0 %v252
      %3909 = vmatprep.subr.mxu0 0.0
      %3910 = vmatpush1.msra.mxu0 %v251
      %3911 = vmatprep.subr.mxu0 0.0
      %3912 = vmatpush2.msra.mxu0 0.0
      %3913 = vmatprep.subr.mxu0 0.0
      %3914 = vmatpush2.msra.mxu0 0.0
      %3915 = vmatprep.subr.mxu0 0.0
      %3916 = vmatpush2.msra.mxu0 0.0
      %3917 = vmatprep.subr.mxu0 0.0
      %3918 = vmatpush2.msra.mxu0 0.0
      %3919 = vmatprep.subr.mxu0 0.0
      %3920 = vmatpush2.msra.mxu0 0.0
      %3921 = vmatprep.subr.mxu0 0.0
      %3922 = vmatpush2.msra.mxu0 0.0
      %3923 = vmatprep.subr.mxu0 0.0
      %3924 = vmatpush2.msra.mxu0 0.0
      %3925 = vmatprep.subr.mxu0 0.0
      %3926 = vmatpush2.msra.mxu0 0.0
      %3927 = vmatprep.subr.mxu0 0.0
      %3928 = vmatpush2.msra.mxu0 0.0
      %3929 = vmatprep.subr.mxu0 0.0
      %3930 = vmatpush2.msra.mxu0 0.0
      %3931 = vmatprep.subr.mxu0 0.0
      %3932 = vmatpush2.msra.mxu0 0.0
      %3933 = vmatprep.subr.mxu0 0.0
      %3934 = vmatpush2.msra.mxu0 0.0
      %3935 = vmatprep.subr.mxu0 0.0
      %3936 = vmatpush2.msra.mxu0 0.0
      %3937 = vmatprep.subr.mxu0 0.0
      %3938 = vmatpush2.msra.mxu0 0.0
      %3939 = vmatprep.subr.mxu0 0.0
      %3940 = vmatpush2.msra.mxu0 0.0
      %3941 = vmatprep.subr.mxu0 0.0
      %3942 = vmatpush2.msra.mxu0 0.0
      %3943 = vmatprep.mubr.f32.mxu0 0.0
      %3944 = vmatmul.mubr.f32.gmra.mxu0 %v3832
      %v3945 = vpop.f32.mrf.mxu0
      %v3946 = vadd.f32 %v275, %v3945
      %v3947 = vpop.f32.mrf.mxu0
      %3948 = vmatprep.mubr.f32.mxu0 0.0
      %3949 = vmatmul.mubr.f32.gmra.mxu0 %v3835
      %v3950 = vpop.f32.mrf.mxu0
      %v3951 = vadd.f32 %v275, %v3950
      %v3952 = vpop.f32.mrf.mxu0
      %3953 = vmatprep.mubr.f32.mxu0 0.0
      %3954 = vmatmul.mubr.f32.gmra.mxu0 %v3838
      %v3955 = vpop.f32.mrf.mxu0
      %v3956 = vadd.f32 %v275, %v3955
      %v3957 = vpop.f32.mrf.mxu0
      %3958 = vmatprep.mubr.f32.mxu0 0.0
      %3959 = vmatmul.mubr.f32.gmra.mxu0 %v3841
      %v3960 = vpop.f32.mrf.mxu0
      %v3961 = vadd.f32 %v275, %v3960
      %v3962 = vpop.f32.mrf.mxu0
      %3963 = vmatprep.mubr.f32.mxu0 0.0
      %3964 = vmatmul.mubr.f32.gmra.mxu0 %v3844
      %v3965 = vpop.f32.mrf.mxu0
      %v3966 = vadd.f32 %v275, %v3965
      %v3967 = vpop.f32.mrf.mxu0
      %3968 = vmatprep.mubr.f32.mxu0 0.0
      %3969 = vmatmul.mubr.f32.gmra.mxu0 %v3847
      %v3970 = vpop.f32.mrf.mxu0
      %v3971 = vadd.f32 %v275, %v3970
      %v3972 = vpop.f32.mrf.mxu0
      %3973 = vmatprep.mubr.f32.mxu0 0.0
      %3974 = vmatmul.mubr.f32.gmra.mxu0 %v3850
      %v3975 = vpop.f32.mrf.mxu0
      %v3976 = vadd.f32 %v275, %v3975
      %v3977 = vpop.f32.mrf.mxu0
      %3978 = vmatprep.mubr.f32.mxu0 0.0
      %3979 = vmatmul.mubr.f32.gmra.mxu0 %v3853
      %v3980 = vpop.f32.mrf.mxu0
      %v3981 = vadd.f32 %v275, %v3980
      %v3982 = vpop.f32.mrf.mxu0
      %3983 = vmatprep.mubr.f32.mxu0 0.0
      %3984 = vmatmul.mubr.f32.gmra.mxu0 %v3856
      %v3985 = vpop.f32.mrf.mxu0
      %v3986 = vadd.f32 %v275, %v3985
      %v3987 = vpop.f32.mrf.mxu0
      %3988 = vmatprep.mubr.f32.mxu0 0.0
      %3989 = vmatmul.mubr.f32.gmra.mxu0 %v3859
      %v3990 = vpop.f32.mrf.mxu0
      %v3991 = vadd.f32 %v275, %v3990
      %v3992 = vpop.f32.mrf.mxu0
      %3993 = vmatprep.mubr.f32.mxu0 0.0
      %3994 = vmatmul.mubr.f32.gmra.mxu0 %v3862
      %v3995 = vpop.f32.mrf.mxu0
      %v3996 = vadd.f32 %v275, %v3995
      %v3997 = vpop.f32.mrf.mxu0
      %3998 = vmatprep.mubr.f32.mxu0 0.0
      %3999 = vmatmul.mubr.f32.gmra.mxu0 %v3865
      %v4000 = vpop.f32.mrf.mxu0
      %v4001 = vadd.f32 %v275, %v4000
      %v4002 = vpop.f32.mrf.mxu0
      %4003 = vmatprep.mubr.f32.mxu0 0.0
      %4004 = vmatmul.mubr.f32.gmra.mxu0 %v3868
      %v4005 = vpop.f32.mrf.mxu0
      %v4006 = vadd.f32 %v275, %v4005
      %v4007 = vpop.f32.mrf.mxu0
      %4008 = vmatprep.mubr.f32.mxu0 0.0
      %4009 = vmatmul.mubr.f32.gmra.mxu0 %v3871
      %v4010 = vpop.f32.mrf.mxu0
      %v4011 = vadd.f32 %v275, %v4010
      %v4012 = vpop.f32.mrf.mxu0
      %4013 = vmatprep.mubr.f32.mxu0 0.0
      %4014 = vmatmul.mubr.f32.gmra.mxu0 %v3874
      %v4015 = vpop.f32.mrf.mxu0
      %v4016 = vadd.f32 %v275, %v4015
      %v4017 = vpop.f32.mrf.mxu0
      %4018 = vmatprep.mubr.f32.mxu0 0.0
      %4019 = vmatmul.mubr.f32.gmra.mxu0 %v3877
      %v4020 = vpop.f32.mrf.mxu0
      %v4021 = vadd.f32 %v275, %v4020
      %v4022 = vpop.f32.mrf.mxu0
      %4023 = vdwg.mxu0
      %vm4024 = vcmp.ge.f32.partialorder %v3946, 0.0
      %vm4025 = vcmp.ge.f32.partialorder %v3951, 0.0
      %vm4026 = vcmp.ge.f32.partialorder %v3956, 0.0
      %vm4027 = vcmp.ge.f32.partialorder %v3961, 0.0
      %vm4028 = vcmp.ge.f32.partialorder %v3966, 0.0
      %vm4029 = vcmp.ge.f32.partialorder %v3971, 0.0
      %vm4030 = vcmp.ge.f32.partialorder %v3976, 0.0
      %vm4031 = vcmp.ge.f32.partialorder %v3981, 0.0
      %vm4032 = vcmp.ge.f32.partialorder %v3986, 0.0
      %vm4033 = vcmp.ge.f32.partialorder %v3991, 0.0
      %vm4034 = vcmp.ge.f32.partialorder %v3996, 0.0
      %vm4035 = vcmp.ge.f32.partialorder %v4001, 0.0
      %vm4036 = vcmp.ge.f32.partialorder %v4006, 0.0
      %vm4037 = vcmp.ge.f32.partialorder %v4011, 0.0
      %vm4038 = vcmp.ge.f32.partialorder %v4016, 0.0
      %vm4039 = vcmp.ge.f32.partialorder %v4021, 0.0
      %v4040 = vmul.f32 %v3946, 0.01
      %v4041 = vmul.f32 %v3951, 0.01
      %v4042 = vmul.f32 %v3956, 0.01
      %v4043 = vmul.f32 %v3961, 0.01
      %v4044 = vmul.f32 %v3966, 0.01
      %v4045 = vmul.f32 %v3971, 0.01
      %v4046 = vmul.f32 %v3976, 0.01
      %v4047 = vmul.f32 %v3981, 0.01
      %v4048 = vmul.f32 %v3986, 0.01
      %v4049 = vmul.f32 %v3991, 0.01
      %v4050 = vmul.f32 %v3996, 0.01
      %v4051 = vmul.f32 %v4001, 0.01
      %v4052 = vmul.f32 %v4006, 0.01
      %v4053 = vmul.f32 %v4011, 0.01
      %v4054 = vmul.f32 %v4016, 0.01
      %v4055 = vmul.f32 %v4021, 0.01
      %v4056 = vsel %vm4024, %v3946, %v4040
      %v4057 = vsel %vm4025, %v3951, %v4041
      %v4058 = vsel %vm4026, %v3956, %v4042
      %v4059 = vsel %vm4027, %v3961, %v4043
      %v4060 = vsel %vm4028, %v3966, %v4044
      %v4061 = vsel %vm4029, %v3971, %v4045
      %v4062 = vsel %vm4030, %v3976, %v4046
      %v4063 = vsel %vm4031, %v3981, %v4047
      %v4064 = vsel %vm4032, %v3986, %v4048
      %v4065 = vsel %vm4033, %v3991, %v4049
      %v4066 = vsel %vm4034, %v3996, %v4050
      %v4067 = vsel %vm4035, %v4001, %v4051
      %v4068 = vsel %vm4036, %v4006, %v4052
      %v4069 = vsel %vm4037, %v4011, %v4053
      %v4070 = vsel %vm4038, %v4016, %v4054
      %v4071 = vsel %vm4039, %v4021, %v4055
      %4072 = vst.msk [vmem:[#allocation2 + $0x680] sm:$0xff] %vm522, %v4056
      %4073 = vst.msk [vmem:[#allocation2 + $0x688] sm:$0xff] %vm522, %v4057
      %4074 = vst.msk [vmem:[#allocation2 + $0x690] sm:$0xff] %vm522, %v4058
      %4075 = vst.msk [vmem:[#allocation2 + $0x698] sm:$0xff] %vm522, %v4059
      %4076 = vst.msk [vmem:[#allocation2 + $0x6a0] sm:$0xff] %vm522, %v4060
      %4077 = vst.msk [vmem:[#allocation2 + $0x6a8] sm:$0xff] %vm522, %v4061
      %4078 = vst.msk [vmem:[#allocation2 + $0x6b0] sm:$0xff] %vm522, %v4062
      %4079 = vst.msk [vmem:[#allocation2 + $0x6b8] sm:$0xff] %vm522, %v4063
      %4080 = vst.msk [vmem:[#allocation2 + $0x6c0] sm:$0xff] %vm522, %v4064
      %4081 = vst.msk [vmem:[#allocation2 + $0x6c8] sm:$0xff] %vm522, %v4065
      %4082 = vst.msk [vmem:[#allocation2 + $0x6d0] sm:$0xff] %vm522, %v4066
      %4083 = vst.msk [vmem:[#allocation2 + $0x6d8] sm:$0xff] %vm522, %v4067
      %4084 = vst.msk [vmem:[#allocation2 + $0x6e0] sm:$0xff] %vm522, %v4068
      %4085 = vst.msk [vmem:[#allocation2 + $0x6e8] sm:$0xff] %vm522, %v4069
      %4086 = vst.msk [vmem:[#allocation2 + $0x6f0] sm:$0xff] %vm522, %v4070
      %4087 = vst.msk [vmem:[#allocation2 + $0x6f8] sm:$0xff] %vm522, %v4071
      %v4088 = vld [vmem:[%s245 + $0x700] sm:$0xff]
      %v4089 = vld [vmem:[%s245 + $0x708] sm:$0xff]
      %v4090 = vld [vmem:[%s245 + $0x710] sm:$0xff]
      %v4091 = vld [vmem:[%s245 + $0x718] sm:$0xff]
      %v4092 = vld [vmem:[%s245 + $0x720] sm:$0xff]
      %v4093 = vld [vmem:[%s245 + $0x728] sm:$0xff]
      %v4094 = vld [vmem:[%s245 + $0x730] sm:$0xff]
      %v4095 = vld [vmem:[%s245 + $0x738] sm:$0xff]
      %v4096 = vld [vmem:[%s245 + $0x740] sm:$0xff]
      %v4097 = vld [vmem:[%s245 + $0x748] sm:$0xff]
      %v4098 = vld [vmem:[%s245 + $0x750] sm:$0xff]
      %v4099 = vld [vmem:[%s245 + $0x758] sm:$0xff]
      %v4100 = vld [vmem:[%s245 + $0x760] sm:$0xff]
      %v4101 = vld [vmem:[%s245 + $0x768] sm:$0xff]
      %v4102 = vld [vmem:[%s245 + $0x770] sm:$0xff]
      %v4103 = vld [vmem:[%s245 + $0x778] sm:$0xff]
      %v4105 = vsel %vm276, %v4088, 0
      %v4108 = vsel %vm276, %v4089, 0
      %v4111 = vsel %vm276, %v4090, 0
      %v4114 = vsel %vm276, %v4091, 0
      %v4117 = vsel %vm276, %v4092, 0
      %v4120 = vsel %vm276, %v4093, 0
      %v4123 = vsel %vm276, %v4094, 0
      %v4126 = vsel %vm276, %v4095, 0
      %v4129 = vsel %vm276, %v4096, 0
      %v4132 = vsel %vm276, %v4097, 0
      %v4135 = vsel %vm276, %v4098, 0
      %v4138 = vsel %vm276, %v4099, 0
      %v4141 = vsel %vm276, %v4100, 0
      %v4144 = vsel %vm276, %v4101, 0
      %v4147 = vsel %vm276, %v4102, 0
      %v4150 = vsel %vm276, %v4103, 0
      %4152 = vmatprep.subr.mxu0 0.0
      %4153 = vmatpush1.msra.mxu0 0.0
      %4154 = vmatprep.subr.mxu0 0.0
      %4155 = vmatpush1.msra.mxu0 0.0
      %4156 = vmatprep.subr.mxu0 0.0
      %4157 = vmatpush1.msra.mxu0 0.0
      %4158 = vmatprep.subr.mxu0 0.0
      %4159 = vmatpush1.msra.mxu0 0.0
      %4160 = vmatprep.subr.mxu0 0.0
      %4161 = vmatpush1.msra.mxu0 0.0
      %4162 = vmatprep.subr.mxu0 0.0
      %4163 = vmatpush1.msra.mxu0 0.0
      %4164 = vmatprep.subr.mxu0 0.0
      %4165 = vmatpush1.msra.mxu0 0.0
      %4166 = vmatprep.subr.mxu0 0.0
      %4167 = vmatpush1.msra.mxu0 0.0
      %4168 = vmatprep.subr.mxu0 0.0
      %4169 = vmatpush1.msra.mxu0 0.0
      %4170 = vmatprep.subr.mxu0 0.0
      %4171 = vmatpush1.msra.mxu0 0.0
      %4172 = vmatprep.subr.mxu0 0.0
      %4173 = vmatpush1.msra.mxu0 0.0
      %4174 = vmatprep.subr.mxu0 0.0
      %4175 = vmatpush1.msra.mxu0 %v327
      %4176 = vmatprep.subr.mxu0 0.0
      %4177 = vmatpush1.msra.mxu0 %v254
      %4178 = vmatprep.subr.mxu0 0.0
      %4179 = vmatpush1.msra.mxu0 %v253
      %4180 = vmatprep.subr.mxu0 0.0
      %4181 = vmatpush1.msra.mxu0 %v252
      %4182 = vmatprep.subr.mxu0 0.0
      %4183 = vmatpush1.msra.mxu0 %v251
      %4184 = vmatprep.subr.mxu0 0.0
      %4185 = vmatpush2.msra.mxu0 0.0
      %4186 = vmatprep.subr.mxu0 0.0
      %4187 = vmatpush2.msra.mxu0 0.0
      %4188 = vmatprep.subr.mxu0 0.0
      %4189 = vmatpush2.msra.mxu0 0.0
      %4190 = vmatprep.subr.mxu0 0.0
      %4191 = vmatpush2.msra.mxu0 0.0
      %4192 = vmatprep.subr.mxu0 0.0
      %4193 = vmatpush2.msra.mxu0 0.0
      %4194 = vmatprep.subr.mxu0 0.0
      %4195 = vmatpush2.msra.mxu0 0.0
      %4196 = vmatprep.subr.mxu0 0.0
      %4197 = vmatpush2.msra.mxu0 0.0
      %4198 = vmatprep.subr.mxu0 0.0
      %4199 = vmatpush2.msra.mxu0 0.0
      %4200 = vmatprep.subr.mxu0 0.0
      %4201 = vmatpush2.msra.mxu0 0.0
      %4202 = vmatprep.subr.mxu0 0.0
      %4203 = vmatpush2.msra.mxu0 0.0
      %4204 = vmatprep.subr.mxu0 0.0
      %4205 = vmatpush2.msra.mxu0 0.0
      %4206 = vmatprep.subr.mxu0 0.0
      %4207 = vmatpush2.msra.mxu0 0.0
      %4208 = vmatprep.subr.mxu0 0.0
      %4209 = vmatpush2.msra.mxu0 0.0
      %4210 = vmatprep.subr.mxu0 0.0
      %4211 = vmatpush2.msra.mxu0 0.0
      %4212 = vmatprep.subr.mxu0 0.0
      %4213 = vmatpush2.msra.mxu0 0.0
      %4214 = vmatprep.subr.mxu0 0.0
      %4215 = vmatpush2.msra.mxu0 0.0
      %4216 = vmatprep.mubr.f32.mxu0 0.0
      %4217 = vmatmul.mubr.f32.gmra.mxu0 %v4105
      %v4218 = vpop.f32.mrf.mxu0
      %v4219 = vadd.f32 %v275, %v4218
      %v4220 = vpop.f32.mrf.mxu0
      %4221 = vmatprep.mubr.f32.mxu0 0.0
      %4222 = vmatmul.mubr.f32.gmra.mxu0 %v4108
      %v4223 = vpop.f32.mrf.mxu0
      %v4224 = vadd.f32 %v275, %v4223
      %v4225 = vpop.f32.mrf.mxu0
      %4226 = vmatprep.mubr.f32.mxu0 0.0
      %4227 = vmatmul.mubr.f32.gmra.mxu0 %v4111
      %v4228 = vpop.f32.mrf.mxu0
      %v4229 = vadd.f32 %v275, %v4228
      %v4230 = vpop.f32.mrf.mxu0
      %4231 = vmatprep.mubr.f32.mxu0 0.0
      %4232 = vmatmul.mubr.f32.gmra.mxu0 %v4114
      %v4233 = vpop.f32.mrf.mxu0
      %v4234 = vadd.f32 %v275, %v4233
      %v4235 = vpop.f32.mrf.mxu0
      %4236 = vmatprep.mubr.f32.mxu0 0.0
      %4237 = vmatmul.mubr.f32.gmra.mxu0 %v4117
      %v4238 = vpop.f32.mrf.mxu0
      %v4239 = vadd.f32 %v275, %v4238
      %v4240 = vpop.f32.mrf.mxu0
      %4241 = vmatprep.mubr.f32.mxu0 0.0
      %4242 = vmatmul.mubr.f32.gmra.mxu0 %v4120
      %v4243 = vpop.f32.mrf.mxu0
      %v4244 = vadd.f32 %v275, %v4243
      %v4245 = vpop.f32.mrf.mxu0
      %4246 = vmatprep.mubr.f32.mxu0 0.0
      %4247 = vmatmul.mubr.f32.gmra.mxu0 %v4123
      %v4248 = vpop.f32.mrf.mxu0
      %v4249 = vadd.f32 %v275, %v4248
      %v4250 = vpop.f32.mrf.mxu0
      %4251 = vmatprep.mubr.f32.mxu0 0.0
      %4252 = vmatmul.mubr.f32.gmra.mxu0 %v4126
      %v4253 = vpop.f32.mrf.mxu0
      %v4254 = vadd.f32 %v275, %v4253
      %v4255 = vpop.f32.mrf.mxu0
      %4256 = vmatprep.mubr.f32.mxu0 0.0
      %4257 = vmatmul.mubr.f32.gmra.mxu0 %v4129
      %v4258 = vpop.f32.mrf.mxu0
      %v4259 = vadd.f32 %v275, %v4258
      %v4260 = vpop.f32.mrf.mxu0
      %4261 = vmatprep.mubr.f32.mxu0 0.0
      %4262 = vmatmul.mubr.f32.gmra.mxu0 %v4132
      %v4263 = vpop.f32.mrf.mxu0
      %v4264 = vadd.f32 %v275, %v4263
      %v4265 = vpop.f32.mrf.mxu0
      %4266 = vmatprep.mubr.f32.mxu0 0.0
      %4267 = vmatmul.mubr.f32.gmra.mxu0 %v4135
      %v4268 = vpop.f32.mrf.mxu0
      %v4269 = vadd.f32 %v275, %v4268
      %v4270 = vpop.f32.mrf.mxu0
      %4271 = vmatprep.mubr.f32.mxu0 0.0
      %4272 = vmatmul.mubr.f32.gmra.mxu0 %v4138
      %v4273 = vpop.f32.mrf.mxu0
      %v4274 = vadd.f32 %v275, %v4273
      %v4275 = vpop.f32.mrf.mxu0
      %4276 = vmatprep.mubr.f32.mxu0 0.0
      %4277 = vmatmul.mubr.f32.gmra.mxu0 %v4141
      %v4278 = vpop.f32.mrf.mxu0
      %v4279 = vadd.f32 %v275, %v4278
      %v4280 = vpop.f32.mrf.mxu0
      %4281 = vmatprep.mubr.f32.mxu0 0.0
      %4282 = vmatmul.mubr.f32.gmra.mxu0 %v4144
      %v4283 = vpop.f32.mrf.mxu0
      %v4284 = vadd.f32 %v275, %v4283
      %v4285 = vpop.f32.mrf.mxu0
      %4286 = vmatprep.mubr.f32.mxu0 0.0
      %4287 = vmatmul.mubr.f32.gmra.mxu0 %v4147
      %v4288 = vpop.f32.mrf.mxu0
      %v4289 = vadd.f32 %v275, %v4288
      %v4290 = vpop.f32.mrf.mxu0
      %4291 = vmatprep.mubr.f32.mxu0 0.0
      %4292 = vmatmul.mubr.f32.gmra.mxu0 %v4150
      %v4293 = vpop.f32.mrf.mxu0
      %v4294 = vadd.f32 %v275, %v4293
      %v4295 = vpop.f32.mrf.mxu0
      %4296 = vdwg.mxu0
      %vm4297 = vcmp.ge.f32.partialorder %v4219, 0.0
      %vm4298 = vcmp.ge.f32.partialorder %v4224, 0.0
      %vm4299 = vcmp.ge.f32.partialorder %v4229, 0.0
      %vm4300 = vcmp.ge.f32.partialorder %v4234, 0.0
      %vm4301 = vcmp.ge.f32.partialorder %v4239, 0.0
      %vm4302 = vcmp.ge.f32.partialorder %v4244, 0.0
      %vm4303 = vcmp.ge.f32.partialorder %v4249, 0.0
      %vm4304 = vcmp.ge.f32.partialorder %v4254, 0.0
      %vm4305 = vcmp.ge.f32.partialorder %v4259, 0.0
      %vm4306 = vcmp.ge.f32.partialorder %v4264, 0.0
      %vm4307 = vcmp.ge.f32.partialorder %v4269, 0.0
      %vm4308 = vcmp.ge.f32.partialorder %v4274, 0.0
      %vm4309 = vcmp.ge.f32.partialorder %v4279, 0.0
      %vm4310 = vcmp.ge.f32.partialorder %v4284, 0.0
      %vm4311 = vcmp.ge.f32.partialorder %v4289, 0.0
      %vm4312 = vcmp.ge.f32.partialorder %v4294, 0.0
      %v4313 = vmul.f32 %v4219, 0.01
      %v4314 = vmul.f32 %v4224, 0.01
      %v4315 = vmul.f32 %v4229, 0.01
      %v4316 = vmul.f32 %v4234, 0.01
      %v4317 = vmul.f32 %v4239, 0.01
      %v4318 = vmul.f32 %v4244, 0.01
      %v4319 = vmul.f32 %v4249, 0.01
      %v4320 = vmul.f32 %v4254, 0.01
      %v4321 = vmul.f32 %v4259, 0.01
      %v4322 = vmul.f32 %v4264, 0.01
      %v4323 = vmul.f32 %v4269, 0.01
      %v4324 = vmul.f32 %v4274, 0.01
      %v4325 = vmul.f32 %v4279, 0.01
      %v4326 = vmul.f32 %v4284, 0.01
      %v4327 = vmul.f32 %v4289, 0.01
      %v4328 = vmul.f32 %v4294, 0.01
      %v4329 = vsel %vm4297, %v4219, %v4313
      %v4330 = vsel %vm4298, %v4224, %v4314
      %v4331 = vsel %vm4299, %v4229, %v4315
      %v4332 = vsel %vm4300, %v4234, %v4316
      %v4333 = vsel %vm4301, %v4239, %v4317
      %v4334 = vsel %vm4302, %v4244, %v4318
      %v4335 = vsel %vm4303, %v4249, %v4319
      %v4336 = vsel %vm4304, %v4254, %v4320
      %v4337 = vsel %vm4305, %v4259, %v4321
      %v4338 = vsel %vm4306, %v4264, %v4322
      %v4339 = vsel %vm4307, %v4269, %v4323
      %v4340 = vsel %vm4308, %v4274, %v4324
      %v4341 = vsel %vm4309, %v4279, %v4325
      %v4342 = vsel %vm4310, %v4284, %v4326
      %v4343 = vsel %vm4311, %v4289, %v4327
      %v4344 = vsel %vm4312, %v4294, %v4328
      %4345 = vst.msk [vmem:[#allocation2 + $0x700] sm:$0xff] %vm522, %v4329
      %4346 = vst.msk [vmem:[#allocation2 + $0x708] sm:$0xff] %vm522, %v4330
      %4347 = vst.msk [vmem:[#allocation2 + $0x710] sm:$0xff] %vm522, %v4331
      %4348 = vst.msk [vmem:[#allocation2 + $0x718] sm:$0xff] %vm522, %v4332
      %4349 = vst.msk [vmem:[#allocation2 + $0x720] sm:$0xff] %vm522, %v4333
      %4350 = vst.msk [vmem:[#allocation2 + $0x728] sm:$0xff] %vm522, %v4334
      %4351 = vst.msk [vmem:[#allocation2 + $0x730] sm:$0xff] %vm522, %v4335
      %4352 = vst.msk [vmem:[#allocation2 + $0x738] sm:$0xff] %vm522, %v4336
      %4353 = vst.msk [vmem:[#allocation2 + $0x740] sm:$0xff] %vm522, %v4337
      %4354 = vst.msk [vmem:[#allocation2 + $0x748] sm:$0xff] %vm522, %v4338
      %4355 = vst.msk [vmem:[#allocation2 + $0x750] sm:$0xff] %vm522, %v4339
      %4356 = vst.msk [vmem:[#allocation2 + $0x758] sm:$0xff] %vm522, %v4340
      %4357 = vst.msk [vmem:[#allocation2 + $0x760] sm:$0xff] %vm522, %v4341
      %4358 = vst.msk [vmem:[#allocation2 + $0x768] sm:$0xff] %vm522, %v4342
      %4359 = vst.msk [vmem:[#allocation2 + $0x770] sm:$0xff] %vm522, %v4343
      %4360 = vst.msk [vmem:[#allocation2 + $0x778] sm:$0xff] %vm522, %v4344
      %v4361 = vld [vmem:[%s245 + $0x780] sm:$0xff]
      %v4362 = vld [vmem:[%s245 + $0x788] sm:$0xff]
      %v4363 = vld [vmem:[%s245 + $0x790] sm:$0xff]
      %v4364 = vld [vmem:[%s245 + $0x798] sm:$0xff]
      %v4365 = vld [vmem:[%s245 + $0x7a0] sm:$0xff]
      %v4366 = vld [vmem:[%s245 + $0x7a8] sm:$0xff]
      %v4367 = vld [vmem:[%s245 + $0x7b0] sm:$0xff]
      %v4368 = vld [vmem:[%s245 + $0x7b8] sm:$0xff]
      %v4369 = vld [vmem:[%s245 + $0x7c0] sm:$0xff]
      %v4370 = vld [vmem:[%s245 + $0x7c8] sm:$0xff]
      %v4371 = vld [vmem:[%s245 + $0x7d0] sm:$0xff]
      %v4372 = vld [vmem:[%s245 + $0x7d8] sm:$0xff]
      %v4373 = vld [vmem:[%s245 + $0x7e0] sm:$0xff]
      %v4374 = vld [vmem:[%s245 + $0x7e8] sm:$0xff]
      %v4375 = vld [vmem:[%s245 + $0x7f0] sm:$0xff]
      %v4376 = vld [vmem:[%s245 + $0x7f8] sm:$0xff]
      %v4378 = vsel %vm276, %v4361, 0
      %v4381 = vsel %vm276, %v4362, 0
      %v4384 = vsel %vm276, %v4363, 0
      %v4387 = vsel %vm276, %v4364, 0
      %v4390 = vsel %vm276, %v4365, 0
      %v4393 = vsel %vm276, %v4366, 0
      %v4396 = vsel %vm276, %v4367, 0
      %v4399 = vsel %vm276, %v4368, 0
      %v4402 = vsel %vm276, %v4369, 0
      %v4405 = vsel %vm276, %v4370, 0
      %v4408 = vsel %vm276, %v4371, 0
      %v4411 = vsel %vm276, %v4372, 0
      %v4414 = vsel %vm276, %v4373, 0
      %v4417 = vsel %vm276, %v4374, 0
      %v4420 = vsel %vm276, %v4375, 0
      %v4423 = vsel %vm276, %v4376, 0
      %4425 = vmatprep.subr.mxu0 0.0
      %4426 = vmatpush1.msra.mxu0 0.0
      %4427 = vmatprep.subr.mxu0 0.0
      %4428 = vmatpush1.msra.mxu0 0.0
      %4429 = vmatprep.subr.mxu0 0.0
      %4430 = vmatpush1.msra.mxu0 0.0
      %4431 = vmatprep.subr.mxu0 0.0
      %4432 = vmatpush1.msra.mxu0 0.0
      %4433 = vmatprep.subr.mxu0 0.0
      %4434 = vmatpush1.msra.mxu0 0.0
      %4435 = vmatprep.subr.mxu0 0.0
      %4436 = vmatpush1.msra.mxu0 0.0
      %4437 = vmatprep.subr.mxu0 0.0
      %4438 = vmatpush1.msra.mxu0 0.0
      %4439 = vmatprep.subr.mxu0 0.0
      %4440 = vmatpush1.msra.mxu0 0.0
      %4441 = vmatprep.subr.mxu0 0.0
      %4442 = vmatpush1.msra.mxu0 0.0
      %4443 = vmatprep.subr.mxu0 0.0
      %4444 = vmatpush1.msra.mxu0 0.0
      %4445 = vmatprep.subr.mxu0 0.0
      %4446 = vmatpush1.msra.mxu0 0.0
      %4447 = vmatprep.subr.mxu0 0.0
      %4448 = vmatpush1.msra.mxu0 %v327
      %4449 = vmatprep.subr.mxu0 0.0
      %4450 = vmatpush1.msra.mxu0 %v254
      %4451 = vmatprep.subr.mxu0 0.0
      %4452 = vmatpush1.msra.mxu0 %v253
      %4453 = vmatprep.subr.mxu0 0.0
      %4454 = vmatpush1.msra.mxu0 %v252
      %4455 = vmatprep.subr.mxu0 0.0
      %4456 = vmatpush1.msra.mxu0 %v251
      %4457 = vmatprep.subr.mxu0 0.0
      %4458 = vmatpush2.msra.mxu0 0.0
      %4459 = vmatprep.subr.mxu0 0.0
      %4460 = vmatpush2.msra.mxu0 0.0
      %4461 = vmatprep.subr.mxu0 0.0
      %4462 = vmatpush2.msra.mxu0 0.0
      %4463 = vmatprep.subr.mxu0 0.0
      %4464 = vmatpush2.msra.mxu0 0.0
      %4465 = vmatprep.subr.mxu0 0.0
      %4466 = vmatpush2.msra.mxu0 0.0
      %4467 = vmatprep.subr.mxu0 0.0
      %4468 = vmatpush2.msra.mxu0 0.0
      %4469 = vmatprep.subr.mxu0 0.0
      %4470 = vmatpush2.msra.mxu0 0.0
      %4471 = vmatprep.subr.mxu0 0.0
      %4472 = vmatpush2.msra.mxu0 0.0
      %4473 = vmatprep.subr.mxu0 0.0
      %4474 = vmatpush2.msra.mxu0 0.0
      %4475 = vmatprep.subr.mxu0 0.0
      %4476 = vmatpush2.msra.mxu0 0.0
      %4477 = vmatprep.subr.mxu0 0.0
      %4478 = vmatpush2.msra.mxu0 0.0
      %4479 = vmatprep.subr.mxu0 0.0
      %4480 = vmatpush2.msra.mxu0 0.0
      %4481 = vmatprep.subr.mxu0 0.0
      %4482 = vmatpush2.msra.mxu0 0.0
      %4483 = vmatprep.subr.mxu0 0.0
      %4484 = vmatpush2.msra.mxu0 0.0
      %4485 = vmatprep.subr.mxu0 0.0
      %4486 = vmatpush2.msra.mxu0 0.0
      %4487 = vmatprep.subr.mxu0 0.0
      %4488 = vmatpush2.msra.mxu0 0.0
      %4489 = vmatprep.mubr.f32.mxu0 0.0
      %4490 = vmatmul.mubr.f32.gmra.mxu0 %v4378
      %v4491 = vpop.f32.mrf.mxu0
      %v4492 = vadd.f32 %v275, %v4491
      %v4493 = vpop.f32.mrf.mxu0
      %4494 = vmatprep.mubr.f32.mxu0 0.0
      %4495 = vmatmul.mubr.f32.gmra.mxu0 %v4381
      %v4496 = vpop.f32.mrf.mxu0
      %v4497 = vadd.f32 %v275, %v4496
      %v4498 = vpop.f32.mrf.mxu0
      %4499 = vmatprep.mubr.f32.mxu0 0.0
      %4500 = vmatmul.mubr.f32.gmra.mxu0 %v4384
      %v4501 = vpop.f32.mrf.mxu0
      %v4502 = vadd.f32 %v275, %v4501
      %v4503 = vpop.f32.mrf.mxu0
      %4504 = vmatprep.mubr.f32.mxu0 0.0
      %4505 = vmatmul.mubr.f32.gmra.mxu0 %v4387
      %v4506 = vpop.f32.mrf.mxu0
      %v4507 = vadd.f32 %v275, %v4506
      %v4508 = vpop.f32.mrf.mxu0
      %4509 = vmatprep.mubr.f32.mxu0 0.0
      %4510 = vmatmul.mubr.f32.gmra.mxu0 %v4390
      %v4511 = vpop.f32.mrf.mxu0
      %v4512 = vadd.f32 %v275, %v4511
      %v4513 = vpop.f32.mrf.mxu0
      %4514 = vmatprep.mubr.f32.mxu0 0.0
      %4515 = vmatmul.mubr.f32.gmra.mxu0 %v4393
      %v4516 = vpop.f32.mrf.mxu0
      %v4517 = vadd.f32 %v275, %v4516
      %v4518 = vpop.f32.mrf.mxu0
      %4519 = vmatprep.mubr.f32.mxu0 0.0
      %4520 = vmatmul.mubr.f32.gmra.mxu0 %v4396
      %v4521 = vpop.f32.mrf.mxu0
      %v4522 = vadd.f32 %v275, %v4521
      %v4523 = vpop.f32.mrf.mxu0
      %4524 = vmatprep.mubr.f32.mxu0 0.0
      %4525 = vmatmul.mubr.f32.gmra.mxu0 %v4399
      %v4526 = vpop.f32.mrf.mxu0
      %v4527 = vadd.f32 %v275, %v4526
      %v4528 = vpop.f32.mrf.mxu0
      %4529 = vmatprep.mubr.f32.mxu0 0.0
      %4530 = vmatmul.mubr.f32.gmra.mxu0 %v4402
      %v4531 = vpop.f32.mrf.mxu0
      %v4532 = vadd.f32 %v275, %v4531
      %v4533 = vpop.f32.mrf.mxu0
      %4534 = vmatprep.mubr.f32.mxu0 0.0
      %4535 = vmatmul.mubr.f32.gmra.mxu0 %v4405
      %v4536 = vpop.f32.mrf.mxu0
      %v4537 = vadd.f32 %v275, %v4536
      %v4538 = vpop.f32.mrf.mxu0
      %4539 = vmatprep.mubr.f32.mxu0 0.0
      %4540 = vmatmul.mubr.f32.gmra.mxu0 %v4408
      %v4541 = vpop.f32.mrf.mxu0
      %v4542 = vadd.f32 %v275, %v4541
      %v4543 = vpop.f32.mrf.mxu0
      %4544 = vmatprep.mubr.f32.mxu0 0.0
      %4545 = vmatmul.mubr.f32.gmra.mxu0 %v4411
      %v4546 = vpop.f32.mrf.mxu0
      %v4547 = vadd.f32 %v275, %v4546
      %v4548 = vpop.f32.mrf.mxu0
      %4549 = vmatprep.mubr.f32.mxu0 0.0
      %4550 = vmatmul.mubr.f32.gmra.mxu0 %v4414
      %v4551 = vpop.f32.mrf.mxu0
      %v4552 = vadd.f32 %v275, %v4551
      %v4553 = vpop.f32.mrf.mxu0
      %4554 = vmatprep.mubr.f32.mxu0 0.0
      %4555 = vmatmul.mubr.f32.gmra.mxu0 %v4417
      %v4556 = vpop.f32.mrf.mxu0
      %v4557 = vadd.f32 %v275, %v4556
      %v4558 = vpop.f32.mrf.mxu0
      %4559 = vmatprep.mubr.f32.mxu0 0.0
      %4560 = vmatmul.mubr.f32.gmra.mxu0 %v4420
      %v4561 = vpop.f32.mrf.mxu0
      %v4562 = vadd.f32 %v275, %v4561
      %v4563 = vpop.f32.mrf.mxu0
      %4564 = vmatprep.mubr.f32.mxu0 0.0
      %4565 = vmatmul.mubr.f32.gmra.mxu0 %v4423
      %v4566 = vpop.f32.mrf.mxu0
      %v4567 = vadd.f32 %v275, %v4566
      %v4568 = vpop.f32.mrf.mxu0
      %4569 = vdwg.mxu0
      %vm4570 = vcmp.ge.f32.partialorder %v4492, 0.0
      %vm4571 = vcmp.ge.f32.partialorder %v4497, 0.0
      %vm4572 = vcmp.ge.f32.partialorder %v4502, 0.0
      %vm4573 = vcmp.ge.f32.partialorder %v4507, 0.0
      %vm4574 = vcmp.ge.f32.partialorder %v4512, 0.0
      %vm4575 = vcmp.ge.f32.partialorder %v4517, 0.0
      %vm4576 = vcmp.ge.f32.partialorder %v4522, 0.0
      %vm4577 = vcmp.ge.f32.partialorder %v4527, 0.0
      %vm4578 = vcmp.ge.f32.partialorder %v4532, 0.0
      %vm4579 = vcmp.ge.f32.partialorder %v4537, 0.0
      %vm4580 = vcmp.ge.f32.partialorder %v4542, 0.0
      %vm4581 = vcmp.ge.f32.partialorder %v4547, 0.0
      %vm4582 = vcmp.ge.f32.partialorder %v4552, 0.0
      %vm4583 = vcmp.ge.f32.partialorder %v4557, 0.0
      %vm4584 = vcmp.ge.f32.partialorder %v4562, 0.0
      %vm4585 = vcmp.ge.f32.partialorder %v4567, 0.0
      %v4586 = vmul.f32 %v4492, 0.01
      %v4587 = vmul.f32 %v4497, 0.01
      %v4588 = vmul.f32 %v4502, 0.01
      %v4589 = vmul.f32 %v4507, 0.01
      %v4590 = vmul.f32 %v4512, 0.01
      %v4591 = vmul.f32 %v4517, 0.01
      %v4592 = vmul.f32 %v4522, 0.01
      %v4593 = vmul.f32 %v4527, 0.01
      %v4594 = vmul.f32 %v4532, 0.01
      %v4595 = vmul.f32 %v4537, 0.01
      %v4596 = vmul.f32 %v4542, 0.01
      %v4597 = vmul.f32 %v4547, 0.01
      %v4598 = vmul.f32 %v4552, 0.01
      %v4599 = vmul.f32 %v4557, 0.01
      %v4600 = vmul.f32 %v4562, 0.01
      %v4601 = vmul.f32 %v4567, 0.01
      %v4602 = vsel %vm4570, %v4492, %v4586
      %v4603 = vsel %vm4571, %v4497, %v4587
      %v4604 = vsel %vm4572, %v4502, %v4588
      %v4605 = vsel %vm4573, %v4507, %v4589
      %v4606 = vsel %vm4574, %v4512, %v4590
      %v4607 = vsel %vm4575, %v4517, %v4591
      %v4608 = vsel %vm4576, %v4522, %v4592
      %v4609 = vsel %vm4577, %v4527, %v4593
      %v4610 = vsel %vm4578, %v4532, %v4594
      %v4611 = vsel %vm4579, %v4537, %v4595
      %v4612 = vsel %vm4580, %v4542, %v4596
      %v4613 = vsel %vm4581, %v4547, %v4597
      %v4614 = vsel %vm4582, %v4552, %v4598
      %v4615 = vsel %vm4583, %v4557, %v4599
      %v4616 = vsel %vm4584, %v4562, %v4600
      %v4617 = vsel %vm4585, %v4567, %v4601
      %4618 = vst.msk [vmem:[#allocation2 + $0x780] sm:$0xff] %vm522, %v4602
      %4619 = vst.msk [vmem:[#allocation2 + $0x788] sm:$0xff] %vm522, %v4603
      %4620 = vst.msk [vmem:[#allocation2 + $0x790] sm:$0xff] %vm522, %v4604
      %4621 = vst.msk [vmem:[#allocation2 + $0x798] sm:$0xff] %vm522, %v4605
      %4622 = vst.msk [vmem:[#allocation2 + $0x7a0] sm:$0xff] %vm522, %v4606
      %4623 = vst.msk [vmem:[#allocation2 + $0x7a8] sm:$0xff] %vm522, %v4607
      %4624 = vst.msk [vmem:[#allocation2 + $0x7b0] sm:$0xff] %vm522, %v4608
      %4625 = vst.msk [vmem:[#allocation2 + $0x7b8] sm:$0xff] %vm522, %v4609
      %4626 = vst.msk [vmem:[#allocation2 + $0x7c0] sm:$0xff] %vm522, %v4610
      %4627 = vst.msk [vmem:[#allocation2 + $0x7c8] sm:$0xff] %vm522, %v4611
      %4628 = vst.msk [vmem:[#allocation2 + $0x7d0] sm:$0xff] %vm522, %v4612
      %4629 = vst.msk [vmem:[#allocation2 + $0x7d8] sm:$0xff] %vm522, %v4613
      %4630 = vst.msk [vmem:[#allocation2 + $0x7e0] sm:$0xff] %vm522, %v4614
      %4631 = vst.msk [vmem:[#allocation2 + $0x7e8] sm:$0xff] %vm522, %v4615
      %4632 = vst.msk [vmem:[#allocation2 + $0x7f0] sm:$0xff] %vm522, %v4616
      %4633 = vst.msk [vmem:[#allocation2 + $0x7f8] sm:$0xff] %vm522, %v4617
      %v4634 = vld [vmem:[%s245 + $0x800] sm:$0xff]
      %v4635 = vld [vmem:[%s245 + $0x808] sm:$0xff]
      %v4636 = vld [vmem:[%s245 + $0x810] sm:$0xff]
      %v4637 = vld [vmem:[%s245 + $0x818] sm:$0xff]
      %v4638 = vld [vmem:[%s245 + $0x820] sm:$0xff]
      %v4639 = vld [vmem:[%s245 + $0x828] sm:$0xff]
      %v4640 = vld [vmem:[%s245 + $0x830] sm:$0xff]
      %v4641 = vld [vmem:[%s245 + $0x838] sm:$0xff]
      %v4642 = vld [vmem:[%s245 + $0x840] sm:$0xff]
      %v4643 = vld [vmem:[%s245 + $0x848] sm:$0xff]
      %v4644 = vld [vmem:[%s245 + $0x850] sm:$0xff]
      %v4645 = vld [vmem:[%s245 + $0x858] sm:$0xff]
      %v4646 = vld [vmem:[%s245 + $0x860] sm:$0xff]
      %v4647 = vld [vmem:[%s245 + $0x868] sm:$0xff]
      %v4648 = vld [vmem:[%s245 + $0x870] sm:$0xff]
      %v4649 = vld [vmem:[%s245 + $0x878] sm:$0xff]
      %v4651 = vsel %vm276, %v4634, 0
      %v4654 = vsel %vm276, %v4635, 0
      %v4657 = vsel %vm276, %v4636, 0
      %v4660 = vsel %vm276, %v4637, 0
      %v4663 = vsel %vm276, %v4638, 0
      %v4666 = vsel %vm276, %v4639, 0
      %v4669 = vsel %vm276, %v4640, 0
      %v4672 = vsel %vm276, %v4641, 0
      %v4675 = vsel %vm276, %v4642, 0
      %v4678 = vsel %vm276, %v4643, 0
      %v4681 = vsel %vm276, %v4644, 0
      %v4684 = vsel %vm276, %v4645, 0
      %v4687 = vsel %vm276, %v4646, 0
      %v4690 = vsel %vm276, %v4647, 0
      %v4693 = vsel %vm276, %v4648, 0
      %v4696 = vsel %vm276, %v4649, 0
      %4698 = vmatprep.subr.mxu0 0.0
      %4699 = vmatpush1.msra.mxu0 0.0
      %4700 = vmatprep.subr.mxu0 0.0
      %4701 = vmatpush1.msra.mxu0 0.0
      %4702 = vmatprep.subr.mxu0 0.0
      %4703 = vmatpush1.msra.mxu0 0.0
      %4704 = vmatprep.subr.mxu0 0.0
      %4705 = vmatpush1.msra.mxu0 0.0
      %4706 = vmatprep.subr.mxu0 0.0
      %4707 = vmatpush1.msra.mxu0 0.0
      %4708 = vmatprep.subr.mxu0 0.0
      %4709 = vmatpush1.msra.mxu0 0.0
      %4710 = vmatprep.subr.mxu0 0.0
      %4711 = vmatpush1.msra.mxu0 0.0
      %4712 = vmatprep.subr.mxu0 0.0
      %4713 = vmatpush1.msra.mxu0 0.0
      %4714 = vmatprep.subr.mxu0 0.0
      %4715 = vmatpush1.msra.mxu0 0.0
      %4716 = vmatprep.subr.mxu0 0.0
      %4717 = vmatpush1.msra.mxu0 0.0
      %4718 = vmatprep.subr.mxu0 0.0
      %4719 = vmatpush1.msra.mxu0 0.0
      %4720 = vmatprep.subr.mxu0 0.0
      %4721 = vmatpush1.msra.mxu0 %v327
      %4722 = vmatprep.subr.mxu0 0.0
      %4723 = vmatpush1.msra.mxu0 %v254
      %4724 = vmatprep.subr.mxu0 0.0
      %4725 = vmatpush1.msra.mxu0 %v253
      %4726 = vmatprep.subr.mxu0 0.0
      %4727 = vmatpush1.msra.mxu0 %v252
      %4728 = vmatprep.subr.mxu0 0.0
      %4729 = vmatpush1.msra.mxu0 %v251
      %4730 = vmatprep.subr.mxu0 0.0
      %4731 = vmatpush2.msra.mxu0 0.0
      %4732 = vmatprep.subr.mxu0 0.0
      %4733 = vmatpush2.msra.mxu0 0.0
      %4734 = vmatprep.subr.mxu0 0.0
      %4735 = vmatpush2.msra.mxu0 0.0
      %4736 = vmatprep.subr.mxu0 0.0
      %4737 = vmatpush2.msra.mxu0 0.0
      %4738 = vmatprep.subr.mxu0 0.0
      %4739 = vmatpush2.msra.mxu0 0.0
      %4740 = vmatprep.subr.mxu0 0.0
      %4741 = vmatpush2.msra.mxu0 0.0
      %4742 = vmatprep.subr.mxu0 0.0
      %4743 = vmatpush2.msra.mxu0 0.0
      %4744 = vmatprep.subr.mxu0 0.0
      %4745 = vmatpush2.msra.mxu0 0.0
      %4746 = vmatprep.subr.mxu0 0.0
      %4747 = vmatpush2.msra.mxu0 0.0
      %4748 = vmatprep.subr.mxu0 0.0
      %4749 = vmatpush2.msra.mxu0 0.0
      %4750 = vmatprep.subr.mxu0 0.0
      %4751 = vmatpush2.msra.mxu0 0.0
      %4752 = vmatprep.subr.mxu0 0.0
      %4753 = vmatpush2.msra.mxu0 0.0
      %4754 = vmatprep.subr.mxu0 0.0
      %4755 = vmatpush2.msra.mxu0 0.0
      %4756 = vmatprep.subr.mxu0 0.0
      %4757 = vmatpush2.msra.mxu0 0.0
      %4758 = vmatprep.subr.mxu0 0.0
      %4759 = vmatpush2.msra.mxu0 0.0
      %4760 = vmatprep.subr.mxu0 0.0
      %4761 = vmatpush2.msra.mxu0 0.0
      %4762 = vmatprep.mubr.f32.mxu0 0.0
      %4763 = vmatmul.mubr.f32.gmra.mxu0 %v4651
      %v4764 = vpop.f32.mrf.mxu0
      %v4765 = vadd.f32 %v275, %v4764
      %v4766 = vpop.f32.mrf.mxu0
      %4767 = vmatprep.mubr.f32.mxu0 0.0
      %4768 = vmatmul.mubr.f32.gmra.mxu0 %v4654
      %v4769 = vpop.f32.mrf.mxu0
      %v4770 = vadd.f32 %v275, %v4769
      %v4771 = vpop.f32.mrf.mxu0
      %4772 = vmatprep.mubr.f32.mxu0 0.0
      %4773 = vmatmul.mubr.f32.gmra.mxu0 %v4657
      %v4774 = vpop.f32.mrf.mxu0
      %v4775 = vadd.f32 %v275, %v4774
      %v4776 = vpop.f32.mrf.mxu0
      %4777 = vmatprep.mubr.f32.mxu0 0.0
      %4778 = vmatmul.mubr.f32.gmra.mxu0 %v4660
      %v4779 = vpop.f32.mrf.mxu0
      %v4780 = vadd.f32 %v275, %v4779
      %v4781 = vpop.f32.mrf.mxu0
      %4782 = vmatprep.mubr.f32.mxu0 0.0
      %4783 = vmatmul.mubr.f32.gmra.mxu0 %v4663
      %v4784 = vpop.f32.mrf.mxu0
      %v4785 = vadd.f32 %v275, %v4784
      %v4786 = vpop.f32.mrf.mxu0
      %4787 = vmatprep.mubr.f32.mxu0 0.0
      %4788 = vmatmul.mubr.f32.gmra.mxu0 %v4666
      %v4789 = vpop.f32.mrf.mxu0
      %v4790 = vadd.f32 %v275, %v4789
      %v4791 = vpop.f32.mrf.mxu0
      %4792 = vmatprep.mubr.f32.mxu0 0.0
      %4793 = vmatmul.mubr.f32.gmra.mxu0 %v4669
      %v4794 = vpop.f32.mrf.mxu0
      %v4795 = vadd.f32 %v275, %v4794
      %v4796 = vpop.f32.mrf.mxu0
      %4797 = vmatprep.mubr.f32.mxu0 0.0
      %4798 = vmatmul.mubr.f32.gmra.mxu0 %v4672
      %v4799 = vpop.f32.mrf.mxu0
      %v4800 = vadd.f32 %v275, %v4799
      %v4801 = vpop.f32.mrf.mxu0
      %4802 = vmatprep.mubr.f32.mxu0 0.0
      %4803 = vmatmul.mubr.f32.gmra.mxu0 %v4675
      %v4804 = vpop.f32.mrf.mxu0
      %v4805 = vadd.f32 %v275, %v4804
      %v4806 = vpop.f32.mrf.mxu0
      %4807 = vmatprep.mubr.f32.mxu0 0.0
      %4808 = vmatmul.mubr.f32.gmra.mxu0 %v4678
      %v4809 = vpop.f32.mrf.mxu0
      %v4810 = vadd.f32 %v275, %v4809
      %v4811 = vpop.f32.mrf.mxu0
      %4812 = vmatprep.mubr.f32.mxu0 0.0
      %4813 = vmatmul.mubr.f32.gmra.mxu0 %v4681
      %v4814 = vpop.f32.mrf.mxu0
      %v4815 = vadd.f32 %v275, %v4814
      %v4816 = vpop.f32.mrf.mxu0
      %4817 = vmatprep.mubr.f32.mxu0 0.0
      %4818 = vmatmul.mubr.f32.gmra.mxu0 %v4684
      %v4819 = vpop.f32.mrf.mxu0
      %v4820 = vadd.f32 %v275, %v4819
      %v4821 = vpop.f32.mrf.mxu0
      %4822 = vmatprep.mubr.f32.mxu0 0.0
      %4823 = vmatmul.mubr.f32.gmra.mxu0 %v4687
      %v4824 = vpop.f32.mrf.mxu0
      %v4825 = vadd.f32 %v275, %v4824
      %v4826 = vpop.f32.mrf.mxu0
      %4827 = vmatprep.mubr.f32.mxu0 0.0
      %4828 = vmatmul.mubr.f32.gmra.mxu0 %v4690
      %v4829 = vpop.f32.mrf.mxu0
      %v4830 = vadd.f32 %v275, %v4829
      %v4831 = vpop.f32.mrf.mxu0
      %4832 = vmatprep.mubr.f32.mxu0 0.0
      %4833 = vmatmul.mubr.f32.gmra.mxu0 %v4693
      %v4834 = vpop.f32.mrf.mxu0
      %v4835 = vadd.f32 %v275, %v4834
      %v4836 = vpop.f32.mrf.mxu0
      %4837 = vmatprep.mubr.f32.mxu0 0.0
      %4838 = vmatmul.mubr.f32.gmra.mxu0 %v4696
      %v4839 = vpop.f32.mrf.mxu0
      %v4840 = vadd.f32 %v275, %v4839
      %v4841 = vpop.f32.mrf.mxu0
      %4842 = vdwg.mxu0
      %vm4843 = vcmp.ge.f32.partialorder %v4765, 0.0
      %vm4844 = vcmp.ge.f32.partialorder %v4770, 0.0
      %vm4845 = vcmp.ge.f32.partialorder %v4775, 0.0
      %vm4846 = vcmp.ge.f32.partialorder %v4780, 0.0
      %vm4847 = vcmp.ge.f32.partialorder %v4785, 0.0
      %vm4848 = vcmp.ge.f32.partialorder %v4790, 0.0
      %vm4849 = vcmp.ge.f32.partialorder %v4795, 0.0
      %vm4850 = vcmp.ge.f32.partialorder %v4800, 0.0
      %vm4851 = vcmp.ge.f32.partialorder %v4805, 0.0
      %vm4852 = vcmp.ge.f32.partialorder %v4810, 0.0
      %vm4853 = vcmp.ge.f32.partialorder %v4815, 0.0
      %vm4854 = vcmp.ge.f32.partialorder %v4820, 0.0
      %vm4855 = vcmp.ge.f32.partialorder %v4825, 0.0
      %vm4856 = vcmp.ge.f32.partialorder %v4830, 0.0
      %vm4857 = vcmp.ge.f32.partialorder %v4835, 0.0
      %vm4858 = vcmp.ge.f32.partialorder %v4840, 0.0
      %v4859 = vmul.f32 %v4765, 0.01
      %v4860 = vmul.f32 %v4770, 0.01
      %v4861 = vmul.f32 %v4775, 0.01
      %v4862 = vmul.f32 %v4780, 0.01
      %v4863 = vmul.f32 %v4785, 0.01
      %v4864 = vmul.f32 %v4790, 0.01
      %v4865 = vmul.f32 %v4795, 0.01
      %v4866 = vmul.f32 %v4800, 0.01
      %v4867 = vmul.f32 %v4805, 0.01
      %v4868 = vmul.f32 %v4810, 0.01
      %v4869 = vmul.f32 %v4815, 0.01
      %v4870 = vmul.f32 %v4820, 0.01
      %v4871 = vmul.f32 %v4825, 0.01
      %v4872 = vmul.f32 %v4830, 0.01
      %v4873 = vmul.f32 %v4835, 0.01
      %v4874 = vmul.f32 %v4840, 0.01
      %v4875 = vsel %vm4843, %v4765, %v4859
      %v4876 = vsel %vm4844, %v4770, %v4860
      %v4877 = vsel %vm4845, %v4775, %v4861
      %v4878 = vsel %vm4846, %v4780, %v4862
      %v4879 = vsel %vm4847, %v4785, %v4863
      %v4880 = vsel %vm4848, %v4790, %v4864
      %v4881 = vsel %vm4849, %v4795, %v4865
      %v4882 = vsel %vm4850, %v4800, %v4866
      %v4883 = vsel %vm4851, %v4805, %v4867
      %v4884 = vsel %vm4852, %v4810, %v4868
      %v4885 = vsel %vm4853, %v4815, %v4869
      %v4886 = vsel %vm4854, %v4820, %v4870
      %v4887 = vsel %vm4855, %v4825, %v4871
      %v4888 = vsel %vm4856, %v4830, %v4872
      %v4889 = vsel %vm4857, %v4835, %v4873
      %v4890 = vsel %vm4858, %v4840, %v4874
      %4891 = vst.msk [vmem:[#allocation2 + $0x800] sm:$0xff] %vm522, %v4875
      %4892 = vst.msk [vmem:[#allocation2 + $0x808] sm:$0xff] %vm522, %v4876
      %4893 = vst.msk [vmem:[#allocation2 + $0x810] sm:$0xff] %vm522, %v4877
      %4894 = vst.msk [vmem:[#allocation2 + $0x818] sm:$0xff] %vm522, %v4878
      %4895 = vst.msk [vmem:[#allocation2 + $0x820] sm:$0xff] %vm522, %v4879
      %4896 = vst.msk [vmem:[#allocation2 + $0x828] sm:$0xff] %vm522, %v4880
      %4897 = vst.msk [vmem:[#allocation2 + $0x830] sm:$0xff] %vm522, %v4881
      %4898 = vst.msk [vmem:[#allocation2 + $0x838] sm:$0xff] %vm522, %v4882
      %4899 = vst.msk [vmem:[#allocation2 + $0x840] sm:$0xff] %vm522, %v4883
      %4900 = vst.msk [vmem:[#allocation2 + $0x848] sm:$0xff] %vm522, %v4884
      %4901 = vst.msk [vmem:[#allocation2 + $0x850] sm:$0xff] %vm522, %v4885
      %4902 = vst.msk [vmem:[#allocation2 + $0x858] sm:$0xff] %vm522, %v4886
      %4903 = vst.msk [vmem:[#allocation2 + $0x860] sm:$0xff] %vm522, %v4887
      %4904 = vst.msk [vmem:[#allocation2 + $0x868] sm:$0xff] %vm522, %v4888
      %4905 = vst.msk [vmem:[#allocation2 + $0x870] sm:$0xff] %vm522, %v4889
      %4906 = vst.msk [vmem:[#allocation2 + $0x878] sm:$0xff] %vm522, %v4890
      %v4907 = vld [vmem:[%s245 + $0x880] sm:$0xff]
      %v4908 = vld [vmem:[%s245 + $0x888] sm:$0xff]
      %v4909 = vld [vmem:[%s245 + $0x890] sm:$0xff]
      %v4910 = vld [vmem:[%s245 + $0x898] sm:$0xff]
      %v4911 = vld [vmem:[%s245 + $0x8a0] sm:$0xff]
      %v4912 = vld [vmem:[%s245 + $0x8a8] sm:$0xff]
      %v4913 = vld [vmem:[%s245 + $0x8b0] sm:$0xff]
      %v4914 = vld [vmem:[%s245 + $0x8b8] sm:$0xff]
      %v4915 = vld [vmem:[%s245 + $0x8c0] sm:$0xff]
      %v4916 = vld [vmem:[%s245 + $0x8c8] sm:$0xff]
      %v4917 = vld [vmem:[%s245 + $0x8d0] sm:$0xff]
      %v4918 = vld [vmem:[%s245 + $0x8d8] sm:$0xff]
      %v4919 = vld [vmem:[%s245 + $0x8e0] sm:$0xff]
      %v4920 = vld [vmem:[%s245 + $0x8e8] sm:$0xff]
      %v4921 = vld [vmem:[%s245 + $0x8f0] sm:$0xff]
      %v4922 = vld [vmem:[%s245 + $0x8f8] sm:$0xff]
      %v4924 = vsel %vm276, %v4907, 0
      %v4927 = vsel %vm276, %v4908, 0
      %v4930 = vsel %vm276, %v4909, 0
      %v4933 = vsel %vm276, %v4910, 0
      %v4936 = vsel %vm276, %v4911, 0
      %v4939 = vsel %vm276, %v4912, 0
      %v4942 = vsel %vm276, %v4913, 0
      %v4945 = vsel %vm276, %v4914, 0
      %v4948 = vsel %vm276, %v4915, 0
      %v4951 = vsel %vm276, %v4916, 0
      %v4954 = vsel %vm276, %v4917, 0
      %v4957 = vsel %vm276, %v4918, 0
      %v4960 = vsel %vm276, %v4919, 0
      %v4963 = vsel %vm276, %v4920, 0
      %v4966 = vsel %vm276, %v4921, 0
      %v4969 = vsel %vm276, %v4922, 0
      %4971 = vmatprep.subr.mxu0 0.0
      %4972 = vmatpush1.msra.mxu0 0.0
      %4973 = vmatprep.subr.mxu0 0.0
      %4974 = vmatpush1.msra.mxu0 0.0
      %4975 = vmatprep.subr.mxu0 0.0
      %4976 = vmatpush1.msra.mxu0 0.0
      %4977 = vmatprep.subr.mxu0 0.0
      %4978 = vmatpush1.msra.mxu0 0.0
      %4979 = vmatprep.subr.mxu0 0.0
      %4980 = vmatpush1.msra.mxu0 0.0
      %4981 = vmatprep.subr.mxu0 0.0
      %4982 = vmatpush1.msra.mxu0 0.0
      %4983 = vmatprep.subr.mxu0 0.0
      %4984 = vmatpush1.msra.mxu0 0.0
      %4985 = vmatprep.subr.mxu0 0.0
      %4986 = vmatpush1.msra.mxu0 0.0
      %4987 = vmatprep.subr.mxu0 0.0
      %4988 = vmatpush1.msra.mxu0 0.0
      %4989 = vmatprep.subr.mxu0 0.0
      %4990 = vmatpush1.msra.mxu0 0.0
      %4991 = vmatprep.subr.mxu0 0.0
      %4992 = vmatpush1.msra.mxu0 0.0
      %4993 = vmatprep.subr.mxu0 0.0
      %4994 = vmatpush1.msra.mxu0 %v327
      %4995 = vmatprep.subr.mxu0 0.0
      %4996 = vmatpush1.msra.mxu0 %v254
      %4997 = vmatprep.subr.mxu0 0.0
      %4998 = vmatpush1.msra.mxu0 %v253
      %4999 = vmatprep.subr.mxu0 0.0
      %5000 = vmatpush1.msra.mxu0 %v252
      %5001 = vmatprep.subr.mxu0 0.0
      %5002 = vmatpush1.msra.mxu0 %v251
      %5003 = vmatprep.subr.mxu0 0.0
      %5004 = vmatpush2.msra.mxu0 0.0
      %5005 = vmatprep.subr.mxu0 0.0
      %5006 = vmatpush2.msra.mxu0 0.0
      %5007 = vmatprep.subr.mxu0 0.0
      %5008 = vmatpush2.msra.mxu0 0.0
      %5009 = vmatprep.subr.mxu0 0.0
      %5010 = vmatpush2.msra.mxu0 0.0
      %5011 = vmatprep.subr.mxu0 0.0
      %5012 = vmatpush2.msra.mxu0 0.0
      %5013 = vmatprep.subr.mxu0 0.0
      %5014 = vmatpush2.msra.mxu0 0.0
      %5015 = vmatprep.subr.mxu0 0.0
      %5016 = vmatpush2.msra.mxu0 0.0
      %5017 = vmatprep.subr.mxu0 0.0
      %5018 = vmatpush2.msra.mxu0 0.0
      %5019 = vmatprep.subr.mxu0 0.0
      %5020 = vmatpush2.msra.mxu0 0.0
      %5021 = vmatprep.subr.mxu0 0.0
      %5022 = vmatpush2.msra.mxu0 0.0
      %5023 = vmatprep.subr.mxu0 0.0
      %5024 = vmatpush2.msra.mxu0 0.0
      %5025 = vmatprep.subr.mxu0 0.0
      %5026 = vmatpush2.msra.mxu0 0.0
      %5027 = vmatprep.subr.mxu0 0.0
      %5028 = vmatpush2.msra.mxu0 0.0
      %5029 = vmatprep.subr.mxu0 0.0
      %5030 = vmatpush2.msra.mxu0 0.0
      %5031 = vmatprep.subr.mxu0 0.0
      %5032 = vmatpush2.msra.mxu0 0.0
      %5033 = vmatprep.subr.mxu0 0.0
      %5034 = vmatpush2.msra.mxu0 0.0
      %5035 = vmatprep.mubr.f32.mxu0 0.0
      %5036 = vmatmul.mubr.f32.gmra.mxu0 %v4924
      %v5037 = vpop.f32.mrf.mxu0
      %v5038 = vadd.f32 %v275, %v5037
      %v5039 = vpop.f32.mrf.mxu0
      %5040 = vmatprep.mubr.f32.mxu0 0.0
      %5041 = vmatmul.mubr.f32.gmra.mxu0 %v4927
      %v5042 = vpop.f32.mrf.mxu0
      %v5043 = vadd.f32 %v275, %v5042
      %v5044 = vpop.f32.mrf.mxu0
      %5045 = vmatprep.mubr.f32.mxu0 0.0
      %5046 = vmatmul.mubr.f32.gmra.mxu0 %v4930
      %v5047 = vpop.f32.mrf.mxu0
      %v5048 = vadd.f32 %v275, %v5047
      %v5049 = vpop.f32.mrf.mxu0
      %5050 = vmatprep.mubr.f32.mxu0 0.0
      %5051 = vmatmul.mubr.f32.gmra.mxu0 %v4933
      %v5052 = vpop.f32.mrf.mxu0
      %v5053 = vadd.f32 %v275, %v5052
      %v5054 = vpop.f32.mrf.mxu0
      %5055 = vmatprep.mubr.f32.mxu0 0.0
      %5056 = vmatmul.mubr.f32.gmra.mxu0 %v4936
      %v5057 = vpop.f32.mrf.mxu0
      %v5058 = vadd.f32 %v275, %v5057
      %v5059 = vpop.f32.mrf.mxu0
      %5060 = vmatprep.mubr.f32.mxu0 0.0
      %5061 = vmatmul.mubr.f32.gmra.mxu0 %v4939
      %v5062 = vpop.f32.mrf.mxu0
      %v5063 = vadd.f32 %v275, %v5062
      %v5064 = vpop.f32.mrf.mxu0
      %5065 = vmatprep.mubr.f32.mxu0 0.0
      %5066 = vmatmul.mubr.f32.gmra.mxu0 %v4942
      %v5067 = vpop.f32.mrf.mxu0
      %v5068 = vadd.f32 %v275, %v5067
      %v5069 = vpop.f32.mrf.mxu0
      %5070 = vmatprep.mubr.f32.mxu0 0.0
      %5071 = vmatmul.mubr.f32.gmra.mxu0 %v4945
      %v5072 = vpop.f32.mrf.mxu0
      %v5073 = vadd.f32 %v275, %v5072
      %v5074 = vpop.f32.mrf.mxu0
      %5075 = vmatprep.mubr.f32.mxu0 0.0
      %5076 = vmatmul.mubr.f32.gmra.mxu0 %v4948
      %v5077 = vpop.f32.mrf.mxu0
      %v5078 = vadd.f32 %v275, %v5077
      %v5079 = vpop.f32.mrf.mxu0
      %5080 = vmatprep.mubr.f32.mxu0 0.0
      %5081 = vmatmul.mubr.f32.gmra.mxu0 %v4951
      %v5082 = vpop.f32.mrf.mxu0
      %v5083 = vadd.f32 %v275, %v5082
      %v5084 = vpop.f32.mrf.mxu0
      %5085 = vmatprep.mubr.f32.mxu0 0.0
      %5086 = vmatmul.mubr.f32.gmra.mxu0 %v4954
      %v5087 = vpop.f32.mrf.mxu0
      %v5088 = vadd.f32 %v275, %v5087
      %v5089 = vpop.f32.mrf.mxu0
      %5090 = vmatprep.mubr.f32.mxu0 0.0
      %5091 = vmatmul.mubr.f32.gmra.mxu0 %v4957
      %v5092 = vpop.f32.mrf.mxu0
      %v5093 = vadd.f32 %v275, %v5092
      %v5094 = vpop.f32.mrf.mxu0
      %5095 = vmatprep.mubr.f32.mxu0 0.0
      %5096 = vmatmul.mubr.f32.gmra.mxu0 %v4960
      %v5097 = vpop.f32.mrf.mxu0
      %v5098 = vadd.f32 %v275, %v5097
      %v5099 = vpop.f32.mrf.mxu0
      %5100 = vmatprep.mubr.f32.mxu0 0.0
      %5101 = vmatmul.mubr.f32.gmra.mxu0 %v4963
      %v5102 = vpop.f32.mrf.mxu0
      %v5103 = vadd.f32 %v275, %v5102
      %v5104 = vpop.f32.mrf.mxu0
      %5105 = vmatprep.mubr.f32.mxu0 0.0
      %5106 = vmatmul.mubr.f32.gmra.mxu0 %v4966
      %v5107 = vpop.f32.mrf.mxu0
      %v5108 = vadd.f32 %v275, %v5107
      %v5109 = vpop.f32.mrf.mxu0
      %5110 = vmatprep.mubr.f32.mxu0 0.0
      %5111 = vmatmul.mubr.f32.gmra.mxu0 %v4969
      %v5112 = vpop.f32.mrf.mxu0
      %v5113 = vadd.f32 %v275, %v5112
      %v5114 = vpop.f32.mrf.mxu0
      %5115 = vdwg.mxu0
      %vm5116 = vcmp.ge.f32.partialorder %v5038, 0.0
      %vm5117 = vcmp.ge.f32.partialorder %v5043, 0.0
      %vm5118 = vcmp.ge.f32.partialorder %v5048, 0.0
      %vm5119 = vcmp.ge.f32.partialorder %v5053, 0.0
      %vm5120 = vcmp.ge.f32.partialorder %v5058, 0.0
      %vm5121 = vcmp.ge.f32.partialorder %v5063, 0.0
      %vm5122 = vcmp.ge.f32.partialorder %v5068, 0.0
      %vm5123 = vcmp.ge.f32.partialorder %v5073, 0.0
      %vm5124 = vcmp.ge.f32.partialorder %v5078, 0.0
      %vm5125 = vcmp.ge.f32.partialorder %v5083, 0.0
      %vm5126 = vcmp.ge.f32.partialorder %v5088, 0.0
      %vm5127 = vcmp.ge.f32.partialorder %v5093, 0.0
      %vm5128 = vcmp.ge.f32.partialorder %v5098, 0.0
      %vm5129 = vcmp.ge.f32.partialorder %v5103, 0.0
      %vm5130 = vcmp.ge.f32.partialorder %v5108, 0.0
      %vm5131 = vcmp.ge.f32.partialorder %v5113, 0.0
      %v5132 = vmul.f32 %v5038, 0.01
      %v5133 = vmul.f32 %v5043, 0.01
      %v5134 = vmul.f32 %v5048, 0.01
      %v5135 = vmul.f32 %v5053, 0.01
      %v5136 = vmul.f32 %v5058, 0.01
      %v5137 = vmul.f32 %v5063, 0.01
      %v5138 = vmul.f32 %v5068, 0.01
      %v5139 = vmul.f32 %v5073, 0.01
      %v5140 = vmul.f32 %v5078, 0.01
      %v5141 = vmul.f32 %v5083, 0.01
      %v5142 = vmul.f32 %v5088, 0.01
      %v5143 = vmul.f32 %v5093, 0.01
      %v5144 = vmul.f32 %v5098, 0.01
      %v5145 = vmul.f32 %v5103, 0.01
      %v5146 = vmul.f32 %v5108, 0.01
      %v5147 = vmul.f32 %v5113, 0.01
      %v5148 = vsel %vm5116, %v5038, %v5132
      %v5149 = vsel %vm5117, %v5043, %v5133
      %v5150 = vsel %vm5118, %v5048, %v5134
      %v5151 = vsel %vm5119, %v5053, %v5135
      %v5152 = vsel %vm5120, %v5058, %v5136
      %v5153 = vsel %vm5121, %v5063, %v5137
      %v5154 = vsel %vm5122, %v5068, %v5138
      %v5155 = vsel %vm5123, %v5073, %v5139
      %v5156 = vsel %vm5124, %v5078, %v5140
      %v5157 = vsel %vm5125, %v5083, %v5141
      %v5158 = vsel %vm5126, %v5088, %v5142
      %v5159 = vsel %vm5127, %v5093, %v5143
      %v5160 = vsel %vm5128, %v5098, %v5144
      %v5161 = vsel %vm5129, %v5103, %v5145
      %v5162 = vsel %vm5130, %v5108, %v5146
      %v5163 = vsel %vm5131, %v5113, %v5147
      %5164 = vst.msk [vmem:[#allocation2 + $0x880] sm:$0xff] %vm522, %v5148
      %5165 = vst.msk [vmem:[#allocation2 + $0x888] sm:$0xff] %vm522, %v5149
      %5166 = vst.msk [vmem:[#allocation2 + $0x890] sm:$0xff] %vm522, %v5150
      %5167 = vst.msk [vmem:[#allocation2 + $0x898] sm:$0xff] %vm522, %v5151
      %5168 = vst.msk [vmem:[#allocation2 + $0x8a0] sm:$0xff] %vm522, %v5152
      %5169 = vst.msk [vmem:[#allocation2 + $0x8a8] sm:$0xff] %vm522, %v5153
      %5170 = vst.msk [vmem:[#allocation2 + $0x8b0] sm:$0xff] %vm522, %v5154
      %5171 = vst.msk [vmem:[#allocation2 + $0x8b8] sm:$0xff] %vm522, %v5155
      %5172 = vst.msk [vmem:[#allocation2 + $0x8c0] sm:$0xff] %vm522, %v5156
      %5173 = vst.msk [vmem:[#allocation2 + $0x8c8] sm:$0xff] %vm522, %v5157
      %5174 = vst.msk [vmem:[#allocation2 + $0x8d0] sm:$0xff] %vm522, %v5158
      %5175 = vst.msk [vmem:[#allocation2 + $0x8d8] sm:$0xff] %vm522, %v5159
      %5176 = vst.msk [vmem:[#allocation2 + $0x8e0] sm:$0xff] %vm522, %v5160
      %5177 = vst.msk [vmem:[#allocation2 + $0x8e8] sm:$0xff] %vm522, %v5161
      %5178 = vst.msk [vmem:[#allocation2 + $0x8f0] sm:$0xff] %vm522, %v5162
      %5179 = vst.msk [vmem:[#allocation2 + $0x8f8] sm:$0xff] %vm522, %v5163
      %5180 = vst.msk [vmem:[#allocation3 + $0x228] sm:$0xff] %vm522, 0.0
      %v5181 = vld [vmem:[#allocation2] ss:$2 sm:$0xff]
      %s5182 = scalar_lea.vmem [#allocation2], 16
      %v5183 = vld [vmem:[%s5182] ss:$2 sm:$0xff]
      %s5184 = scalar_lea.vmem [#allocation2], 32
      %v5185 = vld [vmem:[%s5184] ss:$2 sm:$0xff]
      %s5186 = scalar_lea.vmem [#allocation2], 48
      %v5187 = vld [vmem:[%s5186] ss:$2 sm:$0xff]
      %s5188 = scalar_lea.vmem [#allocation2], 64
      %v5189 = vld [vmem:[%s5188] ss:$2 sm:$0xff]
      %s5190 = scalar_lea.vmem [#allocation2], 80
      %v5191 = vld [vmem:[%s5190] ss:$2 sm:$0xff]
      %s5192 = scalar_lea.vmem [#allocation2], 96
      %v5193 = vld [vmem:[%s5192] ss:$2 sm:$0xff]
      %s5194 = scalar_lea.vmem [#allocation2], 112
      %v5195 = vld [vmem:[%s5194] ss:$2 sm:$0xff]
      %s5196 = scalar_lea.vmem [#allocation2], 128
      %v5197 = vld [vmem:[%s5196] ss:$2 sm:$0xff]
      %s5198 = scalar_lea.vmem [#allocation2], 144
      %v5199 = vld [vmem:[%s5198] ss:$2 sm:$0xff]
      %s5200 = scalar_lea.vmem [#allocation2], 160
      %v5201 = vld [vmem:[%s5200] ss:$2 sm:$0xff]
      %s5202 = scalar_lea.vmem [#allocation2], 176
      %v5203 = vld [vmem:[%s5202] ss:$2 sm:$0xff]
      %s5204 = scalar_lea.vmem [#allocation2], 192
      %v5205 = vld [vmem:[%s5204] ss:$2 sm:$0xff]
      %s5206 = scalar_lea.vmem [#allocation2], 208
      %v5207 = vld [vmem:[%s5206] ss:$2 sm:$0xff]
      %s5208 = scalar_lea.vmem [#allocation2], 224
      %v5209 = vld [vmem:[%s5208] ss:$2 sm:$0xff]
      %s5210 = scalar_lea.vmem [#allocation2], 240
      %v5211 = vld [vmem:[%s5210] ss:$2 sm:$0xff]
      %s5212 = scalar_lea.vmem [#allocation2], 256
      %v5213 = vld [vmem:[%s5212] ss:$2 sm:$0xff]
      %s5214 = scalar_lea.vmem [#allocation2], 272
      %v5215 = vld [vmem:[%s5214] ss:$2 sm:$0x3]
      %s5216 = scalar_lea.vmem [#allocation2], 1
      %v5217 = vld [vmem:[%s5216] ss:$2 sm:$0xff]
      %s5218 = scalar_lea.vmem [#allocation2], 17
      %v5219 = vld [vmem:[%s5218] ss:$2 sm:$0xff]
      %s5220 = scalar_lea.vmem [#allocation2], 33
      %v5221 = vld [vmem:[%s5220] ss:$2 sm:$0xff]
      %s5222 = scalar_lea.vmem [#allocation2], 49
      %v5223 = vld [vmem:[%s5222] ss:$2 sm:$0xff]
      %s5224 = scalar_lea.vmem [#allocation2], 65
      %v5225 = vld [vmem:[%s5224] ss:$2 sm:$0xff]
      %s5226 = scalar_lea.vmem [#allocation2], 81
      %v5227 = vld [vmem:[%s5226] ss:$2 sm:$0xff]
      %s5228 = scalar_lea.vmem [#allocation2], 97
      %v5229 = vld [vmem:[%s5228] ss:$2 sm:$0xff]
      %s5230 = scalar_lea.vmem [#allocation2], 113
      %v5231 = vld [vmem:[%s5230] ss:$2 sm:$0xff]
      %s5232 = scalar_lea.vmem [#allocation2], 129
      %v5233 = vld [vmem:[%s5232] ss:$2 sm:$0xff]
      %s5234 = scalar_lea.vmem [#allocation2], 145
      %v5235 = vld [vmem:[%s5234] ss:$2 sm:$0xff]
      %s5236 = scalar_lea.vmem [#allocation2], 161
      %v5237 = vld [vmem:[%s5236] ss:$2 sm:$0xff]
      %s5238 = scalar_lea.vmem [#allocation2], 177
      %v5239 = vld [vmem:[%s5238] ss:$2 sm:$0xff]
      %s5240 = scalar_lea.vmem [#allocation2], 193
      %v5241 = vld [vmem:[%s5240] ss:$2 sm:$0xff]
      %s5242 = scalar_lea.vmem [#allocation2], 209
      %v5243 = vld [vmem:[%s5242] ss:$2 sm:$0xff]
      %s5244 = scalar_lea.vmem [#allocation2], 225
      %v5245 = vld [vmem:[%s5244] ss:$2 sm:$0xff]
      %s5246 = scalar_lea.vmem [#allocation2], 241
      %v5247 = vld [vmem:[%s5246] ss:$2 sm:$0xff]
      %s5248 = scalar_lea.vmem [#allocation2], 257
      %v5249 = vld [vmem:[%s5248] ss:$2 sm:$0xff]
      %s5250 = scalar_lea.vmem [#allocation2], 273
      %v5251 = vld [vmem:[%s5250] ss:$2 sm:$0x3]
      %v5252 = vmax.f32 %v5181, %v5217
      %v5253 = vmax.f32 %v5183, %v5219
      %v5254 = vmax.f32 %v5185, %v5221
      %v5255 = vmax.f32 %v5187, %v5223
      %v5256 = vmax.f32 %v5189, %v5225
      %v5257 = vmax.f32 %v5191, %v5227
      %v5258 = vmax.f32 %v5193, %v5229
      %v5259 = vmax.f32 %v5195, %v5231
      %v5260 = vmax.f32 %v5197, %v5233
      %v5261 = vmax.f32 %v5199, %v5235
      %v5262 = vmax.f32 %v5201, %v5237
      %v5263 = vmax.f32 %v5203, %v5239
      %v5264 = vmax.f32 %v5205, %v5241
      %v5265 = vmax.f32 %v5207, %v5243
      %v5266 = vmax.f32 %v5209, %v5245
      %v5267 = vmax.f32 %v5211, %v5247
      %v5268 = vmax.f32 %v5213, %v5249
      %v5269 = vmax.f32 %v5215, %v5251
      %s5270 = scalar_lea.vmem [#allocation2], 280
      %v5271 = vld [vmem:[%s5270] ss:$2 sm:$0xff]
      %s5272 = scalar_lea.vmem [#allocation2], 296
      %v5273 = vld [vmem:[%s5272] ss:$2 sm:$0xff]
      %s5274 = scalar_lea.vmem [#allocation2], 312
      %v5275 = vld [vmem:[%s5274] ss:$2 sm:$0xff]
      %s5276 = scalar_lea.vmem [#allocation2], 328
      %v5277 = vld [vmem:[%s5276] ss:$2 sm:$0xff]
      %s5278 = scalar_lea.vmem [#allocation2], 344
      %v5279 = vld [vmem:[%s5278] ss:$2 sm:$0xff]
      %s5280 = scalar_lea.vmem [#allocation2], 360
      %v5281 = vld [vmem:[%s5280] ss:$2 sm:$0xff]
      %s5282 = scalar_lea.vmem [#allocation2], 376
      %v5283 = vld [vmem:[%s5282] ss:$2 sm:$0xff]
      %s5284 = scalar_lea.vmem [#allocation2], 392
      %v5285 = vld [vmem:[%s5284] ss:$2 sm:$0xff]
      %s5286 = scalar_lea.vmem [#allocation2], 408
      %v5287 = vld [vmem:[%s5286] ss:$2 sm:$0xff]
      %s5288 = scalar_lea.vmem [#allocation2], 424
      %v5289 = vld [vmem:[%s5288] ss:$2 sm:$0xff]
      %s5290 = scalar_lea.vmem [#allocation2], 440
      %v5291 = vld [vmem:[%s5290] ss:$2 sm:$0xff]
      %s5292 = scalar_lea.vmem [#allocation2], 456
      %v5293 = vld [vmem:[%s5292] ss:$2 sm:$0xff]
      %s5294 = scalar_lea.vmem [#allocation2], 472
      %v5295 = vld [vmem:[%s5294] ss:$2 sm:$0xff]
      %s5296 = scalar_lea.vmem [#allocation2], 488
      %v5297 = vld [vmem:[%s5296] ss:$2 sm:$0xff]
      %s5298 = scalar_lea.vmem [#allocation2], 504
      %v5299 = vld [vmem:[%s5298] ss:$2 sm:$0xff]
      %s5300 = scalar_lea.vmem [#allocation2], 520
      %v5301 = vld [vmem:[%s5300] ss:$2 sm:$0xff]
      %s5302 = scalar_lea.vmem [#allocation2], 536
      %v5303 = vld [vmem:[%s5302] ss:$2 sm:$0xff]
      %s5304 = scalar_lea.vmem [#allocation2], 552
      %v5305 = vld [vmem:[%s5304] ss:$2 sm:$0x3]
      %s5306 = scalar_lea.vmem [#allocation2], 281
      %v5307 = vld [vmem:[%s5306] ss:$2 sm:$0xff]
      %s5308 = scalar_lea.vmem [#allocation2], 297
      %v5309 = vld [vmem:[%s5308] ss:$2 sm:$0xff]
      %s5310 = scalar_lea.vmem [#allocation2], 313
      %v5311 = vld [vmem:[%s5310] ss:$2 sm:$0xff]
      %s5312 = scalar_lea.vmem [#allocation2], 329
      %v5313 = vld [vmem:[%s5312] ss:$2 sm:$0xff]
      %s5314 = scalar_lea.vmem [#allocation2], 345
      %v5315 = vld [vmem:[%s5314] ss:$2 sm:$0xff]
      %s5316 = scalar_lea.vmem [#allocation2], 361
      %v5317 = vld [vmem:[%s5316] ss:$2 sm:$0xff]
      %s5318 = scalar_lea.vmem [#allocation2], 377
      %v5319 = vld [vmem:[%s5318] ss:$2 sm:$0xff]
      %s5320 = scalar_lea.vmem [#allocation2], 393
      %v5321 = vld [vmem:[%s5320] ss:$2 sm:$0xff]
      %s5322 = scalar_lea.vmem [#allocation2], 409
      %v5323 = vld [vmem:[%s5322] ss:$2 sm:$0xff]
      %s5324 = scalar_lea.vmem [#allocation2], 425
      %v5325 = vld [vmem:[%s5324] ss:$2 sm:$0xff]
      %s5326 = scalar_lea.vmem [#allocation2], 441
      %v5327 = vld [vmem:[%s5326] ss:$2 sm:$0xff]
      %s5328 = scalar_lea.vmem [#allocation2], 457
      %v5329 = vld [vmem:[%s5328] ss:$2 sm:$0xff]
      %s5330 = scalar_lea.vmem [#allocation2], 473
      %v5331 = vld [vmem:[%s5330] ss:$2 sm:$0xff]
      %s5332 = scalar_lea.vmem [#allocation2], 489
      %v5333 = vld [vmem:[%s5332] ss:$2 sm:$0xff]
      %s5334 = scalar_lea.vmem [#allocation2], 505
      %v5335 = vld [vmem:[%s5334] ss:$2 sm:$0xff]
      %s5336 = scalar_lea.vmem [#allocation2], 521
      %v5337 = vld [vmem:[%s5336] ss:$2 sm:$0xff]
      %s5338 = scalar_lea.vmem [#allocation2], 537
      %v5339 = vld [vmem:[%s5338] ss:$2 sm:$0xff]
      %s5340 = scalar_lea.vmem [#allocation2], 553
      %v5341 = vld [vmem:[%s5340] ss:$2 sm:$0x3]
      %v5342 = vmax.f32 %v5271, %v5307
      %v5343 = vmax.f32 %v5273, %v5309
      %v5344 = vmax.f32 %v5275, %v5311
      %v5345 = vmax.f32 %v5277, %v5313
      %v5346 = vmax.f32 %v5279, %v5315
      %v5347 = vmax.f32 %v5281, %v5317
      %v5348 = vmax.f32 %v5283, %v5319
      %v5349 = vmax.f32 %v5285, %v5321
      %v5350 = vmax.f32 %v5287, %v5323
      %v5351 = vmax.f32 %v5289, %v5325
      %v5352 = vmax.f32 %v5291, %v5327
      %v5353 = vmax.f32 %v5293, %v5329
      %v5354 = vmax.f32 %v5295, %v5331
      %v5355 = vmax.f32 %v5297, %v5333
      %v5356 = vmax.f32 %v5299, %v5335
      %v5357 = vmax.f32 %v5301, %v5337
      %v5358 = vmax.f32 %v5303, %v5339
      %v5359 = vmax.f32 %v5305, %v5341
      %v5360 = vmax.f32 %v5252, %v5342
      %v5361 = vmax.f32 %v5253, %v5343
      %v5362 = vmax.f32 %v5254, %v5344
      %v5363 = vmax.f32 %v5255, %v5345
      %v5364 = vmax.f32 %v5256, %v5346
      %v5365 = vmax.f32 %v5257, %v5347
      %v5366 = vmax.f32 %v5258, %v5348
      %v5367 = vmax.f32 %v5259, %v5349
      %v5368 = vmax.f32 %v5260, %v5350
      %v5369 = vmax.f32 %v5261, %v5351
      %v5370 = vmax.f32 %v5262, %v5352
      %v5371 = vmax.f32 %v5263, %v5353
      %v5372 = vmax.f32 %v5264, %v5354
      %v5373 = vmax.f32 %v5265, %v5355
      %v5374 = vmax.f32 %v5266, %v5356
      %v5375 = vmax.f32 %v5267, %v5357
      %v5376 = vmax.f32 %v5268, %v5358
      %v5377 = vmax.f32 %v5269, %v5359
      %5378 = vst.msk [vmem:[#allocation3] sm:$0xff] %vm522, %v5360
      %5379 = vst.msk [vmem:[#allocation3 + $0x8] sm:$0xff] %vm522, %v5361
      %5380 = vst.msk [vmem:[#allocation3 + $0x10] sm:$0xff] %vm522, %v5362
      %5381 = vst.msk [vmem:[#allocation3 + $0x18] sm:$0xff] %vm522, %v5363
      %5382 = vst.msk [vmem:[#allocation3 + $0x20] sm:$0xff] %vm522, %v5364
      %5383 = vst.msk [vmem:[#allocation3 + $0x28] sm:$0xff] %vm522, %v5365
      %5384 = vst.msk [vmem:[#allocation3 + $0x30] sm:$0xff] %vm522, %v5366
      %5385 = vst.msk [vmem:[#allocation3 + $0x38] sm:$0xff] %vm522, %v5367
      %5386 = vst.msk [vmem:[#allocation3 + $0x40] sm:$0xff] %vm522, %v5368
      %5387 = vst.msk [vmem:[#allocation3 + $0x48] sm:$0xff] %vm522, %v5369
      %5388 = vst.msk [vmem:[#allocation3 + $0x50] sm:$0xff] %vm522, %v5370
      %5389 = vst.msk [vmem:[#allocation3 + $0x58] sm:$0xff] %vm522, %v5371
      %5390 = vst.msk [vmem:[#allocation3 + $0x60] sm:$0xff] %vm522, %v5372
      %5391 = vst.msk [vmem:[#allocation3 + $0x68] sm:$0xff] %vm522, %v5373
      %5392 = vst.msk [vmem:[#allocation3 + $0x70] sm:$0xff] %vm522, %v5374
      %5393 = vst.msk [vmem:[#allocation3 + $0x78] sm:$0xff] %vm522, %v5375
      %5394 = vst.msk [vmem:[#allocation3 + $0x80] sm:$0xff] %vm522, %v5376
      %vm5395 = vcmask 402432
      %5396 = vst.msk [vmem:[#allocation3 + $0x88] sm:$0x3] %vm5395, %v5377
      %s5397 = scalar_lea.vmem [#allocation2], 560
      %v5398 = vld [vmem:[%s5397] ss:$2 sm:$0xff]
      %s5399 = scalar_lea.vmem [#allocation2], 576
      %v5400 = vld [vmem:[%s5399] ss:$2 sm:$0xff]
      %s5401 = scalar_lea.vmem [#allocation2], 592
      %v5402 = vld [vmem:[%s5401] ss:$2 sm:$0xff]
      %s5403 = scalar_lea.vmem [#allocation2], 608
      %v5404 = vld [vmem:[%s5403] ss:$2 sm:$0xff]
      %s5405 = scalar_lea.vmem [#allocation2], 624
      %v5406 = vld [vmem:[%s5405] ss:$2 sm:$0xff]
      %s5407 = scalar_lea.vmem [#allocation2], 640
      %v5408 = vld [vmem:[%s5407] ss:$2 sm:$0xff]
      %s5409 = scalar_lea.vmem [#allocation2], 656
      %v5410 = vld [vmem:[%s5409] ss:$2 sm:$0xff]
      %s5411 = scalar_lea.vmem [#allocation2], 672
      %v5412 = vld [vmem:[%s5411] ss:$2 sm:$0xff]
      %s5413 = scalar_lea.vmem [#allocation2], 688
      %v5414 = vld [vmem:[%s5413] ss:$2 sm:$0xff]
      %s5415 = scalar_lea.vmem [#allocation2], 704
      %v5416 = vld [vmem:[%s5415] ss:$2 sm:$0xff]
      %s5417 = scalar_lea.vmem [#allocation2], 720
      %v5418 = vld [vmem:[%s5417] ss:$2 sm:$0xff]
      %s5419 = scalar_lea.vmem [#allocation2], 736
      %v5420 = vld [vmem:[%s5419] ss:$2 sm:$0xff]
      %s5421 = scalar_lea.vmem [#allocation2], 752
      %v5422 = vld [vmem:[%s5421] ss:$2 sm:$0xff]
      %s5423 = scalar_lea.vmem [#allocation2], 768
      %v5424 = vld [vmem:[%s5423] ss:$2 sm:$0xff]
      %s5425 = scalar_lea.vmem [#allocation2], 784
      %v5426 = vld [vmem:[%s5425] ss:$2 sm:$0xff]
      %s5427 = scalar_lea.vmem [#allocation2], 800
      %v5428 = vld [vmem:[%s5427] ss:$2 sm:$0xff]
      %s5429 = scalar_lea.vmem [#allocation2], 816
      %v5430 = vld [vmem:[%s5429] ss:$2 sm:$0xff]
      %s5431 = scalar_lea.vmem [#allocation2], 832
      %v5432 = vld [vmem:[%s5431] ss:$2 sm:$0x3]
      %s5433 = scalar_lea.vmem [#allocation2], 561
      %v5434 = vld [vmem:[%s5433] ss:$2 sm:$0xff]
      %s5435 = scalar_lea.vmem [#allocation2], 577
      %v5436 = vld [vmem:[%s5435] ss:$2 sm:$0xff]
      %s5437 = scalar_lea.vmem [#allocation2], 593
      %v5438 = vld [vmem:[%s5437] ss:$2 sm:$0xff]
      %s5439 = scalar_lea.vmem [#allocation2], 609
      %v5440 = vld [vmem:[%s5439] ss:$2 sm:$0xff]
      %s5441 = scalar_lea.vmem [#allocation2], 625
      %v5442 = vld [vmem:[%s5441] ss:$2 sm:$0xff]
      %s5443 = scalar_lea.vmem [#allocation2], 641
      %v5444 = vld [vmem:[%s5443] ss:$2 sm:$0xff]
      %s5445 = scalar_lea.vmem [#allocation2], 657
      %v5446 = vld [vmem:[%s5445] ss:$2 sm:$0xff]
      %s5447 = scalar_lea.vmem [#allocation2], 673
      %v5448 = vld [vmem:[%s5447] ss:$2 sm:$0xff]
      %s5449 = scalar_lea.vmem [#allocation2], 689
      %v5450 = vld [vmem:[%s5449] ss:$2 sm:$0xff]
      %s5451 = scalar_lea.vmem [#allocation2], 705
      %v5452 = vld [vmem:[%s5451] ss:$2 sm:$0xff]
      %s5453 = scalar_lea.vmem [#allocation2], 721
      %v5454 = vld [vmem:[%s5453] ss:$2 sm:$0xff]
      %s5455 = scalar_lea.vmem [#allocation2], 737
      %v5456 = vld [vmem:[%s5455] ss:$2 sm:$0xff]
      %s5457 = scalar_lea.vmem [#allocation2], 753
      %v5458 = vld [vmem:[%s5457] ss:$2 sm:$0xff]
      %s5459 = scalar_lea.vmem [#allocation2], 769
      %v5460 = vld [vmem:[%s5459] ss:$2 sm:$0xff]
      %s5461 = scalar_lea.vmem [#allocation2], 785
      %v5462 = vld [vmem:[%s5461] ss:$2 sm:$0xff]
      %s5463 = scalar_lea.vmem [#allocation2], 801
      %v5464 = vld [vmem:[%s5463] ss:$2 sm:$0xff]
      %s5465 = scalar_lea.vmem [#allocation2], 817
      %v5466 = vld [vmem:[%s5465] ss:$2 sm:$0xff]
      %s5467 = scalar_lea.vmem [#allocation2], 833
      %v5468 = vld [vmem:[%s5467] ss:$2 sm:$0x3]
      %v5469 = vmax.f32 %v5398, %v5434
      %v5470 = vmax.f32 %v5400, %v5436
      %v5471 = vmax.f32 %v5402, %v5438
      %v5472 = vmax.f32 %v5404, %v5440
      %v5473 = vmax.f32 %v5406, %v5442
      %v5474 = vmax.f32 %v5408, %v5444
      %v5475 = vmax.f32 %v5410, %v5446
      %v5476 = vmax.f32 %v5412, %v5448
      %v5477 = vmax.f32 %v5414, %v5450
      %v5478 = vmax.f32 %v5416, %v5452
      %v5479 = vmax.f32 %v5418, %v5454
      %v5480 = vmax.f32 %v5420, %v5456
      %v5481 = vmax.f32 %v5422, %v5458
      %v5482 = vmax.f32 %v5424, %v5460
      %v5483 = vmax.f32 %v5426, %v5462
      %v5484 = vmax.f32 %v5428, %v5464
      %v5485 = vmax.f32 %v5430, %v5466
      %v5486 = vmax.f32 %v5432, %v5468
      %s5487 = scalar_lea.vmem [#allocation2], 840
      %v5488 = vld [vmem:[%s5487] ss:$2 sm:$0xff]
      %s5489 = scalar_lea.vmem [#allocation2], 856
      %v5490 = vld [vmem:[%s5489] ss:$2 sm:$0xff]
      %s5491 = scalar_lea.vmem [#allocation2], 872
      %v5492 = vld [vmem:[%s5491] ss:$2 sm:$0xff]
      %s5493 = scalar_lea.vmem [#allocation2], 888
      %v5494 = vld [vmem:[%s5493] ss:$2 sm:$0xff]
      %s5495 = scalar_lea.vmem [#allocation2], 904
      %v5496 = vld [vmem:[%s5495] ss:$2 sm:$0xff]
      %s5497 = scalar_lea.vmem [#allocation2], 920
      %v5498 = vld [vmem:[%s5497] ss:$2 sm:$0xff]
      %s5499 = scalar_lea.vmem [#allocation2], 936
      %v5500 = vld [vmem:[%s5499] ss:$2 sm:$0xff]
      %s5501 = scalar_lea.vmem [#allocation2], 952
      %v5502 = vld [vmem:[%s5501] ss:$2 sm:$0xff]
      %s5503 = scalar_lea.vmem [#allocation2], 968
      %v5504 = vld [vmem:[%s5503] ss:$2 sm:$0xff]
      %s5505 = scalar_lea.vmem [#allocation2], 984
      %v5506 = vld [vmem:[%s5505] ss:$2 sm:$0xff]
      %s5507 = scalar_lea.vmem [#allocation2], 1000
      %v5508 = vld [vmem:[%s5507] ss:$2 sm:$0xff]
      %s5509 = scalar_lea.vmem [#allocation2], 1016
      %v5510 = vld [vmem:[%s5509] ss:$2 sm:$0xff]
      %s5511 = scalar_lea.vmem [#allocation2], 1032
      %v5512 = vld [vmem:[%s5511] ss:$2 sm:$0xff]
      %s5513 = scalar_lea.vmem [#allocation2], 1048
      %v5514 = vld [vmem:[%s5513] ss:$2 sm:$0xff]
      %s5515 = scalar_lea.vmem [#allocation2], 1064
      %v5516 = vld [vmem:[%s5515] ss:$2 sm:$0xff]
      %s5517 = scalar_lea.vmem [#allocation2], 1080
      %v5518 = vld [vmem:[%s5517] ss:$2 sm:$0xff]
      %s5519 = scalar_lea.vmem [#allocation2], 1096
      %v5520 = vld [vmem:[%s5519] ss:$2 sm:$0xff]
      %s5521 = scalar_lea.vmem [#allocation2], 1112
      %v5522 = vld [vmem:[%s5521] ss:$2 sm:$0x3]
      %s5523 = scalar_lea.vmem [#allocation2], 841
      %v5524 = vld [vmem:[%s5523] ss:$2 sm:$0xff]
      %s5525 = scalar_lea.vmem [#allocation2], 857
      %v5526 = vld [vmem:[%s5525] ss:$2 sm:$0xff]
      %s5527 = scalar_lea.vmem [#allocation2], 873
      %v5528 = vld [vmem:[%s5527] ss:$2 sm:$0xff]
      %s5529 = scalar_lea.vmem [#allocation2], 889
      %v5530 = vld [vmem:[%s5529] ss:$2 sm:$0xff]
      %s5531 = scalar_lea.vmem [#allocation2], 905
      %v5532 = vld [vmem:[%s5531] ss:$2 sm:$0xff]
      %s5533 = scalar_lea.vmem [#allocation2], 921
      %v5534 = vld [vmem:[%s5533] ss:$2 sm:$0xff]
      %s5535 = scalar_lea.vmem [#allocation2], 937
      %v5536 = vld [vmem:[%s5535] ss:$2 sm:$0xff]
      %s5537 = scalar_lea.vmem [#allocation2], 953
      %v5538 = vld [vmem:[%s5537] ss:$2 sm:$0xff]
      %s5539 = scalar_lea.vmem [#allocation2], 969
      %v5540 = vld [vmem:[%s5539] ss:$2 sm:$0xff]
      %s5541 = scalar_lea.vmem [#allocation2], 985
      %v5542 = vld [vmem:[%s5541] ss:$2 sm:$0xff]
      %s5543 = scalar_lea.vmem [#allocation2], 1001
      %v5544 = vld [vmem:[%s5543] ss:$2 sm:$0xff]
      %s5545 = scalar_lea.vmem [#allocation2], 1017
      %v5546 = vld [vmem:[%s5545] ss:$2 sm:$0xff]
      %s5547 = scalar_lea.vmem [#allocation2], 1033
      %v5548 = vld [vmem:[%s5547] ss:$2 sm:$0xff]
      %s5549 = scalar_lea.vmem [#allocation2], 1049
      %v5550 = vld [vmem:[%s5549] ss:$2 sm:$0xff]
      %s5551 = scalar_lea.vmem [#allocation2], 1065
      %v5552 = vld [vmem:[%s5551] ss:$2 sm:$0xff]
      %s5553 = scalar_lea.vmem [#allocation2], 1081
      %v5554 = vld [vmem:[%s5553] ss:$2 sm:$0xff]
      %s5555 = scalar_lea.vmem [#allocation2], 1097
      %v5556 = vld [vmem:[%s5555] ss:$2 sm:$0xff]
      %s5557 = scalar_lea.vmem [#allocation2], 1113
      %v5558 = vld [vmem:[%s5557] ss:$2 sm:$0x3]
      %v5559 = vmax.f32 %v5488, %v5524
      %v5560 = vmax.f32 %v5490, %v5526
      %v5561 = vmax.f32 %v5492, %v5528
      %v5562 = vmax.f32 %v5494, %v5530
      %v5563 = vmax.f32 %v5496, %v5532
      %v5564 = vmax.f32 %v5498, %v5534
      %v5565 = vmax.f32 %v5500, %v5536
      %v5566 = vmax.f32 %v5502, %v5538
      %v5567 = vmax.f32 %v5504, %v5540
      %v5568 = vmax.f32 %v5506, %v5542
      %v5569 = vmax.f32 %v5508, %v5544
      %v5570 = vmax.f32 %v5510, %v5546
      %v5571 = vmax.f32 %v5512, %v5548
      %v5572 = vmax.f32 %v5514, %v5550
      %v5573 = vmax.f32 %v5516, %v5552
      %v5574 = vmax.f32 %v5518, %v5554
      %v5575 = vmax.f32 %v5520, %v5556
      %v5576 = vmax.f32 %v5522, %v5558
      %v5577 = vmax.f32 %v5469, %v5559
      %v5578 = vmax.f32 %v5470, %v5560
      %v5579 = vmax.f32 %v5471, %v5561
      %v5580 = vmax.f32 %v5472, %v5562
      %v5581 = vmax.f32 %v5473, %v5563
      %v5582 = vmax.f32 %v5474, %v5564
      %v5583 = vmax.f32 %v5475, %v5565
      %v5584 = vmax.f32 %v5476, %v5566
      %v5585 = vmax.f32 %v5477, %v5567
      %v5586 = vmax.f32 %v5478, %v5568
      %v5587 = vmax.f32 %v5479, %v5569
      %v5588 = vmax.f32 %v5480, %v5570
      %v5589 = vmax.f32 %v5481, %v5571
      %v5590 = vmax.f32 %v5482, %v5572
      %v5591 = vmax.f32 %v5483, %v5573
      %v5592 = vmax.f32 %v5484, %v5574
      %v5593 = vmax.f32 %v5485, %v5575
      %v5594 = vmax.f32 %v5486, %v5576
      %5595 = vst.msk [vmem:[#allocation3 + $0x8a] sm:$0xff] %vm522, %v5577
      %5596 = vst.msk [vmem:[#allocation3 + $0x92] sm:$0xff] %vm522, %v5578
      %5597 = vst.msk [vmem:[#allocation3 + $0x9a] sm:$0xff] %vm522, %v5579
      %5598 = vst.msk [vmem:[#allocation3 + $0xa2] sm:$0xff] %vm522, %v5580
      %5599 = vst.msk [vmem:[#allocation3 + $0xaa] sm:$0xff] %vm522, %v5581
      %5600 = vst.msk [vmem:[#allocation3 + $0xb2] sm:$0xff] %vm522, %v5582
      %5601 = vst.msk [vmem:[#allocation3 + $0xba] sm:$0xff] %vm522, %v5583
      %5602 = vst.msk [vmem:[#allocation3 + $0xc2] sm:$0xff] %vm522, %v5584
      %5603 = vst.msk [vmem:[#allocation3 + $0xca] sm:$0xff] %vm522, %v5585
      %5604 = vst.msk [vmem:[#allocation3 + $0xd2] sm:$0xff] %vm522, %v5586
      %5605 = vst.msk [vmem:[#allocation3 + $0xda] sm:$0xff] %vm522, %v5587
      %5606 = vst.msk [vmem:[#allocation3 + $0xe2] sm:$0xff] %vm522, %v5588
      %5607 = vst.msk [vmem:[#allocation3 + $0xea] sm:$0xff] %vm522, %v5589
      %5608 = vst.msk [vmem:[#allocation3 + $0xf2] sm:$0xff] %vm522, %v5590
      %5609 = vst.msk [vmem:[#allocation3 + $0xfa] sm:$0xff] %vm522, %v5591
      %5610 = vst.msk [vmem:[#allocation3 + $0x102] sm:$0xff] %vm522, %v5592
      %5611 = vst.msk [vmem:[#allocation3 + $0x10a] sm:$0xff] %vm522, %v5593
      %5612 = vst.msk [vmem:[#allocation3 + $0x112] sm:$0x3] %vm5395, %v5594
      %s5613 = scalar_lea.vmem [#allocation2], 1120
      %v5614 = vld [vmem:[%s5613] ss:$2 sm:$0xff]
      %s5615 = scalar_lea.vmem [#allocation2], 1136
      %v5616 = vld [vmem:[%s5615] ss:$2 sm:$0xff]
      %s5617 = scalar_lea.vmem [#allocation2], 1152
      %v5618 = vld [vmem:[%s5617] ss:$2 sm:$0xff]
      %s5619 = scalar_lea.vmem [#allocation2], 1168
      %v5620 = vld [vmem:[%s5619] ss:$2 sm:$0xff]
      %s5621 = scalar_lea.vmem [#allocation2], 1184
      %v5622 = vld [vmem:[%s5621] ss:$2 sm:$0xff]
      %s5623 = scalar_lea.vmem [#allocation2], 1200
      %v5624 = vld [vmem:[%s5623] ss:$2 sm:$0xff]
      %s5625 = scalar_lea.vmem [#allocation2], 1216
      %v5626 = vld [vmem:[%s5625] ss:$2 sm:$0xff]
      %s5627 = scalar_lea.vmem [#allocation2], 1232
      %v5628 = vld [vmem:[%s5627] ss:$2 sm:$0xff]
      %s5629 = scalar_lea.vmem [#allocation2], 1248
      %v5630 = vld [vmem:[%s5629] ss:$2 sm:$0xff]
      %s5631 = scalar_lea.vmem [#allocation2], 1264
      %v5632 = vld [vmem:[%s5631] ss:$2 sm:$0xff]
      %s5633 = scalar_lea.vmem [#allocation2], 1280
      %v5634 = vld [vmem:[%s5633] ss:$2 sm:$0xff]
      %s5635 = scalar_lea.vmem [#allocation2], 1296
      %v5636 = vld [vmem:[%s5635] ss:$2 sm:$0xff]
      %s5637 = scalar_lea.vmem [#allocation2], 1312
      %v5638 = vld [vmem:[%s5637] ss:$2 sm:$0xff]
      %s5639 = scalar_lea.vmem [#allocation2], 1328
      %v5640 = vld [vmem:[%s5639] ss:$2 sm:$0xff]
      %s5641 = scalar_lea.vmem [#allocation2], 1344
      %v5642 = vld [vmem:[%s5641] ss:$2 sm:$0xff]
      %s5643 = scalar_lea.vmem [#allocation2], 1360
      %v5644 = vld [vmem:[%s5643] ss:$2 sm:$0xff]
      %s5645 = scalar_lea.vmem [#allocation2], 1376
      %v5646 = vld [vmem:[%s5645] ss:$2 sm:$0xff]
      %s5647 = scalar_lea.vmem [#allocation2], 1392
      %v5648 = vld [vmem:[%s5647] ss:$2 sm:$0x3]
      %s5649 = scalar_lea.vmem [#allocation2], 1121
      %v5650 = vld [vmem:[%s5649] ss:$2 sm:$0xff]
      %s5651 = scalar_lea.vmem [#allocation2], 1137
      %v5652 = vld [vmem:[%s5651] ss:$2 sm:$0xff]
      %s5653 = scalar_lea.vmem [#allocation2], 1153
      %v5654 = vld [vmem:[%s5653] ss:$2 sm:$0xff]
      %s5655 = scalar_lea.vmem [#allocation2], 1169
      %v5656 = vld [vmem:[%s5655] ss:$2 sm:$0xff]
      %s5657 = scalar_lea.vmem [#allocation2], 1185
      %v5658 = vld [vmem:[%s5657] ss:$2 sm:$0xff]
      %s5659 = scalar_lea.vmem [#allocation2], 1201
      %v5660 = vld [vmem:[%s5659] ss:$2 sm:$0xff]
      %s5661 = scalar_lea.vmem [#allocation2], 1217
      %v5662 = vld [vmem:[%s5661] ss:$2 sm:$0xff]
      %s5663 = scalar_lea.vmem [#allocation2], 1233
      %v5664 = vld [vmem:[%s5663] ss:$2 sm:$0xff]
      %s5665 = scalar_lea.vmem [#allocation2], 1249
      %v5666 = vld [vmem:[%s5665] ss:$2 sm:$0xff]
      %s5667 = scalar_lea.vmem [#allocation2], 1265
      %v5668 = vld [vmem:[%s5667] ss:$2 sm:$0xff]
      %s5669 = scalar_lea.vmem [#allocation2], 1281
      %v5670 = vld [vmem:[%s5669] ss:$2 sm:$0xff]
      %s5671 = scalar_lea.vmem [#allocation2], 1297
      %v5672 = vld [vmem:[%s5671] ss:$2 sm:$0xff]
      %s5673 = scalar_lea.vmem [#allocation2], 1313
      %v5674 = vld [vmem:[%s5673] ss:$2 sm:$0xff]
      %s5675 = scalar_lea.vmem [#allocation2], 1329
      %v5676 = vld [vmem:[%s5675] ss:$2 sm:$0xff]
      %s5677 = scalar_lea.vmem [#allocation2], 1345
      %v5678 = vld [vmem:[%s5677] ss:$2 sm:$0xff]
      %s5679 = scalar_lea.vmem [#allocation2], 1361
      %v5680 = vld [vmem:[%s5679] ss:$2 sm:$0xff]
      %s5681 = scalar_lea.vmem [#allocation2], 1377
      %v5682 = vld [vmem:[%s5681] ss:$2 sm:$0xff]
      %s5683 = scalar_lea.vmem [#allocation2], 1393
      %v5684 = vld [vmem:[%s5683] ss:$2 sm:$0x3]
      %v5685 = vmax.f32 %v5614, %v5650
      %v5686 = vmax.f32 %v5616, %v5652
      %v5687 = vmax.f32 %v5618, %v5654
      %v5688 = vmax.f32 %v5620, %v5656
      %v5689 = vmax.f32 %v5622, %v5658
      %v5690 = vmax.f32 %v5624, %v5660
      %v5691 = vmax.f32 %v5626, %v5662
      %v5692 = vmax.f32 %v5628, %v5664
      %v5693 = vmax.f32 %v5630, %v5666
      %v5694 = vmax.f32 %v5632, %v5668
      %v5695 = vmax.f32 %v5634, %v5670
      %v5696 = vmax.f32 %v5636, %v5672
      %v5697 = vmax.f32 %v5638, %v5674
      %v5698 = vmax.f32 %v5640, %v5676
      %v5699 = vmax.f32 %v5642, %v5678
      %v5700 = vmax.f32 %v5644, %v5680
      %v5701 = vmax.f32 %v5646, %v5682
      %v5702 = vmax.f32 %v5648, %v5684
      %s5703 = scalar_lea.vmem [#allocation2], 1400
      %v5704 = vld [vmem:[%s5703] ss:$2 sm:$0xff]
      %s5705 = scalar_lea.vmem [#allocation2], 1416
      %v5706 = vld [vmem:[%s5705] ss:$2 sm:$0xff]
      %s5707 = scalar_lea.vmem [#allocation2], 1432
      %v5708 = vld [vmem:[%s5707] ss:$2 sm:$0xff]
      %s5709 = scalar_lea.vmem [#allocation2], 1448
      %v5710 = vld [vmem:[%s5709] ss:$2 sm:$0xff]
      %s5711 = scalar_lea.vmem [#allocation2], 1464
      %v5712 = vld [vmem:[%s5711] ss:$2 sm:$0xff]
      %s5713 = scalar_lea.vmem [#allocation2], 1480
      %v5714 = vld [vmem:[%s5713] ss:$2 sm:$0xff]
      %s5715 = scalar_lea.vmem [#allocation2], 1496
      %v5716 = vld [vmem:[%s5715] ss:$2 sm:$0xff]
      %s5717 = scalar_lea.vmem [#allocation2], 1512
      %v5718 = vld [vmem:[%s5717] ss:$2 sm:$0xff]
      %s5719 = scalar_lea.vmem [#allocation2], 1528
      %v5720 = vld [vmem:[%s5719] ss:$2 sm:$0xff]
      %s5721 = scalar_lea.vmem [#allocation2], 1544
      %v5722 = vld [vmem:[%s5721] ss:$2 sm:$0xff]
      %s5723 = scalar_lea.vmem [#allocation2], 1560
      %v5724 = vld [vmem:[%s5723] ss:$2 sm:$0xff]
      %s5725 = scalar_lea.vmem [#allocation2], 1576
      %v5726 = vld [vmem:[%s5725] ss:$2 sm:$0xff]
      %s5727 = scalar_lea.vmem [#allocation2], 1592
      %v5728 = vld [vmem:[%s5727] ss:$2 sm:$0xff]
      %s5729 = scalar_lea.vmem [#allocation2], 1608
      %v5730 = vld [vmem:[%s5729] ss:$2 sm:$0xff]
      %s5731 = scalar_lea.vmem [#allocation2], 1624
      %v5732 = vld [vmem:[%s5731] ss:$2 sm:$0xff]
      %s5733 = scalar_lea.vmem [#allocation2], 1640
      %v5734 = vld [vmem:[%s5733] ss:$2 sm:$0xff]
      %s5735 = scalar_lea.vmem [#allocation2], 1656
      %v5736 = vld [vmem:[%s5735] ss:$2 sm:$0xff]
      %s5737 = scalar_lea.vmem [#allocation2], 1672
      %v5738 = vld [vmem:[%s5737] ss:$2 sm:$0x3]
      %s5739 = scalar_lea.vmem [#allocation2], 1401
      %v5740 = vld [vmem:[%s5739] ss:$2 sm:$0xff]
      %s5741 = scalar_lea.vmem [#allocation2], 1417
      %v5742 = vld [vmem:[%s5741] ss:$2 sm:$0xff]
      %s5743 = scalar_lea.vmem [#allocation2], 1433
      %v5744 = vld [vmem:[%s5743] ss:$2 sm:$0xff]
      %s5745 = scalar_lea.vmem [#allocation2], 1449
      %v5746 = vld [vmem:[%s5745] ss:$2 sm:$0xff]
      %s5747 = scalar_lea.vmem [#allocation2], 1465
      %v5748 = vld [vmem:[%s5747] ss:$2 sm:$0xff]
      %s5749 = scalar_lea.vmem [#allocation2], 1481
      %v5750 = vld [vmem:[%s5749] ss:$2 sm:$0xff]
      %s5751 = scalar_lea.vmem [#allocation2], 1497
      %v5752 = vld [vmem:[%s5751] ss:$2 sm:$0xff]
      %s5753 = scalar_lea.vmem [#allocation2], 1513
      %v5754 = vld [vmem:[%s5753] ss:$2 sm:$0xff]
      %s5755 = scalar_lea.vmem [#allocation2], 1529
      %v5756 = vld [vmem:[%s5755] ss:$2 sm:$0xff]
      %s5757 = scalar_lea.vmem [#allocation2], 1545
      %v5758 = vld [vmem:[%s5757] ss:$2 sm:$0xff]
      %s5759 = scalar_lea.vmem [#allocation2], 1561
      %v5760 = vld [vmem:[%s5759] ss:$2 sm:$0xff]
      %s5761 = scalar_lea.vmem [#allocation2], 1577
      %v5762 = vld [vmem:[%s5761] ss:$2 sm:$0xff]
      %s5763 = scalar_lea.vmem [#allocation2], 1593
      %v5764 = vld [vmem:[%s5763] ss:$2 sm:$0xff]
      %s5765 = scalar_lea.vmem [#allocation2], 1609
      %v5766 = vld [vmem:[%s5765] ss:$2 sm:$0xff]
      %s5767 = scalar_lea.vmem [#allocation2], 1625
      %v5768 = vld [vmem:[%s5767] ss:$2 sm:$0xff]
      %s5769 = scalar_lea.vmem [#allocation2], 1641
      %v5770 = vld [vmem:[%s5769] ss:$2 sm:$0xff]
      %s5771 = scalar_lea.vmem [#allocation2], 1657
      %v5772 = vld [vmem:[%s5771] ss:$2 sm:$0xff]
      %s5773 = scalar_lea.vmem [#allocation2], 1673
      %v5774 = vld [vmem:[%s5773] ss:$2 sm:$0x3]
      %v5775 = vmax.f32 %v5704, %v5740
      %v5776 = vmax.f32 %v5706, %v5742
      %v5777 = vmax.f32 %v5708, %v5744
      %v5778 = vmax.f32 %v5710, %v5746
      %v5779 = vmax.f32 %v5712, %v5748
      %v5780 = vmax.f32 %v5714, %v5750
      %v5781 = vmax.f32 %v5716, %v5752
      %v5782 = vmax.f32 %v5718, %v5754
      %v5783 = vmax.f32 %v5720, %v5756
      %v5784 = vmax.f32 %v5722, %v5758
      %v5785 = vmax.f32 %v5724, %v5760
      %v5786 = vmax.f32 %v5726, %v5762
      %v5787 = vmax.f32 %v5728, %v5764
      %v5788 = vmax.f32 %v5730, %v5766
      %v5789 = vmax.f32 %v5732, %v5768
      %v5790 = vmax.f32 %v5734, %v5770
      %v5791 = vmax.f32 %v5736, %v5772
      %v5792 = vmax.f32 %v5738, %v5774
      %v5793 = vmax.f32 %v5685, %v5775
      %v5794 = vmax.f32 %v5686, %v5776
      %v5795 = vmax.f32 %v5687, %v5777
      %v5796 = vmax.f32 %v5688, %v5778
      %v5797 = vmax.f32 %v5689, %v5779
      %v5798 = vmax.f32 %v5690, %v5780
      %v5799 = vmax.f32 %v5691, %v5781
      %v5800 = vmax.f32 %v5692, %v5782
      %v5801 = vmax.f32 %v5693, %v5783
      %v5802 = vmax.f32 %v5694, %v5784
      %v5803 = vmax.f32 %v5695, %v5785
      %v5804 = vmax.f32 %v5696, %v5786
      %v5805 = vmax.f32 %v5697, %v5787
      %v5806 = vmax.f32 %v5698, %v5788
      %v5807 = vmax.f32 %v5699, %v5789
      %v5808 = vmax.f32 %v5700, %v5790
      %v5809 = vmax.f32 %v5701, %v5791
      %v5810 = vmax.f32 %v5702, %v5792
      %5811 = vst.msk [vmem:[#allocation3 + $0x114] sm:$0xff] %vm522, %v5793
      %5812 = vst.msk [vmem:[#allocation3 + $0x11c] sm:$0xff] %vm522, %v5794
      %5813 = vst.msk [vmem:[#allocation3 + $0x124] sm:$0xff] %vm522, %v5795
      %5814 = vst.msk [vmem:[#allocation3 + $0x12c] sm:$0xff] %vm522, %v5796
      %5815 = vst.msk [vmem:[#allocation3 + $0x134] sm:$0xff] %vm522, %v5797
      %5816 = vst.msk [vmem:[#allocation3 + $0x13c] sm:$0xff] %vm522, %v5798
      %5817 = vst.msk [vmem:[#allocation3 + $0x144] sm:$0xff] %vm522, %v5799
      %5818 = vst.msk [vmem:[#allocation3 + $0x14c] sm:$0xff] %vm522, %v5800
      %5819 = vst.msk [vmem:[#allocation3 + $0x154] sm:$0xff] %vm522, %v5801
      %5820 = vst.msk [vmem:[#allocation3 + $0x15c] sm:$0xff] %vm522, %v5802
      %5821 = vst.msk [vmem:[#allocation3 + $0x164] sm:$0xff] %vm522, %v5803
      %5822 = vst.msk [vmem:[#allocation3 + $0x16c] sm:$0xff] %vm522, %v5804
      %5823 = vst.msk [vmem:[#allocation3 + $0x174] sm:$0xff] %vm522, %v5805
      %5824 = vst.msk [vmem:[#allocation3 + $0x17c] sm:$0xff] %vm522, %v5806
      %5825 = vst.msk [vmem:[#allocation3 + $0x184] sm:$0xff] %vm522, %v5807
      %5826 = vst.msk [vmem:[#allocation3 + $0x18c] sm:$0xff] %vm522, %v5808
      %5827 = vst.msk [vmem:[#allocation3 + $0x194] sm:$0xff] %vm522, %v5809
      %5828 = vst.msk [vmem:[#allocation3 + $0x19c] sm:$0x3] %vm5395, %v5810
      %s5829 = scalar_lea.vmem [#allocation2], 1680
      %v5830 = vld [vmem:[%s5829] ss:$2 sm:$0xff]
      %s5831 = scalar_lea.vmem [#allocation2], 1696
      %v5832 = vld [vmem:[%s5831] ss:$2 sm:$0xff]
      %s5833 = scalar_lea.vmem [#allocation2], 1712
      %v5834 = vld [vmem:[%s5833] ss:$2 sm:$0xff]
      %s5835 = scalar_lea.vmem [#allocation2], 1728
      %v5836 = vld [vmem:[%s5835] ss:$2 sm:$0xff]
      %s5837 = scalar_lea.vmem [#allocation2], 1744
      %v5838 = vld [vmem:[%s5837] ss:$2 sm:$0xff]
      %s5839 = scalar_lea.vmem [#allocation2], 1760
      %v5840 = vld [vmem:[%s5839] ss:$2 sm:$0xff]
      %s5841 = scalar_lea.vmem [#allocation2], 1776
      %v5842 = vld [vmem:[%s5841] ss:$2 sm:$0xff]
      %s5843 = scalar_lea.vmem [#allocation2], 1792
      %v5844 = vld [vmem:[%s5843] ss:$2 sm:$0xff]
      %s5845 = scalar_lea.vmem [#allocation2], 1808
      %v5846 = vld [vmem:[%s5845] ss:$2 sm:$0xff]
      %s5847 = scalar_lea.vmem [#allocation2], 1824
      %v5848 = vld [vmem:[%s5847] ss:$2 sm:$0xff]
      %s5849 = scalar_lea.vmem [#allocation2], 1840
      %v5850 = vld [vmem:[%s5849] ss:$2 sm:$0xff]
      %s5851 = scalar_lea.vmem [#allocation2], 1856
      %v5852 = vld [vmem:[%s5851] ss:$2 sm:$0xff]
      %s5853 = scalar_lea.vmem [#allocation2], 1872
      %v5854 = vld [vmem:[%s5853] ss:$2 sm:$0xff]
      %s5855 = scalar_lea.vmem [#allocation2], 1888
      %v5856 = vld [vmem:[%s5855] ss:$2 sm:$0xff]
      %s5857 = scalar_lea.vmem [#allocation2], 1904
      %v5858 = vld [vmem:[%s5857] ss:$2 sm:$0xff]
      %s5859 = scalar_lea.vmem [#allocation2], 1920
      %v5860 = vld [vmem:[%s5859] ss:$2 sm:$0xff]
      %s5861 = scalar_lea.vmem [#allocation2], 1936
      %v5862 = vld [vmem:[%s5861] ss:$2 sm:$0xff]
      %s5863 = scalar_lea.vmem [#allocation2], 1952
      %v5864 = vld [vmem:[%s5863] ss:$2 sm:$0x3]
      %s5865 = scalar_lea.vmem [#allocation2], 1681
      %v5866 = vld [vmem:[%s5865] ss:$2 sm:$0xff]
      %s5867 = scalar_lea.vmem [#allocation2], 1697
      %v5868 = vld [vmem:[%s5867] ss:$2 sm:$0xff]
      %s5869 = scalar_lea.vmem [#allocation2], 1713
      %v5870 = vld [vmem:[%s5869] ss:$2 sm:$0xff]
      %s5871 = scalar_lea.vmem [#allocation2], 1729
      %v5872 = vld [vmem:[%s5871] ss:$2 sm:$0xff]
      %s5873 = scalar_lea.vmem [#allocation2], 1745
      %v5874 = vld [vmem:[%s5873] ss:$2 sm:$0xff]
      %s5875 = scalar_lea.vmem [#allocation2], 1761
      %v5876 = vld [vmem:[%s5875] ss:$2 sm:$0xff]
      %s5877 = scalar_lea.vmem [#allocation2], 1777
      %v5878 = vld [vmem:[%s5877] ss:$2 sm:$0xff]
      %s5879 = scalar_lea.vmem [#allocation2], 1793
      %v5880 = vld [vmem:[%s5879] ss:$2 sm:$0xff]
      %s5881 = scalar_lea.vmem [#allocation2], 1809
      %v5882 = vld [vmem:[%s5881] ss:$2 sm:$0xff]
      %s5883 = scalar_lea.vmem [#allocation2], 1825
      %v5884 = vld [vmem:[%s5883] ss:$2 sm:$0xff]
      %s5885 = scalar_lea.vmem [#allocation2], 1841
      %v5886 = vld [vmem:[%s5885] ss:$2 sm:$0xff]
      %s5887 = scalar_lea.vmem [#allocation2], 1857
      %v5888 = vld [vmem:[%s5887] ss:$2 sm:$0xff]
      %s5889 = scalar_lea.vmem [#allocation2], 1873
      %v5890 = vld [vmem:[%s5889] ss:$2 sm:$0xff]
      %s5891 = scalar_lea.vmem [#allocation2], 1889
      %v5892 = vld [vmem:[%s5891] ss:$2 sm:$0xff]
      %s5893 = scalar_lea.vmem [#allocation2], 1905
      %v5894 = vld [vmem:[%s5893] ss:$2 sm:$0xff]
      %s5895 = scalar_lea.vmem [#allocation2], 1921
      %v5896 = vld [vmem:[%s5895] ss:$2 sm:$0xff]
      %s5897 = scalar_lea.vmem [#allocation2], 1937
      %v5898 = vld [vmem:[%s5897] ss:$2 sm:$0xff]
      %s5899 = scalar_lea.vmem [#allocation2], 1953
      %v5900 = vld [vmem:[%s5899] ss:$2 sm:$0x3]
      %v5901 = vmax.f32 %v5830, %v5866
      %v5902 = vmax.f32 %v5832, %v5868
      %v5903 = vmax.f32 %v5834, %v5870
      %v5904 = vmax.f32 %v5836, %v5872
      %v5905 = vmax.f32 %v5838, %v5874
      %v5906 = vmax.f32 %v5840, %v5876
      %v5907 = vmax.f32 %v5842, %v5878
      %v5908 = vmax.f32 %v5844, %v5880
      %v5909 = vmax.f32 %v5846, %v5882
      %v5910 = vmax.f32 %v5848, %v5884
      %v5911 = vmax.f32 %v5850, %v5886
      %v5912 = vmax.f32 %v5852, %v5888
      %v5913 = vmax.f32 %v5854, %v5890
      %v5914 = vmax.f32 %v5856, %v5892
      %v5915 = vmax.f32 %v5858, %v5894
      %v5916 = vmax.f32 %v5860, %v5896
      %v5917 = vmax.f32 %v5862, %v5898
      %v5918 = vmax.f32 %v5864, %v5900
      %s5919 = scalar_lea.vmem [#allocation2], 1960
      %v5920 = vld [vmem:[%s5919] ss:$2 sm:$0xff]
      %s5921 = scalar_lea.vmem [#allocation2], 1976
      %v5922 = vld [vmem:[%s5921] ss:$2 sm:$0xff]
      %s5923 = scalar_lea.vmem [#allocation2], 1992
      %v5924 = vld [vmem:[%s5923] ss:$2 sm:$0xff]
      %s5925 = scalar_lea.vmem [#allocation2], 2008
      %v5926 = vld [vmem:[%s5925] ss:$2 sm:$0xff]
      %s5927 = scalar_lea.vmem [#allocation2], 2024
      %v5928 = vld [vmem:[%s5927] ss:$2 sm:$0xff]
      %s5929 = scalar_lea.vmem [#allocation2], 2040
      %v5930 = vld [vmem:[%s5929] ss:$2 sm:$0xff]
      %s5931 = scalar_lea.vmem [#allocation2], 2056
      %v5932 = vld [vmem:[%s5931] ss:$2 sm:$0xff]
      %s5933 = scalar_lea.vmem [#allocation2], 2072
      %v5934 = vld [vmem:[%s5933] ss:$2 sm:$0xff]
      %s5935 = scalar_lea.vmem [#allocation2], 2088
      %v5936 = vld [vmem:[%s5935] ss:$2 sm:$0xff]
      %s5937 = scalar_lea.vmem [#allocation2], 2104
      %v5938 = vld [vmem:[%s5937] ss:$2 sm:$0xff]
      %s5939 = scalar_lea.vmem [#allocation2], 2120
      %v5940 = vld [vmem:[%s5939] ss:$2 sm:$0xff]
      %s5941 = scalar_lea.vmem [#allocation2], 2136
      %v5942 = vld [vmem:[%s5941] ss:$2 sm:$0xff]
      %s5943 = scalar_lea.vmem [#allocation2], 2152
      %v5944 = vld [vmem:[%s5943] ss:$2 sm:$0xff]
      %s5945 = scalar_lea.vmem [#allocation2], 2168
      %v5946 = vld [vmem:[%s5945] ss:$2 sm:$0xff]
      %s5947 = scalar_lea.vmem [#allocation2], 2184
      %v5948 = vld [vmem:[%s5947] ss:$2 sm:$0xff]
      %s5949 = scalar_lea.vmem [#allocation2], 2200
      %v5950 = vld [vmem:[%s5949] ss:$2 sm:$0xff]
      %s5951 = scalar_lea.vmem [#allocation2], 2216
      %v5952 = vld [vmem:[%s5951] ss:$2 sm:$0xff]
      %s5953 = scalar_lea.vmem [#allocation2], 2232
      %v5954 = vld [vmem:[%s5953] ss:$2 sm:$0x3]
      %s5955 = scalar_lea.vmem [#allocation2], 1961
      %v5956 = vld [vmem:[%s5955] ss:$2 sm:$0xff]
      %s5957 = scalar_lea.vmem [#allocation2], 1977
      %v5958 = vld [vmem:[%s5957] ss:$2 sm:$0xff]
      %s5959 = scalar_lea.vmem [#allocation2], 1993
      %v5960 = vld [vmem:[%s5959] ss:$2 sm:$0xff]
      %s5961 = scalar_lea.vmem [#allocation2], 2009
      %v5962 = vld [vmem:[%s5961] ss:$2 sm:$0xff]
      %s5963 = scalar_lea.vmem [#allocation2], 2025
      %v5964 = vld [vmem:[%s5963] ss:$2 sm:$0xff]
      %s5965 = scalar_lea.vmem [#allocation2], 2041
      %v5966 = vld [vmem:[%s5965] ss:$2 sm:$0xff]
      %s5967 = scalar_lea.vmem [#allocation2], 2057
      %v5968 = vld [vmem:[%s5967] ss:$2 sm:$0xff]
      %s5969 = scalar_lea.vmem [#allocation2], 2073
      %v5970 = vld [vmem:[%s5969] ss:$2 sm:$0xff]
      %s5971 = scalar_lea.vmem [#allocation2], 2089
      %v5972 = vld [vmem:[%s5971] ss:$2 sm:$0xff]
      %s5973 = scalar_lea.vmem [#allocation2], 2105
      %v5974 = vld [vmem:[%s5973] ss:$2 sm:$0xff]
      %s5975 = scalar_lea.vmem [#allocation2], 2121
      %v5976 = vld [vmem:[%s5975] ss:$2 sm:$0xff]
      %s5977 = scalar_lea.vmem [#allocation2], 2137
      %v5978 = vld [vmem:[%s5977] ss:$2 sm:$0xff]
      %s5979 = scalar_lea.vmem [#allocation2], 2153
      %v5980 = vld [vmem:[%s5979] ss:$2 sm:$0xff]
      %s5981 = scalar_lea.vmem [#allocation2], 2169
      %v5982 = vld [vmem:[%s5981] ss:$2 sm:$0xff]
      %s5983 = scalar_lea.vmem [#allocation2], 2185
      %v5984 = vld [vmem:[%s5983] ss:$2 sm:$0xff]
      %s5985 = scalar_lea.vmem [#allocation2], 2201
      %v5986 = vld [vmem:[%s5985] ss:$2 sm:$0xff]
      %s5987 = scalar_lea.vmem [#allocation2], 2217
      %v5988 = vld [vmem:[%s5987] ss:$2 sm:$0xff]
      %s5989 = scalar_lea.vmem [#allocation2], 2233
      %v5990 = vld [vmem:[%s5989] ss:$2 sm:$0x3]
      %v5991 = vmax.f32 %v5920, %v5956
      %v5992 = vmax.f32 %v5922, %v5958
      %v5993 = vmax.f32 %v5924, %v5960
      %v5994 = vmax.f32 %v5926, %v5962
      %v5995 = vmax.f32 %v5928, %v5964
      %v5996 = vmax.f32 %v5930, %v5966
      %v5997 = vmax.f32 %v5932, %v5968
      %v5998 = vmax.f32 %v5934, %v5970
      %v5999 = vmax.f32 %v5936, %v5972
      %v6000 = vmax.f32 %v5938, %v5974
      %v6001 = vmax.f32 %v5940, %v5976
      %v6002 = vmax.f32 %v5942, %v5978
      %v6003 = vmax.f32 %v5944, %v5980
      %v6004 = vmax.f32 %v5946, %v5982
      %v6005 = vmax.f32 %v5948, %v5984
      %v6006 = vmax.f32 %v5950, %v5986
      %v6007 = vmax.f32 %v5952, %v5988
      %v6008 = vmax.f32 %v5954, %v5990
      %v6009 = vmax.f32 %v5901, %v5991
      %v6010 = vmax.f32 %v5902, %v5992
      %v6011 = vmax.f32 %v5903, %v5993
      %v6012 = vmax.f32 %v5904, %v5994
      %v6013 = vmax.f32 %v5905, %v5995
      %v6014 = vmax.f32 %v5906, %v5996
      %v6015 = vmax.f32 %v5907, %v5997
      %v6016 = vmax.f32 %v5908, %v5998
      %v6017 = vmax.f32 %v5909, %v5999
      %v6018 = vmax.f32 %v5910, %v6000
      %v6019 = vmax.f32 %v5911, %v6001
      %v6020 = vmax.f32 %v5912, %v6002
      %v6021 = vmax.f32 %v5913, %v6003
      %v6022 = vmax.f32 %v5914, %v6004
      %v6023 = vmax.f32 %v5915, %v6005
      %v6024 = vmax.f32 %v5916, %v6006
      %v6025 = vmax.f32 %v5917, %v6007
      %v6026 = vmax.f32 %v5918, %v6008
      %6027 = vst.msk [vmem:[#allocation3 + $0x19e] sm:$0xff] %vm522, %v6009
      %6028 = vst.msk [vmem:[#allocation3 + $0x1a6] sm:$0xff] %vm522, %v6010
      %6029 = vst.msk [vmem:[#allocation3 + $0x1ae] sm:$0xff] %vm522, %v6011
      %6030 = vst.msk [vmem:[#allocation3 + $0x1b6] sm:$0xff] %vm522, %v6012
      %6031 = vst.msk [vmem:[#allocation3 + $0x1be] sm:$0xff] %vm522, %v6013
      %6032 = vst.msk [vmem:[#allocation3 + $0x1c6] sm:$0xff] %vm522, %v6014
      %6033 = vst.msk [vmem:[#allocation3 + $0x1ce] sm:$0xff] %vm522, %v6015
      %6034 = vst.msk [vmem:[#allocation3 + $0x1d6] sm:$0xff] %vm522, %v6016
      %6035 = vst.msk [vmem:[#allocation3 + $0x1de] sm:$0xff] %vm522, %v6017
      %6036 = vst.msk [vmem:[#allocation3 + $0x1e6] sm:$0xff] %vm522, %v6018
      %6037 = vst.msk [vmem:[#allocation3 + $0x1ee] sm:$0xff] %vm522, %v6019
      %6038 = vst.msk [vmem:[#allocation3 + $0x1f6] sm:$0xff] %vm522, %v6020
      %6039 = vst.msk [vmem:[#allocation3 + $0x1fe] sm:$0xff] %vm522, %v6021
      %6040 = vst.msk [vmem:[#allocation3 + $0x206] sm:$0xff] %vm522, %v6022
      %6041 = vst.msk [vmem:[#allocation3 + $0x20e] sm:$0xff] %vm522, %v6023
      %6042 = vst.msk [vmem:[#allocation3 + $0x216] sm:$0xff] %vm522, %v6024
      %6043 = vst.msk [vmem:[#allocation3 + $0x21e] sm:$0xff] %vm522, %v6025
      %6044 = vst.msk [vmem:[#allocation3 + $0x226] sm:$0x3] %vm5395, %v6026
      %v6045 = vld [vmem:[#allocation3] sm:$0xff]
      %v6046 = vld [vmem:[#allocation3 + $0x8] sm:$0xff]
      %v6047 = vld [vmem:[#allocation3 + $0x10] sm:$0xff]
      %v6048 = vld [vmem:[#allocation3 + $0x18] sm:$0xff]
      %v6049 = vld [vmem:[#allocation3 + $0x20] sm:$0xff]
      %v6050 = vld [vmem:[#allocation3 + $0x28] sm:$0xff]
      %v6051 = vld [vmem:[#allocation3 + $0x30] sm:$0xff]
      %v6052 = vld [vmem:[#allocation3 + $0x38] sm:$0xff]
      %v6053 = vld [vmem:[#allocation3 + $0x40] sm:$0xff]
      %v6054 = vld [vmem:[#allocation3 + $0x48] sm:$0xff]
      %v6055 = vld [vmem:[#allocation3 + $0x50] sm:$0xff]
      %v6056 = vld [vmem:[#allocation3 + $0x58] sm:$0xff]
      %v6057 = vld [vmem:[#allocation3 + $0x60] sm:$0xff]
      %v6058 = vld [vmem:[#allocation3 + $0x68] sm:$0xff]
      %v6059 = vld [vmem:[#allocation3 + $0x70] sm:$0xff]
      %v6060 = vld [vmem:[#allocation3 + $0x78] sm:$0xff]
      %v6061 = vld [vmem:[#allocation3 + $0x80] sm:$0xff]
      %v6062 = vld [vmem:[#allocation3 + $0x88] sm:$0xff]
      %v6063 = vld [vmem:[%s2] sm:$0xff]
      %v6064 = vld [vmem:[%s2 + $0x8] sm:$0xff]
      %v6065 = vld [vmem:[%s2 + $0x10] sm:$0xff]
      %v6066 = vld [vmem:[%s2 + $0x18] sm:$0xff]
      %v6067 = vld [vmem:[%s2 + $0x20] sm:$0xff]
      %v6068 = vld [vmem:[%s2 + $0x28] sm:$0xff]
      %v6069 = vld [vmem:[%s2 + $0x30] sm:$0x3]
      %v6070 = vld [vmem:[#allocation3 + $0x1] sm:$0xff]
      %v6071 = vld [vmem:[#allocation3 + $0x9] sm:$0xff]
      %v6072 = vld [vmem:[#allocation3 + $0x11] sm:$0xff]
      %v6073 = vld [vmem:[#allocation3 + $0x19] sm:$0xff]
      %v6074 = vld [vmem:[#allocation3 + $0x21] sm:$0xff]
      %v6075 = vld [vmem:[#allocation3 + $0x29] sm:$0xff]
      %v6076 = vld [vmem:[#allocation3 + $0x31] sm:$0xff]
      %v6077 = vld [vmem:[#allocation3 + $0x39] sm:$0xff]
      %v6078 = vld [vmem:[#allocation3 + $0x41] sm:$0xff]
      %v6079 = vld [vmem:[#allocation3 + $0x49] sm:$0xff]
      %v6080 = vld [vmem:[#allocation3 + $0x51] sm:$0xff]
      %v6081 = vld [vmem:[#allocation3 + $0x59] sm:$0xff]
      %v6082 = vld [vmem:[#allocation3 + $0x61] sm:$0xff]
      %v6083 = vld [vmem:[#allocation3 + $0x69] sm:$0xff]
      %v6084 = vld [vmem:[#allocation3 + $0x71] sm:$0xff]
      %v6085 = vld [vmem:[#allocation3 + $0x79] sm:$0xff]
      %v6086 = vld [vmem:[#allocation3 + $0x81] sm:$0xff]
      %v6087 = vld [vmem:[#allocation3 + $0x89] sm:$0xff]
      %s6088 = scalar_lea.vmem %s2, 56
      %v6089 = vld [vmem:[%s6088] sm:$0xff]
      %v6090 = vld [vmem:[%s6088 + $0x8] sm:$0xff]
      %v6091 = vld [vmem:[%s6088 + $0x10] sm:$0xff]
      %v6092 = vld [vmem:[%s6088 + $0x18] sm:$0xff]
      %v6093 = vld [vmem:[%s6088 + $0x20] sm:$0xff]
      %v6094 = vld [vmem:[%s6088 + $0x28] sm:$0xff]
      %v6095 = vld [vmem:[%s6088 + $0x30] sm:$0x3]
      %v6097 = vsel %vm522, %v6070, 0
      %v6100 = vsel %vm522, %v6071, 0
      %v6103 = vsel %vm522, %v6072, 0
      %v6106 = vsel %vm522, %v6073, 0
      %v6109 = vsel %vm522, %v6074, 0
      %v6112 = vsel %vm522, %v6075, 0
      %v6115 = vsel %vm522, %v6076, 0
      %v6118 = vsel %vm522, %v6077, 0
      %v6121 = vsel %vm522, %v6078, 0
      %v6124 = vsel %vm522, %v6079, 0
      %v6127 = vsel %vm522, %v6080, 0
      %v6130 = vsel %vm522, %v6081, 0
      %v6133 = vsel %vm522, %v6082, 0
      %v6136 = vsel %vm522, %v6083, 0
      %v6139 = vsel %vm522, %v6084, 0
      %v6142 = vsel %vm522, %v6085, 0
      %v6145 = vsel %vm522, %v6086, 0
      %v6148 = vsel %vm522, %v6087, 0
      %vm6150 = vcmask 1041408
      %v6152 = vsel %vm6150, %v6095, 0
      %6154 = vmatprep.subr.mxu0 0.0
      %6155 = vmatpush1.msra.mxu0 0.0
      %6156 = vmatprep.subr.mxu0 0.0
      %6157 = vmatpush1.msra.mxu0 0.0
      %6158 = vmatprep.subr.mxu0 0.0
      %6159 = vmatpush1.msra.mxu0 0.0
      %6160 = vmatprep.subr.mxu0 0.0
      %6161 = vmatpush1.msra.mxu0 0.0
      %6162 = vmatprep.subr.mxu0 0.0
      %6163 = vmatpush1.msra.mxu0 0.0
      %6164 = vmatprep.subr.mxu0 0.0
      %6165 = vmatpush1.msra.mxu0 0.0
      %6166 = vmatprep.subr.mxu0 0.0
      %6167 = vmatpush1.msra.mxu0 0.0
      %6168 = vmatprep.subr.mxu0 0.0
      %6169 = vmatpush1.msra.mxu0 0.0
      %6170 = vmatprep.subr.mxu0 0.0
      %6171 = vmatpush1.msra.mxu0 0.0
      %6172 = vmatprep.subr.mxu0 0.0
      %6173 = vmatpush1.msra.mxu0 %v6152
      %6174 = vmatprep.subr.mxu0 0.0
      %6175 = vmatpush1.msra.mxu0 %v6094
      %6176 = vmatprep.subr.mxu0 0.0
      %6177 = vmatpush1.msra.mxu0 %v6093
      %6178 = vmatprep.subr.mxu0 0.0
      %6179 = vmatpush1.msra.mxu0 %v6092
      %6180 = vmatprep.subr.mxu0 0.0
      %6181 = vmatpush1.msra.mxu0 %v6091
      %6182 = vmatprep.subr.mxu0 0.0
      %6183 = vmatpush1.msra.mxu0 %v6090
      %6184 = vmatprep.subr.mxu0 0.0
      %6185 = vmatpush1.msra.mxu0 %v6089
      %6186 = vmatprep.subr.mxu0 0.0
      %6187 = vmatpush2.msra.mxu0 0.0
      %6188 = vmatprep.subr.mxu0 0.0
      %6189 = vmatpush2.msra.mxu0 0.0
      %6190 = vmatprep.subr.mxu0 0.0
      %6191 = vmatpush2.msra.mxu0 0.0
      %6192 = vmatprep.subr.mxu0 0.0
      %6193 = vmatpush2.msra.mxu0 0.0
      %6194 = vmatprep.subr.mxu0 0.0
      %6195 = vmatpush2.msra.mxu0 0.0
      %6196 = vmatprep.subr.mxu0 0.0
      %6197 = vmatpush2.msra.mxu0 0.0
      %6198 = vmatprep.subr.mxu0 0.0
      %6199 = vmatpush2.msra.mxu0 0.0
      %6200 = vmatprep.subr.mxu0 0.0
      %6201 = vmatpush2.msra.mxu0 0.0
      %6202 = vmatprep.subr.mxu0 0.0
      %6203 = vmatpush2.msra.mxu0 0.0
      %6204 = vmatprep.subr.mxu0 0.0
      %6205 = vmatpush2.msra.mxu0 0.0
      %6206 = vmatprep.subr.mxu0 0.0
      %6207 = vmatpush2.msra.mxu0 0.0
      %6208 = vmatprep.subr.mxu0 0.0
      %6209 = vmatpush2.msra.mxu0 0.0
      %6210 = vmatprep.subr.mxu0 0.0
      %6211 = vmatpush2.msra.mxu0 0.0
      %6212 = vmatprep.subr.mxu0 0.0
      %6213 = vmatpush2.msra.mxu0 0.0
      %6214 = vmatprep.subr.mxu0 0.0
      %6215 = vmatpush2.msra.mxu0 0.0
      %6216 = vmatprep.subr.mxu0 0.0
      %6217 = vmatpush2.msra.mxu0 0.0
      %6218 = vmatprep.mubr.f32.mxu0 0.0
      %6219 = vmatmul.mubr.f32.gmra.mxu0 %v6097
      %v6220 = vpop.f32.mrf.mxu0
      %v6221 = vadd.f32 0.0, %v6220
      %v6222 = vpop.f32.mrf.mxu0
      %6223 = vmatprep.mubr.f32.mxu0 0.0
      %6224 = vmatmul.mubr.f32.gmra.mxu0 %v6100
      %v6225 = vpop.f32.mrf.mxu0
      %v6226 = vadd.f32 0.0, %v6225
      %v6227 = vpop.f32.mrf.mxu0
      %6228 = vmatprep.mubr.f32.mxu0 0.0
      %6229 = vmatmul.mubr.f32.gmra.mxu0 %v6103
      %v6230 = vpop.f32.mrf.mxu0
      %v6231 = vadd.f32 0.0, %v6230
      %v6232 = vpop.f32.mrf.mxu0
      %6233 = vmatprep.mubr.f32.mxu0 0.0
      %6234 = vmatmul.mubr.f32.gmra.mxu0 %v6106
      %v6235 = vpop.f32.mrf.mxu0
      %v6236 = vadd.f32 0.0, %v6235
      %v6237 = vpop.f32.mrf.mxu0
      %6238 = vmatprep.mubr.f32.mxu0 0.0
      %6239 = vmatmul.mubr.f32.gmra.mxu0 %v6109
      %v6240 = vpop.f32.mrf.mxu0
      %v6241 = vadd.f32 0.0, %v6240
      %v6242 = vpop.f32.mrf.mxu0
      %6243 = vmatprep.mubr.f32.mxu0 0.0
      %6244 = vmatmul.mubr.f32.gmra.mxu0 %v6112
      %v6245 = vpop.f32.mrf.mxu0
      %v6246 = vadd.f32 0.0, %v6245
      %v6247 = vpop.f32.mrf.mxu0
      %6248 = vmatprep.mubr.f32.mxu0 0.0
      %6249 = vmatmul.mubr.f32.gmra.mxu0 %v6115
      %v6250 = vpop.f32.mrf.mxu0
      %v6251 = vadd.f32 0.0, %v6250
      %v6252 = vpop.f32.mrf.mxu0
      %6253 = vmatprep.mubr.f32.mxu0 0.0
      %6254 = vmatmul.mubr.f32.gmra.mxu0 %v6118
      %v6255 = vpop.f32.mrf.mxu0
      %v6256 = vadd.f32 0.0, %v6255
      %v6257 = vpop.f32.mrf.mxu0
      %6258 = vmatprep.mubr.f32.mxu0 0.0
      %6259 = vmatmul.mubr.f32.gmra.mxu0 %v6121
      %v6260 = vpop.f32.mrf.mxu0
      %v6261 = vadd.f32 0.0, %v6260
      %v6262 = vpop.f32.mrf.mxu0
      %6263 = vmatprep.mubr.f32.mxu0 0.0
      %6264 = vmatmul.mubr.f32.gmra.mxu0 %v6124
      %v6265 = vpop.f32.mrf.mxu0
      %v6266 = vadd.f32 0.0, %v6265
      %v6267 = vpop.f32.mrf.mxu0
      %6268 = vmatprep.mubr.f32.mxu0 0.0
      %6269 = vmatmul.mubr.f32.gmra.mxu0 %v6127
      %v6270 = vpop.f32.mrf.mxu0
      %v6271 = vadd.f32 0.0, %v6270
      %v6272 = vpop.f32.mrf.mxu0
      %6273 = vmatprep.mubr.f32.mxu0 0.0
      %6274 = vmatmul.mubr.f32.gmra.mxu0 %v6130
      %v6275 = vpop.f32.mrf.mxu0
      %v6276 = vadd.f32 0.0, %v6275
      %v6277 = vpop.f32.mrf.mxu0
      %6278 = vmatprep.mubr.f32.mxu0 0.0
      %6279 = vmatmul.mubr.f32.gmra.mxu0 %v6133
      %v6280 = vpop.f32.mrf.mxu0
      %v6281 = vadd.f32 0.0, %v6280
      %v6282 = vpop.f32.mrf.mxu0
      %6283 = vmatprep.mubr.f32.mxu0 0.0
      %6284 = vmatmul.mubr.f32.gmra.mxu0 %v6136
      %v6285 = vpop.f32.mrf.mxu0
      %v6286 = vadd.f32 0.0, %v6285
      %v6287 = vpop.f32.mrf.mxu0
      %6288 = vmatprep.mubr.f32.mxu0 0.0
      %6289 = vmatmul.mubr.f32.gmra.mxu0 %v6139
      %v6290 = vpop.f32.mrf.mxu0
      %v6291 = vadd.f32 0.0, %v6290
      %v6292 = vpop.f32.mrf.mxu0
      %6293 = vmatprep.mubr.f32.mxu0 0.0
      %6294 = vmatmul.mubr.f32.gmra.mxu0 %v6142
      %v6295 = vpop.f32.mrf.mxu0
      %v6296 = vadd.f32 0.0, %v6295
      %v6297 = vpop.f32.mrf.mxu0
      %6298 = vmatprep.mubr.f32.mxu0 0.0
      %6299 = vmatmul.mubr.f32.gmra.mxu0 %v6145
      %v6300 = vpop.f32.mrf.mxu0
      %v6301 = vadd.f32 0.0, %v6300
      %v6302 = vpop.f32.mrf.mxu0
      %6303 = vmatprep.mubr.f32.mxu0 0.0
      %6304 = vmatmul.mubr.f32.gmra.mxu0 %v6148
      %v6305 = vpop.f32.mrf.mxu0
      %v6306 = vadd.f32 0.0, %v6305
      %v6307 = vpop.f32.mrf.mxu0
      %6308 = vdwg.mxu0
      %v6310 = vsel %vm522, %v6045, 0
      %v6313 = vsel %vm522, %v6046, 0
      %v6316 = vsel %vm522, %v6047, 0
      %v6319 = vsel %vm522, %v6048, 0
      %v6322 = vsel %vm522, %v6049, 0
      %v6325 = vsel %vm522, %v6050, 0
      %v6328 = vsel %vm522, %v6051, 0
      %v6331 = vsel %vm522, %v6052, 0
      %v6334 = vsel %vm522, %v6053, 0
      %v6337 = vsel %vm522, %v6054, 0
      %v6340 = vsel %vm522, %v6055, 0
      %v6343 = vsel %vm522, %v6056, 0
      %v6346 = vsel %vm522, %v6057, 0
      %v6349 = vsel %vm522, %v6058, 0
      %v6352 = vsel %vm522, %v6059, 0
      %v6355 = vsel %vm522, %v6060, 0
      %v6358 = vsel %vm522, %v6061, 0
      %v6361 = vsel %vm522, %v6062, 0
      %v6364 = vsel %vm6150, %v6069, 0
      %6366 = vmatprep.subr.mxu0 0.0
      %6367 = vmatpush1.msra.mxu0 0.0
      %6368 = vmatprep.subr.mxu0 0.0
      %6369 = vmatpush1.msra.mxu0 0.0
      %6370 = vmatprep.subr.mxu0 0.0
      %6371 = vmatpush1.msra.mxu0 0.0
      %6372 = vmatprep.subr.mxu0 0.0
      %6373 = vmatpush1.msra.mxu0 0.0
      %6374 = vmatprep.subr.mxu0 0.0
      %6375 = vmatpush1.msra.mxu0 0.0
      %6376 = vmatprep.subr.mxu0 0.0
      %6377 = vmatpush1.msra.mxu0 0.0
      %6378 = vmatprep.subr.mxu0 0.0
      %6379 = vmatpush1.msra.mxu0 0.0
      %6380 = vmatprep.subr.mxu0 0.0
      %6381 = vmatpush1.msra.mxu0 0.0
      %6382 = vmatprep.subr.mxu0 0.0
      %6383 = vmatpush1.msra.mxu0 0.0
      %6384 = vmatprep.subr.mxu0 0.0
      %6385 = vmatpush1.msra.mxu0 %v6364
      %6386 = vmatprep.subr.mxu0 0.0
      %6387 = vmatpush1.msra.mxu0 %v6068
      %6388 = vmatprep.subr.mxu0 0.0
      %6389 = vmatpush1.msra.mxu0 %v6067
      %6390 = vmatprep.subr.mxu0 0.0
      %6391 = vmatpush1.msra.mxu0 %v6066
      %6392 = vmatprep.subr.mxu0 0.0
      %6393 = vmatpush1.msra.mxu0 %v6065
      %6394 = vmatprep.subr.mxu0 0.0
      %6395 = vmatpush1.msra.mxu0 %v6064
      %6396 = vmatprep.subr.mxu0 0.0
      %6397 = vmatpush1.msra.mxu0 %v6063
      %6398 = vmatprep.subr.mxu0 0.0
      %6399 = vmatpush2.msra.mxu0 0.0
      %6400 = vmatprep.subr.mxu0 0.0
      %6401 = vmatpush2.msra.mxu0 0.0
      %6402 = vmatprep.subr.mxu0 0.0
      %6403 = vmatpush2.msra.mxu0 0.0
      %6404 = vmatprep.subr.mxu0 0.0
      %6405 = vmatpush2.msra.mxu0 0.0
      %6406 = vmatprep.subr.mxu0 0.0
      %6407 = vmatpush2.msra.mxu0 0.0
      %6408 = vmatprep.subr.mxu0 0.0
      %6409 = vmatpush2.msra.mxu0 0.0
      %6410 = vmatprep.subr.mxu0 0.0
      %6411 = vmatpush2.msra.mxu0 0.0
      %6412 = vmatprep.subr.mxu0 0.0
      %6413 = vmatpush2.msra.mxu0 0.0
      %6414 = vmatprep.subr.mxu0 0.0
      %6415 = vmatpush2.msra.mxu0 0.0
      %6416 = vmatprep.subr.mxu0 0.0
      %6417 = vmatpush2.msra.mxu0 0.0
      %6418 = vmatprep.subr.mxu0 0.0
      %6419 = vmatpush2.msra.mxu0 0.0
      %6420 = vmatprep.subr.mxu0 0.0
      %6421 = vmatpush2.msra.mxu0 0.0
      %6422 = vmatprep.subr.mxu0 0.0
      %6423 = vmatpush2.msra.mxu0 0.0
      %6424 = vmatprep.subr.mxu0 0.0
      %6425 = vmatpush2.msra.mxu0 0.0
      %6426 = vmatprep.subr.mxu0 0.0
      %6427 = vmatpush2.msra.mxu0 0.0
      %6428 = vmatprep.subr.mxu0 0.0
      %6429 = vmatpush2.msra.mxu0 0.0
      %6430 = vmatprep.mubr.f32.mxu0 0.0
      %6431 = vmatmul.mubr.f32.gmra.mxu0 %v6310
      %v6432 = vpop.f32.mrf.mxu0
      %v6433 = vadd.f32 %v6221, %v6432
      %v6434 = vpop.f32.mrf.mxu0
      %6435 = vmatprep.mubr.f32.mxu0 0.0
      %6436 = vmatmul.mubr.f32.gmra.mxu0 %v6313
      %v6437 = vpop.f32.mrf.mxu0
      %v6438 = vadd.f32 %v6226, %v6437
      %v6439 = vpop.f32.mrf.mxu0
      %6440 = vmatprep.mubr.f32.mxu0 0.0
      %6441 = vmatmul.mubr.f32.gmra.mxu0 %v6316
      %v6442 = vpop.f32.mrf.mxu0
      %v6443 = vadd.f32 %v6231, %v6442
      %v6444 = vpop.f32.mrf.mxu0
      %6445 = vmatprep.mubr.f32.mxu0 0.0
      %6446 = vmatmul.mubr.f32.gmra.mxu0 %v6319
      %v6447 = vpop.f32.mrf.mxu0
      %v6448 = vadd.f32 %v6236, %v6447
      %v6449 = vpop.f32.mrf.mxu0
      %6450 = vmatprep.mubr.f32.mxu0 0.0
      %6451 = vmatmul.mubr.f32.gmra.mxu0 %v6322
      %v6452 = vpop.f32.mrf.mxu0
      %v6453 = vadd.f32 %v6241, %v6452
      %v6454 = vpop.f32.mrf.mxu0
      %6455 = vmatprep.mubr.f32.mxu0 0.0
      %6456 = vmatmul.mubr.f32.gmra.mxu0 %v6325
      %v6457 = vpop.f32.mrf.mxu0
      %v6458 = vadd.f32 %v6246, %v6457
      %v6459 = vpop.f32.mrf.mxu0
      %6460 = vmatprep.mubr.f32.mxu0 0.0
      %6461 = vmatmul.mubr.f32.gmra.mxu0 %v6328
      %v6462 = vpop.f32.mrf.mxu0
      %v6463 = vadd.f32 %v6251, %v6462
      %v6464 = vpop.f32.mrf.mxu0
      %6465 = vmatprep.mubr.f32.mxu0 0.0
      %6466 = vmatmul.mubr.f32.gmra.mxu0 %v6331
      %v6467 = vpop.f32.mrf.mxu0
      %v6468 = vadd.f32 %v6256, %v6467
      %v6469 = vpop.f32.mrf.mxu0
      %6470 = vmatprep.mubr.f32.mxu0 0.0
      %6471 = vmatmul.mubr.f32.gmra.mxu0 %v6334
      %v6472 = vpop.f32.mrf.mxu0
      %v6473 = vadd.f32 %v6261, %v6472
      %v6474 = vpop.f32.mrf.mxu0
      %6475 = vmatprep.mubr.f32.mxu0 0.0
      %6476 = vmatmul.mubr.f32.gmra.mxu0 %v6337
      %v6477 = vpop.f32.mrf.mxu0
      %v6478 = vadd.f32 %v6266, %v6477
      %v6479 = vpop.f32.mrf.mxu0
      %6480 = vmatprep.mubr.f32.mxu0 0.0
      %6481 = vmatmul.mubr.f32.gmra.mxu0 %v6340
      %v6482 = vpop.f32.mrf.mxu0
      %v6483 = vadd.f32 %v6271, %v6482
      %v6484 = vpop.f32.mrf.mxu0
      %6485 = vmatprep.mubr.f32.mxu0 0.0
      %6486 = vmatmul.mubr.f32.gmra.mxu0 %v6343
      %v6487 = vpop.f32.mrf.mxu0
      %v6488 = vadd.f32 %v6276, %v6487
      %v6489 = vpop.f32.mrf.mxu0
      %6490 = vmatprep.mubr.f32.mxu0 0.0
      %6491 = vmatmul.mubr.f32.gmra.mxu0 %v6346
      %v6492 = vpop.f32.mrf.mxu0
      %v6493 = vadd.f32 %v6281, %v6492
      %v6494 = vpop.f32.mrf.mxu0
      %6495 = vmatprep.mubr.f32.mxu0 0.0
      %6496 = vmatmul.mubr.f32.gmra.mxu0 %v6349
      %v6497 = vpop.f32.mrf.mxu0
      %v6498 = vadd.f32 %v6286, %v6497
      %v6499 = vpop.f32.mrf.mxu0
      %6500 = vmatprep.mubr.f32.mxu0 0.0
      %6501 = vmatmul.mubr.f32.gmra.mxu0 %v6352
      %v6502 = vpop.f32.mrf.mxu0
      %v6503 = vadd.f32 %v6291, %v6502
      %v6504 = vpop.f32.mrf.mxu0
      %6505 = vmatprep.mubr.f32.mxu0 0.0
      %6506 = vmatmul.mubr.f32.gmra.mxu0 %v6355
      %v6507 = vpop.f32.mrf.mxu0
      %v6508 = vadd.f32 %v6296, %v6507
      %v6509 = vpop.f32.mrf.mxu0
      %6510 = vmatprep.mubr.f32.mxu0 0.0
      %6511 = vmatmul.mubr.f32.gmra.mxu0 %v6358
      %v6512 = vpop.f32.mrf.mxu0
      %v6513 = vadd.f32 %v6301, %v6512
      %v6514 = vpop.f32.mrf.mxu0
      %6515 = vmatprep.mubr.f32.mxu0 0.0
      %6516 = vmatmul.mubr.f32.gmra.mxu0 %v6361
      %v6517 = vpop.f32.mrf.mxu0
      %v6518 = vadd.f32 %v6306, %v6517
      %v6519 = vpop.f32.mrf.mxu0
      %6520 = vdwg.mxu0
      %v6521 = vld [vmem:[#allocation3 + $0x2] sm:$0xff]
      %v6522 = vld [vmem:[#allocation3 + $0xa] sm:$0xff]
      %v6523 = vld [vmem:[#allocation3 + $0x12] sm:$0xff]
      %v6524 = vld [vmem:[#allocation3 + $0x1a] sm:$0xff]
      %v6525 = vld [vmem:[#allocation3 + $0x22] sm:$0xff]
      %v6526 = vld [vmem:[#allocation3 + $0x2a] sm:$0xff]
      %v6527 = vld [vmem:[#allocation3 + $0x32] sm:$0xff]
      %v6528 = vld [vmem:[#allocation3 + $0x3a] sm:$0xff]
      %v6529 = vld [vmem:[#allocation3 + $0x42] sm:$0xff]
      %v6530 = vld [vmem:[#allocation3 + $0x4a] sm:$0xff]
      %v6531 = vld [vmem:[#allocation3 + $0x52] sm:$0xff]
      %v6532 = vld [vmem:[#allocation3 + $0x5a] sm:$0xff]
      %v6533 = vld [vmem:[#allocation3 + $0x62] sm:$0xff]
      %v6534 = vld [vmem:[#allocation3 + $0x6a] sm:$0xff]
      %v6535 = vld [vmem:[#allocation3 + $0x72] sm:$0xff]
      %v6536 = vld [vmem:[#allocation3 + $0x7a] sm:$0xff]
      %v6537 = vld [vmem:[#allocation3 + $0x82] sm:$0xff]
      %v6538 = vld [vmem:[#allocation3 + $0x8a] sm:$0xff]
      %s6539 = scalar_lea.vmem %s2, 112
      %v6540 = vld [vmem:[%s6539] sm:$0xff]
      %v6541 = vld [vmem:[%s6539 + $0x8] sm:$0xff]
      %v6542 = vld [vmem:[%s6539 + $0x10] sm:$0xff]
      %v6543 = vld [vmem:[%s6539 + $0x18] sm:$0xff]
      %v6544 = vld [vmem:[%s6539 + $0x20] sm:$0xff]
      %v6545 = vld [vmem:[%s6539 + $0x28] sm:$0xff]
      %v6546 = vld [vmem:[%s6539 + $0x30] sm:$0x3]
      %v6548 = vsel %vm522, %v6521, 0
      %v6551 = vsel %vm522, %v6522, 0
      %v6554 = vsel %vm522, %v6523, 0
      %v6557 = vsel %vm522, %v6524, 0
      %v6560 = vsel %vm522, %v6525, 0
      %v6563 = vsel %vm522, %v6526, 0
      %v6566 = vsel %vm522, %v6527, 0
      %v6569 = vsel %vm522, %v6528, 0
      %v6572 = vsel %vm522, %v6529, 0
      %v6575 = vsel %vm522, %v6530, 0
      %v6578 = vsel %vm522, %v6531, 0
      %v6581 = vsel %vm522, %v6532, 0
      %v6584 = vsel %vm522, %v6533, 0
      %v6587 = vsel %vm522, %v6534, 0
      %v6590 = vsel %vm522, %v6535, 0
      %v6593 = vsel %vm522, %v6536, 0
      %v6596 = vsel %vm522, %v6537, 0
      %v6599 = vsel %vm522, %v6538, 0
      %v6602 = vsel %vm6150, %v6546, 0
      %6604 = vmatprep.subr.mxu0 0.0
      %6605 = vmatpush1.msra.mxu0 0.0
      %6606 = vmatprep.subr.mxu0 0.0
      %6607 = vmatpush1.msra.mxu0 0.0
      %6608 = vmatprep.subr.mxu0 0.0
      %6609 = vmatpush1.msra.mxu0 0.0
      %6610 = vmatprep.subr.mxu0 0.0
      %6611 = vmatpush1.msra.mxu0 0.0
      %6612 = vmatprep.subr.mxu0 0.0
      %6613 = vmatpush1.msra.mxu0 0.0
      %6614 = vmatprep.subr.mxu0 0.0
      %6615 = vmatpush1.msra.mxu0 0.0
      %6616 = vmatprep.subr.mxu0 0.0
      %6617 = vmatpush1.msra.mxu0 0.0
      %6618 = vmatprep.subr.mxu0 0.0
      %6619 = vmatpush1.msra.mxu0 0.0
      %6620 = vmatprep.subr.mxu0 0.0
      %6621 = vmatpush1.msra.mxu0 0.0
      %6622 = vmatprep.subr.mxu0 0.0
      %6623 = vmatpush1.msra.mxu0 %v6602
      %6624 = vmatprep.subr.mxu0 0.0
      %6625 = vmatpush1.msra.mxu0 %v6545
      %6626 = vmatprep.subr.mxu0 0.0
      %6627 = vmatpush1.msra.mxu0 %v6544
      %6628 = vmatprep.subr.mxu0 0.0
      %6629 = vmatpush1.msra.mxu0 %v6543
      %6630 = vmatprep.subr.mxu0 0.0
      %6631 = vmatpush1.msra.mxu0 %v6542
      %6632 = vmatprep.subr.mxu0 0.0
      %6633 = vmatpush1.msra.mxu0 %v6541
      %6634 = vmatprep.subr.mxu0 0.0
      %6635 = vmatpush1.msra.mxu0 %v6540
      %6636 = vmatprep.subr.mxu0 0.0
      %6637 = vmatpush2.msra.mxu0 0.0
      %6638 = vmatprep.subr.mxu0 0.0
      %6639 = vmatpush2.msra.mxu0 0.0
      %6640 = vmatprep.subr.mxu0 0.0
      %6641 = vmatpush2.msra.mxu0 0.0
      %6642 = vmatprep.subr.mxu0 0.0
      %6643 = vmatpush2.msra.mxu0 0.0
      %6644 = vmatprep.subr.mxu0 0.0
      %6645 = vmatpush2.msra.mxu0 0.0
      %6646 = vmatprep.subr.mxu0 0.0
      %6647 = vmatpush2.msra.mxu0 0.0
      %6648 = vmatprep.subr.mxu0 0.0
      %6649 = vmatpush2.msra.mxu0 0.0
      %6650 = vmatprep.subr.mxu0 0.0
      %6651 = vmatpush2.msra.mxu0 0.0
      %6652 = vmatprep.subr.mxu0 0.0
      %6653 = vmatpush2.msra.mxu0 0.0
      %6654 = vmatprep.subr.mxu0 0.0
      %6655 = vmatpush2.msra.mxu0 0.0
      %6656 = vmatprep.subr.mxu0 0.0
      %6657 = vmatpush2.msra.mxu0 0.0
      %6658 = vmatprep.subr.mxu0 0.0
      %6659 = vmatpush2.msra.mxu0 0.0
      %6660 = vmatprep.subr.mxu0 0.0
      %6661 = vmatpush2.msra.mxu0 0.0
      %6662 = vmatprep.subr.mxu0 0.0
      %6663 = vmatpush2.msra.mxu0 0.0
      %6664 = vmatprep.subr.mxu0 0.0
      %6665 = vmatpush2.msra.mxu0 0.0
      %6666 = vmatprep.subr.mxu0 0.0
      %6667 = vmatpush2.msra.mxu0 0.0
      %6668 = vmatprep.mubr.f32.mxu0 0.0
      %6669 = vmatmul.mubr.f32.gmra.mxu0 %v6548
      %v6670 = vpop.f32.mrf.mxu0
      %v6671 = vadd.f32 0.0, %v6670
      %v6672 = vpop.f32.mrf.mxu0
      %6673 = vmatprep.mubr.f32.mxu0 0.0
      %6674 = vmatmul.mubr.f32.gmra.mxu0 %v6551
      %v6675 = vpop.f32.mrf.mxu0
      %v6676 = vadd.f32 0.0, %v6675
      %v6677 = vpop.f32.mrf.mxu0
      %6678 = vmatprep.mubr.f32.mxu0 0.0
      %6679 = vmatmul.mubr.f32.gmra.mxu0 %v6554
      %v6680 = vpop.f32.mrf.mxu0
      %v6681 = vadd.f32 0.0, %v6680
      %v6682 = vpop.f32.mrf.mxu0
      %6683 = vmatprep.mubr.f32.mxu0 0.0
      %6684 = vmatmul.mubr.f32.gmra.mxu0 %v6557
      %v6685 = vpop.f32.mrf.mxu0
      %v6686 = vadd.f32 0.0, %v6685
      %v6687 = vpop.f32.mrf.mxu0
      %6688 = vmatprep.mubr.f32.mxu0 0.0
      %6689 = vmatmul.mubr.f32.gmra.mxu0 %v6560
      %v6690 = vpop.f32.mrf.mxu0
      %v6691 = vadd.f32 0.0, %v6690
      %v6692 = vpop.f32.mrf.mxu0
      %6693 = vmatprep.mubr.f32.mxu0 0.0
      %6694 = vmatmul.mubr.f32.gmra.mxu0 %v6563
      %v6695 = vpop.f32.mrf.mxu0
      %v6696 = vadd.f32 0.0, %v6695
      %v6697 = vpop.f32.mrf.mxu0
      %6698 = vmatprep.mubr.f32.mxu0 0.0
      %6699 = vmatmul.mubr.f32.gmra.mxu0 %v6566
      %v6700 = vpop.f32.mrf.mxu0
      %v6701 = vadd.f32 0.0, %v6700
      %v6702 = vpop.f32.mrf.mxu0
      %6703 = vmatprep.mubr.f32.mxu0 0.0
      %6704 = vmatmul.mubr.f32.gmra.mxu0 %v6569
      %v6705 = vpop.f32.mrf.mxu0
      %v6706 = vadd.f32 0.0, %v6705
      %v6707 = vpop.f32.mrf.mxu0
      %6708 = vmatprep.mubr.f32.mxu0 0.0
      %6709 = vmatmul.mubr.f32.gmra.mxu0 %v6572
      %v6710 = vpop.f32.mrf.mxu0
      %v6711 = vadd.f32 0.0, %v6710
      %v6712 = vpop.f32.mrf.mxu0
      %6713 = vmatprep.mubr.f32.mxu0 0.0
      %6714 = vmatmul.mubr.f32.gmra.mxu0 %v6575
      %v6715 = vpop.f32.mrf.mxu0
      %v6716 = vadd.f32 0.0, %v6715
      %v6717 = vpop.f32.mrf.mxu0
      %6718 = vmatprep.mubr.f32.mxu0 0.0
      %6719 = vmatmul.mubr.f32.gmra.mxu0 %v6578
      %v6720 = vpop.f32.mrf.mxu0
      %v6721 = vadd.f32 0.0, %v6720
      %v6722 = vpop.f32.mrf.mxu0
      %6723 = vmatprep.mubr.f32.mxu0 0.0
      %6724 = vmatmul.mubr.f32.gmra.mxu0 %v6581
      %v6725 = vpop.f32.mrf.mxu0
      %v6726 = vadd.f32 0.0, %v6725
      %v6727 = vpop.f32.mrf.mxu0
      %6728 = vmatprep.mubr.f32.mxu0 0.0
      %6729 = vmatmul.mubr.f32.gmra.mxu0 %v6584
      %v6730 = vpop.f32.mrf.mxu0
      %v6731 = vadd.f32 0.0, %v6730
      %v6732 = vpop.f32.mrf.mxu0
      %6733 = vmatprep.mubr.f32.mxu0 0.0
      %6734 = vmatmul.mubr.f32.gmra.mxu0 %v6587
      %v6735 = vpop.f32.mrf.mxu0
      %v6736 = vadd.f32 0.0, %v6735
      %v6737 = vpop.f32.mrf.mxu0
      %6738 = vmatprep.mubr.f32.mxu0 0.0
      %6739 = vmatmul.mubr.f32.gmra.mxu0 %v6590
      %v6740 = vpop.f32.mrf.mxu0
      %v6741 = vadd.f32 0.0, %v6740
      %v6742 = vpop.f32.mrf.mxu0
      %6743 = vmatprep.mubr.f32.mxu0 0.0
      %6744 = vmatmul.mubr.f32.gmra.mxu0 %v6593
      %v6745 = vpop.f32.mrf.mxu0
      %v6746 = vadd.f32 0.0, %v6745
      %v6747 = vpop.f32.mrf.mxu0
      %6748 = vmatprep.mubr.f32.mxu0 0.0
      %6749 = vmatmul.mubr.f32.gmra.mxu0 %v6596
      %v6750 = vpop.f32.mrf.mxu0
      %v6751 = vadd.f32 0.0, %v6750
      %v6752 = vpop.f32.mrf.mxu0
      %6753 = vmatprep.mubr.f32.mxu0 0.0
      %6754 = vmatmul.mubr.f32.gmra.mxu0 %v6599
      %v6755 = vpop.f32.mrf.mxu0
      %v6756 = vadd.f32 0.0, %v6755
      %v6757 = vpop.f32.mrf.mxu0
      %6758 = vdwg.mxu0
      %v6759 = vadd.f32 %v6433, %v6671
      %v6760 = vadd.f32 %v6438, %v6676
      %v6761 = vadd.f32 %v6443, %v6681
      %v6762 = vadd.f32 %v6448, %v6686
      %v6763 = vadd.f32 %v6453, %v6691
      %v6764 = vadd.f32 %v6458, %v6696
      %v6765 = vadd.f32 %v6463, %v6701
      %v6766 = vadd.f32 %v6468, %v6706
      %v6767 = vadd.f32 %v6473, %v6711
      %v6768 = vadd.f32 %v6478, %v6716
      %v6769 = vadd.f32 %v6483, %v6721
      %v6770 = vadd.f32 %v6488, %v6726
      %v6771 = vadd.f32 %v6493, %v6731
      %v6772 = vadd.f32 %v6498, %v6736
      %v6773 = vadd.f32 %v6503, %v6741
      %v6774 = vadd.f32 %v6508, %v6746
      %v6775 = vadd.f32 %v6513, %v6751
      %v6776 = vadd.f32 %v6518, %v6756
      %v6777 = vld [vmem:[#allocation3 + $0x8a] sm:$0xff]
      %v6778 = vld [vmem:[#allocation3 + $0x92] sm:$0xff]
      %v6779 = vld [vmem:[#allocation3 + $0x9a] sm:$0xff]
      %v6780 = vld [vmem:[#allocation3 + $0xa2] sm:$0xff]
      %v6781 = vld [vmem:[#allocation3 + $0xaa] sm:$0xff]
      %v6782 = vld [vmem:[#allocation3 + $0xb2] sm:$0xff]
      %v6783 = vld [vmem:[#allocation3 + $0xba] sm:$0xff]
      %v6784 = vld [vmem:[#allocation3 + $0xc2] sm:$0xff]
      %v6785 = vld [vmem:[#allocation3 + $0xca] sm:$0xff]
      %v6786 = vld [vmem:[#allocation3 + $0xd2] sm:$0xff]
      %v6787 = vld [vmem:[#allocation3 + $0xda] sm:$0xff]
      %v6788 = vld [vmem:[#allocation3 + $0xe2] sm:$0xff]
      %v6789 = vld [vmem:[#allocation3 + $0xea] sm:$0xff]
      %v6790 = vld [vmem:[#allocation3 + $0xf2] sm:$0xff]
      %v6791 = vld [vmem:[#allocation3 + $0xfa] sm:$0xff]
      %v6792 = vld [vmem:[#allocation3 + $0x102] sm:$0xff]
      %v6793 = vld [vmem:[#allocation3 + $0x10a] sm:$0xff]
      %v6794 = vld [vmem:[#allocation3 + $0x112] sm:$0xff]
      %s6795 = scalar_lea.vmem %s2, 168
      %v6796 = vld [vmem:[%s6795] sm:$0xff]
      %v6797 = vld [vmem:[%s6795 + $0x8] sm:$0xff]
      %v6798 = vld [vmem:[%s6795 + $0x10] sm:$0xff]
      %v6799 = vld [vmem:[%s6795 + $0x18] sm:$0xff]
      %v6800 = vld [vmem:[%s6795 + $0x20] sm:$0xff]
      %v6801 = vld [vmem:[%s6795 + $0x28] sm:$0xff]
      %v6802 = vld [vmem:[%s6795 + $0x30] sm:$0x3]
      %v6804 = vsel %vm522, %v6777, 0
      %v6807 = vsel %vm522, %v6778, 0
      %v6810 = vsel %vm522, %v6779, 0
      %v6813 = vsel %vm522, %v6780, 0
      %v6816 = vsel %vm522, %v6781, 0
      %v6819 = vsel %vm522, %v6782, 0
      %v6822 = vsel %vm522, %v6783, 0
      %v6825 = vsel %vm522, %v6784, 0
      %v6828 = vsel %vm522, %v6785, 0
      %v6831 = vsel %vm522, %v6786, 0
      %v6834 = vsel %vm522, %v6787, 0
      %v6837 = vsel %vm522, %v6788, 0
      %v6840 = vsel %vm522, %v6789, 0
      %v6843 = vsel %vm522, %v6790, 0
      %v6846 = vsel %vm522, %v6791, 0
      %v6849 = vsel %vm522, %v6792, 0
      %v6852 = vsel %vm522, %v6793, 0
      %v6855 = vsel %vm522, %v6794, 0
      %v6858 = vsel %vm6150, %v6802, 0
      %6860 = vmatprep.subr.mxu0 0.0
      %6861 = vmatpush1.msra.mxu0 0.0
      %6862 = vmatprep.subr.mxu0 0.0
      %6863 = vmatpush1.msra.mxu0 0.0
      %6864 = vmatprep.subr.mxu0 0.0
      %6865 = vmatpush1.msra.mxu0 0.0
      %6866 = vmatprep.subr.mxu0 0.0
      %6867 = vmatpush1.msra.mxu0 0.0
      %6868 = vmatprep.subr.mxu0 0.0
      %6869 = vmatpush1.msra.mxu0 0.0
      %6870 = vmatprep.subr.mxu0 0.0
      %6871 = vmatpush1.msra.mxu0 0.0
      %6872 = vmatprep.subr.mxu0 0.0
      %6873 = vmatpush1.msra.mxu0 0.0
      %6874 = vmatprep.subr.mxu0 0.0
      %6875 = vmatpush1.msra.mxu0 0.0
      %6876 = vmatprep.subr.mxu0 0.0
      %6877 = vmatpush1.msra.mxu0 0.0
      %6878 = vmatprep.subr.mxu0 0.0
      %6879 = vmatpush1.msra.mxu0 %v6858
      %6880 = vmatprep.subr.mxu0 0.0
      %6881 = vmatpush1.msra.mxu0 %v6801
      %6882 = vmatprep.subr.mxu0 0.0
      %6883 = vmatpush1.msra.mxu0 %v6800
      %6884 = vmatprep.subr.mxu0 0.0
      %6885 = vmatpush1.msra.mxu0 %v6799
      %6886 = vmatprep.subr.mxu0 0.0
      %6887 = vmatpush1.msra.mxu0 %v6798
      %6888 = vmatprep.subr.mxu0 0.0
      %6889 = vmatpush1.msra.mxu0 %v6797
      %6890 = vmatprep.subr.mxu0 0.0
      %6891 = vmatpush1.msra.mxu0 %v6796
      %6892 = vmatprep.subr.mxu0 0.0
      %6893 = vmatpush2.msra.mxu0 0.0
      %6894 = vmatprep.subr.mxu0 0.0
      %6895 = vmatpush2.msra.mxu0 0.0
      %6896 = vmatprep.subr.mxu0 0.0
      %6897 = vmatpush2.msra.mxu0 0.0
      %6898 = vmatprep.subr.mxu0 0.0
      %6899 = vmatpush2.msra.mxu0 0.0
      %6900 = vmatprep.subr.mxu0 0.0
      %6901 = vmatpush2.msra.mxu0 0.0
      %6902 = vmatprep.subr.mxu0 0.0
      %6903 = vmatpush2.msra.mxu0 0.0
      %6904 = vmatprep.subr.mxu0 0.0
      %6905 = vmatpush2.msra.mxu0 0.0
      %6906 = vmatprep.subr.mxu0 0.0
      %6907 = vmatpush2.msra.mxu0 0.0
      %6908 = vmatprep.subr.mxu0 0.0
      %6909 = vmatpush2.msra.mxu0 0.0
      %6910 = vmatprep.subr.mxu0 0.0
      %6911 = vmatpush2.msra.mxu0 0.0
      %6912 = vmatprep.subr.mxu0 0.0
      %6913 = vmatpush2.msra.mxu0 0.0
      %6914 = vmatprep.subr.mxu0 0.0
      %6915 = vmatpush2.msra.mxu0 0.0
      %6916 = vmatprep.subr.mxu0 0.0
      %6917 = vmatpush2.msra.mxu0 0.0
      %6918 = vmatprep.subr.mxu0 0.0
      %6919 = vmatpush2.msra.mxu0 0.0
      %6920 = vmatprep.subr.mxu0 0.0
      %6921 = vmatpush2.msra.mxu0 0.0
      %6922 = vmatprep.subr.mxu0 0.0
      %6923 = vmatpush2.msra.mxu0 0.0
      %6924 = vmatprep.mubr.f32.mxu0 0.0
      %6925 = vmatmul.mubr.f32.gmra.mxu0 %v6804
      %v6926 = vpop.f32.mrf.mxu0
      %v6927 = vadd.f32 0.0, %v6926
      %v6928 = vpop.f32.mrf.mxu0
      %6929 = vmatprep.mubr.f32.mxu0 0.0
      %6930 = vmatmul.mubr.f32.gmra.mxu0 %v6807
      %v6931 = vpop.f32.mrf.mxu0
      %v6932 = vadd.f32 0.0, %v6931
      %v6933 = vpop.f32.mrf.mxu0
      %6934 = vmatprep.mubr.f32.mxu0 0.0
      %6935 = vmatmul.mubr.f32.gmra.mxu0 %v6810
      %v6936 = vpop.f32.mrf.mxu0
      %v6937 = vadd.f32 0.0, %v6936
      %v6938 = vpop.f32.mrf.mxu0
      %6939 = vmatprep.mubr.f32.mxu0 0.0
      %6940 = vmatmul.mubr.f32.gmra.mxu0 %v6813
      %v6941 = vpop.f32.mrf.mxu0
      %v6942 = vadd.f32 0.0, %v6941
      %v6943 = vpop.f32.mrf.mxu0
      %6944 = vmatprep.mubr.f32.mxu0 0.0
      %6945 = vmatmul.mubr.f32.gmra.mxu0 %v6816
      %v6946 = vpop.f32.mrf.mxu0
      %v6947 = vadd.f32 0.0, %v6946
      %v6948 = vpop.f32.mrf.mxu0
      %6949 = vmatprep.mubr.f32.mxu0 0.0
      %6950 = vmatmul.mubr.f32.gmra.mxu0 %v6819
      %v6951 = vpop.f32.mrf.mxu0
      %v6952 = vadd.f32 0.0, %v6951
      %v6953 = vpop.f32.mrf.mxu0
      %6954 = vmatprep.mubr.f32.mxu0 0.0
      %6955 = vmatmul.mubr.f32.gmra.mxu0 %v6822
      %v6956 = vpop.f32.mrf.mxu0
      %v6957 = vadd.f32 0.0, %v6956
      %v6958 = vpop.f32.mrf.mxu0
      %6959 = vmatprep.mubr.f32.mxu0 0.0
      %6960 = vmatmul.mubr.f32.gmra.mxu0 %v6825
      %v6961 = vpop.f32.mrf.mxu0
      %v6962 = vadd.f32 0.0, %v6961
      %v6963 = vpop.f32.mrf.mxu0
      %6964 = vmatprep.mubr.f32.mxu0 0.0
      %6965 = vmatmul.mubr.f32.gmra.mxu0 %v6828
      %v6966 = vpop.f32.mrf.mxu0
      %v6967 = vadd.f32 0.0, %v6966
      %v6968 = vpop.f32.mrf.mxu0
      %6969 = vmatprep.mubr.f32.mxu0 0.0
      %6970 = vmatmul.mubr.f32.gmra.mxu0 %v6831
      %v6971 = vpop.f32.mrf.mxu0
      %v6972 = vadd.f32 0.0, %v6971
      %v6973 = vpop.f32.mrf.mxu0
      %6974 = vmatprep.mubr.f32.mxu0 0.0
      %6975 = vmatmul.mubr.f32.gmra.mxu0 %v6834
      %v6976 = vpop.f32.mrf.mxu0
      %v6977 = vadd.f32 0.0, %v6976
      %v6978 = vpop.f32.mrf.mxu0
      %6979 = vmatprep.mubr.f32.mxu0 0.0
      %6980 = vmatmul.mubr.f32.gmra.mxu0 %v6837
      %v6981 = vpop.f32.mrf.mxu0
      %v6982 = vadd.f32 0.0, %v6981
      %v6983 = vpop.f32.mrf.mxu0
      %6984 = vmatprep.mubr.f32.mxu0 0.0
      %6985 = vmatmul.mubr.f32.gmra.mxu0 %v6840
      %v6986 = vpop.f32.mrf.mxu0
      %v6987 = vadd.f32 0.0, %v6986
      %v6988 = vpop.f32.mrf.mxu0
      %6989 = vmatprep.mubr.f32.mxu0 0.0
      %6990 = vmatmul.mubr.f32.gmra.mxu0 %v6843
      %v6991 = vpop.f32.mrf.mxu0
      %v6992 = vadd.f32 0.0, %v6991
      %v6993 = vpop.f32.mrf.mxu0
      %6994 = vmatprep.mubr.f32.mxu0 0.0
      %6995 = vmatmul.mubr.f32.gmra.mxu0 %v6846
      %v6996 = vpop.f32.mrf.mxu0
      %v6997 = vadd.f32 0.0, %v6996
      %v6998 = vpop.f32.mrf.mxu0
      %6999 = vmatprep.mubr.f32.mxu0 0.0
      %7000 = vmatmul.mubr.f32.gmra.mxu0 %v6849
      %v7001 = vpop.f32.mrf.mxu0
      %v7002 = vadd.f32 0.0, %v7001
      %v7003 = vpop.f32.mrf.mxu0
      %7004 = vmatprep.mubr.f32.mxu0 0.0
      %7005 = vmatmul.mubr.f32.gmra.mxu0 %v6852
      %v7006 = vpop.f32.mrf.mxu0
      %v7007 = vadd.f32 0.0, %v7006
      %v7008 = vpop.f32.mrf.mxu0
      %7009 = vmatprep.mubr.f32.mxu0 0.0
      %7010 = vmatmul.mubr.f32.gmra.mxu0 %v6855
      %v7011 = vpop.f32.mrf.mxu0
      %v7012 = vadd.f32 0.0, %v7011
      %v7013 = vpop.f32.mrf.mxu0
      %7014 = vdwg.mxu0
      %v7015 = vadd.f32 %v6759, %v6927
      %v7016 = vadd.f32 %v6760, %v6932
      %v7017 = vadd.f32 %v6761, %v6937
      %v7018 = vadd.f32 %v6762, %v6942
      %v7019 = vadd.f32 %v6763, %v6947
      %v7020 = vadd.f32 %v6764, %v6952
      %v7021 = vadd.f32 %v6765, %v6957
      %v7022 = vadd.f32 %v6766, %v6962
      %v7023 = vadd.f32 %v6767, %v6967
      %v7024 = vadd.f32 %v6768, %v6972
      %v7025 = vadd.f32 %v6769, %v6977
      %v7026 = vadd.f32 %v6770, %v6982
      %v7027 = vadd.f32 %v6771, %v6987
      %v7028 = vadd.f32 %v6772, %v6992
      %v7029 = vadd.f32 %v6773, %v6997
      %v7030 = vadd.f32 %v6774, %v7002
      %v7031 = vadd.f32 %v6775, %v7007
      %v7032 = vadd.f32 %v6776, %v7012
      %v7033 = vld [vmem:[#allocation3 + $0x8b] sm:$0xff]
      %v7034 = vld [vmem:[#allocation3 + $0x93] sm:$0xff]
      %v7035 = vld [vmem:[#allocation3 + $0x9b] sm:$0xff]
      %v7036 = vld [vmem:[#allocation3 + $0xa3] sm:$0xff]
      %v7037 = vld [vmem:[#allocation3 + $0xab] sm:$0xff]
      %v7038 = vld [vmem:[#allocation3 + $0xb3] sm:$0xff]
      %v7039 = vld [vmem:[#allocation3 + $0xbb] sm:$0xff]
      %v7040 = vld [vmem:[#allocation3 + $0xc3] sm:$0xff]
      %v7041 = vld [vmem:[#allocation3 + $0xcb] sm:$0xff]
      %v7042 = vld [vmem:[#allocation3 + $0xd3] sm:$0xff]
      %v7043 = vld [vmem:[#allocation3 + $0xdb] sm:$0xff]
      %v7044 = vld [vmem:[#allocation3 + $0xe3] sm:$0xff]
      %v7045 = vld [vmem:[#allocation3 + $0xeb] sm:$0xff]
      %v7046 = vld [vmem:[#allocation3 + $0xf3] sm:$0xff]
      %v7047 = vld [vmem:[#allocation3 + $0xfb] sm:$0xff]
      %v7048 = vld [vmem:[#allocation3 + $0x103] sm:$0xff]
      %v7049 = vld [vmem:[#allocation3 + $0x10b] sm:$0xff]
      %v7050 = vld [vmem:[#allocation3 + $0x113] sm:$0xff]
      %s7051 = scalar_lea.vmem %s2, 224
      %v7052 = vld [vmem:[%s7051] sm:$0xff]
      %v7053 = vld [vmem:[%s7051 + $0x8] sm:$0xff]
      %v7054 = vld [vmem:[%s7051 + $0x10] sm:$0xff]
      %v7055 = vld [vmem:[%s7051 + $0x18] sm:$0xff]
      %v7056 = vld [vmem:[%s7051 + $0x20] sm:$0xff]
      %v7057 = vld [vmem:[%s7051 + $0x28] sm:$0xff]
      %v7058 = vld [vmem:[%s7051 + $0x30] sm:$0x3]
      %v7060 = vsel %vm522, %v7033, 0
      %v7063 = vsel %vm522, %v7034, 0
      %v7066 = vsel %vm522, %v7035, 0
      %v7069 = vsel %vm522, %v7036, 0
      %v7072 = vsel %vm522, %v7037, 0
      %v7075 = vsel %vm522, %v7038, 0
      %v7078 = vsel %vm522, %v7039, 0
      %v7081 = vsel %vm522, %v7040, 0
      %v7084 = vsel %vm522, %v7041, 0
      %v7087 = vsel %vm522, %v7042, 0
      %v7090 = vsel %vm522, %v7043, 0
      %v7093 = vsel %vm522, %v7044, 0
      %v7096 = vsel %vm522, %v7045, 0
      %v7099 = vsel %vm522, %v7046, 0
      %v7102 = vsel %vm522, %v7047, 0
      %v7105 = vsel %vm522, %v7048, 0
      %v7108 = vsel %vm522, %v7049, 0
      %v7111 = vsel %vm522, %v7050, 0
      %v7114 = vsel %vm6150, %v7058, 0
      %7116 = vmatprep.subr.mxu0 0.0
      %7117 = vmatpush1.msra.mxu0 0.0
      %7118 = vmatprep.subr.mxu0 0.0
      %7119 = vmatpush1.msra.mxu0 0.0
      %7120 = vmatprep.subr.mxu0 0.0
      %7121 = vmatpush1.msra.mxu0 0.0
      %7122 = vmatprep.subr.mxu0 0.0
      %7123 = vmatpush1.msra.mxu0 0.0
      %7124 = vmatprep.subr.mxu0 0.0
      %7125 = vmatpush1.msra.mxu0 0.0
      %7126 = vmatprep.subr.mxu0 0.0
      %7127 = vmatpush1.msra.mxu0 0.0
      %7128 = vmatprep.subr.mxu0 0.0
      %7129 = vmatpush1.msra.mxu0 0.0
      %7130 = vmatprep.subr.mxu0 0.0
      %7131 = vmatpush1.msra.mxu0 0.0
      %7132 = vmatprep.subr.mxu0 0.0
      %7133 = vmatpush1.msra.mxu0 0.0
      %7134 = vmatprep.subr.mxu0 0.0
      %7135 = vmatpush1.msra.mxu0 %v7114
      %7136 = vmatprep.subr.mxu0 0.0
      %7137 = vmatpush1.msra.mxu0 %v7057
      %7138 = vmatprep.subr.mxu0 0.0
      %7139 = vmatpush1.msra.mxu0 %v7056
      %7140 = vmatprep.subr.mxu0 0.0
      %7141 = vmatpush1.msra.mxu0 %v7055
      %7142 = vmatprep.subr.mxu0 0.0
      %7143 = vmatpush1.msra.mxu0 %v7054
      %7144 = vmatprep.subr.mxu0 0.0
      %7145 = vmatpush1.msra.mxu0 %v7053
      %7146 = vmatprep.subr.mxu0 0.0
      %7147 = vmatpush1.msra.mxu0 %v7052
      %7148 = vmatprep.subr.mxu0 0.0
      %7149 = vmatpush2.msra.mxu0 0.0
      %7150 = vmatprep.subr.mxu0 0.0
      %7151 = vmatpush2.msra.mxu0 0.0
      %7152 = vmatprep.subr.mxu0 0.0
      %7153 = vmatpush2.msra.mxu0 0.0
      %7154 = vmatprep.subr.mxu0 0.0
      %7155 = vmatpush2.msra.mxu0 0.0
      %7156 = vmatprep.subr.mxu0 0.0
      %7157 = vmatpush2.msra.mxu0 0.0
      %7158 = vmatprep.subr.mxu0 0.0
      %7159 = vmatpush2.msra.mxu0 0.0
      %7160 = vmatprep.subr.mxu0 0.0
      %7161 = vmatpush2.msra.mxu0 0.0
      %7162 = vmatprep.subr.mxu0 0.0
      %7163 = vmatpush2.msra.mxu0 0.0
      %7164 = vmatprep.subr.mxu0 0.0
      %7165 = vmatpush2.msra.mxu0 0.0
      %7166 = vmatprep.subr.mxu0 0.0
      %7167 = vmatpush2.msra.mxu0 0.0
      %7168 = vmatprep.subr.mxu0 0.0
      %7169 = vmatpush2.msra.mxu0 0.0
      %7170 = vmatprep.subr.mxu0 0.0
      %7171 = vmatpush2.msra.mxu0 0.0
      %7172 = vmatprep.subr.mxu0 0.0
      %7173 = vmatpush2.msra.mxu0 0.0
      %7174 = vmatprep.subr.mxu0 0.0
      %7175 = vmatpush2.msra.mxu0 0.0
      %7176 = vmatprep.subr.mxu0 0.0
      %7177 = vmatpush2.msra.mxu0 0.0
      %7178 = vmatprep.subr.mxu0 0.0
      %7179 = vmatpush2.msra.mxu0 0.0
      %7180 = vmatprep.mubr.f32.mxu0 0.0
      %7181 = vmatmul.mubr.f32.gmra.mxu0 %v7060
      %v7182 = vpop.f32.mrf.mxu0
      %v7183 = vadd.f32 0.0, %v7182
      %v7184 = vpop.f32.mrf.mxu0
      %7185 = vmatprep.mubr.f32.mxu0 0.0
      %7186 = vmatmul.mubr.f32.gmra.mxu0 %v7063
      %v7187 = vpop.f32.mrf.mxu0
      %v7188 = vadd.f32 0.0, %v7187
      %v7189 = vpop.f32.mrf.mxu0
      %7190 = vmatprep.mubr.f32.mxu0 0.0
      %7191 = vmatmul.mubr.f32.gmra.mxu0 %v7066
      %v7192 = vpop.f32.mrf.mxu0
      %v7193 = vadd.f32 0.0, %v7192
      %v7194 = vpop.f32.mrf.mxu0
      %7195 = vmatprep.mubr.f32.mxu0 0.0
      %7196 = vmatmul.mubr.f32.gmra.mxu0 %v7069
      %v7197 = vpop.f32.mrf.mxu0
      %v7198 = vadd.f32 0.0, %v7197
      %v7199 = vpop.f32.mrf.mxu0
      %7200 = vmatprep.mubr.f32.mxu0 0.0
      %7201 = vmatmul.mubr.f32.gmra.mxu0 %v7072
      %v7202 = vpop.f32.mrf.mxu0
      %v7203 = vadd.f32 0.0, %v7202
      %v7204 = vpop.f32.mrf.mxu0
      %7205 = vmatprep.mubr.f32.mxu0 0.0
      %7206 = vmatmul.mubr.f32.gmra.mxu0 %v7075
      %v7207 = vpop.f32.mrf.mxu0
      %v7208 = vadd.f32 0.0, %v7207
      %v7209 = vpop.f32.mrf.mxu0
      %7210 = vmatprep.mubr.f32.mxu0 0.0
      %7211 = vmatmul.mubr.f32.gmra.mxu0 %v7078
      %v7212 = vpop.f32.mrf.mxu0
      %v7213 = vadd.f32 0.0, %v7212
      %v7214 = vpop.f32.mrf.mxu0
      %7215 = vmatprep.mubr.f32.mxu0 0.0
      %7216 = vmatmul.mubr.f32.gmra.mxu0 %v7081
      %v7217 = vpop.f32.mrf.mxu0
      %v7218 = vadd.f32 0.0, %v7217
      %v7219 = vpop.f32.mrf.mxu0
      %7220 = vmatprep.mubr.f32.mxu0 0.0
      %7221 = vmatmul.mubr.f32.gmra.mxu0 %v7084
      %v7222 = vpop.f32.mrf.mxu0
      %v7223 = vadd.f32 0.0, %v7222
      %v7224 = vpop.f32.mrf.mxu0
      %7225 = vmatprep.mubr.f32.mxu0 0.0
      %7226 = vmatmul.mubr.f32.gmra.mxu0 %v7087
      %v7227 = vpop.f32.mrf.mxu0
      %v7228 = vadd.f32 0.0, %v7227
      %v7229 = vpop.f32.mrf.mxu0
      %7230 = vmatprep.mubr.f32.mxu0 0.0
      %7231 = vmatmul.mubr.f32.gmra.mxu0 %v7090
      %v7232 = vpop.f32.mrf.mxu0
      %v7233 = vadd.f32 0.0, %v7232
      %v7234 = vpop.f32.mrf.mxu0
      %7235 = vmatprep.mubr.f32.mxu0 0.0
      %7236 = vmatmul.mubr.f32.gmra.mxu0 %v7093
      %v7237 = vpop.f32.mrf.mxu0
      %v7238 = vadd.f32 0.0, %v7237
      %v7239 = vpop.f32.mrf.mxu0
      %7240 = vmatprep.mubr.f32.mxu0 0.0
      %7241 = vmatmul.mubr.f32.gmra.mxu0 %v7096
      %v7242 = vpop.f32.mrf.mxu0
      %v7243 = vadd.f32 0.0, %v7242
      %v7244 = vpop.f32.mrf.mxu0
      %7245 = vmatprep.mubr.f32.mxu0 0.0
      %7246 = vmatmul.mubr.f32.gmra.mxu0 %v7099
      %v7247 = vpop.f32.mrf.mxu0
      %v7248 = vadd.f32 0.0, %v7247
      %v7249 = vpop.f32.mrf.mxu0
      %7250 = vmatprep.mubr.f32.mxu0 0.0
      %7251 = vmatmul.mubr.f32.gmra.mxu0 %v7102
      %v7252 = vpop.f32.mrf.mxu0
      %v7253 = vadd.f32 0.0, %v7252
      %v7254 = vpop.f32.mrf.mxu0
      %7255 = vmatprep.mubr.f32.mxu0 0.0
      %7256 = vmatmul.mubr.f32.gmra.mxu0 %v7105
      %v7257 = vpop.f32.mrf.mxu0
      %v7258 = vadd.f32 0.0, %v7257
      %v7259 = vpop.f32.mrf.mxu0
      %7260 = vmatprep.mubr.f32.mxu0 0.0
      %7261 = vmatmul.mubr.f32.gmra.mxu0 %v7108
      %v7262 = vpop.f32.mrf.mxu0
      %v7263 = vadd.f32 0.0, %v7262
      %v7264 = vpop.f32.mrf.mxu0
      %7265 = vmatprep.mubr.f32.mxu0 0.0
      %7266 = vmatmul.mubr.f32.gmra.mxu0 %v7111
      %v7267 = vpop.f32.mrf.mxu0
      %v7268 = vadd.f32 0.0, %v7267
      %v7269 = vpop.f32.mrf.mxu0
      %7270 = vdwg.mxu0
      %v7271 = vadd.f32 %v7015, %v7183
      %v7272 = vadd.f32 %v7016, %v7188
      %v7273 = vadd.f32 %v7017, %v7193
      %v7274 = vadd.f32 %v7018, %v7198
      %v7275 = vadd.f32 %v7019, %v7203
      %v7276 = vadd.f32 %v7020, %v7208
      %v7277 = vadd.f32 %v7021, %v7213
      %v7278 = vadd.f32 %v7022, %v7218
      %v7279 = vadd.f32 %v7023, %v7223
      %v7280 = vadd.f32 %v7024, %v7228
      %v7281 = vadd.f32 %v7025, %v7233
      %v7282 = vadd.f32 %v7026, %v7238
      %v7283 = vadd.f32 %v7027, %v7243
      %v7284 = vadd.f32 %v7028, %v7248
      %v7285 = vadd.f32 %v7029, %v7253
      %v7286 = vadd.f32 %v7030, %v7258
      %v7287 = vadd.f32 %v7031, %v7263
      %v7288 = vadd.f32 %v7032, %v7268
      %v7289 = vld [vmem:[#allocation3 + $0x8c] sm:$0xff]
      %v7290 = vld [vmem:[#allocation3 + $0x94] sm:$0xff]
      %v7291 = vld [vmem:[#allocation3 + $0x9c] sm:$0xff]
      %v7292 = vld [vmem:[#allocation3 + $0xa4] sm:$0xff]
      %v7293 = vld [vmem:[#allocation3 + $0xac] sm:$0xff]
      %v7294 = vld [vmem:[#allocation3 + $0xb4] sm:$0xff]
      %v7295 = vld [vmem:[#allocation3 + $0xbc] sm:$0xff]
      %v7296 = vld [vmem:[#allocation3 + $0xc4] sm:$0xff]
      %v7297 = vld [vmem:[#allocation3 + $0xcc] sm:$0xff]
      %v7298 = vld [vmem:[#allocation3 + $0xd4] sm:$0xff]
      %v7299 = vld [vmem:[#allocation3 + $0xdc] sm:$0xff]
      %v7300 = vld [vmem:[#allocation3 + $0xe4] sm:$0xff]
      %v7301 = vld [vmem:[#allocation3 + $0xec] sm:$0xff]
      %v7302 = vld [vmem:[#allocation3 + $0xf4] sm:$0xff]
      %v7303 = vld [vmem:[#allocation3 + $0xfc] sm:$0xff]
      %v7304 = vld [vmem:[#allocation3 + $0x104] sm:$0xff]
      %v7305 = vld [vmem:[#allocation3 + $0x10c] sm:$0xff]
      %v7306 = vld [vmem:[#allocation3 + $0x114] sm:$0xff]
      %s7307 = scalar_lea.vmem %s2, 280
      %v7308 = vld [vmem:[%s7307] sm:$0xff]
      %v7309 = vld [vmem:[%s7307 + $0x8] sm:$0xff]
      %v7310 = vld [vmem:[%s7307 + $0x10] sm:$0xff]
      %v7311 = vld [vmem:[%s7307 + $0x18] sm:$0xff]
      %v7312 = vld [vmem:[%s7307 + $0x20] sm:$0xff]
      %v7313 = vld [vmem:[%s7307 + $0x28] sm:$0xff]
      %v7314 = vld [vmem:[%s7307 + $0x30] sm:$0x3]
      %v7316 = vsel %vm522, %v7289, 0
      %v7319 = vsel %vm522, %v7290, 0
      %v7322 = vsel %vm522, %v7291, 0
      %v7325 = vsel %vm522, %v7292, 0
      %v7328 = vsel %vm522, %v7293, 0
      %v7331 = vsel %vm522, %v7294, 0
      %v7334 = vsel %vm522, %v7295, 0
      %v7337 = vsel %vm522, %v7296, 0
      %v7340 = vsel %vm522, %v7297, 0
      %v7343 = vsel %vm522, %v7298, 0
      %v7346 = vsel %vm522, %v7299, 0
      %v7349 = vsel %vm522, %v7300, 0
      %v7352 = vsel %vm522, %v7301, 0
      %v7355 = vsel %vm522, %v7302, 0
      %v7358 = vsel %vm522, %v7303, 0
      %v7361 = vsel %vm522, %v7304, 0
      %v7364 = vsel %vm522, %v7305, 0
      %v7367 = vsel %vm522, %v7306, 0
      %v7370 = vsel %vm6150, %v7314, 0
      %7372 = vmatprep.subr.mxu0 0.0
      %7373 = vmatpush1.msra.mxu0 0.0
      %7374 = vmatprep.subr.mxu0 0.0
      %7375 = vmatpush1.msra.mxu0 0.0
      %7376 = vmatprep.subr.mxu0 0.0
      %7377 = vmatpush1.msra.mxu0 0.0
      %7378 = vmatprep.subr.mxu0 0.0
      %7379 = vmatpush1.msra.mxu0 0.0
      %7380 = vmatprep.subr.mxu0 0.0
      %7381 = vmatpush1.msra.mxu0 0.0
      %7382 = vmatprep.subr.mxu0 0.0
      %7383 = vmatpush1.msra.mxu0 0.0
      %7384 = vmatprep.subr.mxu0 0.0
      %7385 = vmatpush1.msra.mxu0 0.0
      %7386 = vmatprep.subr.mxu0 0.0
      %7387 = vmatpush1.msra.mxu0 0.0
      %7388 = vmatprep.subr.mxu0 0.0
      %7389 = vmatpush1.msra.mxu0 0.0
      %7390 = vmatprep.subr.mxu0 0.0
      %7391 = vmatpush1.msra.mxu0 %v7370
      %7392 = vmatprep.subr.mxu0 0.0
      %7393 = vmatpush1.msra.mxu0 %v7313
      %7394 = vmatprep.subr.mxu0 0.0
      %7395 = vmatpush1.msra.mxu0 %v7312
      %7396 = vmatprep.subr.mxu0 0.0
      %7397 = vmatpush1.msra.mxu0 %v7311
      %7398 = vmatprep.subr.mxu0 0.0
      %7399 = vmatpush1.msra.mxu0 %v7310
      %7400 = vmatprep.subr.mxu0 0.0
      %7401 = vmatpush1.msra.mxu0 %v7309
      %7402 = vmatprep.subr.mxu0 0.0
      %7403 = vmatpush1.msra.mxu0 %v7308
      %7404 = vmatprep.subr.mxu0 0.0
      %7405 = vmatpush2.msra.mxu0 0.0
      %7406 = vmatprep.subr.mxu0 0.0
      %7407 = vmatpush2.msra.mxu0 0.0
      %7408 = vmatprep.subr.mxu0 0.0
      %7409 = vmatpush2.msra.mxu0 0.0
      %7410 = vmatprep.subr.mxu0 0.0
      %7411 = vmatpush2.msra.mxu0 0.0
      %7412 = vmatprep.subr.mxu0 0.0
      %7413 = vmatpush2.msra.mxu0 0.0
      %7414 = vmatprep.subr.mxu0 0.0
      %7415 = vmatpush2.msra.mxu0 0.0
      %7416 = vmatprep.subr.mxu0 0.0
      %7417 = vmatpush2.msra.mxu0 0.0
      %7418 = vmatprep.subr.mxu0 0.0
      %7419 = vmatpush2.msra.mxu0 0.0
      %7420 = vmatprep.subr.mxu0 0.0
      %7421 = vmatpush2.msra.mxu0 0.0
      %7422 = vmatprep.subr.mxu0 0.0
      %7423 = vmatpush2.msra.mxu0 0.0
      %7424 = vmatprep.subr.mxu0 0.0
      %7425 = vmatpush2.msra.mxu0 0.0
      %7426 = vmatprep.subr.mxu0 0.0
      %7427 = vmatpush2.msra.mxu0 0.0
      %7428 = vmatprep.subr.mxu0 0.0
      %7429 = vmatpush2.msra.mxu0 0.0
      %7430 = vmatprep.subr.mxu0 0.0
      %7431 = vmatpush2.msra.mxu0 0.0
      %7432 = vmatprep.subr.mxu0 0.0
      %7433 = vmatpush2.msra.mxu0 0.0
      %7434 = vmatprep.subr.mxu0 0.0
      %7435 = vmatpush2.msra.mxu0 0.0
      %7436 = vmatprep.mubr.f32.mxu0 0.0
      %7437 = vmatmul.mubr.f32.gmra.mxu0 %v7316
      %v7438 = vpop.f32.mrf.mxu0
      %v7439 = vadd.f32 0.0, %v7438
      %v7440 = vpop.f32.mrf.mxu0
      %7441 = vmatprep.mubr.f32.mxu0 0.0
      %7442 = vmatmul.mubr.f32.gmra.mxu0 %v7319
      %v7443 = vpop.f32.mrf.mxu0
      %v7444 = vadd.f32 0.0, %v7443
      %v7445 = vpop.f32.mrf.mxu0
      %7446 = vmatprep.mubr.f32.mxu0 0.0
      %7447 = vmatmul.mubr.f32.gmra.mxu0 %v7322
      %v7448 = vpop.f32.mrf.mxu0
      %v7449 = vadd.f32 0.0, %v7448
      %v7450 = vpop.f32.mrf.mxu0
      %7451 = vmatprep.mubr.f32.mxu0 0.0
      %7452 = vmatmul.mubr.f32.gmra.mxu0 %v7325
      %v7453 = vpop.f32.mrf.mxu0
      %v7454 = vadd.f32 0.0, %v7453
      %v7455 = vpop.f32.mrf.mxu0
      %7456 = vmatprep.mubr.f32.mxu0 0.0
      %7457 = vmatmul.mubr.f32.gmra.mxu0 %v7328
      %v7458 = vpop.f32.mrf.mxu0
      %v7459 = vadd.f32 0.0, %v7458
      %v7460 = vpop.f32.mrf.mxu0
      %7461 = vmatprep.mubr.f32.mxu0 0.0
      %7462 = vmatmul.mubr.f32.gmra.mxu0 %v7331
      %v7463 = vpop.f32.mrf.mxu0
      %v7464 = vadd.f32 0.0, %v7463
      %v7465 = vpop.f32.mrf.mxu0
      %7466 = vmatprep.mubr.f32.mxu0 0.0
      %7467 = vmatmul.mubr.f32.gmra.mxu0 %v7334
      %v7468 = vpop.f32.mrf.mxu0
      %v7469 = vadd.f32 0.0, %v7468
      %v7470 = vpop.f32.mrf.mxu0
      %7471 = vmatprep.mubr.f32.mxu0 0.0
      %7472 = vmatmul.mubr.f32.gmra.mxu0 %v7337
      %v7473 = vpop.f32.mrf.mxu0
      %v7474 = vadd.f32 0.0, %v7473
      %v7475 = vpop.f32.mrf.mxu0
      %7476 = vmatprep.mubr.f32.mxu0 0.0
      %7477 = vmatmul.mubr.f32.gmra.mxu0 %v7340
      %v7478 = vpop.f32.mrf.mxu0
      %v7479 = vadd.f32 0.0, %v7478
      %v7480 = vpop.f32.mrf.mxu0
      %7481 = vmatprep.mubr.f32.mxu0 0.0
      %7482 = vmatmul.mubr.f32.gmra.mxu0 %v7343
      %v7483 = vpop.f32.mrf.mxu0
      %v7484 = vadd.f32 0.0, %v7483
      %v7485 = vpop.f32.mrf.mxu0
      %7486 = vmatprep.mubr.f32.mxu0 0.0
      %7487 = vmatmul.mubr.f32.gmra.mxu0 %v7346
      %v7488 = vpop.f32.mrf.mxu0
      %v7489 = vadd.f32 0.0, %v7488
      %v7490 = vpop.f32.mrf.mxu0
      %7491 = vmatprep.mubr.f32.mxu0 0.0
      %7492 = vmatmul.mubr.f32.gmra.mxu0 %v7349
      %v7493 = vpop.f32.mrf.mxu0
      %v7494 = vadd.f32 0.0, %v7493
      %v7495 = vpop.f32.mrf.mxu0
      %7496 = vmatprep.mubr.f32.mxu0 0.0
      %7497 = vmatmul.mubr.f32.gmra.mxu0 %v7352
      %v7498 = vpop.f32.mrf.mxu0
      %v7499 = vadd.f32 0.0, %v7498
      %v7500 = vpop.f32.mrf.mxu0
      %7501 = vmatprep.mubr.f32.mxu0 0.0
      %7502 = vmatmul.mubr.f32.gmra.mxu0 %v7355
      %v7503 = vpop.f32.mrf.mxu0
      %v7504 = vadd.f32 0.0, %v7503
      %v7505 = vpop.f32.mrf.mxu0
      %7506 = vmatprep.mubr.f32.mxu0 0.0
      %7507 = vmatmul.mubr.f32.gmra.mxu0 %v7358
      %v7508 = vpop.f32.mrf.mxu0
      %v7509 = vadd.f32 0.0, %v7508
      %v7510 = vpop.f32.mrf.mxu0
      %7511 = vmatprep.mubr.f32.mxu0 0.0
      %7512 = vmatmul.mubr.f32.gmra.mxu0 %v7361
      %v7513 = vpop.f32.mrf.mxu0
      %v7514 = vadd.f32 0.0, %v7513
      %v7515 = vpop.f32.mrf.mxu0
      %7516 = vmatprep.mubr.f32.mxu0 0.0
      %7517 = vmatmul.mubr.f32.gmra.mxu0 %v7364
      %v7518 = vpop.f32.mrf.mxu0
      %v7519 = vadd.f32 0.0, %v7518
      %v7520 = vpop.f32.mrf.mxu0
      %7521 = vmatprep.mubr.f32.mxu0 0.0
      %7522 = vmatmul.mubr.f32.gmra.mxu0 %v7367
      %v7523 = vpop.f32.mrf.mxu0
      %v7524 = vadd.f32 0.0, %v7523
      %v7525 = vpop.f32.mrf.mxu0
      %7526 = vdwg.mxu0
      %v7527 = vadd.f32 %v7271, %v7439
      %v7528 = vadd.f32 %v7272, %v7444
      %v7529 = vadd.f32 %v7273, %v7449
      %v7530 = vadd.f32 %v7274, %v7454
      %v7531 = vadd.f32 %v7275, %v7459
      %v7532 = vadd.f32 %v7276, %v7464
      %v7533 = vadd.f32 %v7277, %v7469
      %v7534 = vadd.f32 %v7278, %v7474
      %v7535 = vadd.f32 %v7279, %v7479
      %v7536 = vadd.f32 %v7280, %v7484
      %v7537 = vadd.f32 %v7281, %v7489
      %v7538 = vadd.f32 %v7282, %v7494
      %v7539 = vadd.f32 %v7283, %v7499
      %v7540 = vadd.f32 %v7284, %v7504
      %v7541 = vadd.f32 %v7285, %v7509
      %v7542 = vadd.f32 %v7286, %v7514
      %v7543 = vadd.f32 %v7287, %v7519
      %v7544 = vadd.f32 %v7288, %v7524
      %v7545 = vld [vmem:[#allocation3 + $0x114] sm:$0xff]
      %v7546 = vld [vmem:[#allocation3 + $0x11c] sm:$0xff]
      %v7547 = vld [vmem:[#allocation3 + $0x124] sm:$0xff]
      %v7548 = vld [vmem:[#allocation3 + $0x12c] sm:$0xff]
      %v7549 = vld [vmem:[#allocation3 + $0x134] sm:$0xff]
      %v7550 = vld [vmem:[#allocation3 + $0x13c] sm:$0xff]
      %v7551 = vld [vmem:[#allocation3 + $0x144] sm:$0xff]
      %v7552 = vld [vmem:[#allocation3 + $0x14c] sm:$0xff]
      %v7553 = vld [vmem:[#allocation3 + $0x154] sm:$0xff]
      %v7554 = vld [vmem:[#allocation3 + $0x15c] sm:$0xff]
      %v7555 = vld [vmem:[#allocation3 + $0x164] sm:$0xff]
      %v7556 = vld [vmem:[#allocation3 + $0x16c] sm:$0xff]
      %v7557 = vld [vmem:[#allocation3 + $0x174] sm:$0xff]
      %v7558 = vld [vmem:[#allocation3 + $0x17c] sm:$0xff]
      %v7559 = vld [vmem:[#allocation3 + $0x184] sm:$0xff]
      %v7560 = vld [vmem:[#allocation3 + $0x18c] sm:$0xff]
      %v7561 = vld [vmem:[#allocation3 + $0x194] sm:$0xff]
      %v7562 = vld [vmem:[#allocation3 + $0x19c] sm:$0xff]
      %s7563 = scalar_lea.vmem %s2, 336
      %v7564 = vld [vmem:[%s7563] sm:$0xff]
      %v7565 = vld [vmem:[%s7563 + $0x8] sm:$0xff]
      %v7566 = vld [vmem:[%s7563 + $0x10] sm:$0xff]
      %v7567 = vld [vmem:[%s7563 + $0x18] sm:$0xff]
      %v7568 = vld [vmem:[%s7563 + $0x20] sm:$0xff]
      %v7569 = vld [vmem:[%s7563 + $0x28] sm:$0xff]
      %v7570 = vld [vmem:[%s7563 + $0x30] sm:$0x3]
      %v7572 = vsel %vm522, %v7545, 0
      %v7575 = vsel %vm522, %v7546, 0
      %v7578 = vsel %vm522, %v7547, 0
      %v7581 = vsel %vm522, %v7548, 0
      %v7584 = vsel %vm522, %v7549, 0
      %v7587 = vsel %vm522, %v7550, 0
      %v7590 = vsel %vm522, %v7551, 0
      %v7593 = vsel %vm522, %v7552, 0
      %v7596 = vsel %vm522, %v7553, 0
      %v7599 = vsel %vm522, %v7554, 0
      %v7602 = vsel %vm522, %v7555, 0
      %v7605 = vsel %vm522, %v7556, 0
      %v7608 = vsel %vm522, %v7557, 0
      %v7611 = vsel %vm522, %v7558, 0
      %v7614 = vsel %vm522, %v7559, 0
      %v7617 = vsel %vm522, %v7560, 0
      %v7620 = vsel %vm522, %v7561, 0
      %v7623 = vsel %vm522, %v7562, 0
      %v7626 = vsel %vm6150, %v7570, 0
      %7628 = vmatprep.subr.mxu0 0.0
      %7629 = vmatpush1.msra.mxu0 0.0
      %7630 = vmatprep.subr.mxu0 0.0
      %7631 = vmatpush1.msra.mxu0 0.0
      %7632 = vmatprep.subr.mxu0 0.0
      %7633 = vmatpush1.msra.mxu0 0.0
      %7634 = vmatprep.subr.mxu0 0.0
      %7635 = vmatpush1.msra.mxu0 0.0
      %7636 = vmatprep.subr.mxu0 0.0
      %7637 = vmatpush1.msra.mxu0 0.0
      %7638 = vmatprep.subr.mxu0 0.0
      %7639 = vmatpush1.msra.mxu0 0.0
      %7640 = vmatprep.subr.mxu0 0.0
      %7641 = vmatpush1.msra.mxu0 0.0
      %7642 = vmatprep.subr.mxu0 0.0
      %7643 = vmatpush1.msra.mxu0 0.0
      %7644 = vmatprep.subr.mxu0 0.0
      %7645 = vmatpush1.msra.mxu0 0.0
      %7646 = vmatprep.subr.mxu0 0.0
      %7647 = vmatpush1.msra.mxu0 %v7626
      %7648 = vmatprep.subr.mxu0 0.0
      %7649 = vmatpush1.msra.mxu0 %v7569
      %7650 = vmatprep.subr.mxu0 0.0
      %7651 = vmatpush1.msra.mxu0 %v7568
      %7652 = vmatprep.subr.mxu0 0.0
      %7653 = vmatpush1.msra.mxu0 %v7567
      %7654 = vmatprep.subr.mxu0 0.0
      %7655 = vmatpush1.msra.mxu0 %v7566
      %7656 = vmatprep.subr.mxu0 0.0
      %7657 = vmatpush1.msra.mxu0 %v7565
      %7658 = vmatprep.subr.mxu0 0.0
      %7659 = vmatpush1.msra.mxu0 %v7564
      %7660 = vmatprep.subr.mxu0 0.0
      %7661 = vmatpush2.msra.mxu0 0.0
      %7662 = vmatprep.subr.mxu0 0.0
      %7663 = vmatpush2.msra.mxu0 0.0
      %7664 = vmatprep.subr.mxu0 0.0
      %7665 = vmatpush2.msra.mxu0 0.0
      %7666 = vmatprep.subr.mxu0 0.0
      %7667 = vmatpush2.msra.mxu0 0.0
      %7668 = vmatprep.subr.mxu0 0.0
      %7669 = vmatpush2.msra.mxu0 0.0
      %7670 = vmatprep.subr.mxu0 0.0
      %7671 = vmatpush2.msra.mxu0 0.0
      %7672 = vmatprep.subr.mxu0 0.0
      %7673 = vmatpush2.msra.mxu0 0.0
      %7674 = vmatprep.subr.mxu0 0.0
      %7675 = vmatpush2.msra.mxu0 0.0
      %7676 = vmatprep.subr.mxu0 0.0
      %7677 = vmatpush2.msra.mxu0 0.0
      %7678 = vmatprep.subr.mxu0 0.0
      %7679 = vmatpush2.msra.mxu0 0.0
      %7680 = vmatprep.subr.mxu0 0.0
      %7681 = vmatpush2.msra.mxu0 0.0
      %7682 = vmatprep.subr.mxu0 0.0
      %7683 = vmatpush2.msra.mxu0 0.0
      %7684 = vmatprep.subr.mxu0 0.0
      %7685 = vmatpush2.msra.mxu0 0.0
      %7686 = vmatprep.subr.mxu0 0.0
      %7687 = vmatpush2.msra.mxu0 0.0
      %7688 = vmatprep.subr.mxu0 0.0
      %7689 = vmatpush2.msra.mxu0 0.0
      %7690 = vmatprep.subr.mxu0 0.0
      %7691 = vmatpush2.msra.mxu0 0.0
      %7692 = vmatprep.mubr.f32.mxu0 0.0
      %7693 = vmatmul.mubr.f32.gmra.mxu0 %v7572
      %v7694 = vpop.f32.mrf.mxu0
      %v7695 = vadd.f32 0.0, %v7694
      %v7696 = vpop.f32.mrf.mxu0
      %7697 = vmatprep.mubr.f32.mxu0 0.0
      %7698 = vmatmul.mubr.f32.gmra.mxu0 %v7575
      %v7699 = vpop.f32.mrf.mxu0
      %v7700 = vadd.f32 0.0, %v7699
      %v7701 = vpop.f32.mrf.mxu0
      %7702 = vmatprep.mubr.f32.mxu0 0.0
      %7703 = vmatmul.mubr.f32.gmra.mxu0 %v7578
      %v7704 = vpop.f32.mrf.mxu0
      %v7705 = vadd.f32 0.0, %v7704
      %v7706 = vpop.f32.mrf.mxu0
      %7707 = vmatprep.mubr.f32.mxu0 0.0
      %7708 = vmatmul.mubr.f32.gmra.mxu0 %v7581
      %v7709 = vpop.f32.mrf.mxu0
      %v7710 = vadd.f32 0.0, %v7709
      %v7711 = vpop.f32.mrf.mxu0
      %7712 = vmatprep.mubr.f32.mxu0 0.0
      %7713 = vmatmul.mubr.f32.gmra.mxu0 %v7584
      %v7714 = vpop.f32.mrf.mxu0
      %v7715 = vadd.f32 0.0, %v7714
      %v7716 = vpop.f32.mrf.mxu0
      %7717 = vmatprep.mubr.f32.mxu0 0.0
      %7718 = vmatmul.mubr.f32.gmra.mxu0 %v7587
      %v7719 = vpop.f32.mrf.mxu0
      %v7720 = vadd.f32 0.0, %v7719
      %v7721 = vpop.f32.mrf.mxu0
      %7722 = vmatprep.mubr.f32.mxu0 0.0
      %7723 = vmatmul.mubr.f32.gmra.mxu0 %v7590
      %v7724 = vpop.f32.mrf.mxu0
      %v7725 = vadd.f32 0.0, %v7724
      %v7726 = vpop.f32.mrf.mxu0
      %7727 = vmatprep.mubr.f32.mxu0 0.0
      %7728 = vmatmul.mubr.f32.gmra.mxu0 %v7593
      %v7729 = vpop.f32.mrf.mxu0
      %v7730 = vadd.f32 0.0, %v7729
      %v7731 = vpop.f32.mrf.mxu0
      %7732 = vmatprep.mubr.f32.mxu0 0.0
      %7733 = vmatmul.mubr.f32.gmra.mxu0 %v7596
      %v7734 = vpop.f32.mrf.mxu0
      %v7735 = vadd.f32 0.0, %v7734
      %v7736 = vpop.f32.mrf.mxu0
      %7737 = vmatprep.mubr.f32.mxu0 0.0
      %7738 = vmatmul.mubr.f32.gmra.mxu0 %v7599
      %v7739 = vpop.f32.mrf.mxu0
      %v7740 = vadd.f32 0.0, %v7739
      %v7741 = vpop.f32.mrf.mxu0
      %7742 = vmatprep.mubr.f32.mxu0 0.0
      %7743 = vmatmul.mubr.f32.gmra.mxu0 %v7602
      %v7744 = vpop.f32.mrf.mxu0
      %v7745 = vadd.f32 0.0, %v7744
      %v7746 = vpop.f32.mrf.mxu0
      %7747 = vmatprep.mubr.f32.mxu0 0.0
      %7748 = vmatmul.mubr.f32.gmra.mxu0 %v7605
      %v7749 = vpop.f32.mrf.mxu0
      %v7750 = vadd.f32 0.0, %v7749
      %v7751 = vpop.f32.mrf.mxu0
      %7752 = vmatprep.mubr.f32.mxu0 0.0
      %7753 = vmatmul.mubr.f32.gmra.mxu0 %v7608
      %v7754 = vpop.f32.mrf.mxu0
      %v7755 = vadd.f32 0.0, %v7754
      %v7756 = vpop.f32.mrf.mxu0
      %7757 = vmatprep.mubr.f32.mxu0 0.0
      %7758 = vmatmul.mubr.f32.gmra.mxu0 %v7611
      %v7759 = vpop.f32.mrf.mxu0
      %v7760 = vadd.f32 0.0, %v7759
      %v7761 = vpop.f32.mrf.mxu0
      %7762 = vmatprep.mubr.f32.mxu0 0.0
      %7763 = vmatmul.mubr.f32.gmra.mxu0 %v7614
      %v7764 = vpop.f32.mrf.mxu0
      %v7765 = vadd.f32 0.0, %v7764
      %v7766 = vpop.f32.mrf.mxu0
      %7767 = vmatprep.mubr.f32.mxu0 0.0
      %7768 = vmatmul.mubr.f32.gmra.mxu0 %v7617
      %v7769 = vpop.f32.mrf.mxu0
      %v7770 = vadd.f32 0.0, %v7769
      %v7771 = vpop.f32.mrf.mxu0
      %7772 = vmatprep.mubr.f32.mxu0 0.0
      %7773 = vmatmul.mubr.f32.gmra.mxu0 %v7620
      %v7774 = vpop.f32.mrf.mxu0
      %v7775 = vadd.f32 0.0, %v7774
      %v7776 = vpop.f32.mrf.mxu0
      %7777 = vmatprep.mubr.f32.mxu0 0.0
      %7778 = vmatmul.mubr.f32.gmra.mxu0 %v7623
      %v7779 = vpop.f32.mrf.mxu0
      %v7780 = vadd.f32 0.0, %v7779
      %v7781 = vpop.f32.mrf.mxu0
      %7782 = vdwg.mxu0
      %v7783 = vadd.f32 %v7527, %v7695
      %v7784 = vadd.f32 %v7528, %v7700
      %v7785 = vadd.f32 %v7529, %v7705
      %v7786 = vadd.f32 %v7530, %v7710
      %v7787 = vadd.f32 %v7531, %v7715
      %v7788 = vadd.f32 %v7532, %v7720
      %v7789 = vadd.f32 %v7533, %v7725
      %v7790 = vadd.f32 %v7534, %v7730
      %v7791 = vadd.f32 %v7535, %v7735
      %v7792 = vadd.f32 %v7536, %v7740
      %v7793 = vadd.f32 %v7537, %v7745
      %v7794 = vadd.f32 %v7538, %v7750
      %v7795 = vadd.f32 %v7539, %v7755
      %v7796 = vadd.f32 %v7540, %v7760
      %v7797 = vadd.f32 %v7541, %v7765
      %v7798 = vadd.f32 %v7542, %v7770
      %v7799 = vadd.f32 %v7543, %v7775
      %v7800 = vadd.f32 %v7544, %v7780
      %v7801 = vld [vmem:[#allocation3 + $0x115] sm:$0xff]
      %v7802 = vld [vmem:[#allocation3 + $0x11d] sm:$0xff]
      %v7803 = vld [vmem:[#allocation3 + $0x125] sm:$0xff]
      %v7804 = vld [vmem:[#allocation3 + $0x12d] sm:$0xff]
      %v7805 = vld [vmem:[#allocation3 + $0x135] sm:$0xff]
      %v7806 = vld [vmem:[#allocation3 + $0x13d] sm:$0xff]
      %v7807 = vld [vmem:[#allocation3 + $0x145] sm:$0xff]
      %v7808 = vld [vmem:[#allocation3 + $0x14d] sm:$0xff]
      %v7809 = vld [vmem:[#allocation3 + $0x155] sm:$0xff]
      %v7810 = vld [vmem:[#allocation3 + $0x15d] sm:$0xff]
      %v7811 = vld [vmem:[#allocation3 + $0x165] sm:$0xff]
      %v7812 = vld [vmem:[#allocation3 + $0x16d] sm:$0xff]
      %v7813 = vld [vmem:[#allocation3 + $0x175] sm:$0xff]
      %v7814 = vld [vmem:[#allocation3 + $0x17d] sm:$0xff]
      %v7815 = vld [vmem:[#allocation3 + $0x185] sm:$0xff]
      %v7816 = vld [vmem:[#allocation3 + $0x18d] sm:$0xff]
      %v7817 = vld [vmem:[#allocation3 + $0x195] sm:$0xff]
      %v7818 = vld [vmem:[#allocation3 + $0x19d] sm:$0xff]
      %s7819 = scalar_lea.vmem %s2, 392
      %v7820 = vld [vmem:[%s7819] sm:$0xff]
      %v7821 = vld [vmem:[%s7819 + $0x8] sm:$0xff]
      %v7822 = vld [vmem:[%s7819 + $0x10] sm:$0xff]
      %v7823 = vld [vmem:[%s7819 + $0x18] sm:$0xff]
      %v7824 = vld [vmem:[%s7819 + $0x20] sm:$0xff]
      %v7825 = vld [vmem:[%s7819 + $0x28] sm:$0xff]
      %v7826 = vld [vmem:[%s7819 + $0x30] sm:$0x3]
      %v7828 = vsel %vm522, %v7801, 0
      %v7831 = vsel %vm522, %v7802, 0
      %v7834 = vsel %vm522, %v7803, 0
      %v7837 = vsel %vm522, %v7804, 0
      %v7840 = vsel %vm522, %v7805, 0
      %v7843 = vsel %vm522, %v7806, 0
      %v7846 = vsel %vm522, %v7807, 0
      %v7849 = vsel %vm522, %v7808, 0
      %v7852 = vsel %vm522, %v7809, 0
      %v7855 = vsel %vm522, %v7810, 0
      %v7858 = vsel %vm522, %v7811, 0
      %v7861 = vsel %vm522, %v7812, 0
      %v7864 = vsel %vm522, %v7813, 0
      %v7867 = vsel %vm522, %v7814, 0
      %v7870 = vsel %vm522, %v7815, 0
      %v7873 = vsel %vm522, %v7816, 0
      %v7876 = vsel %vm522, %v7817, 0
      %v7879 = vsel %vm522, %v7818, 0
      %v7882 = vsel %vm6150, %v7826, 0
      %7884 = vmatprep.subr.mxu0 0.0
      %7885 = vmatpush1.msra.mxu0 0.0
      %7886 = vmatprep.subr.mxu0 0.0
      %7887 = vmatpush1.msra.mxu0 0.0
      %7888 = vmatprep.subr.mxu0 0.0
      %7889 = vmatpush1.msra.mxu0 0.0
      %7890 = vmatprep.subr.mxu0 0.0
      %7891 = vmatpush1.msra.mxu0 0.0
      %7892 = vmatprep.subr.mxu0 0.0
      %7893 = vmatpush1.msra.mxu0 0.0
      %7894 = vmatprep.subr.mxu0 0.0
      %7895 = vmatpush1.msra.mxu0 0.0
      %7896 = vmatprep.subr.mxu0 0.0
      %7897 = vmatpush1.msra.mxu0 0.0
      %7898 = vmatprep.subr.mxu0 0.0
      %7899 = vmatpush1.msra.mxu0 0.0
      %7900 = vmatprep.subr.mxu0 0.0
      %7901 = vmatpush1.msra.mxu0 0.0
      %7902 = vmatprep.subr.mxu0 0.0
      %7903 = vmatpush1.msra.mxu0 %v7882
      %7904 = vmatprep.subr.mxu0 0.0
      %7905 = vmatpush1.msra.mxu0 %v7825
      %7906 = vmatprep.subr.mxu0 0.0
      %7907 = vmatpush1.msra.mxu0 %v7824
      %7908 = vmatprep.subr.mxu0 0.0
      %7909 = vmatpush1.msra.mxu0 %v7823
      %7910 = vmatprep.subr.mxu0 0.0
      %7911 = vmatpush1.msra.mxu0 %v7822
      %7912 = vmatprep.subr.mxu0 0.0
      %7913 = vmatpush1.msra.mxu0 %v7821
      %7914 = vmatprep.subr.mxu0 0.0
      %7915 = vmatpush1.msra.mxu0 %v7820
      %7916 = vmatprep.subr.mxu0 0.0
      %7917 = vmatpush2.msra.mxu0 0.0
      %7918 = vmatprep.subr.mxu0 0.0
      %7919 = vmatpush2.msra.mxu0 0.0
      %7920 = vmatprep.subr.mxu0 0.0
      %7921 = vmatpush2.msra.mxu0 0.0
      %7922 = vmatprep.subr.mxu0 0.0
      %7923 = vmatpush2.msra.mxu0 0.0
      %7924 = vmatprep.subr.mxu0 0.0
      %7925 = vmatpush2.msra.mxu0 0.0
      %7926 = vmatprep.subr.mxu0 0.0
      %7927 = vmatpush2.msra.mxu0 0.0
      %7928 = vmatprep.subr.mxu0 0.0
      %7929 = vmatpush2.msra.mxu0 0.0
      %7930 = vmatprep.subr.mxu0 0.0
      %7931 = vmatpush2.msra.mxu0 0.0
      %7932 = vmatprep.subr.mxu0 0.0
      %7933 = vmatpush2.msra.mxu0 0.0
      %7934 = vmatprep.subr.mxu0 0.0
      %7935 = vmatpush2.msra.mxu0 0.0
      %7936 = vmatprep.subr.mxu0 0.0
      %7937 = vmatpush2.msra.mxu0 0.0
      %7938 = vmatprep.subr.mxu0 0.0
      %7939 = vmatpush2.msra.mxu0 0.0
      %7940 = vmatprep.subr.mxu0 0.0
      %7941 = vmatpush2.msra.mxu0 0.0
      %7942 = vmatprep.subr.mxu0 0.0
      %7943 = vmatpush2.msra.mxu0 0.0
      %7944 = vmatprep.subr.mxu0 0.0
      %7945 = vmatpush2.msra.mxu0 0.0
      %7946 = vmatprep.subr.mxu0 0.0
      %7947 = vmatpush2.msra.mxu0 0.0
      %7948 = vmatprep.mubr.f32.mxu0 0.0
      %7949 = vmatmul.mubr.f32.gmra.mxu0 %v7828
      %v7950 = vpop.f32.mrf.mxu0
      %v7951 = vadd.f32 0.0, %v7950
      %v7952 = vpop.f32.mrf.mxu0
      %7953 = vmatprep.mubr.f32.mxu0 0.0
      %7954 = vmatmul.mubr.f32.gmra.mxu0 %v7831
      %v7955 = vpop.f32.mrf.mxu0
      %v7956 = vadd.f32 0.0, %v7955
      %v7957 = vpop.f32.mrf.mxu0
      %7958 = vmatprep.mubr.f32.mxu0 0.0
      %7959 = vmatmul.mubr.f32.gmra.mxu0 %v7834
      %v7960 = vpop.f32.mrf.mxu0
      %v7961 = vadd.f32 0.0, %v7960
      %v7962 = vpop.f32.mrf.mxu0
      %7963 = vmatprep.mubr.f32.mxu0 0.0
      %7964 = vmatmul.mubr.f32.gmra.mxu0 %v7837
      %v7965 = vpop.f32.mrf.mxu0
      %v7966 = vadd.f32 0.0, %v7965
      %v7967 = vpop.f32.mrf.mxu0
      %7968 = vmatprep.mubr.f32.mxu0 0.0
      %7969 = vmatmul.mubr.f32.gmra.mxu0 %v7840
      %v7970 = vpop.f32.mrf.mxu0
      %v7971 = vadd.f32 0.0, %v7970
      %v7972 = vpop.f32.mrf.mxu0
      %7973 = vmatprep.mubr.f32.mxu0 0.0
      %7974 = vmatmul.mubr.f32.gmra.mxu0 %v7843
      %v7975 = vpop.f32.mrf.mxu0
      %v7976 = vadd.f32 0.0, %v7975
      %v7977 = vpop.f32.mrf.mxu0
      %7978 = vmatprep.mubr.f32.mxu0 0.0
      %7979 = vmatmul.mubr.f32.gmra.mxu0 %v7846
      %v7980 = vpop.f32.mrf.mxu0
      %v7981 = vadd.f32 0.0, %v7980
      %v7982 = vpop.f32.mrf.mxu0
      %7983 = vmatprep.mubr.f32.mxu0 0.0
      %7984 = vmatmul.mubr.f32.gmra.mxu0 %v7849
      %v7985 = vpop.f32.mrf.mxu0
      %v7986 = vadd.f32 0.0, %v7985
      %v7987 = vpop.f32.mrf.mxu0
      %7988 = vmatprep.mubr.f32.mxu0 0.0
      %7989 = vmatmul.mubr.f32.gmra.mxu0 %v7852
      %v7990 = vpop.f32.mrf.mxu0
      %v7991 = vadd.f32 0.0, %v7990
      %v7992 = vpop.f32.mrf.mxu0
      %7993 = vmatprep.mubr.f32.mxu0 0.0
      %7994 = vmatmul.mubr.f32.gmra.mxu0 %v7855
      %v7995 = vpop.f32.mrf.mxu0
      %v7996 = vadd.f32 0.0, %v7995
      %v7997 = vpop.f32.mrf.mxu0
      %7998 = vmatprep.mubr.f32.mxu0 0.0
      %7999 = vmatmul.mubr.f32.gmra.mxu0 %v7858
      %v8000 = vpop.f32.mrf.mxu0
      %v8001 = vadd.f32 0.0, %v8000
      %v8002 = vpop.f32.mrf.mxu0
      %8003 = vmatprep.mubr.f32.mxu0 0.0
      %8004 = vmatmul.mubr.f32.gmra.mxu0 %v7861
      %v8005 = vpop.f32.mrf.mxu0
      %v8006 = vadd.f32 0.0, %v8005
      %v8007 = vpop.f32.mrf.mxu0
      %8008 = vmatprep.mubr.f32.mxu0 0.0
      %8009 = vmatmul.mubr.f32.gmra.mxu0 %v7864
      %v8010 = vpop.f32.mrf.mxu0
      %v8011 = vadd.f32 0.0, %v8010
      %v8012 = vpop.f32.mrf.mxu0
      %8013 = vmatprep.mubr.f32.mxu0 0.0
      %8014 = vmatmul.mubr.f32.gmra.mxu0 %v7867
      %v8015 = vpop.f32.mrf.mxu0
      %v8016 = vadd.f32 0.0, %v8015
      %v8017 = vpop.f32.mrf.mxu0
      %8018 = vmatprep.mubr.f32.mxu0 0.0
      %8019 = vmatmul.mubr.f32.gmra.mxu0 %v7870
      %v8020 = vpop.f32.mrf.mxu0
      %v8021 = vadd.f32 0.0, %v8020
      %v8022 = vpop.f32.mrf.mxu0
      %8023 = vmatprep.mubr.f32.mxu0 0.0
      %8024 = vmatmul.mubr.f32.gmra.mxu0 %v7873
      %v8025 = vpop.f32.mrf.mxu0
      %v8026 = vadd.f32 0.0, %v8025
      %v8027 = vpop.f32.mrf.mxu0
      %8028 = vmatprep.mubr.f32.mxu0 0.0
      %8029 = vmatmul.mubr.f32.gmra.mxu0 %v7876
      %v8030 = vpop.f32.mrf.mxu0
      %v8031 = vadd.f32 0.0, %v8030
      %v8032 = vpop.f32.mrf.mxu0
      %8033 = vmatprep.mubr.f32.mxu0 0.0
      %8034 = vmatmul.mubr.f32.gmra.mxu0 %v7879
      %v8035 = vpop.f32.mrf.mxu0
      %v8036 = vadd.f32 0.0, %v8035
      %v8037 = vpop.f32.mrf.mxu0
      %8038 = vdwg.mxu0
      %v8039 = vadd.f32 %v7783, %v7951
      %v8040 = vadd.f32 %v7784, %v7956
      %v8041 = vadd.f32 %v7785, %v7961
      %v8042 = vadd.f32 %v7786, %v7966
      %v8043 = vadd.f32 %v7787, %v7971
      %v8044 = vadd.f32 %v7788, %v7976
      %v8045 = vadd.f32 %v7789, %v7981
      %v8046 = vadd.f32 %v7790, %v7986
      %v8047 = vadd.f32 %v7791, %v7991
      %v8048 = vadd.f32 %v7792, %v7996
      %v8049 = vadd.f32 %v7793, %v8001
      %v8050 = vadd.f32 %v7794, %v8006
      %v8051 = vadd.f32 %v7795, %v8011
      %v8052 = vadd.f32 %v7796, %v8016
      %v8053 = vadd.f32 %v7797, %v8021
      %v8054 = vadd.f32 %v7798, %v8026
      %v8055 = vadd.f32 %v7799, %v8031
      %v8056 = vadd.f32 %v7800, %v8036
      %v8057 = vld [vmem:[#allocation3 + $0x116] sm:$0xff]
      %v8058 = vld [vmem:[#allocation3 + $0x11e] sm:$0xff]
      %v8059 = vld [vmem:[#allocation3 + $0x126] sm:$0xff]
      %v8060 = vld [vmem:[#allocation3 + $0x12e] sm:$0xff]
      %v8061 = vld [vmem:[#allocation3 + $0x136] sm:$0xff]
      %v8062 = vld [vmem:[#allocation3 + $0x13e] sm:$0xff]
      %v8063 = vld [vmem:[#allocation3 + $0x146] sm:$0xff]
      %v8064 = vld [vmem:[#allocation3 + $0x14e] sm:$0xff]
      %v8065 = vld [vmem:[#allocation3 + $0x156] sm:$0xff]
      %v8066 = vld [vmem:[#allocation3 + $0x15e] sm:$0xff]
      %v8067 = vld [vmem:[#allocation3 + $0x166] sm:$0xff]
      %v8068 = vld [vmem:[#allocation3 + $0x16e] sm:$0xff]
      %v8069 = vld [vmem:[#allocation3 + $0x176] sm:$0xff]
      %v8070 = vld [vmem:[#allocation3 + $0x17e] sm:$0xff]
      %v8071 = vld [vmem:[#allocation3 + $0x186] sm:$0xff]
      %v8072 = vld [vmem:[#allocation3 + $0x18e] sm:$0xff]
      %v8073 = vld [vmem:[#allocation3 + $0x196] sm:$0xff]
      %v8074 = vld [vmem:[#allocation3 + $0x19e] sm:$0xff]
      %s8075 = scalar_lea.vmem %s2, 448
      %v8076 = vld [vmem:[%s8075] sm:$0xff]
      %v8077 = vld [vmem:[%s8075 + $0x8] sm:$0xff]
      %v8078 = vld [vmem:[%s8075 + $0x10] sm:$0xff]
      %v8079 = vld [vmem:[%s8075 + $0x18] sm:$0xff]
      %v8080 = vld [vmem:[%s8075 + $0x20] sm:$0xff]
      %v8081 = vld [vmem:[%s8075 + $0x28] sm:$0xff]
      %v8082 = vld [vmem:[%s8075 + $0x30] sm:$0x3]
      %v8084 = vsel %vm522, %v8057, 0
      %v8087 = vsel %vm522, %v8058, 0
      %v8090 = vsel %vm522, %v8059, 0
      %v8093 = vsel %vm522, %v8060, 0
      %v8096 = vsel %vm522, %v8061, 0
      %v8099 = vsel %vm522, %v8062, 0
      %v8102 = vsel %vm522, %v8063, 0
      %v8105 = vsel %vm522, %v8064, 0
      %v8108 = vsel %vm522, %v8065, 0
      %v8111 = vsel %vm522, %v8066, 0
      %v8114 = vsel %vm522, %v8067, 0
      %v8117 = vsel %vm522, %v8068, 0
      %v8120 = vsel %vm522, %v8069, 0
      %v8123 = vsel %vm522, %v8070, 0
      %v8126 = vsel %vm522, %v8071, 0
      %v8129 = vsel %vm522, %v8072, 0
      %v8132 = vsel %vm522, %v8073, 0
      %v8135 = vsel %vm522, %v8074, 0
      %v8138 = vsel %vm6150, %v8082, 0
      %8140 = vmatprep.subr.mxu0 0.0
      %8141 = vmatpush1.msra.mxu0 0.0
      %8142 = vmatprep.subr.mxu0 0.0
      %8143 = vmatpush1.msra.mxu0 0.0
      %8144 = vmatprep.subr.mxu0 0.0
      %8145 = vmatpush1.msra.mxu0 0.0
      %8146 = vmatprep.subr.mxu0 0.0
      %8147 = vmatpush1.msra.mxu0 0.0
      %8148 = vmatprep.subr.mxu0 0.0
      %8149 = vmatpush1.msra.mxu0 0.0
      %8150 = vmatprep.subr.mxu0 0.0
      %8151 = vmatpush1.msra.mxu0 0.0
      %8152 = vmatprep.subr.mxu0 0.0
      %8153 = vmatpush1.msra.mxu0 0.0
      %8154 = vmatprep.subr.mxu0 0.0
      %8155 = vmatpush1.msra.mxu0 0.0
      %8156 = vmatprep.subr.mxu0 0.0
      %8157 = vmatpush1.msra.mxu0 0.0
      %8158 = vmatprep.subr.mxu0 0.0
      %8159 = vmatpush1.msra.mxu0 %v8138
      %8160 = vmatprep.subr.mxu0 0.0
      %8161 = vmatpush1.msra.mxu0 %v8081
      %8162 = vmatprep.subr.mxu0 0.0
      %8163 = vmatpush1.msra.mxu0 %v8080
      %8164 = vmatprep.subr.mxu0 0.0
      %8165 = vmatpush1.msra.mxu0 %v8079
      %8166 = vmatprep.subr.mxu0 0.0
      %8167 = vmatpush1.msra.mxu0 %v8078
      %8168 = vmatprep.subr.mxu0 0.0
      %8169 = vmatpush1.msra.mxu0 %v8077
      %8170 = vmatprep.subr.mxu0 0.0
      %8171 = vmatpush1.msra.mxu0 %v8076
      %8172 = vmatprep.subr.mxu0 0.0
      %8173 = vmatpush2.msra.mxu0 0.0
      %8174 = vmatprep.subr.mxu0 0.0
      %8175 = vmatpush2.msra.mxu0 0.0
      %8176 = vmatprep.subr.mxu0 0.0
      %8177 = vmatpush2.msra.mxu0 0.0
      %8178 = vmatprep.subr.mxu0 0.0
      %8179 = vmatpush2.msra.mxu0 0.0
      %8180 = vmatprep.subr.mxu0 0.0
      %8181 = vmatpush2.msra.mxu0 0.0
      %8182 = vmatprep.subr.mxu0 0.0
      %8183 = vmatpush2.msra.mxu0 0.0
      %8184 = vmatprep.subr.mxu0 0.0
      %8185 = vmatpush2.msra.mxu0 0.0
      %8186 = vmatprep.subr.mxu0 0.0
      %8187 = vmatpush2.msra.mxu0 0.0
      %8188 = vmatprep.subr.mxu0 0.0
      %8189 = vmatpush2.msra.mxu0 0.0
      %8190 = vmatprep.subr.mxu0 0.0
      %8191 = vmatpush2.msra.mxu0 0.0
      %8192 = vmatprep.subr.mxu0 0.0
      %8193 = vmatpush2.msra.mxu0 0.0
      %8194 = vmatprep.subr.mxu0 0.0
      %8195 = vmatpush2.msra.mxu0 0.0
      %8196 = vmatprep.subr.mxu0 0.0
      %8197 = vmatpush2.msra.mxu0 0.0
      %8198 = vmatprep.subr.mxu0 0.0
      %8199 = vmatpush2.msra.mxu0 0.0
      %8200 = vmatprep.subr.mxu0 0.0
      %8201 = vmatpush2.msra.mxu0 0.0
      %8202 = vmatprep.subr.mxu0 0.0
      %8203 = vmatpush2.msra.mxu0 0.0
      %8204 = vmatprep.mubr.f32.mxu0 0.0
      %8205 = vmatmul.mubr.f32.gmra.mxu0 %v8084
      %v8206 = vpop.f32.mrf.mxu0
      %v8207 = vadd.f32 0.0, %v8206
      %v8208 = vpop.f32.mrf.mxu0
      %8209 = vmatprep.mubr.f32.mxu0 0.0
      %8210 = vmatmul.mubr.f32.gmra.mxu0 %v8087
      %v8211 = vpop.f32.mrf.mxu0
      %v8212 = vadd.f32 0.0, %v8211
      %v8213 = vpop.f32.mrf.mxu0
      %8214 = vmatprep.mubr.f32.mxu0 0.0
      %8215 = vmatmul.mubr.f32.gmra.mxu0 %v8090
      %v8216 = vpop.f32.mrf.mxu0
      %v8217 = vadd.f32 0.0, %v8216
      %v8218 = vpop.f32.mrf.mxu0
      %8219 = vmatprep.mubr.f32.mxu0 0.0
      %8220 = vmatmul.mubr.f32.gmra.mxu0 %v8093
      %v8221 = vpop.f32.mrf.mxu0
      %v8222 = vadd.f32 0.0, %v8221
      %v8223 = vpop.f32.mrf.mxu0
      %8224 = vmatprep.mubr.f32.mxu0 0.0
      %8225 = vmatmul.mubr.f32.gmra.mxu0 %v8096
      %v8226 = vpop.f32.mrf.mxu0
      %v8227 = vadd.f32 0.0, %v8226
      %v8228 = vpop.f32.mrf.mxu0
      %8229 = vmatprep.mubr.f32.mxu0 0.0
      %8230 = vmatmul.mubr.f32.gmra.mxu0 %v8099
      %v8231 = vpop.f32.mrf.mxu0
      %v8232 = vadd.f32 0.0, %v8231
      %v8233 = vpop.f32.mrf.mxu0
      %8234 = vmatprep.mubr.f32.mxu0 0.0
      %8235 = vmatmul.mubr.f32.gmra.mxu0 %v8102
      %v8236 = vpop.f32.mrf.mxu0
      %v8237 = vadd.f32 0.0, %v8236
      %v8238 = vpop.f32.mrf.mxu0
      %8239 = vmatprep.mubr.f32.mxu0 0.0
      %8240 = vmatmul.mubr.f32.gmra.mxu0 %v8105
      %v8241 = vpop.f32.mrf.mxu0
      %v8242 = vadd.f32 0.0, %v8241
      %v8243 = vpop.f32.mrf.mxu0
      %8244 = vmatprep.mubr.f32.mxu0 0.0
      %8245 = vmatmul.mubr.f32.gmra.mxu0 %v8108
      %v8246 = vpop.f32.mrf.mxu0
      %v8247 = vadd.f32 0.0, %v8246
      %v8248 = vpop.f32.mrf.mxu0
      %8249 = vmatprep.mubr.f32.mxu0 0.0
      %8250 = vmatmul.mubr.f32.gmra.mxu0 %v8111
      %v8251 = vpop.f32.mrf.mxu0
      %v8252 = vadd.f32 0.0, %v8251
      %v8253 = vpop.f32.mrf.mxu0
      %8254 = vmatprep.mubr.f32.mxu0 0.0
      %8255 = vmatmul.mubr.f32.gmra.mxu0 %v8114
      %v8256 = vpop.f32.mrf.mxu0
      %v8257 = vadd.f32 0.0, %v8256
      %v8258 = vpop.f32.mrf.mxu0
      %8259 = vmatprep.mubr.f32.mxu0 0.0
      %8260 = vmatmul.mubr.f32.gmra.mxu0 %v8117
      %v8261 = vpop.f32.mrf.mxu0
      %v8262 = vadd.f32 0.0, %v8261
      %v8263 = vpop.f32.mrf.mxu0
      %8264 = vmatprep.mubr.f32.mxu0 0.0
      %8265 = vmatmul.mubr.f32.gmra.mxu0 %v8120
      %v8266 = vpop.f32.mrf.mxu0
      %v8267 = vadd.f32 0.0, %v8266
      %v8268 = vpop.f32.mrf.mxu0
      %8269 = vmatprep.mubr.f32.mxu0 0.0
      %8270 = vmatmul.mubr.f32.gmra.mxu0 %v8123
      %v8271 = vpop.f32.mrf.mxu0
      %v8272 = vadd.f32 0.0, %v8271
      %v8273 = vpop.f32.mrf.mxu0
      %8274 = vmatprep.mubr.f32.mxu0 0.0
      %8275 = vmatmul.mubr.f32.gmra.mxu0 %v8126
      %v8276 = vpop.f32.mrf.mxu0
      %v8277 = vadd.f32 0.0, %v8276
      %v8278 = vpop.f32.mrf.mxu0
      %8279 = vmatprep.mubr.f32.mxu0 0.0
      %8280 = vmatmul.mubr.f32.gmra.mxu0 %v8129
      %v8281 = vpop.f32.mrf.mxu0
      %v8282 = vadd.f32 0.0, %v8281
      %v8283 = vpop.f32.mrf.mxu0
      %8284 = vmatprep.mubr.f32.mxu0 0.0
      %8285 = vmatmul.mubr.f32.gmra.mxu0 %v8132
      %v8286 = vpop.f32.mrf.mxu0
      %v8287 = vadd.f32 0.0, %v8286
      %v8288 = vpop.f32.mrf.mxu0
      %8289 = vmatprep.mubr.f32.mxu0 0.0
      %8290 = vmatmul.mubr.f32.gmra.mxu0 %v8135
      %v8291 = vpop.f32.mrf.mxu0
      %v8292 = vadd.f32 0.0, %v8291
      %v8293 = vpop.f32.mrf.mxu0
      %8294 = vdwg.mxu0
      %v8295 = vadd.f32 %v8039, %v8207
      %v8296 = vadd.f32 %v8040, %v8212
      %v8297 = vadd.f32 %v8041, %v8217
      %v8298 = vadd.f32 %v8042, %v8222
      %v8299 = vadd.f32 %v8043, %v8227
      %v8300 = vadd.f32 %v8044, %v8232
      %v8301 = vadd.f32 %v8045, %v8237
      %v8302 = vadd.f32 %v8046, %v8242
      %v8303 = vadd.f32 %v8047, %v8247
      %v8304 = vadd.f32 %v8048, %v8252
      %v8305 = vadd.f32 %v8049, %v8257
      %v8306 = vadd.f32 %v8050, %v8262
      %v8307 = vadd.f32 %v8051, %v8267
      %v8308 = vadd.f32 %v8052, %v8272
      %v8309 = vadd.f32 %v8053, %v8277
      %v8310 = vadd.f32 %v8054, %v8282
      %v8311 = vadd.f32 %v8055, %v8287
      %v8312 = vadd.f32 %v8056, %v8292
      %v8313 = vlaneseq
      %v8314 = vshrl.u32 %v8313, 7
      %v8315 = vsub.s32 1, %v8314
      %v8316 = vrot.slane %v250, %v8315
      %v8317 = vadd.f32 %v8295, %v8316
      %v8318 = vadd.f32 %v8296, %v8316
      %v8319 = vadd.f32 %v8297, %v8316
      %v8320 = vadd.f32 %v8298, %v8316
      %v8321 = vadd.f32 %v8299, %v8316
      %v8322 = vadd.f32 %v8300, %v8316
      %v8323 = vadd.f32 %v8301, %v8316
      %v8324 = vadd.f32 %v8302, %v8316
      %v8325 = vadd.f32 %v8303, %v8316
      %v8326 = vadd.f32 %v8304, %v8316
      %v8327 = vadd.f32 %v8305, %v8316
      %v8328 = vadd.f32 %v8306, %v8316
      %v8329 = vadd.f32 %v8307, %v8316
      %v8330 = vadd.f32 %v8308, %v8316
      %v8331 = vadd.f32 %v8309, %v8316
      %v8332 = vadd.f32 %v8310, %v8316
      %v8333 = vadd.f32 %v8311, %v8316
      %v8334 = vadd.f32 %v8312, %v8316
      %vm8335 = vcmp.ge.f32.partialorder %v8317, 0.0
      %vm8336 = vcmp.ge.f32.partialorder %v8318, 0.0
      %vm8337 = vcmp.ge.f32.partialorder %v8319, 0.0
      %vm8338 = vcmp.ge.f32.partialorder %v8320, 0.0
      %vm8339 = vcmp.ge.f32.partialorder %v8321, 0.0
      %vm8340 = vcmp.ge.f32.partialorder %v8322, 0.0
      %vm8341 = vcmp.ge.f32.partialorder %v8323, 0.0
      %vm8342 = vcmp.ge.f32.partialorder %v8324, 0.0
      %vm8343 = vcmp.ge.f32.partialorder %v8325, 0.0
      %vm8344 = vcmp.ge.f32.partialorder %v8326, 0.0
      %vm8345 = vcmp.ge.f32.partialorder %v8327, 0.0
      %vm8346 = vcmp.ge.f32.partialorder %v8328, 0.0
      %vm8347 = vcmp.ge.f32.partialorder %v8329, 0.0
      %vm8348 = vcmp.ge.f32.partialorder %v8330, 0.0
      %vm8349 = vcmp.ge.f32.partialorder %v8331, 0.0
      %vm8350 = vcmp.ge.f32.partialorder %v8332, 0.0
      %vm8351 = vcmp.ge.f32.partialorder %v8333, 0.0
      %vm8352 = vcmp.ge.f32.partialorder %v8334, 0.0
      %v8353 = vmul.f32 %v8317, 0.01
      %v8354 = vmul.f32 %v8318, 0.01
      %v8355 = vmul.f32 %v8319, 0.01
      %v8356 = vmul.f32 %v8320, 0.01
      %v8357 = vmul.f32 %v8321, 0.01
      %v8358 = vmul.f32 %v8322, 0.01
      %v8359 = vmul.f32 %v8323, 0.01
      %v8360 = vmul.f32 %v8324, 0.01
      %v8361 = vmul.f32 %v8325, 0.01
      %v8362 = vmul.f32 %v8326, 0.01
      %v8363 = vmul.f32 %v8327, 0.01
      %v8364 = vmul.f32 %v8328, 0.01
      %v8365 = vmul.f32 %v8329, 0.01
      %v8366 = vmul.f32 %v8330, 0.01
      %v8367 = vmul.f32 %v8331, 0.01
      %v8368 = vmul.f32 %v8332, 0.01
      %v8369 = vmul.f32 %v8333, 0.01
      %v8370 = vmul.f32 %v8334, 0.01
      %v8371 = vsel %vm8335, %v8317, %v8353
      %v8372 = vsel %vm8336, %v8318, %v8354
      %v8373 = vsel %vm8337, %v8319, %v8355
      %v8374 = vsel %vm8338, %v8320, %v8356
      %v8375 = vsel %vm8339, %v8321, %v8357
      %v8376 = vsel %vm8340, %v8322, %v8358
      %v8377 = vsel %vm8341, %v8323, %v8359
      %v8378 = vsel %vm8342, %v8324, %v8360
      %v8379 = vsel %vm8343, %v8325, %v8361
      %v8380 = vsel %vm8344, %v8326, %v8362
      %v8381 = vsel %vm8345, %v8327, %v8363
      %v8382 = vsel %vm8346, %v8328, %v8364
      %v8383 = vsel %vm8347, %v8329, %v8365
      %v8384 = vsel %vm8348, %v8330, %v8366
      %v8385 = vsel %vm8349, %v8331, %v8367
      %v8386 = vsel %vm8350, %v8332, %v8368
      %v8387 = vsel %vm8351, %v8333, %v8369
      %v8388 = vsel %vm8352, %v8334, %v8370
      %8389 = vst.msk [vmem:[#allocation4] sm:$0xff] %vm522, %v8371
      %8390 = vst.msk [vmem:[#allocation4 + $0x8] sm:$0xff] %vm522, %v8372
      %8391 = vst.msk [vmem:[#allocation4 + $0x10] sm:$0xff] %vm522, %v8373
      %8392 = vst.msk [vmem:[#allocation4 + $0x18] sm:$0xff] %vm522, %v8374
      %8393 = vst.msk [vmem:[#allocation4 + $0x20] sm:$0xff] %vm522, %v8375
      %8394 = vst.msk [vmem:[#allocation4 + $0x28] sm:$0xff] %vm522, %v8376
      %8395 = vst.msk [vmem:[#allocation4 + $0x30] sm:$0xff] %vm522, %v8377
      %8396 = vst.msk [vmem:[#allocation4 + $0x38] sm:$0xff] %vm522, %v8378
      %8397 = vst.msk [vmem:[#allocation4 + $0x40] sm:$0xff] %vm522, %v8379
      %8398 = vst.msk [vmem:[#allocation4 + $0x48] sm:$0xff] %vm522, %v8380
      %8399 = vst.msk [vmem:[#allocation4 + $0x50] sm:$0xff] %vm522, %v8381
      %8400 = vst.msk [vmem:[#allocation4 + $0x58] sm:$0xff] %vm522, %v8382
      %8401 = vst.msk [vmem:[#allocation4 + $0x60] sm:$0xff] %vm522, %v8383
      %8402 = vst.msk [vmem:[#allocation4 + $0x68] sm:$0xff] %vm522, %v8384
      %8403 = vst.msk [vmem:[#allocation4 + $0x70] sm:$0xff] %vm522, %v8385
      %8404 = vst.msk [vmem:[#allocation4 + $0x78] sm:$0xff] %vm522, %v8386
      %8405 = vst.msk [vmem:[#allocation4 + $0x80] sm:$0xff] %vm522, %v8387
      %8406 = vst.msk [vmem:[#allocation4 + $0x88] sm:$0xff] %vm522, %v8388
      %v8407 = vld [vmem:[#allocation3 + $0x90] sm:$0xff]
      %v8408 = vld [vmem:[#allocation3 + $0x98] sm:$0xff]
      %v8409 = vld [vmem:[#allocation3 + $0xa0] sm:$0xff]
      %v8410 = vld [vmem:[#allocation3 + $0xa8] sm:$0xff]
      %v8411 = vld [vmem:[#allocation3 + $0xb0] sm:$0xff]
      %v8412 = vld [vmem:[#allocation3 + $0xb8] sm:$0xff]
      %v8413 = vld [vmem:[#allocation3 + $0xc0] sm:$0xff]
      %v8414 = vld [vmem:[#allocation3 + $0xc8] sm:$0xff]
      %v8415 = vld [vmem:[#allocation3 + $0xd0] sm:$0xff]
      %v8416 = vld [vmem:[#allocation3 + $0xd8] sm:$0xff]
      %v8417 = vld [vmem:[#allocation3 + $0xe0] sm:$0xff]
      %v8418 = vld [vmem:[#allocation3 + $0xe8] sm:$0xff]
      %v8419 = vld [vmem:[#allocation3 + $0xf0] sm:$0xff]
      %v8420 = vld [vmem:[#allocation3 + $0xf8] sm:$0xff]
      %v8421 = vld [vmem:[#allocation3 + $0x100] sm:$0xff]
      %v8422 = vld [vmem:[#allocation3 + $0x108] sm:$0xff]
      %v8423 = vld [vmem:[#allocation3 + $0x110] sm:$0xff]
      %v8424 = vld [vmem:[%s2] sm:$0xff]
      %v8425 = vld [vmem:[%s2 + $0x8] sm:$0xff]
      %v8426 = vld [vmem:[%s2 + $0x10] sm:$0xff]
      %v8427 = vld [vmem:[%s2 + $0x18] sm:$0xff]
      %v8428 = vld [vmem:[%s2 + $0x20] sm:$0xff]
      %v8429 = vld [vmem:[%s2 + $0x28] sm:$0xff]
      %v8430 = vld [vmem:[%s2 + $0x30] sm:$0x3]
      %v8431 = vld [vmem:[#allocation3 + $0x91] sm:$0xff]
      %v8432 = vld [vmem:[#allocation3 + $0x99] sm:$0xff]
      %v8433 = vld [vmem:[#allocation3 + $0xa1] sm:$0xff]
      %v8434 = vld [vmem:[#allocation3 + $0xa9] sm:$0xff]
      %v8435 = vld [vmem:[#allocation3 + $0xb1] sm:$0xff]
      %v8436 = vld [vmem:[#allocation3 + $0xb9] sm:$0xff]
      %v8437 = vld [vmem:[#allocation3 + $0xc1] sm:$0xff]
      %v8438 = vld [vmem:[#allocation3 + $0xc9] sm:$0xff]
      %v8439 = vld [vmem:[#allocation3 + $0xd1] sm:$0xff]
      %v8440 = vld [vmem:[#allocation3 + $0xd9] sm:$0xff]
      %v8441 = vld [vmem:[#allocation3 + $0xe1] sm:$0xff]
      %v8442 = vld [vmem:[#allocation3 + $0xe9] sm:$0xff]
      %v8443 = vld [vmem:[#allocation3 + $0xf1] sm:$0xff]
      %v8444 = vld [vmem:[#allocation3 + $0xf9] sm:$0xff]
      %v8445 = vld [vmem:[#allocation3 + $0x101] sm:$0xff]
      %v8446 = vld [vmem:[#allocation3 + $0x109] sm:$0xff]
      %v8447 = vld [vmem:[#allocation3 + $0x111] sm:$0xff]
      %v8448 = vld [vmem:[%s6088] sm:$0xff]
      %v8449 = vld [vmem:[%s6088 + $0x8] sm:$0xff]
      %v8450 = vld [vmem:[%s6088 + $0x10] sm:$0xff]
      %v8451 = vld [vmem:[%s6088 + $0x18] sm:$0xff]
      %v8452 = vld [vmem:[%s6088 + $0x20] sm:$0xff]
      %v8453 = vld [vmem:[%s6088 + $0x28] sm:$0xff]
      %v8454 = vld [vmem:[%s6088 + $0x30] sm:$0x3]
      %v8456 = vsel %vm522, %v8431, 0
      %v8459 = vsel %vm522, %v8432, 0
      %v8462 = vsel %vm522, %v8433, 0
      %v8465 = vsel %vm522, %v8434, 0
      %v8468 = vsel %vm522, %v8435, 0
      %v8471 = vsel %vm522, %v8436, 0
      %v8474 = vsel %vm522, %v8437, 0
      %v8477 = vsel %vm522, %v8438, 0
      %v8480 = vsel %vm522, %v8439, 0
      %v8483 = vsel %vm522, %v8440, 0
      %v8486 = vsel %vm522, %v8441, 0
      %v8489 = vsel %vm522, %v8442, 0
      %v8492 = vsel %vm522, %v8443, 0
      %v8495 = vsel %vm522, %v8444, 0
      %v8498 = vsel %vm522, %v8445, 0
      %v8501 = vsel %vm522, %v8446, 0
      %v8504 = vsel %vm522, %v8447, 0
      %v8507 = vsel %vm6150, %v8454, 0
      %8509 = vmatprep.subr.mxu0 0.0
      %8510 = vmatpush1.msra.mxu0 0.0
      %8511 = vmatprep.subr.mxu0 0.0
      %8512 = vmatpush1.msra.mxu0 0.0
      %8513 = vmatprep.subr.mxu0 0.0
      %8514 = vmatpush1.msra.mxu0 0.0
      %8515 = vmatprep.subr.mxu0 0.0
      %8516 = vmatpush1.msra.mxu0 0.0
      %8517 = vmatprep.subr.mxu0 0.0
      %8518 = vmatpush1.msra.mxu0 0.0
      %8519 = vmatprep.subr.mxu0 0.0
      %8520 = vmatpush1.msra.mxu0 0.0
      %8521 = vmatprep.subr.mxu0 0.0
      %8522 = vmatpush1.msra.mxu0 0.0
      %8523 = vmatprep.subr.mxu0 0.0
      %8524 = vmatpush1.msra.mxu0 0.0
      %8525 = vmatprep.subr.mxu0 0.0
      %8526 = vmatpush1.msra.mxu0 0.0
      %8527 = vmatprep.subr.mxu0 0.0
      %8528 = vmatpush1.msra.mxu0 %v8507
      %8529 = vmatprep.subr.mxu0 0.0
      %8530 = vmatpush1.msra.mxu0 %v8453
      %8531 = vmatprep.subr.mxu0 0.0
      %8532 = vmatpush1.msra.mxu0 %v8452
      %8533 = vmatprep.subr.mxu0 0.0
      %8534 = vmatpush1.msra.mxu0 %v8451
      %8535 = vmatprep.subr.mxu0 0.0
      %8536 = vmatpush1.msra.mxu0 %v8450
      %8537 = vmatprep.subr.mxu0 0.0
      %8538 = vmatpush1.msra.mxu0 %v8449
      %8539 = vmatprep.subr.mxu0 0.0
      %8540 = vmatpush1.msra.mxu0 %v8448
      %8541 = vmatprep.subr.mxu0 0.0
      %8542 = vmatpush2.msra.mxu0 0.0
      %8543 = vmatprep.subr.mxu0 0.0
      %8544 = vmatpush2.msra.mxu0 0.0
      %8545 = vmatprep.subr.mxu0 0.0
      %8546 = vmatpush2.msra.mxu0 0.0
      %8547 = vmatprep.subr.mxu0 0.0
      %8548 = vmatpush2.msra.mxu0 0.0
      %8549 = vmatprep.subr.mxu0 0.0
      %8550 = vmatpush2.msra.mxu0 0.0
      %8551 = vmatprep.subr.mxu0 0.0
      %8552 = vmatpush2.msra.mxu0 0.0
      %8553 = vmatprep.subr.mxu0 0.0
      %8554 = vmatpush2.msra.mxu0 0.0
      %8555 = vmatprep.subr.mxu0 0.0
      %8556 = vmatpush2.msra.mxu0 0.0
      %8557 = vmatprep.subr.mxu0 0.0
      %8558 = vmatpush2.msra.mxu0 0.0
      %8559 = vmatprep.subr.mxu0 0.0
      %8560 = vmatpush2.msra.mxu0 0.0
      %8561 = vmatprep.subr.mxu0 0.0
      %8562 = vmatpush2.msra.mxu0 0.0
      %8563 = vmatprep.subr.mxu0 0.0
      %8564 = vmatpush2.msra.mxu0 0.0
      %8565 = vmatprep.subr.mxu0 0.0
      %8566 = vmatpush2.msra.mxu0 0.0
      %8567 = vmatprep.subr.mxu0 0.0
      %8568 = vmatpush2.msra.mxu0 0.0
      %8569 = vmatprep.subr.mxu0 0.0
      %8570 = vmatpush2.msra.mxu0 0.0
      %8571 = vmatprep.subr.mxu0 0.0
      %8572 = vmatpush2.msra.mxu0 0.0
      %8573 = vmatprep.mubr.f32.mxu0 0.0
      %8574 = vmatmul.mubr.f32.gmra.mxu0 %v8456
      %v8575 = vpop.f32.mrf.mxu0
      %v8576 = vadd.f32 0.0, %v8575
      %v8577 = vpop.f32.mrf.mxu0
      %8578 = vmatprep.mubr.f32.mxu0 0.0
      %8579 = vmatmul.mubr.f32.gmra.mxu0 %v8459
      %v8580 = vpop.f32.mrf.mxu0
      %v8581 = vadd.f32 0.0, %v8580
      %v8582 = vpop.f32.mrf.mxu0
      %8583 = vmatprep.mubr.f32.mxu0 0.0
      %8584 = vmatmul.mubr.f32.gmra.mxu0 %v8462
      %v8585 = vpop.f32.mrf.mxu0
      %v8586 = vadd.f32 0.0, %v8585
      %v8587 = vpop.f32.mrf.mxu0
      %8588 = vmatprep.mubr.f32.mxu0 0.0
      %8589 = vmatmul.mubr.f32.gmra.mxu0 %v8465
      %v8590 = vpop.f32.mrf.mxu0
      %v8591 = vadd.f32 0.0, %v8590
      %v8592 = vpop.f32.mrf.mxu0
      %8593 = vmatprep.mubr.f32.mxu0 0.0
      %8594 = vmatmul.mubr.f32.gmra.mxu0 %v8468
      %v8595 = vpop.f32.mrf.mxu0
      %v8596 = vadd.f32 0.0, %v8595
      %v8597 = vpop.f32.mrf.mxu0
      %8598 = vmatprep.mubr.f32.mxu0 0.0
      %8599 = vmatmul.mubr.f32.gmra.mxu0 %v8471
      %v8600 = vpop.f32.mrf.mxu0
      %v8601 = vadd.f32 0.0, %v8600
      %v8602 = vpop.f32.mrf.mxu0
      %8603 = vmatprep.mubr.f32.mxu0 0.0
      %8604 = vmatmul.mubr.f32.gmra.mxu0 %v8474
      %v8605 = vpop.f32.mrf.mxu0
      %v8606 = vadd.f32 0.0, %v8605
      %v8607 = vpop.f32.mrf.mxu0
      %8608 = vmatprep.mubr.f32.mxu0 0.0
      %8609 = vmatmul.mubr.f32.gmra.mxu0 %v8477
      %v8610 = vpop.f32.mrf.mxu0
      %v8611 = vadd.f32 0.0, %v8610
      %v8612 = vpop.f32.mrf.mxu0
      %8613 = vmatprep.mubr.f32.mxu0 0.0
      %8614 = vmatmul.mubr.f32.gmra.mxu0 %v8480
      %v8615 = vpop.f32.mrf.mxu0
      %v8616 = vadd.f32 0.0, %v8615
      %v8617 = vpop.f32.mrf.mxu0
      %8618 = vmatprep.mubr.f32.mxu0 0.0
      %8619 = vmatmul.mubr.f32.gmra.mxu0 %v8483
      %v8620 = vpop.f32.mrf.mxu0
      %v8621 = vadd.f32 0.0, %v8620
      %v8622 = vpop.f32.mrf.mxu0
      %8623 = vmatprep.mubr.f32.mxu0 0.0
      %8624 = vmatmul.mubr.f32.gmra.mxu0 %v8486
      %v8625 = vpop.f32.mrf.mxu0
      %v8626 = vadd.f32 0.0, %v8625
      %v8627 = vpop.f32.mrf.mxu0
      %8628 = vmatprep.mubr.f32.mxu0 0.0
      %8629 = vmatmul.mubr.f32.gmra.mxu0 %v8489
      %v8630 = vpop.f32.mrf.mxu0
      %v8631 = vadd.f32 0.0, %v8630
      %v8632 = vpop.f32.mrf.mxu0
      %8633 = vmatprep.mubr.f32.mxu0 0.0
      %8634 = vmatmul.mubr.f32.gmra.mxu0 %v8492
      %v8635 = vpop.f32.mrf.mxu0
      %v8636 = vadd.f32 0.0, %v8635
      %v8637 = vpop.f32.mrf.mxu0
      %8638 = vmatprep.mubr.f32.mxu0 0.0
      %8639 = vmatmul.mubr.f32.gmra.mxu0 %v8495
      %v8640 = vpop.f32.mrf.mxu0
      %v8641 = vadd.f32 0.0, %v8640
      %v8642 = vpop.f32.mrf.mxu0
      %8643 = vmatprep.mubr.f32.mxu0 0.0
      %8644 = vmatmul.mubr.f32.gmra.mxu0 %v8498
      %v8645 = vpop.f32.mrf.mxu0
      %v8646 = vadd.f32 0.0, %v8645
      %v8647 = vpop.f32.mrf.mxu0
      %8648 = vmatprep.mubr.f32.mxu0 0.0
      %8649 = vmatmul.mubr.f32.gmra.mxu0 %v8501
      %v8650 = vpop.f32.mrf.mxu0
      %v8651 = vadd.f32 0.0, %v8650
      %v8652 = vpop.f32.mrf.mxu0
      %8653 = vmatprep.mubr.f32.mxu0 0.0
      %8654 = vmatmul.mubr.f32.gmra.mxu0 %v8504
      %v8655 = vpop.f32.mrf.mxu0
      %v8656 = vadd.f32 0.0, %v8655
      %v8657 = vpop.f32.mrf.mxu0
      %8658 = vdwg.mxu0
      %v8660 = vsel %vm522, %v8407, 0
      %v8663 = vsel %vm522, %v8408, 0
      %v8666 = vsel %vm522, %v8409, 0
      %v8669 = vsel %vm522, %v8410, 0
      %v8672 = vsel %vm522, %v8411, 0
      %v8675 = vsel %vm522, %v8412, 0
      %v8678 = vsel %vm522, %v8413, 0
      %v8681 = vsel %vm522, %v8414, 0
      %v8684 = vsel %vm522, %v8415, 0
      %v8687 = vsel %vm522, %v8416, 0
      %v8690 = vsel %vm522, %v8417, 0
      %v8693 = vsel %vm522, %v8418, 0
      %v8696 = vsel %vm522, %v8419, 0
      %v8699 = vsel %vm522, %v8420, 0
      %v8702 = vsel %vm522, %v8421, 0
      %v8705 = vsel %vm522, %v8422, 0
      %v8708 = vsel %vm522, %v8423, 0
      %v8711 = vsel %vm6150, %v8430, 0
      %8713 = vmatprep.subr.mxu0 0.0
      %8714 = vmatpush1.msra.mxu0 0.0
      %8715 = vmatprep.subr.mxu0 0.0
      %8716 = vmatpush1.msra.mxu0 0.0
      %8717 = vmatprep.subr.mxu0 0.0
      %8718 = vmatpush1.msra.mxu0 0.0
      %8719 = vmatprep.subr.mxu0 0.0
      %8720 = vmatpush1.msra.mxu0 0.0
      %8721 = vmatprep.subr.mxu0 0.0
      %8722 = vmatpush1.msra.mxu0 0.0
      %8723 = vmatprep.subr.mxu0 0.0
      %8724 = vmatpush1.msra.mxu0 0.0
      %8725 = vmatprep.subr.mxu0 0.0
      %8726 = vmatpush1.msra.mxu0 0.0
      %8727 = vmatprep.subr.mxu0 0.0
      %8728 = vmatpush1.msra.mxu0 0.0
      %8729 = vmatprep.subr.mxu0 0.0
      %8730 = vmatpush1.msra.mxu0 0.0
      %8731 = vmatprep.subr.mxu0 0.0
      %8732 = vmatpush1.msra.mxu0 %v8711
      %8733 = vmatprep.subr.mxu0 0.0
      %8734 = vmatpush1.msra.mxu0 %v8429
      %8735 = vmatprep.subr.mxu0 0.0
      %8736 = vmatpush1.msra.mxu0 %v8428
      %8737 = vmatprep.subr.mxu0 0.0
      %8738 = vmatpush1.msra.mxu0 %v8427
      %8739 = vmatprep.subr.mxu0 0.0
      %8740 = vmatpush1.msra.mxu0 %v8426
      %8741 = vmatprep.subr.mxu0 0.0
      %8742 = vmatpush1.msra.mxu0 %v8425
      %8743 = vmatprep.subr.mxu0 0.0
      %8744 = vmatpush1.msra.mxu0 %v8424
      %8745 = vmatprep.subr.mxu0 0.0
      %8746 = vmatpush2.msra.mxu0 0.0
      %8747 = vmatprep.subr.mxu0 0.0
      %8748 = vmatpush2.msra.mxu0 0.0
      %8749 = vmatprep.subr.mxu0 0.0
      %8750 = vmatpush2.msra.mxu0 0.0
      %8751 = vmatprep.subr.mxu0 0.0
      %8752 = vmatpush2.msra.mxu0 0.0
      %8753 = vmatprep.subr.mxu0 0.0
      %8754 = vmatpush2.msra.mxu0 0.0
      %8755 = vmatprep.subr.mxu0 0.0
      %8756 = vmatpush2.msra.mxu0 0.0
      %8757 = vmatprep.subr.mxu0 0.0
      %8758 = vmatpush2.msra.mxu0 0.0
      %8759 = vmatprep.subr.mxu0 0.0
      %8760 = vmatpush2.msra.mxu0 0.0
      %8761 = vmatprep.subr.mxu0 0.0
      %8762 = vmatpush2.msra.mxu0 0.0
      %8763 = vmatprep.subr.mxu0 0.0
      %8764 = vmatpush2.msra.mxu0 0.0
      %8765 = vmatprep.subr.mxu0 0.0
      %8766 = vmatpush2.msra.mxu0 0.0
      %8767 = vmatprep.subr.mxu0 0.0
      %8768 = vmatpush2.msra.mxu0 0.0
      %8769 = vmatprep.subr.mxu0 0.0
      %8770 = vmatpush2.msra.mxu0 0.0
      %8771 = vmatprep.subr.mxu0 0.0
      %8772 = vmatpush2.msra.mxu0 0.0
      %8773 = vmatprep.subr.mxu0 0.0
      %8774 = vmatpush2.msra.mxu0 0.0
      %8775 = vmatprep.subr.mxu0 0.0
      %8776 = vmatpush2.msra.mxu0 0.0
      %8777 = vmatprep.mubr.f32.mxu0 0.0
      %8778 = vmatmul.mubr.f32.gmra.mxu0 %v8660
      %v8779 = vpop.f32.mrf.mxu0
      %v8780 = vadd.f32 %v8576, %v8779
      %v8781 = vpop.f32.mrf.mxu0
      %8782 = vmatprep.mubr.f32.mxu0 0.0
      %8783 = vmatmul.mubr.f32.gmra.mxu0 %v8663
      %v8784 = vpop.f32.mrf.mxu0
      %v8785 = vadd.f32 %v8581, %v8784
      %v8786 = vpop.f32.mrf.mxu0
      %8787 = vmatprep.mubr.f32.mxu0 0.0
      %8788 = vmatmul.mubr.f32.gmra.mxu0 %v8666
      %v8789 = vpop.f32.mrf.mxu0
      %v8790 = vadd.f32 %v8586, %v8789
      %v8791 = vpop.f32.mrf.mxu0
      %8792 = vmatprep.mubr.f32.mxu0 0.0
      %8793 = vmatmul.mubr.f32.gmra.mxu0 %v8669
      %v8794 = vpop.f32.mrf.mxu0
      %v8795 = vadd.f32 %v8591, %v8794
      %v8796 = vpop.f32.mrf.mxu0
      %8797 = vmatprep.mubr.f32.mxu0 0.0
      %8798 = vmatmul.mubr.f32.gmra.mxu0 %v8672
      %v8799 = vpop.f32.mrf.mxu0
      %v8800 = vadd.f32 %v8596, %v8799
      %v8801 = vpop.f32.mrf.mxu0
      %8802 = vmatprep.mubr.f32.mxu0 0.0
      %8803 = vmatmul.mubr.f32.gmra.mxu0 %v8675
      %v8804 = vpop.f32.mrf.mxu0
      %v8805 = vadd.f32 %v8601, %v8804
      %v8806 = vpop.f32.mrf.mxu0
      %8807 = vmatprep.mubr.f32.mxu0 0.0
      %8808 = vmatmul.mubr.f32.gmra.mxu0 %v8678
      %v8809 = vpop.f32.mrf.mxu0
      %v8810 = vadd.f32 %v8606, %v8809
      %v8811 = vpop.f32.mrf.mxu0
      %8812 = vmatprep.mubr.f32.mxu0 0.0
      %8813 = vmatmul.mubr.f32.gmra.mxu0 %v8681
      %v8814 = vpop.f32.mrf.mxu0
      %v8815 = vadd.f32 %v8611, %v8814
      %v8816 = vpop.f32.mrf.mxu0
      %8817 = vmatprep.mubr.f32.mxu0 0.0
      %8818 = vmatmul.mubr.f32.gmra.mxu0 %v8684
      %v8819 = vpop.f32.mrf.mxu0
      %v8820 = vadd.f32 %v8616, %v8819
      %v8821 = vpop.f32.mrf.mxu0
      %8822 = vmatprep.mubr.f32.mxu0 0.0
      %8823 = vmatmul.mubr.f32.gmra.mxu0 %v8687
      %v8824 = vpop.f32.mrf.mxu0
      %v8825 = vadd.f32 %v8621, %v8824
      %v8826 = vpop.f32.mrf.mxu0
      %8827 = vmatprep.mubr.f32.mxu0 0.0
      %8828 = vmatmul.mubr.f32.gmra.mxu0 %v8690
      %v8829 = vpop.f32.mrf.mxu0
      %v8830 = vadd.f32 %v8626, %v8829
      %v8831 = vpop.f32.mrf.mxu0
      %8832 = vmatprep.mubr.f32.mxu0 0.0
      %8833 = vmatmul.mubr.f32.gmra.mxu0 %v8693
      %v8834 = vpop.f32.mrf.mxu0
      %v8835 = vadd.f32 %v8631, %v8834
      %v8836 = vpop.f32.mrf.mxu0
      %8837 = vmatprep.mubr.f32.mxu0 0.0
      %8838 = vmatmul.mubr.f32.gmra.mxu0 %v8696
      %v8839 = vpop.f32.mrf.mxu0
      %v8840 = vadd.f32 %v8636, %v8839
      %v8841 = vpop.f32.mrf.mxu0
      %8842 = vmatprep.mubr.f32.mxu0 0.0
      %8843 = vmatmul.mubr.f32.gmra.mxu0 %v8699
      %v8844 = vpop.f32.mrf.mxu0
      %v8845 = vadd.f32 %v8641, %v8844
      %v8846 = vpop.f32.mrf.mxu0
      %8847 = vmatprep.mubr.f32.mxu0 0.0
      %8848 = vmatmul.mubr.f32.gmra.mxu0 %v8702
      %v8849 = vpop.f32.mrf.mxu0
      %v8850 = vadd.f32 %v8646, %v8849
      %v8851 = vpop.f32.mrf.mxu0
      %8852 = vmatprep.mubr.f32.mxu0 0.0
      %8853 = vmatmul.mubr.f32.gmra.mxu0 %v8705
      %v8854 = vpop.f32.mrf.mxu0
      %v8855 = vadd.f32 %v8651, %v8854
      %v8856 = vpop.f32.mrf.mxu0
      %8857 = vmatprep.mubr.f32.mxu0 0.0
      %8858 = vmatmul.mubr.f32.gmra.mxu0 %v8708
      %v8859 = vpop.f32.mrf.mxu0
      %v8860 = vadd.f32 %v8656, %v8859
      %v8861 = vpop.f32.mrf.mxu0
      %8862 = vdwg.mxu0
      %v8863 = vld [vmem:[#allocation3 + $0x92] sm:$0xff]
      %v8864 = vld [vmem:[#allocation3 + $0x9a] sm:$0xff]
      %v8865 = vld [vmem:[#allocation3 + $0xa2] sm:$0xff]
      %v8866 = vld [vmem:[#allocation3 + $0xaa] sm:$0xff]
      %v8867 = vld [vmem:[#allocation3 + $0xb2] sm:$0xff]
      %v8868 = vld [vmem:[#allocation3 + $0xba] sm:$0xff]
      %v8869 = vld [vmem:[#allocation3 + $0xc2] sm:$0xff]
      %v8870 = vld [vmem:[#allocation3 + $0xca] sm:$0xff]
      %v8871 = vld [vmem:[#allocation3 + $0xd2] sm:$0xff]
      %v8872 = vld [vmem:[#allocation3 + $0xda] sm:$0xff]
      %v8873 = vld [vmem:[#allocation3 + $0xe2] sm:$0xff]
      %v8874 = vld [vmem:[#allocation3 + $0xea] sm:$0xff]
      %v8875 = vld [vmem:[#allocation3 + $0xf2] sm:$0xff]
      %v8876 = vld [vmem:[#allocation3 + $0xfa] sm:$0xff]
      %v8877 = vld [vmem:[#allocation3 + $0x102] sm:$0xff]
      %v8878 = vld [vmem:[#allocation3 + $0x10a] sm:$0xff]
      %v8879 = vld [vmem:[#allocation3 + $0x112] sm:$0xff]
      %v8880 = vld [vmem:[%s6539] sm:$0xff]
      %v8881 = vld [vmem:[%s6539 + $0x8] sm:$0xff]
      %v8882 = vld [vmem:[%s6539 + $0x10] sm:$0xff]
      %v8883 = vld [vmem:[%s6539 + $0x18] sm:$0xff]
      %v8884 = vld [vmem:[%s6539 + $0x20] sm:$0xff]
      %v8885 = vld [vmem:[%s6539 + $0x28] sm:$0xff]
      %v8886 = vld [vmem:[%s6539 + $0x30] sm:$0x3]
      %v8888 = vsel %vm522, %v8863, 0
      %v8891 = vsel %vm522, %v8864, 0
      %v8894 = vsel %vm522, %v8865, 0
      %v8897 = vsel %vm522, %v8866, 0
      %v8900 = vsel %vm522, %v8867, 0
      %v8903 = vsel %vm522, %v8868, 0
      %v8906 = vsel %vm522, %v8869, 0
      %v8909 = vsel %vm522, %v8870, 0
      %v8912 = vsel %vm522, %v8871, 0
      %v8915 = vsel %vm522, %v8872, 0
      %v8918 = vsel %vm522, %v8873, 0
      %v8921 = vsel %vm522, %v8874, 0
      %v8924 = vsel %vm522, %v8875, 0
      %v8927 = vsel %vm522, %v8876, 0
      %v8930 = vsel %vm522, %v8877, 0
      %v8933 = vsel %vm522, %v8878, 0
      %v8936 = vsel %vm522, %v8879, 0
      %v8939 = vsel %vm6150, %v8886, 0
      %8941 = vmatprep.subr.mxu0 0.0
      %8942 = vmatpush1.msra.mxu0 0.0
      %8943 = vmatprep.subr.mxu0 0.0
      %8944 = vmatpush1.msra.mxu0 0.0
      %8945 = vmatprep.subr.mxu0 0.0
      %8946 = vmatpush1.msra.mxu0 0.0
      %8947 = vmatprep.subr.mxu0 0.0
      %8948 = vmatpush1.msra.mxu0 0.0
      %8949 = vmatprep.subr.mxu0 0.0
      %8950 = vmatpush1.msra.mxu0 0.0
      %8951 = vmatprep.subr.mxu0 0.0
      %8952 = vmatpush1.msra.mxu0 0.0
      %8953 = vmatprep.subr.mxu0 0.0
      %8954 = vmatpush1.msra.mxu0 0.0
      %8955 = vmatprep.subr.mxu0 0.0
      %8956 = vmatpush1.msra.mxu0 0.0
      %8957 = vmatprep.subr.mxu0 0.0
      %8958 = vmatpush1.msra.mxu0 0.0
      %8959 = vmatprep.subr.mxu0 0.0
      %8960 = vmatpush1.msra.mxu0 %v8939
      %8961 = vmatprep.subr.mxu0 0.0
      %8962 = vmatpush1.msra.mxu0 %v8885
      %8963 = vmatprep.subr.mxu0 0.0
      %8964 = vmatpush1.msra.mxu0 %v8884
      %8965 = vmatprep.subr.mxu0 0.0
      %8966 = vmatpush1.msra.mxu0 %v8883
      %8967 = vmatprep.subr.mxu0 0.0
      %8968 = vmatpush1.msra.mxu0 %v8882
      %8969 = vmatprep.subr.mxu0 0.0
      %8970 = vmatpush1.msra.mxu0 %v8881
      %8971 = vmatprep.subr.mxu0 0.0
      %8972 = vmatpush1.msra.mxu0 %v8880
      %8973 = vmatprep.subr.mxu0 0.0
      %8974 = vmatpush2.msra.mxu0 0.0
      %8975 = vmatprep.subr.mxu0 0.0
      %8976 = vmatpush2.msra.mxu0 0.0
      %8977 = vmatprep.subr.mxu0 0.0
      %8978 = vmatpush2.msra.mxu0 0.0
      %8979 = vmatprep.subr.mxu0 0.0
      %8980 = vmatpush2.msra.mxu0 0.0
      %8981 = vmatprep.subr.mxu0 0.0
      %8982 = vmatpush2.msra.mxu0 0.0
      %8983 = vmatprep.subr.mxu0 0.0
      %8984 = vmatpush2.msra.mxu0 0.0
      %8985 = vmatprep.subr.mxu0 0.0
      %8986 = vmatpush2.msra.mxu0 0.0
      %8987 = vmatprep.subr.mxu0 0.0
      %8988 = vmatpush2.msra.mxu0 0.0
      %8989 = vmatprep.subr.mxu0 0.0
      %8990 = vmatpush2.msra.mxu0 0.0
      %8991 = vmatprep.subr.mxu0 0.0
      %8992 = vmatpush2.msra.mxu0 0.0
      %8993 = vmatprep.subr.mxu0 0.0
      %8994 = vmatpush2.msra.mxu0 0.0
      %8995 = vmatprep.subr.mxu0 0.0
      %8996 = vmatpush2.msra.mxu0 0.0
      %8997 = vmatprep.subr.mxu0 0.0
      %8998 = vmatpush2.msra.mxu0 0.0
      %8999 = vmatprep.subr.mxu0 0.0
      %9000 = vmatpush2.msra.mxu0 0.0
      %9001 = vmatprep.subr.mxu0 0.0
      %9002 = vmatpush2.msra.mxu0 0.0
      %9003 = vmatprep.subr.mxu0 0.0
      %9004 = vmatpush2.msra.mxu0 0.0
      %9005 = vmatprep.mubr.f32.mxu0 0.0
      %9006 = vmatmul.mubr.f32.gmra.mxu0 %v8888
      %v9007 = vpop.f32.mrf.mxu0
      %v9008 = vadd.f32 0.0, %v9007
      %v9009 = vpop.f32.mrf.mxu0
      %9010 = vmatprep.mubr.f32.mxu0 0.0
      %9011 = vmatmul.mubr.f32.gmra.mxu0 %v8891
      %v9012 = vpop.f32.mrf.mxu0
      %v9013 = vadd.f32 0.0, %v9012
      %v9014 = vpop.f32.mrf.mxu0
      %9015 = vmatprep.mubr.f32.mxu0 0.0
      %9016 = vmatmul.mubr.f32.gmra.mxu0 %v8894
      %v9017 = vpop.f32.mrf.mxu0
      %v9018 = vadd.f32 0.0, %v9017
      %v9019 = vpop.f32.mrf.mxu0
      %9020 = vmatprep.mubr.f32.mxu0 0.0
      %9021 = vmatmul.mubr.f32.gmra.mxu0 %v8897
      %v9022 = vpop.f32.mrf.mxu0
      %v9023 = vadd.f32 0.0, %v9022
      %v9024 = vpop.f32.mrf.mxu0
      %9025 = vmatprep.mubr.f32.mxu0 0.0
      %9026 = vmatmul.mubr.f32.gmra.mxu0 %v8900
      %v9027 = vpop.f32.mrf.mxu0
      %v9028 = vadd.f32 0.0, %v9027
      %v9029 = vpop.f32.mrf.mxu0
      %9030 = vmatprep.mubr.f32.mxu0 0.0
      %9031 = vmatmul.mubr.f32.gmra.mxu0 %v8903
      %v9032 = vpop.f32.mrf.mxu0
      %v9033 = vadd.f32 0.0, %v9032
      %v9034 = vpop.f32.mrf.mxu0
      %9035 = vmatprep.mubr.f32.mxu0 0.0
      %9036 = vmatmul.mubr.f32.gmra.mxu0 %v8906
      %v9037 = vpop.f32.mrf.mxu0
      %v9038 = vadd.f32 0.0, %v9037
      %v9039 = vpop.f32.mrf.mxu0
      %9040 = vmatprep.mubr.f32.mxu0 0.0
      %9041 = vmatmul.mubr.f32.gmra.mxu0 %v8909
      %v9042 = vpop.f32.mrf.mxu0
      %v9043 = vadd.f32 0.0, %v9042
      %v9044 = vpop.f32.mrf.mxu0
      %9045 = vmatprep.mubr.f32.mxu0 0.0
      %9046 = vmatmul.mubr.f32.gmra.mxu0 %v8912
      %v9047 = vpop.f32.mrf.mxu0
      %v9048 = vadd.f32 0.0, %v9047
      %v9049 = vpop.f32.mrf.mxu0
      %9050 = vmatprep.mubr.f32.mxu0 0.0
      %9051 = vmatmul.mubr.f32.gmra.mxu0 %v8915
      %v9052 = vpop.f32.mrf.mxu0
      %v9053 = vadd.f32 0.0, %v9052
      %v9054 = vpop.f32.mrf.mxu0
      %9055 = vmatprep.mubr.f32.mxu0 0.0
      %9056 = vmatmul.mubr.f32.gmra.mxu0 %v8918
      %v9057 = vpop.f32.mrf.mxu0
      %v9058 = vadd.f32 0.0, %v9057
      %v9059 = vpop.f32.mrf.mxu0
      %9060 = vmatprep.mubr.f32.mxu0 0.0
      %9061 = vmatmul.mubr.f32.gmra.mxu0 %v8921
      %v9062 = vpop.f32.mrf.mxu0
      %v9063 = vadd.f32 0.0, %v9062
      %v9064 = vpop.f32.mrf.mxu0
      %9065 = vmatprep.mubr.f32.mxu0 0.0
      %9066 = vmatmul.mubr.f32.gmra.mxu0 %v8924
      %v9067 = vpop.f32.mrf.mxu0
      %v9068 = vadd.f32 0.0, %v9067
      %v9069 = vpop.f32.mrf.mxu0
      %9070 = vmatprep.mubr.f32.mxu0 0.0
      %9071 = vmatmul.mubr.f32.gmra.mxu0 %v8927
      %v9072 = vpop.f32.mrf.mxu0
      %v9073 = vadd.f32 0.0, %v9072
      %v9074 = vpop.f32.mrf.mxu0
      %9075 = vmatprep.mubr.f32.mxu0 0.0
      %9076 = vmatmul.mubr.f32.gmra.mxu0 %v8930
      %v9077 = vpop.f32.mrf.mxu0
      %v9078 = vadd.f32 0.0, %v9077
      %v9079 = vpop.f32.mrf.mxu0
      %9080 = vmatprep.mubr.f32.mxu0 0.0
      %9081 = vmatmul.mubr.f32.gmra.mxu0 %v8933
      %v9082 = vpop.f32.mrf.mxu0
      %v9083 = vadd.f32 0.0, %v9082
      %v9084 = vpop.f32.mrf.mxu0
      %9085 = vmatprep.mubr.f32.mxu0 0.0
      %9086 = vmatmul.mubr.f32.gmra.mxu0 %v8936
      %v9087 = vpop.f32.mrf.mxu0
      %v9088 = vadd.f32 0.0, %v9087
      %v9089 = vpop.f32.mrf.mxu0
      %9090 = vdwg.mxu0
      %v9091 = vadd.f32 %v8780, %v9008
      %v9092 = vadd.f32 %v8785, %v9013
      %v9093 = vadd.f32 %v8790, %v9018
      %v9094 = vadd.f32 %v8795, %v9023
      %v9095 = vadd.f32 %v8800, %v9028
      %v9096 = vadd.f32 %v8805, %v9033
      %v9097 = vadd.f32 %v8810, %v9038
      %v9098 = vadd.f32 %v8815, %v9043
      %v9099 = vadd.f32 %v8820, %v9048
      %v9100 = vadd.f32 %v8825, %v9053
      %v9101 = vadd.f32 %v8830, %v9058
      %v9102 = vadd.f32 %v8835, %v9063
      %v9103 = vadd.f32 %v8840, %v9068
      %v9104 = vadd.f32 %v8845, %v9073
      %v9105 = vadd.f32 %v8850, %v9078
      %v9106 = vadd.f32 %v8855, %v9083
      %v9107 = vadd.f32 %v8860, %v9088
      %v9108 = vld [vmem:[#allocation3 + $0x11a] sm:$0xff]
      %v9109 = vld [vmem:[#allocation3 + $0x122] sm:$0xff]
      %v9110 = vld [vmem:[#allocation3 + $0x12a] sm:$0xff]
      %v9111 = vld [vmem:[#allocation3 + $0x132] sm:$0xff]
      %v9112 = vld [vmem:[#allocation3 + $0x13a] sm:$0xff]
      %v9113 = vld [vmem:[#allocation3 + $0x142] sm:$0xff]
      %v9114 = vld [vmem:[#allocation3 + $0x14a] sm:$0xff]
      %v9115 = vld [vmem:[#allocation3 + $0x152] sm:$0xff]
      %v9116 = vld [vmem:[#allocation3 + $0x15a] sm:$0xff]
      %v9117 = vld [vmem:[#allocation3 + $0x162] sm:$0xff]
      %v9118 = vld [vmem:[#allocation3 + $0x16a] sm:$0xff]
      %v9119 = vld [vmem:[#allocation3 + $0x172] sm:$0xff]
      %v9120 = vld [vmem:[#allocation3 + $0x17a] sm:$0xff]
      %v9121 = vld [vmem:[#allocation3 + $0x182] sm:$0xff]
      %v9122 = vld [vmem:[#allocation3 + $0x18a] sm:$0xff]
      %v9123 = vld [vmem:[#allocation3 + $0x192] sm:$0xff]
      %v9124 = vld [vmem:[#allocation3 + $0x19a] sm:$0xff]
      %v9125 = vld [vmem:[%s6795] sm:$0xff]
      %v9126 = vld [vmem:[%s6795 + $0x8] sm:$0xff]
      %v9127 = vld [vmem:[%s6795 + $0x10] sm:$0xff]
      %v9128 = vld [vmem:[%s6795 + $0x18] sm:$0xff]
      %v9129 = vld [vmem:[%s6795 + $0x20] sm:$0xff]
      %v9130 = vld [vmem:[%s6795 + $0x28] sm:$0xff]
      %v9131 = vld [vmem:[%s6795 + $0x30] sm:$0x3]
      %v9133 = vsel %vm522, %v9108, 0
      %v9136 = vsel %vm522, %v9109, 0
      %v9139 = vsel %vm522, %v9110, 0
      %v9142 = vsel %vm522, %v9111, 0
      %v9145 = vsel %vm522, %v9112, 0
      %v9148 = vsel %vm522, %v9113, 0
      %v9151 = vsel %vm522, %v9114, 0
      %v9154 = vsel %vm522, %v9115, 0
      %v9157 = vsel %vm522, %v9116, 0
      %v9160 = vsel %vm522, %v9117, 0
      %v9163 = vsel %vm522, %v9118, 0
      %v9166 = vsel %vm522, %v9119, 0
      %v9169 = vsel %vm522, %v9120, 0
      %v9172 = vsel %vm522, %v9121, 0
      %v9175 = vsel %vm522, %v9122, 0
      %v9178 = vsel %vm522, %v9123, 0
      %v9181 = vsel %vm522, %v9124, 0
      %v9184 = vsel %vm6150, %v9131, 0
      %9186 = vmatprep.subr.mxu0 0.0
      %9187 = vmatpush1.msra.mxu0 0.0
      %9188 = vmatprep.subr.mxu0 0.0
      %9189 = vmatpush1.msra.mxu0 0.0
      %9190 = vmatprep.subr.mxu0 0.0
      %9191 = vmatpush1.msra.mxu0 0.0
      %9192 = vmatprep.subr.mxu0 0.0
      %9193 = vmatpush1.msra.mxu0 0.0
      %9194 = vmatprep.subr.mxu0 0.0
      %9195 = vmatpush1.msra.mxu0 0.0
      %9196 = vmatprep.subr.mxu0 0.0
      %9197 = vmatpush1.msra.mxu0 0.0
      %9198 = vmatprep.subr.mxu0 0.0
      %9199 = vmatpush1.msra.mxu0 0.0
      %9200 = vmatprep.subr.mxu0 0.0
      %9201 = vmatpush1.msra.mxu0 0.0
      %9202 = vmatprep.subr.mxu0 0.0
      %9203 = vmatpush1.msra.mxu0 0.0
      %9204 = vmatprep.subr.mxu0 0.0
      %9205 = vmatpush1.msra.mxu0 %v9184
      %9206 = vmatprep.subr.mxu0 0.0
      %9207 = vmatpush1.msra.mxu0 %v9130
      %9208 = vmatprep.subr.mxu0 0.0
      %9209 = vmatpush1.msra.mxu0 %v9129
      %9210 = vmatprep.subr.mxu0 0.0
      %9211 = vmatpush1.msra.mxu0 %v9128
      %9212 = vmatprep.subr.mxu0 0.0
      %9213 = vmatpush1.msra.mxu0 %v9127
      %9214 = vmatprep.subr.mxu0 0.0
      %9215 = vmatpush1.msra.mxu0 %v9126
      %9216 = vmatprep.subr.mxu0 0.0
      %9217 = vmatpush1.msra.mxu0 %v9125
      %9218 = vmatprep.subr.mxu0 0.0
      %9219 = vmatpush2.msra.mxu0 0.0
      %9220 = vmatprep.subr.mxu0 0.0
      %9221 = vmatpush2.msra.mxu0 0.0
      %9222 = vmatprep.subr.mxu0 0.0
      %9223 = vmatpush2.msra.mxu0 0.0
      %9224 = vmatprep.subr.mxu0 0.0
      %9225 = vmatpush2.msra.mxu0 0.0
      %9226 = vmatprep.subr.mxu0 0.0
      %9227 = vmatpush2.msra.mxu0 0.0
      %9228 = vmatprep.subr.mxu0 0.0
      %9229 = vmatpush2.msra.mxu0 0.0
      %9230 = vmatprep.subr.mxu0 0.0
      %9231 = vmatpush2.msra.mxu0 0.0
      %9232 = vmatprep.subr.mxu0 0.0
      %9233 = vmatpush2.msra.mxu0 0.0
      %9234 = vmatprep.subr.mxu0 0.0
      %9235 = vmatpush2.msra.mxu0 0.0
      %9236 = vmatprep.subr.mxu0 0.0
      %9237 = vmatpush2.msra.mxu0 0.0
      %9238 = vmatprep.subr.mxu0 0.0
      %9239 = vmatpush2.msra.mxu0 0.0
      %9240 = vmatprep.subr.mxu0 0.0
      %9241 = vmatpush2.msra.mxu0 0.0
      %9242 = vmatprep.subr.mxu0 0.0
      %9243 = vmatpush2.msra.mxu0 0.0
      %9244 = vmatprep.subr.mxu0 0.0
      %9245 = vmatpush2.msra.mxu0 0.0
      %9246 = vmatprep.subr.mxu0 0.0
      %9247 = vmatpush2.msra.mxu0 0.0
      %9248 = vmatprep.subr.mxu0 0.0
      %9249 = vmatpush2.msra.mxu0 0.0
      %9250 = vmatprep.mubr.f32.mxu0 0.0
      %9251 = vmatmul.mubr.f32.gmra.mxu0 %v9133
      %v9252 = vpop.f32.mrf.mxu0
      %v9253 = vadd.f32 0.0, %v9252
      %v9254 = vpop.f32.mrf.mxu0
      %9255 = vmatprep.mubr.f32.mxu0 0.0
      %9256 = vmatmul.mubr.f32.gmra.mxu0 %v9136
      %v9257 = vpop.f32.mrf.mxu0
      %v9258 = vadd.f32 0.0, %v9257
      %v9259 = vpop.f32.mrf.mxu0
      %9260 = vmatprep.mubr.f32.mxu0 0.0
      %9261 = vmatmul.mubr.f32.gmra.mxu0 %v9139
      %v9262 = vpop.f32.mrf.mxu0
      %v9263 = vadd.f32 0.0, %v9262
      %v9264 = vpop.f32.mrf.mxu0
      %9265 = vmatprep.mubr.f32.mxu0 0.0
      %9266 = vmatmul.mubr.f32.gmra.mxu0 %v9142
      %v9267 = vpop.f32.mrf.mxu0
      %v9268 = vadd.f32 0.0, %v9267
      %v9269 = vpop.f32.mrf.mxu0
      %9270 = vmatprep.mubr.f32.mxu0 0.0
      %9271 = vmatmul.mubr.f32.gmra.mxu0 %v9145
      %v9272 = vpop.f32.mrf.mxu0
      %v9273 = vadd.f32 0.0, %v9272
      %v9274 = vpop.f32.mrf.mxu0
      %9275 = vmatprep.mubr.f32.mxu0 0.0
      %9276 = vmatmul.mubr.f32.gmra.mxu0 %v9148
      %v9277 = vpop.f32.mrf.mxu0
      %v9278 = vadd.f32 0.0, %v9277
      %v9279 = vpop.f32.mrf.mxu0
      %9280 = vmatprep.mubr.f32.mxu0 0.0
      %9281 = vmatmul.mubr.f32.gmra.mxu0 %v9151
      %v9282 = vpop.f32.mrf.mxu0
      %v9283 = vadd.f32 0.0, %v9282
      %v9284 = vpop.f32.mrf.mxu0
      %9285 = vmatprep.mubr.f32.mxu0 0.0
      %9286 = vmatmul.mubr.f32.gmra.mxu0 %v9154
      %v9287 = vpop.f32.mrf.mxu0
      %v9288 = vadd.f32 0.0, %v9287
      %v9289 = vpop.f32.mrf.mxu0
      %9290 = vmatprep.mubr.f32.mxu0 0.0
      %9291 = vmatmul.mubr.f32.gmra.mxu0 %v9157
      %v9292 = vpop.f32.mrf.mxu0
      %v9293 = vadd.f32 0.0, %v9292
      %v9294 = vpop.f32.mrf.mxu0
      %9295 = vmatprep.mubr.f32.mxu0 0.0
      %9296 = vmatmul.mubr.f32.gmra.mxu0 %v9160
      %v9297 = vpop.f32.mrf.mxu0
      %v9298 = vadd.f32 0.0, %v9297
      %v9299 = vpop.f32.mrf.mxu0
      %9300 = vmatprep.mubr.f32.mxu0 0.0
      %9301 = vmatmul.mubr.f32.gmra.mxu0 %v9163
      %v9302 = vpop.f32.mrf.mxu0
      %v9303 = vadd.f32 0.0, %v9302
      %v9304 = vpop.f32.mrf.mxu0
      %9305 = vmatprep.mubr.f32.mxu0 0.0
      %9306 = vmatmul.mubr.f32.gmra.mxu0 %v9166
      %v9307 = vpop.f32.mrf.mxu0
      %v9308 = vadd.f32 0.0, %v9307
      %v9309 = vpop.f32.mrf.mxu0
      %9310 = vmatprep.mubr.f32.mxu0 0.0
      %9311 = vmatmul.mubr.f32.gmra.mxu0 %v9169
      %v9312 = vpop.f32.mrf.mxu0
      %v9313 = vadd.f32 0.0, %v9312
      %v9314 = vpop.f32.mrf.mxu0
      %9315 = vmatprep.mubr.f32.mxu0 0.0
      %9316 = vmatmul.mubr.f32.gmra.mxu0 %v9172
      %v9317 = vpop.f32.mrf.mxu0
      %v9318 = vadd.f32 0.0, %v9317
      %v9319 = vpop.f32.mrf.mxu0
      %9320 = vmatprep.mubr.f32.mxu0 0.0
      %9321 = vmatmul.mubr.f32.gmra.mxu0 %v9175
      %v9322 = vpop.f32.mrf.mxu0
      %v9323 = vadd.f32 0.0, %v9322
      %v9324 = vpop.f32.mrf.mxu0
      %9325 = vmatprep.mubr.f32.mxu0 0.0
      %9326 = vmatmul.mubr.f32.gmra.mxu0 %v9178
      %v9327 = vpop.f32.mrf.mxu0
      %v9328 = vadd.f32 0.0, %v9327
      %v9329 = vpop.f32.mrf.mxu0
      %9330 = vmatprep.mubr.f32.mxu0 0.0
      %9331 = vmatmul.mubr.f32.gmra.mxu0 %v9181
      %v9332 = vpop.f32.mrf.mxu0
      %v9333 = vadd.f32 0.0, %v9332
      %v9334 = vpop.f32.mrf.mxu0
      %9335 = vdwg.mxu0
      %v9336 = vadd.f32 %v9091, %v9253
      %v9337 = vadd.f32 %v9092, %v9258
      %v9338 = vadd.f32 %v9093, %v9263
      %v9339 = vadd.f32 %v9094, %v9268
      %v9340 = vadd.f32 %v9095, %v9273
      %v9341 = vadd.f32 %v9096, %v9278
      %v9342 = vadd.f32 %v9097, %v9283
      %v9343 = vadd.f32 %v9098, %v9288
      %v9344 = vadd.f32 %v9099, %v9293
      %v9345 = vadd.f32 %v9100, %v9298
      %v9346 = vadd.f32 %v9101, %v9303
      %v9347 = vadd.f32 %v9102, %v9308
      %v9348 = vadd.f32 %v9103, %v9313
      %v9349 = vadd.f32 %v9104, %v9318
      %v9350 = vadd.f32 %v9105, %v9323
      %v9351 = vadd.f32 %v9106, %v9328
      %v9352 = vadd.f32 %v9107, %v9333
      %v9353 = vld [vmem:[#allocation3 + $0x11b] sm:$0xff]
      %v9354 = vld [vmem:[#allocation3 + $0x123] sm:$0xff]
      %v9355 = vld [vmem:[#allocation3 + $0x12b] sm:$0xff]
      %v9356 = vld [vmem:[#allocation3 + $0x133] sm:$0xff]
      %v9357 = vld [vmem:[#allocation3 + $0x13b] sm:$0xff]
      %v9358 = vld [vmem:[#allocation3 + $0x143] sm:$0xff]
      %v9359 = vld [vmem:[#allocation3 + $0x14b] sm:$0xff]
      %v9360 = vld [vmem:[#allocation3 + $0x153] sm:$0xff]
      %v9361 = vld [vmem:[#allocation3 + $0x15b] sm:$0xff]
      %v9362 = vld [vmem:[#allocation3 + $0x163] sm:$0xff]
      %v9363 = vld [vmem:[#allocation3 + $0x16b] sm:$0xff]
      %v9364 = vld [vmem:[#allocation3 + $0x173] sm:$0xff]
      %v9365 = vld [vmem:[#allocation3 + $0x17b] sm:$0xff]
      %v9366 = vld [vmem:[#allocation3 + $0x183] sm:$0xff]
      %v9367 = vld [vmem:[#allocation3 + $0x18b] sm:$0xff]
      %v9368 = vld [vmem:[#allocation3 + $0x193] sm:$0xff]
      %v9369 = vld [vmem:[#allocation3 + $0x19b] sm:$0xff]
      %v9370 = vld [vmem:[%s7051] sm:$0xff]
      %v9371 = vld [vmem:[%s7051 + $0x8] sm:$0xff]
      %v9372 = vld [vmem:[%s7051 + $0x10] sm:$0xff]
      %v9373 = vld [vmem:[%s7051 + $0x18] sm:$0xff]
      %v9374 = vld [vmem:[%s7051 + $0x20] sm:$0xff]
      %v9375 = vld [vmem:[%s7051 + $0x28] sm:$0xff]
      %v9376 = vld [vmem:[%s7051 + $0x30] sm:$0x3]
      %v9378 = vsel %vm522, %v9353, 0
      %v9381 = vsel %vm522, %v9354, 0
      %v9384 = vsel %vm522, %v9355, 0
      %v9387 = vsel %vm522, %v9356, 0
      %v9390 = vsel %vm522, %v9357, 0
      %v9393 = vsel %vm522, %v9358, 0
      %v9396 = vsel %vm522, %v9359, 0
      %v9399 = vsel %vm522, %v9360, 0
      %v9402 = vsel %vm522, %v9361, 0
      %v9405 = vsel %vm522, %v9362, 0
      %v9408 = vsel %vm522, %v9363, 0
      %v9411 = vsel %vm522, %v9364, 0
      %v9414 = vsel %vm522, %v9365, 0
      %v9417 = vsel %vm522, %v9366, 0
      %v9420 = vsel %vm522, %v9367, 0
      %v9423 = vsel %vm522, %v9368, 0
      %v9426 = vsel %vm522, %v9369, 0
      %v9429 = vsel %vm6150, %v9376, 0
      %9431 = vmatprep.subr.mxu0 0.0
      %9432 = vmatpush1.msra.mxu0 0.0
      %9433 = vmatprep.subr.mxu0 0.0
      %9434 = vmatpush1.msra.mxu0 0.0
      %9435 = vmatprep.subr.mxu0 0.0
      %9436 = vmatpush1.msra.mxu0 0.0
      %9437 = vmatprep.subr.mxu0 0.0
      %9438 = vmatpush1.msra.mxu0 0.0
      %9439 = vmatprep.subr.mxu0 0.0
      %9440 = vmatpush1.msra.mxu0 0.0
      %9441 = vmatprep.subr.mxu0 0.0
      %9442 = vmatpush1.msra.mxu0 0.0
      %9443 = vmatprep.subr.mxu0 0.0
      %9444 = vmatpush1.msra.mxu0 0.0
      %9445 = vmatprep.subr.mxu0 0.0
      %9446 = vmatpush1.msra.mxu0 0.0
      %9447 = vmatprep.subr.mxu0 0.0
      %9448 = vmatpush1.msra.mxu0 0.0
      %9449 = vmatprep.subr.mxu0 0.0
      %9450 = vmatpush1.msra.mxu0 %v9429
      %9451 = vmatprep.subr.mxu0 0.0
      %9452 = vmatpush1.msra.mxu0 %v9375
      %9453 = vmatprep.subr.mxu0 0.0
      %9454 = vmatpush1.msra.mxu0 %v9374
      %9455 = vmatprep.subr.mxu0 0.0
      %9456 = vmatpush1.msra.mxu0 %v9373
      %9457 = vmatprep.subr.mxu0 0.0
      %9458 = vmatpush1.msra.mxu0 %v9372
      %9459 = vmatprep.subr.mxu0 0.0
      %9460 = vmatpush1.msra.mxu0 %v9371
      %9461 = vmatprep.subr.mxu0 0.0
      %9462 = vmatpush1.msra.mxu0 %v9370
      %9463 = vmatprep.subr.mxu0 0.0
      %9464 = vmatpush2.msra.mxu0 0.0
      %9465 = vmatprep.subr.mxu0 0.0
      %9466 = vmatpush2.msra.mxu0 0.0
      %9467 = vmatprep.subr.mxu0 0.0
      %9468 = vmatpush2.msra.mxu0 0.0
      %9469 = vmatprep.subr.mxu0 0.0
      %9470 = vmatpush2.msra.mxu0 0.0
      %9471 = vmatprep.subr.mxu0 0.0
      %9472 = vmatpush2.msra.mxu0 0.0
      %9473 = vmatprep.subr.mxu0 0.0
      %9474 = vmatpush2.msra.mxu0 0.0
      %9475 = vmatprep.subr.mxu0 0.0
      %9476 = vmatpush2.msra.mxu0 0.0
      %9477 = vmatprep.subr.mxu0 0.0
      %9478 = vmatpush2.msra.mxu0 0.0
      %9479 = vmatprep.subr.mxu0 0.0
      %9480 = vmatpush2.msra.mxu0 0.0
      %9481 = vmatprep.subr.mxu0 0.0
      %9482 = vmatpush2.msra.mxu0 0.0
      %9483 = vmatprep.subr.mxu0 0.0
      %9484 = vmatpush2.msra.mxu0 0.0
      %9485 = vmatprep.subr.mxu0 0.0
      %9486 = vmatpush2.msra.mxu0 0.0
      %9487 = vmatprep.subr.mxu0 0.0
      %9488 = vmatpush2.msra.mxu0 0.0
      %9489 = vmatprep.subr.mxu0 0.0
      %9490 = vmatpush2.msra.mxu0 0.0
      %9491 = vmatprep.subr.mxu0 0.0
      %9492 = vmatpush2.msra.mxu0 0.0
      %9493 = vmatprep.subr.mxu0 0.0
      %9494 = vmatpush2.msra.mxu0 0.0
      %9495 = vmatprep.mubr.f32.mxu0 0.0
      %9496 = vmatmul.mubr.f32.gmra.mxu0 %v9378
      %v9497 = vpop.f32.mrf.mxu0
      %v9498 = vadd.f32 0.0, %v9497
      %v9499 = vpop.f32.mrf.mxu0
      %9500 = vmatprep.mubr.f32.mxu0 0.0
      %9501 = vmatmul.mubr.f32.gmra.mxu0 %v9381
      %v9502 = vpop.f32.mrf.mxu0
      %v9503 = vadd.f32 0.0, %v9502
      %v9504 = vpop.f32.mrf.mxu0
      %9505 = vmatprep.mubr.f32.mxu0 0.0
      %9506 = vmatmul.mubr.f32.gmra.mxu0 %v9384
      %v9507 = vpop.f32.mrf.mxu0
      %v9508 = vadd.f32 0.0, %v9507
      %v9509 = vpop.f32.mrf.mxu0
      %9510 = vmatprep.mubr.f32.mxu0 0.0
      %9511 = vmatmul.mubr.f32.gmra.mxu0 %v9387
      %v9512 = vpop.f32.mrf.mxu0
      %v9513 = vadd.f32 0.0, %v9512
      %v9514 = vpop.f32.mrf.mxu0
      %9515 = vmatprep.mubr.f32.mxu0 0.0
      %9516 = vmatmul.mubr.f32.gmra.mxu0 %v9390
      %v9517 = vpop.f32.mrf.mxu0
      %v9518 = vadd.f32 0.0, %v9517
      %v9519 = vpop.f32.mrf.mxu0
      %9520 = vmatprep.mubr.f32.mxu0 0.0
      %9521 = vmatmul.mubr.f32.gmra.mxu0 %v9393
      %v9522 = vpop.f32.mrf.mxu0
      %v9523 = vadd.f32 0.0, %v9522
      %v9524 = vpop.f32.mrf.mxu0
      %9525 = vmatprep.mubr.f32.mxu0 0.0
      %9526 = vmatmul.mubr.f32.gmra.mxu0 %v9396
      %v9527 = vpop.f32.mrf.mxu0
      %v9528 = vadd.f32 0.0, %v9527
      %v9529 = vpop.f32.mrf.mxu0
      %9530 = vmatprep.mubr.f32.mxu0 0.0
      %9531 = vmatmul.mubr.f32.gmra.mxu0 %v9399
      %v9532 = vpop.f32.mrf.mxu0
      %v9533 = vadd.f32 0.0, %v9532
      %v9534 = vpop.f32.mrf.mxu0
      %9535 = vmatprep.mubr.f32.mxu0 0.0
      %9536 = vmatmul.mubr.f32.gmra.mxu0 %v9402
      %v9537 = vpop.f32.mrf.mxu0
      %v9538 = vadd.f32 0.0, %v9537
      %v9539 = vpop.f32.mrf.mxu0
      %9540 = vmatprep.mubr.f32.mxu0 0.0
      %9541 = vmatmul.mubr.f32.gmra.mxu0 %v9405
      %v9542 = vpop.f32.mrf.mxu0
      %v9543 = vadd.f32 0.0, %v9542
      %v9544 = vpop.f32.mrf.mxu0
      %9545 = vmatprep.mubr.f32.mxu0 0.0
      %9546 = vmatmul.mubr.f32.gmra.mxu0 %v9408
      %v9547 = vpop.f32.mrf.mxu0
      %v9548 = vadd.f32 0.0, %v9547
      %v9549 = vpop.f32.mrf.mxu0
      %9550 = vmatprep.mubr.f32.mxu0 0.0
      %9551 = vmatmul.mubr.f32.gmra.mxu0 %v9411
      %v9552 = vpop.f32.mrf.mxu0
      %v9553 = vadd.f32 0.0, %v9552
      %v9554 = vpop.f32.mrf.mxu0
      %9555 = vmatprep.mubr.f32.mxu0 0.0
      %9556 = vmatmul.mubr.f32.gmra.mxu0 %v9414
      %v9557 = vpop.f32.mrf.mxu0
      %v9558 = vadd.f32 0.0, %v9557
      %v9559 = vpop.f32.mrf.mxu0
      %9560 = vmatprep.mubr.f32.mxu0 0.0
      %9561 = vmatmul.mubr.f32.gmra.mxu0 %v9417
      %v9562 = vpop.f32.mrf.mxu0
      %v9563 = vadd.f32 0.0, %v9562
      %v9564 = vpop.f32.mrf.mxu0
      %9565 = vmatprep.mubr.f32.mxu0 0.0
      %9566 = vmatmul.mubr.f32.gmra.mxu0 %v9420
      %v9567 = vpop.f32.mrf.mxu0
      %v9568 = vadd.f32 0.0, %v9567
      %v9569 = vpop.f32.mrf.mxu0
      %9570 = vmatprep.mubr.f32.mxu0 0.0
      %9571 = vmatmul.mubr.f32.gmra.mxu0 %v9423
      %v9572 = vpop.f32.mrf.mxu0
      %v9573 = vadd.f32 0.0, %v9572
      %v9574 = vpop.f32.mrf.mxu0
      %9575 = vmatprep.mubr.f32.mxu0 0.0
      %9576 = vmatmul.mubr.f32.gmra.mxu0 %v9426
      %v9577 = vpop.f32.mrf.mxu0
      %v9578 = vadd.f32 0.0, %v9577
      %v9579 = vpop.f32.mrf.mxu0
      %9580 = vdwg.mxu0
      %v9581 = vadd.f32 %v9336, %v9498
      %v9582 = vadd.f32 %v9337, %v9503
      %v9583 = vadd.f32 %v9338, %v9508
      %v9584 = vadd.f32 %v9339, %v9513
      %v9585 = vadd.f32 %v9340, %v9518
      %v9586 = vadd.f32 %v9341, %v9523
      %v9587 = vadd.f32 %v9342, %v9528
      %v9588 = vadd.f32 %v9343, %v9533
      %v9589 = vadd.f32 %v9344, %v9538
      %v9590 = vadd.f32 %v9345, %v9543
      %v9591 = vadd.f32 %v9346, %v9548
      %v9592 = vadd.f32 %v9347, %v9553
      %v9593 = vadd.f32 %v9348, %v9558
      %v9594 = vadd.f32 %v9349, %v9563
      %v9595 = vadd.f32 %v9350, %v9568
      %v9596 = vadd.f32 %v9351, %v9573
      %v9597 = vadd.f32 %v9352, %v9578
      %v9598 = vld [vmem:[#allocation3 + $0x11c] sm:$0xff]
      %v9599 = vld [vmem:[#allocation3 + $0x124] sm:$0xff]
      %v9600 = vld [vmem:[#allocation3 + $0x12c] sm:$0xff]
      %v9601 = vld [vmem:[#allocation3 + $0x134] sm:$0xff]
      %v9602 = vld [vmem:[#allocation3 + $0x13c] sm:$0xff]
      %v9603 = vld [vmem:[#allocation3 + $0x144] sm:$0xff]
      %v9604 = vld [vmem:[#allocation3 + $0x14c] sm:$0xff]
      %v9605 = vld [vmem:[#allocation3 + $0x154] sm:$0xff]
      %v9606 = vld [vmem:[#allocation3 + $0x15c] sm:$0xff]
      %v9607 = vld [vmem:[#allocation3 + $0x164] sm:$0xff]
      %v9608 = vld [vmem:[#allocation3 + $0x16c] sm:$0xff]
      %v9609 = vld [vmem:[#allocation3 + $0x174] sm:$0xff]
      %v9610 = vld [vmem:[#allocation3 + $0x17c] sm:$0xff]
      %v9611 = vld [vmem:[#allocation3 + $0x184] sm:$0xff]
      %v9612 = vld [vmem:[#allocation3 + $0x18c] sm:$0xff]
      %v9613 = vld [vmem:[#allocation3 + $0x194] sm:$0xff]
      %v9614 = vld [vmem:[#allocation3 + $0x19c] sm:$0xff]
      %v9615 = vld [vmem:[%s7307] sm:$0xff]
      %v9616 = vld [vmem:[%s7307 + $0x8] sm:$0xff]
      %v9617 = vld [vmem:[%s7307 + $0x10] sm:$0xff]
      %v9618 = vld [vmem:[%s7307 + $0x18] sm:$0xff]
      %v9619 = vld [vmem:[%s7307 + $0x20] sm:$0xff]
      %v9620 = vld [vmem:[%s7307 + $0x28] sm:$0xff]
      %v9621 = vld [vmem:[%s7307 + $0x30] sm:$0x3]
      %v9623 = vsel %vm522, %v9598, 0
      %v9626 = vsel %vm522, %v9599, 0
      %v9629 = vsel %vm522, %v9600, 0
      %v9632 = vsel %vm522, %v9601, 0
      %v9635 = vsel %vm522, %v9602, 0
      %v9638 = vsel %vm522, %v9603, 0
      %v9641 = vsel %vm522, %v9604, 0
      %v9644 = vsel %vm522, %v9605, 0
      %v9647 = vsel %vm522, %v9606, 0
      %v9650 = vsel %vm522, %v9607, 0
      %v9653 = vsel %vm522, %v9608, 0
      %v9656 = vsel %vm522, %v9609, 0
      %v9659 = vsel %vm522, %v9610, 0
      %v9662 = vsel %vm522, %v9611, 0
      %v9665 = vsel %vm522, %v9612, 0
      %v9668 = vsel %vm522, %v9613, 0
      %v9671 = vsel %vm522, %v9614, 0
      %v9674 = vsel %vm6150, %v9621, 0
      %9676 = vmatprep.subr.mxu0 0.0
      %9677 = vmatpush1.msra.mxu0 0.0
      %9678 = vmatprep.subr.mxu0 0.0
      %9679 = vmatpush1.msra.mxu0 0.0
      %9680 = vmatprep.subr.mxu0 0.0
      %9681 = vmatpush1.msra.mxu0 0.0
      %9682 = vmatprep.subr.mxu0 0.0
      %9683 = vmatpush1.msra.mxu0 0.0
      %9684 = vmatprep.subr.mxu0 0.0
      %9685 = vmatpush1.msra.mxu0 0.0
      %9686 = vmatprep.subr.mxu0 0.0
      %9687 = vmatpush1.msra.mxu0 0.0
      %9688 = vmatprep.subr.mxu0 0.0
      %9689 = vmatpush1.msra.mxu0 0.0
      %9690 = vmatprep.subr.mxu0 0.0
      %9691 = vmatpush1.msra.mxu0 0.0
      %9692 = vmatprep.subr.mxu0 0.0
      %9693 = vmatpush1.msra.mxu0 0.0
      %9694 = vmatprep.subr.mxu0 0.0
      %9695 = vmatpush1.msra.mxu0 %v9674
      %9696 = vmatprep.subr.mxu0 0.0
      %9697 = vmatpush1.msra.mxu0 %v9620
      %9698 = vmatprep.subr.mxu0 0.0
      %9699 = vmatpush1.msra.mxu0 %v9619
      %9700 = vmatprep.subr.mxu0 0.0
      %9701 = vmatpush1.msra.mxu0 %v9618
      %9702 = vmatprep.subr.mxu0 0.0
      %9703 = vmatpush1.msra.mxu0 %v9617
      %9704 = vmatprep.subr.mxu0 0.0
      %9705 = vmatpush1.msra.mxu0 %v9616
      %9706 = vmatprep.subr.mxu0 0.0
      %9707 = vmatpush1.msra.mxu0 %v9615
      %9708 = vmatprep.subr.mxu0 0.0
      %9709 = vmatpush2.msra.mxu0 0.0
      %9710 = vmatprep.subr.mxu0 0.0
      %9711 = vmatpush2.msra.mxu0 0.0
      %9712 = vmatprep.subr.mxu0 0.0
      %9713 = vmatpush2.msra.mxu0 0.0
      %9714 = vmatprep.subr.mxu0 0.0
      %9715 = vmatpush2.msra.mxu0 0.0
      %9716 = vmatprep.subr.mxu0 0.0
      %9717 = vmatpush2.msra.mxu0 0.0
      %9718 = vmatprep.subr.mxu0 0.0
      %9719 = vmatpush2.msra.mxu0 0.0
      %9720 = vmatprep.subr.mxu0 0.0
      %9721 = vmatpush2.msra.mxu0 0.0
      %9722 = vmatprep.subr.mxu0 0.0
      %9723 = vmatpush2.msra.mxu0 0.0
      %9724 = vmatprep.subr.mxu0 0.0
      %9725 = vmatpush2.msra.mxu0 0.0
      %9726 = vmatprep.subr.mxu0 0.0
      %9727 = vmatpush2.msra.mxu0 0.0
      %9728 = vmatprep.subr.mxu0 0.0
      %9729 = vmatpush2.msra.mxu0 0.0
      %9730 = vmatprep.subr.mxu0 0.0
      %9731 = vmatpush2.msra.mxu0 0.0
      %9732 = vmatprep.subr.mxu0 0.0
      %9733 = vmatpush2.msra.mxu0 0.0
      %9734 = vmatprep.subr.mxu0 0.0
      %9735 = vmatpush2.msra.mxu0 0.0
      %9736 = vmatprep.subr.mxu0 0.0
      %9737 = vmatpush2.msra.mxu0 0.0
      %9738 = vmatprep.subr.mxu0 0.0
      %9739 = vmatpush2.msra.mxu0 0.0
      %9740 = vmatprep.mubr.f32.mxu0 0.0
      %9741 = vmatmul.mubr.f32.gmra.mxu0 %v9623
      %v9742 = vpop.f32.mrf.mxu0
      %v9743 = vadd.f32 0.0, %v9742
      %v9744 = vpop.f32.mrf.mxu0
      %9745 = vmatprep.mubr.f32.mxu0 0.0
      %9746 = vmatmul.mubr.f32.gmra.mxu0 %v9626
      %v9747 = vpop.f32.mrf.mxu0
      %v9748 = vadd.f32 0.0, %v9747
      %v9749 = vpop.f32.mrf.mxu0
      %9750 = vmatprep.mubr.f32.mxu0 0.0
      %9751 = vmatmul.mubr.f32.gmra.mxu0 %v9629
      %v9752 = vpop.f32.mrf.mxu0
      %v9753 = vadd.f32 0.0, %v9752
      %v9754 = vpop.f32.mrf.mxu0
      %9755 = vmatprep.mubr.f32.mxu0 0.0
      %9756 = vmatmul.mubr.f32.gmra.mxu0 %v9632
      %v9757 = vpop.f32.mrf.mxu0
      %v9758 = vadd.f32 0.0, %v9757
      %v9759 = vpop.f32.mrf.mxu0
      %9760 = vmatprep.mubr.f32.mxu0 0.0
      %9761 = vmatmul.mubr.f32.gmra.mxu0 %v9635
      %v9762 = vpop.f32.mrf.mxu0
      %v9763 = vadd.f32 0.0, %v9762
      %v9764 = vpop.f32.mrf.mxu0
      %9765 = vmatprep.mubr.f32.mxu0 0.0
      %9766 = vmatmul.mubr.f32.gmra.mxu0 %v9638
      %v9767 = vpop.f32.mrf.mxu0
      %v9768 = vadd.f32 0.0, %v9767
      %v9769 = vpop.f32.mrf.mxu0
      %9770 = vmatprep.mubr.f32.mxu0 0.0
      %9771 = vmatmul.mubr.f32.gmra.mxu0 %v9641
      %v9772 = vpop.f32.mrf.mxu0
      %v9773 = vadd.f32 0.0, %v9772
      %v9774 = vpop.f32.mrf.mxu0
      %9775 = vmatprep.mubr.f32.mxu0 0.0
      %9776 = vmatmul.mubr.f32.gmra.mxu0 %v9644
      %v9777 = vpop.f32.mrf.mxu0
      %v9778 = vadd.f32 0.0, %v9777
      %v9779 = vpop.f32.mrf.mxu0
      %9780 = vmatprep.mubr.f32.mxu0 0.0
      %9781 = vmatmul.mubr.f32.gmra.mxu0 %v9647
      %v9782 = vpop.f32.mrf.mxu0
      %v9783 = vadd.f32 0.0, %v9782
      %v9784 = vpop.f32.mrf.mxu0
      %9785 = vmatprep.mubr.f32.mxu0 0.0
      %9786 = vmatmul.mubr.f32.gmra.mxu0 %v9650
      %v9787 = vpop.f32.mrf.mxu0
      %v9788 = vadd.f32 0.0, %v9787
      %v9789 = vpop.f32.mrf.mxu0
      %9790 = vmatprep.mubr.f32.mxu0 0.0
      %9791 = vmatmul.mubr.f32.gmra.mxu0 %v9653
      %v9792 = vpop.f32.mrf.mxu0
      %v9793 = vadd.f32 0.0, %v9792
      %v9794 = vpop.f32.mrf.mxu0
      %9795 = vmatprep.mubr.f32.mxu0 0.0
      %9796 = vmatmul.mubr.f32.gmra.mxu0 %v9656
      %v9797 = vpop.f32.mrf.mxu0
      %v9798 = vadd.f32 0.0, %v9797
      %v9799 = vpop.f32.mrf.mxu0
      %9800 = vmatprep.mubr.f32.mxu0 0.0
      %9801 = vmatmul.mubr.f32.gmra.mxu0 %v9659
      %v9802 = vpop.f32.mrf.mxu0
      %v9803 = vadd.f32 0.0, %v9802
      %v9804 = vpop.f32.mrf.mxu0
      %9805 = vmatprep.mubr.f32.mxu0 0.0
      %9806 = vmatmul.mubr.f32.gmra.mxu0 %v9662
      %v9807 = vpop.f32.mrf.mxu0
      %v9808 = vadd.f32 0.0, %v9807
      %v9809 = vpop.f32.mrf.mxu0
      %9810 = vmatprep.mubr.f32.mxu0 0.0
      %9811 = vmatmul.mubr.f32.gmra.mxu0 %v9665
      %v9812 = vpop.f32.mrf.mxu0
      %v9813 = vadd.f32 0.0, %v9812
      %v9814 = vpop.f32.mrf.mxu0
      %9815 = vmatprep.mubr.f32.mxu0 0.0
      %9816 = vmatmul.mubr.f32.gmra.mxu0 %v9668
      %v9817 = vpop.f32.mrf.mxu0
      %v9818 = vadd.f32 0.0, %v9817
      %v9819 = vpop.f32.mrf.mxu0
      %9820 = vmatprep.mubr.f32.mxu0 0.0
      %9821 = vmatmul.mubr.f32.gmra.mxu0 %v9671
      %v9822 = vpop.f32.mrf.mxu0
      %v9823 = vadd.f32 0.0, %v9822
      %v9824 = vpop.f32.mrf.mxu0
      %9825 = vdwg.mxu0
      %v9826 = vadd.f32 %v9581, %v9743
      %v9827 = vadd.f32 %v9582, %v9748
      %v9828 = vadd.f32 %v9583, %v9753
      %v9829 = vadd.f32 %v9584, %v9758
      %v9830 = vadd.f32 %v9585, %v9763
      %v9831 = vadd.f32 %v9586, %v9768
      %v9832 = vadd.f32 %v9587, %v9773
      %v9833 = vadd.f32 %v9588, %v9778
      %v9834 = vadd.f32 %v9589, %v9783
      %v9835 = vadd.f32 %v9590, %v9788
      %v9836 = vadd.f32 %v9591, %v9793
      %v9837 = vadd.f32 %v9592, %v9798
      %v9838 = vadd.f32 %v9593, %v9803
      %v9839 = vadd.f32 %v9594, %v9808
      %v9840 = vadd.f32 %v9595, %v9813
      %v9841 = vadd.f32 %v9596, %v9818
      %v9842 = vadd.f32 %v9597, %v9823
      %v9843 = vld [vmem:[#allocation3 + $0x1a4] sm:$0xff]
      %v9844 = vld [vmem:[#allocation3 + $0x1ac] sm:$0xff]
      %v9845 = vld [vmem:[#allocation3 + $0x1b4] sm:$0xff]
      %v9846 = vld [vmem:[#allocation3 + $0x1bc] sm:$0xff]
      %v9847 = vld [vmem:[#allocation3 + $0x1c4] sm:$0xff]
      %v9848 = vld [vmem:[#allocation3 + $0x1cc] sm:$0xff]
      %v9849 = vld [vmem:[#allocation3 + $0x1d4] sm:$0xff]
      %v9850 = vld [vmem:[#allocation3 + $0x1dc] sm:$0xff]
      %v9851 = vld [vmem:[#allocation3 + $0x1e4] sm:$0xff]
      %v9852 = vld [vmem:[#allocation3 + $0x1ec] sm:$0xff]
      %v9853 = vld [vmem:[#allocation3 + $0x1f4] sm:$0xff]
      %v9854 = vld [vmem:[#allocation3 + $0x1fc] sm:$0xff]
      %v9855 = vld [vmem:[#allocation3 + $0x204] sm:$0xff]
      %v9856 = vld [vmem:[#allocation3 + $0x20c] sm:$0xff]
      %v9857 = vld [vmem:[#allocation3 + $0x214] sm:$0xff]
      %v9858 = vld [vmem:[#allocation3 + $0x21c] sm:$0xff]
      %v9859 = vld [vmem:[#allocation3 + $0x224] sm:$0xff]
      %v9860 = vld [vmem:[%s7563] sm:$0xff]
      %v9861 = vld [vmem:[%s7563 + $0x8] sm:$0xff]
      %v9862 = vld [vmem:[%s7563 + $0x10] sm:$0xff]
      %v9863 = vld [vmem:[%s7563 + $0x18] sm:$0xff]
      %v9864 = vld [vmem:[%s7563 + $0x20] sm:$0xff]
      %v9865 = vld [vmem:[%s7563 + $0x28] sm:$0xff]
      %v9866 = vld [vmem:[%s7563 + $0x30] sm:$0x3]
      %v9868 = vsel %vm522, %v9843, 0
      %v9871 = vsel %vm522, %v9844, 0
      %v9874 = vsel %vm522, %v9845, 0
      %v9877 = vsel %vm522, %v9846, 0
      %v9880 = vsel %vm522, %v9847, 0
      %v9883 = vsel %vm522, %v9848, 0
      %v9886 = vsel %vm522, %v9849, 0
      %v9889 = vsel %vm522, %v9850, 0
      %v9892 = vsel %vm522, %v9851, 0
      %v9895 = vsel %vm522, %v9852, 0
      %v9898 = vsel %vm522, %v9853, 0
      %v9901 = vsel %vm522, %v9854, 0
      %v9904 = vsel %vm522, %v9855, 0
      %v9907 = vsel %vm522, %v9856, 0
      %v9910 = vsel %vm522, %v9857, 0
      %v9913 = vsel %vm522, %v9858, 0
      %v9916 = vsel %vm522, %v9859, 0
      %v9919 = vsel %vm6150, %v9866, 0
      %9921 = vmatprep.subr.mxu0 0.0
      %9922 = vmatpush1.msra.mxu0 0.0
      %9923 = vmatprep.subr.mxu0 0.0
      %9924 = vmatpush1.msra.mxu0 0.0
      %9925 = vmatprep.subr.mxu0 0.0
      %9926 = vmatpush1.msra.mxu0 0.0
      %9927 = vmatprep.subr.mxu0 0.0
      %9928 = vmatpush1.msra.mxu0 0.0
      %9929 = vmatprep.subr.mxu0 0.0
      %9930 = vmatpush1.msra.mxu0 0.0
      %9931 = vmatprep.subr.mxu0 0.0
      %9932 = vmatpush1.msra.mxu0 0.0
      %9933 = vmatprep.subr.mxu0 0.0
      %9934 = vmatpush1.msra.mxu0 0.0
      %9935 = vmatprep.subr.mxu0 0.0
      %9936 = vmatpush1.msra.mxu0 0.0
      %9937 = vmatprep.subr.mxu0 0.0
      %9938 = vmatpush1.msra.mxu0 0.0
      %9939 = vmatprep.subr.mxu0 0.0
      %9940 = vmatpush1.msra.mxu0 %v9919
      %9941 = vmatprep.subr.mxu0 0.0
      %9942 = vmatpush1.msra.mxu0 %v9865
      %9943 = vmatprep.subr.mxu0 0.0
      %9944 = vmatpush1.msra.mxu0 %v9864
      %9945 = vmatprep.subr.mxu0 0.0
      %9946 = vmatpush1.msra.mxu0 %v9863
      %9947 = vmatprep.subr.mxu0 0.0
      %9948 = vmatpush1.msra.mxu0 %v9862
      %9949 = vmatprep.subr.mxu0 0.0
      %9950 = vmatpush1.msra.mxu0 %v9861
      %9951 = vmatprep.subr.mxu0 0.0
      %9952 = vmatpush1.msra.mxu0 %v9860
      %9953 = vmatprep.subr.mxu0 0.0
      %9954 = vmatpush2.msra.mxu0 0.0
      %9955 = vmatprep.subr.mxu0 0.0
      %9956 = vmatpush2.msra.mxu0 0.0
      %9957 = vmatprep.subr.mxu0 0.0
      %9958 = vmatpush2.msra.mxu0 0.0
      %9959 = vmatprep.subr.mxu0 0.0
      %9960 = vmatpush2.msra.mxu0 0.0
      %9961 = vmatprep.subr.mxu0 0.0
      %9962 = vmatpush2.msra.mxu0 0.0
      %9963 = vmatprep.subr.mxu0 0.0
      %9964 = vmatpush2.msra.mxu0 0.0
      %9965 = vmatprep.subr.mxu0 0.0
      %9966 = vmatpush2.msra.mxu0 0.0
      %9967 = vmatprep.subr.mxu0 0.0
      %9968 = vmatpush2.msra.mxu0 0.0
      %9969 = vmatprep.subr.mxu0 0.0
      %9970 = vmatpush2.msra.mxu0 0.0
      %9971 = vmatprep.subr.mxu0 0.0
      %9972 = vmatpush2.msra.mxu0 0.0
      %9973 = vmatprep.subr.mxu0 0.0
      %9974 = vmatpush2.msra.mxu0 0.0
      %9975 = vmatprep.subr.mxu0 0.0
      %9976 = vmatpush2.msra.mxu0 0.0
      %9977 = vmatprep.subr.mxu0 0.0
      %9978 = vmatpush2.msra.mxu0 0.0
      %9979 = vmatprep.subr.mxu0 0.0
      %9980 = vmatpush2.msra.mxu0 0.0
      %9981 = vmatprep.subr.mxu0 0.0
      %9982 = vmatpush2.msra.mxu0 0.0
      %9983 = vmatprep.subr.mxu0 0.0
      %9984 = vmatpush2.msra.mxu0 0.0
      %9985 = vmatprep.mubr.f32.mxu0 0.0
      %9986 = vmatmul.mubr.f32.gmra.mxu0 %v9868
      %v9987 = vpop.f32.mrf.mxu0
      %v9988 = vadd.f32 0.0, %v9987
      %v9989 = vpop.f32.mrf.mxu0
      %9990 = vmatprep.mubr.f32.mxu0 0.0
      %9991 = vmatmul.mubr.f32.gmra.mxu0 %v9871
      %v9992 = vpop.f32.mrf.mxu0
      %v9993 = vadd.f32 0.0, %v9992
      %v9994 = vpop.f32.mrf.mxu0
      %9995 = vmatprep.mubr.f32.mxu0 0.0
      %9996 = vmatmul.mubr.f32.gmra.mxu0 %v9874
      %v9997 = vpop.f32.mrf.mxu0
      %v9998 = vadd.f32 0.0, %v9997
      %v9999 = vpop.f32.mrf.mxu0
      %10000 = vmatprep.mubr.f32.mxu0 0.0
      %10001 = vmatmul.mubr.f32.gmra.mxu0 %v9877
      %v10002 = vpop.f32.mrf.mxu0
      %v10003 = vadd.f32 0.0, %v10002
      %v10004 = vpop.f32.mrf.mxu0
      %10005 = vmatprep.mubr.f32.mxu0 0.0
      %10006 = vmatmul.mubr.f32.gmra.mxu0 %v9880
      %v10007 = vpop.f32.mrf.mxu0
      %v10008 = vadd.f32 0.0, %v10007
      %v10009 = vpop.f32.mrf.mxu0
      %10010 = vmatprep.mubr.f32.mxu0 0.0
      %10011 = vmatmul.mubr.f32.gmra.mxu0 %v9883
      %v10012 = vpop.f32.mrf.mxu0
      %v10013 = vadd.f32 0.0, %v10012
      %v10014 = vpop.f32.mrf.mxu0
      %10015 = vmatprep.mubr.f32.mxu0 0.0
      %10016 = vmatmul.mubr.f32.gmra.mxu0 %v9886
      %v10017 = vpop.f32.mrf.mxu0
      %v10018 = vadd.f32 0.0, %v10017
      %v10019 = vpop.f32.mrf.mxu0
      %10020 = vmatprep.mubr.f32.mxu0 0.0
      %10021 = vmatmul.mubr.f32.gmra.mxu0 %v9889
      %v10022 = vpop.f32.mrf.mxu0
      %v10023 = vadd.f32 0.0, %v10022
      %v10024 = vpop.f32.mrf.mxu0
      %10025 = vmatprep.mubr.f32.mxu0 0.0
      %10026 = vmatmul.mubr.f32.gmra.mxu0 %v9892
      %v10027 = vpop.f32.mrf.mxu0
      %v10028 = vadd.f32 0.0, %v10027
      %v10029 = vpop.f32.mrf.mxu0
      %10030 = vmatprep.mubr.f32.mxu0 0.0
      %10031 = vmatmul.mubr.f32.gmra.mxu0 %v9895
      %v10032 = vpop.f32.mrf.mxu0
      %v10033 = vadd.f32 0.0, %v10032
      %v10034 = vpop.f32.mrf.mxu0
      %10035 = vmatprep.mubr.f32.mxu0 0.0
      %10036 = vmatmul.mubr.f32.gmra.mxu0 %v9898
      %v10037 = vpop.f32.mrf.mxu0
      %v10038 = vadd.f32 0.0, %v10037
      %v10039 = vpop.f32.mrf.mxu0
      %10040 = vmatprep.mubr.f32.mxu0 0.0
      %10041 = vmatmul.mubr.f32.gmra.mxu0 %v9901
      %v10042 = vpop.f32.mrf.mxu0
      %v10043 = vadd.f32 0.0, %v10042
      %v10044 = vpop.f32.mrf.mxu0
      %10045 = vmatprep.mubr.f32.mxu0 0.0
      %10046 = vmatmul.mubr.f32.gmra.mxu0 %v9904
      %v10047 = vpop.f32.mrf.mxu0
      %v10048 = vadd.f32 0.0, %v10047
      %v10049 = vpop.f32.mrf.mxu0
      %10050 = vmatprep.mubr.f32.mxu0 0.0
      %10051 = vmatmul.mubr.f32.gmra.mxu0 %v9907
      %v10052 = vpop.f32.mrf.mxu0
      %v10053 = vadd.f32 0.0, %v10052
      %v10054 = vpop.f32.mrf.mxu0
      %10055 = vmatprep.mubr.f32.mxu0 0.0
      %10056 = vmatmul.mubr.f32.gmra.mxu0 %v9910
      %v10057 = vpop.f32.mrf.mxu0
      %v10058 = vadd.f32 0.0, %v10057
      %v10059 = vpop.f32.mrf.mxu0
      %10060 = vmatprep.mubr.f32.mxu0 0.0
      %10061 = vmatmul.mubr.f32.gmra.mxu0 %v9913
      %v10062 = vpop.f32.mrf.mxu0
      %v10063 = vadd.f32 0.0, %v10062
      %v10064 = vpop.f32.mrf.mxu0
      %10065 = vmatprep.mubr.f32.mxu0 0.0
      %10066 = vmatmul.mubr.f32.gmra.mxu0 %v9916
      %v10067 = vpop.f32.mrf.mxu0
      %v10068 = vadd.f32 0.0, %v10067
      %v10069 = vpop.f32.mrf.mxu0
      %10070 = vdwg.mxu0
      %v10071 = vadd.f32 %v9826, %v9988
      %v10072 = vadd.f32 %v9827, %v9993
      %v10073 = vadd.f32 %v9828, %v9998
      %v10074 = vadd.f32 %v9829, %v10003
      %v10075 = vadd.f32 %v9830, %v10008
      %v10076 = vadd.f32 %v9831, %v10013
      %v10077 = vadd.f32 %v9832, %v10018
      %v10078 = vadd.f32 %v9833, %v10023
      %v10079 = vadd.f32 %v9834, %v10028
      %v10080 = vadd.f32 %v9835, %v10033
      %v10081 = vadd.f32 %v9836, %v10038
      %v10082 = vadd.f32 %v9837, %v10043
      %v10083 = vadd.f32 %v9838, %v10048
      %v10084 = vadd.f32 %v9839, %v10053
      %v10085 = vadd.f32 %v9840, %v10058
      %v10086 = vadd.f32 %v9841, %v10063
      %v10087 = vadd.f32 %v9842, %v10068
      %v10088 = vld [vmem:[#allocation3 + $0x1a5] sm:$0xff]
      %v10089 = vld [vmem:[#allocation3 + $0x1ad] sm:$0xff]
      %v10090 = vld [vmem:[#allocation3 + $0x1b5] sm:$0xff]
      %v10091 = vld [vmem:[#allocation3 + $0x1bd] sm:$0xff]
      %v10092 = vld [vmem:[#allocation3 + $0x1c5] sm:$0xff]
      %v10093 = vld [vmem:[#allocation3 + $0x1cd] sm:$0xff]
      %v10094 = vld [vmem:[#allocation3 + $0x1d5] sm:$0xff]
      %v10095 = vld [vmem:[#allocation3 + $0x1dd] sm:$0xff]
      %v10096 = vld [vmem:[#allocation3 + $0x1e5] sm:$0xff]
      %v10097 = vld [vmem:[#allocation3 + $0x1ed] sm:$0xff]
      %v10098 = vld [vmem:[#allocation3 + $0x1f5] sm:$0xff]
      %v10099 = vld [vmem:[#allocation3 + $0x1fd] sm:$0xff]
      %v10100 = vld [vmem:[#allocation3 + $0x205] sm:$0xff]
      %v10101 = vld [vmem:[#allocation3 + $0x20d] sm:$0xff]
      %v10102 = vld [vmem:[#allocation3 + $0x215] sm:$0xff]
      %v10103 = vld [vmem:[#allocation3 + $0x21d] sm:$0xff]
      %v10104 = vld [vmem:[#allocation3 + $0x225] sm:$0xff]
      %v10105 = vld [vmem:[%s7819] sm:$0xff]
      %v10106 = vld [vmem:[%s7819 + $0x8] sm:$0xff]
      %v10107 = vld [vmem:[%s7819 + $0x10] sm:$0xff]
      %v10108 = vld [vmem:[%s7819 + $0x18] sm:$0xff]
      %v10109 = vld [vmem:[%s7819 + $0x20] sm:$0xff]
      %v10110 = vld [vmem:[%s7819 + $0x28] sm:$0xff]
      %v10111 = vld [vmem:[%s7819 + $0x30] sm:$0x3]
      %v10113 = vsel %vm522, %v10088, 0
      %v10116 = vsel %vm522, %v10089, 0
      %v10119 = vsel %vm522, %v10090, 0
      %v10122 = vsel %vm522, %v10091, 0
      %v10125 = vsel %vm522, %v10092, 0
      %v10128 = vsel %vm522, %v10093, 0
      %v10131 = vsel %vm522, %v10094, 0
      %v10134 = vsel %vm522, %v10095, 0
      %v10137 = vsel %vm522, %v10096, 0
      %v10140 = vsel %vm522, %v10097, 0
      %v10143 = vsel %vm522, %v10098, 0
      %v10146 = vsel %vm522, %v10099, 0
      %v10149 = vsel %vm522, %v10100, 0
      %v10152 = vsel %vm522, %v10101, 0
      %v10155 = vsel %vm522, %v10102, 0
      %v10158 = vsel %vm522, %v10103, 0
      %v10161 = vsel %vm522, %v10104, 0
      %v10164 = vsel %vm6150, %v10111, 0
      %10166 = vmatprep.subr.mxu0 0.0
      %10167 = vmatpush1.msra.mxu0 0.0
      %10168 = vmatprep.subr.mxu0 0.0
      %10169 = vmatpush1.msra.mxu0 0.0
      %10170 = vmatprep.subr.mxu0 0.0
      %10171 = vmatpush1.msra.mxu0 0.0
      %10172 = vmatprep.subr.mxu0 0.0
      %10173 = vmatpush1.msra.mxu0 0.0
      %10174 = vmatprep.subr.mxu0 0.0
      %10175 = vmatpush1.msra.mxu0 0.0
      %10176 = vmatprep.subr.mxu0 0.0
      %10177 = vmatpush1.msra.mxu0 0.0
      %10178 = vmatprep.subr.mxu0 0.0
      %10179 = vmatpush1.msra.mxu0 0.0
      %10180 = vmatprep.subr.mxu0 0.0
      %10181 = vmatpush1.msra.mxu0 0.0
      %10182 = vmatprep.subr.mxu0 0.0
      %10183 = vmatpush1.msra.mxu0 0.0
      %10184 = vmatprep.subr.mxu0 0.0
      %10185 = vmatpush1.msra.mxu0 %v10164
      %10186 = vmatprep.subr.mxu0 0.0
      %10187 = vmatpush1.msra.mxu0 %v10110
      %10188 = vmatprep.subr.mxu0 0.0
      %10189 = vmatpush1.msra.mxu0 %v10109
      %10190 = vmatprep.subr.mxu0 0.0
      %10191 = vmatpush1.msra.mxu0 %v10108
      %10192 = vmatprep.subr.mxu0 0.0
      %10193 = vmatpush1.msra.mxu0 %v10107
      %10194 = vmatprep.subr.mxu0 0.0
      %10195 = vmatpush1.msra.mxu0 %v10106
      %10196 = vmatprep.subr.mxu0 0.0
      %10197 = vmatpush1.msra.mxu0 %v10105
      %10198 = vmatprep.subr.mxu0 0.0
      %10199 = vmatpush2.msra.mxu0 0.0
      %10200 = vmatprep.subr.mxu0 0.0
      %10201 = vmatpush2.msra.mxu0 0.0
      %10202 = vmatprep.subr.mxu0 0.0
      %10203 = vmatpush2.msra.mxu0 0.0
      %10204 = vmatprep.subr.mxu0 0.0
      %10205 = vmatpush2.msra.mxu0 0.0
      %10206 = vmatprep.subr.mxu0 0.0
      %10207 = vmatpush2.msra.mxu0 0.0
      %10208 = vmatprep.subr.mxu0 0.0
      %10209 = vmatpush2.msra.mxu0 0.0
      %10210 = vmatprep.subr.mxu0 0.0
      %10211 = vmatpush2.msra.mxu0 0.0
      %10212 = vmatprep.subr.mxu0 0.0
      %10213 = vmatpush2.msra.mxu0 0.0
      %10214 = vmatprep.subr.mxu0 0.0
      %10215 = vmatpush2.msra.mxu0 0.0
      %10216 = vmatprep.subr.mxu0 0.0
      %10217 = vmatpush2.msra.mxu0 0.0
      %10218 = vmatprep.subr.mxu0 0.0
      %10219 = vmatpush2.msra.mxu0 0.0
      %10220 = vmatprep.subr.mxu0 0.0
      %10221 = vmatpush2.msra.mxu0 0.0
      %10222 = vmatprep.subr.mxu0 0.0
      %10223 = vmatpush2.msra.mxu0 0.0
      %10224 = vmatprep.subr.mxu0 0.0
      %10225 = vmatpush2.msra.mxu0 0.0
      %10226 = vmatprep.subr.mxu0 0.0
      %10227 = vmatpush2.msra.mxu0 0.0
      %10228 = vmatprep.subr.mxu0 0.0
      %10229 = vmatpush2.msra.mxu0 0.0
      %10230 = vmatprep.mubr.f32.mxu0 0.0
      %10231 = vmatmul.mubr.f32.gmra.mxu0 %v10113
      %v10232 = vpop.f32.mrf.mxu0
      %v10233 = vadd.f32 0.0, %v10232
      %v10234 = vpop.f32.mrf.mxu0
      %10235 = vmatprep.mubr.f32.mxu0 0.0
      %10236 = vmatmul.mubr.f32.gmra.mxu0 %v10116
      %v10237 = vpop.f32.mrf.mxu0
      %v10238 = vadd.f32 0.0, %v10237
      %v10239 = vpop.f32.mrf.mxu0
      %10240 = vmatprep.mubr.f32.mxu0 0.0
      %10241 = vmatmul.mubr.f32.gmra.mxu0 %v10119
      %v10242 = vpop.f32.mrf.mxu0
      %v10243 = vadd.f32 0.0, %v10242
      %v10244 = vpop.f32.mrf.mxu0
      %10245 = vmatprep.mubr.f32.mxu0 0.0
      %10246 = vmatmul.mubr.f32.gmra.mxu0 %v10122
      %v10247 = vpop.f32.mrf.mxu0
      %v10248 = vadd.f32 0.0, %v10247
      %v10249 = vpop.f32.mrf.mxu0
      %10250 = vmatprep.mubr.f32.mxu0 0.0
      %10251 = vmatmul.mubr.f32.gmra.mxu0 %v10125
      %v10252 = vpop.f32.mrf.mxu0
      %v10253 = vadd.f32 0.0, %v10252
      %v10254 = vpop.f32.mrf.mxu0
      %10255 = vmatprep.mubr.f32.mxu0 0.0
      %10256 = vmatmul.mubr.f32.gmra.mxu0 %v10128
      %v10257 = vpop.f32.mrf.mxu0
      %v10258 = vadd.f32 0.0, %v10257
      %v10259 = vpop.f32.mrf.mxu0
      %10260 = vmatprep.mubr.f32.mxu0 0.0
      %10261 = vmatmul.mubr.f32.gmra.mxu0 %v10131
      %v10262 = vpop.f32.mrf.mxu0
      %v10263 = vadd.f32 0.0, %v10262
      %v10264 = vpop.f32.mrf.mxu0
      %10265 = vmatprep.mubr.f32.mxu0 0.0
      %10266 = vmatmul.mubr.f32.gmra.mxu0 %v10134
      %v10267 = vpop.f32.mrf.mxu0
      %v10268 = vadd.f32 0.0, %v10267
      %v10269 = vpop.f32.mrf.mxu0
      %10270 = vmatprep.mubr.f32.mxu0 0.0
      %10271 = vmatmul.mubr.f32.gmra.mxu0 %v10137
      %v10272 = vpop.f32.mrf.mxu0
      %v10273 = vadd.f32 0.0, %v10272
      %v10274 = vpop.f32.mrf.mxu0
      %10275 = vmatprep.mubr.f32.mxu0 0.0
      %10276 = vmatmul.mubr.f32.gmra.mxu0 %v10140
      %v10277 = vpop.f32.mrf.mxu0
      %v10278 = vadd.f32 0.0, %v10277
      %v10279 = vpop.f32.mrf.mxu0
      %10280 = vmatprep.mubr.f32.mxu0 0.0
      %10281 = vmatmul.mubr.f32.gmra.mxu0 %v10143
      %v10282 = vpop.f32.mrf.mxu0
      %v10283 = vadd.f32 0.0, %v10282
      %v10284 = vpop.f32.mrf.mxu0
      %10285 = vmatprep.mubr.f32.mxu0 0.0
      %10286 = vmatmul.mubr.f32.gmra.mxu0 %v10146
      %v10287 = vpop.f32.mrf.mxu0
      %v10288 = vadd.f32 0.0, %v10287
      %v10289 = vpop.f32.mrf.mxu0
      %10290 = vmatprep.mubr.f32.mxu0 0.0
      %10291 = vmatmul.mubr.f32.gmra.mxu0 %v10149
      %v10292 = vpop.f32.mrf.mxu0
      %v10293 = vadd.f32 0.0, %v10292
      %v10294 = vpop.f32.mrf.mxu0
      %10295 = vmatprep.mubr.f32.mxu0 0.0
      %10296 = vmatmul.mubr.f32.gmra.mxu0 %v10152
      %v10297 = vpop.f32.mrf.mxu0
      %v10298 = vadd.f32 0.0, %v10297
      %v10299 = vpop.f32.mrf.mxu0
      %10300 = vmatprep.mubr.f32.mxu0 0.0
      %10301 = vmatmul.mubr.f32.gmra.mxu0 %v10155
      %v10302 = vpop.f32.mrf.mxu0
      %v10303 = vadd.f32 0.0, %v10302
      %v10304 = vpop.f32.mrf.mxu0
      %10305 = vmatprep.mubr.f32.mxu0 0.0
      %10306 = vmatmul.mubr.f32.gmra.mxu0 %v10158
      %v10307 = vpop.f32.mrf.mxu0
      %v10308 = vadd.f32 0.0, %v10307
      %v10309 = vpop.f32.mrf.mxu0
      %10310 = vmatprep.mubr.f32.mxu0 0.0
      %10311 = vmatmul.mubr.f32.gmra.mxu0 %v10161
      %v10312 = vpop.f32.mrf.mxu0
      %v10313 = vadd.f32 0.0, %v10312
      %v10314 = vpop.f32.mrf.mxu0
      %10315 = vdwg.mxu0
      %v10316 = vadd.f32 %v10071, %v10233
      %v10317 = vadd.f32 %v10072, %v10238
      %v10318 = vadd.f32 %v10073, %v10243
      %v10319 = vadd.f32 %v10074, %v10248
      %v10320 = vadd.f32 %v10075, %v10253
      %v10321 = vadd.f32 %v10076, %v10258
      %v10322 = vadd.f32 %v10077, %v10263
      %v10323 = vadd.f32 %v10078, %v10268
      %v10324 = vadd.f32 %v10079, %v10273
      %v10325 = vadd.f32 %v10080, %v10278
      %v10326 = vadd.f32 %v10081, %v10283
      %v10327 = vadd.f32 %v10082, %v10288
      %v10328 = vadd.f32 %v10083, %v10293
      %v10329 = vadd.f32 %v10084, %v10298
      %v10330 = vadd.f32 %v10085, %v10303
      %v10331 = vadd.f32 %v10086, %v10308
      %v10332 = vadd.f32 %v10087, %v10313
      %v10333 = vld [vmem:[#allocation3 + $0x1a6] sm:$0xff]
      %v10334 = vld [vmem:[#allocation3 + $0x1ae] sm:$0xff]
      %v10335 = vld [vmem:[#allocation3 + $0x1b6] sm:$0xff]
      %v10336 = vld [vmem:[#allocation3 + $0x1be] sm:$0xff]
      %v10337 = vld [vmem:[#allocation3 + $0x1c6] sm:$0xff]
      %v10338 = vld [vmem:[#allocation3 + $0x1ce] sm:$0xff]
      %v10339 = vld [vmem:[#allocation3 + $0x1d6] sm:$0xff]
      %v10340 = vld [vmem:[#allocation3 + $0x1de] sm:$0xff]
      %v10341 = vld [vmem:[#allocation3 + $0x1e6] sm:$0xff]
      %v10342 = vld [vmem:[#allocation3 + $0x1ee] sm:$0xff]
      %v10343 = vld [vmem:[#allocation3 + $0x1f6] sm:$0xff]
      %v10344 = vld [vmem:[#allocation3 + $0x1fe] sm:$0xff]
      %v10345 = vld [vmem:[#allocation3 + $0x206] sm:$0xff]
      %v10346 = vld [vmem:[#allocation3 + $0x20e] sm:$0xff]
      %v10347 = vld [vmem:[#allocation3 + $0x216] sm:$0xff]
      %v10348 = vld [vmem:[#allocation3 + $0x21e] sm:$0xff]
      %v10349 = vld [vmem:[#allocation3 + $0x226] sm:$0xff]
      %v10350 = vld [vmem:[%s8075] sm:$0xff]
      %v10351 = vld [vmem:[%s8075 + $0x8] sm:$0xff]
      %v10352 = vld [vmem:[%s8075 + $0x10] sm:$0xff]
      %v10353 = vld [vmem:[%s8075 + $0x18] sm:$0xff]
      %v10354 = vld [vmem:[%s8075 + $0x20] sm:$0xff]
      %v10355 = vld [vmem:[%s8075 + $0x28] sm:$0xff]
      %v10356 = vld [vmem:[%s8075 + $0x30] sm:$0x3]
      %v10358 = vsel %vm522, %v10333, 0
      %v10361 = vsel %vm522, %v10334, 0
      %v10364 = vsel %vm522, %v10335, 0
      %v10367 = vsel %vm522, %v10336, 0
      %v10370 = vsel %vm522, %v10337, 0
      %v10373 = vsel %vm522, %v10338, 0
      %v10376 = vsel %vm522, %v10339, 0
      %v10379 = vsel %vm522, %v10340, 0
      %v10382 = vsel %vm522, %v10341, 0
      %v10385 = vsel %vm522, %v10342, 0
      %v10388 = vsel %vm522, %v10343, 0
      %v10391 = vsel %vm522, %v10344, 0
      %v10394 = vsel %vm522, %v10345, 0
      %v10397 = vsel %vm522, %v10346, 0
      %v10400 = vsel %vm522, %v10347, 0
      %v10403 = vsel %vm522, %v10348, 0
      %v10406 = vsel %vm522, %v10349, 0
      %v10409 = vsel %vm6150, %v10356, 0
      %10411 = vmatprep.subr.mxu0 0.0
      %10412 = vmatpush1.msra.mxu0 0.0
      %10413 = vmatprep.subr.mxu0 0.0
      %10414 = vmatpush1.msra.mxu0 0.0
      %10415 = vmatprep.subr.mxu0 0.0
      %10416 = vmatpush1.msra.mxu0 0.0
      %10417 = vmatprep.subr.mxu0 0.0
      %10418 = vmatpush1.msra.mxu0 0.0
      %10419 = vmatprep.subr.mxu0 0.0
      %10420 = vmatpush1.msra.mxu0 0.0
      %10421 = vmatprep.subr.mxu0 0.0
      %10422 = vmatpush1.msra.mxu0 0.0
      %10423 = vmatprep.subr.mxu0 0.0
      %10424 = vmatpush1.msra.mxu0 0.0
      %10425 = vmatprep.subr.mxu0 0.0
      %10426 = vmatpush1.msra.mxu0 0.0
      %10427 = vmatprep.subr.mxu0 0.0
      %10428 = vmatpush1.msra.mxu0 0.0
      %10429 = vmatprep.subr.mxu0 0.0
      %10430 = vmatpush1.msra.mxu0 %v10409
      %10431 = vmatprep.subr.mxu0 0.0
      %10432 = vmatpush1.msra.mxu0 %v10355
      %10433 = vmatprep.subr.mxu0 0.0
      %10434 = vmatpush1.msra.mxu0 %v10354
      %10435 = vmatprep.subr.mxu0 0.0
      %10436 = vmatpush1.msra.mxu0 %v10353
      %10437 = vmatprep.subr.mxu0 0.0
      %10438 = vmatpush1.msra.mxu0 %v10352
      %10439 = vmatprep.subr.mxu0 0.0
      %10440 = vmatpush1.msra.mxu0 %v10351
      %10441 = vmatprep.subr.mxu0 0.0
      %10442 = vmatpush1.msra.mxu0 %v10350
      %10443 = vmatprep.subr.mxu0 0.0
      %10444 = vmatpush2.msra.mxu0 0.0
      %10445 = vmatprep.subr.mxu0 0.0
      %10446 = vmatpush2.msra.mxu0 0.0
      %10447 = vmatprep.subr.mxu0 0.0
      %10448 = vmatpush2.msra.mxu0 0.0
      %10449 = vmatprep.subr.mxu0 0.0
      %10450 = vmatpush2.msra.mxu0 0.0
      %10451 = vmatprep.subr.mxu0 0.0
      %10452 = vmatpush2.msra.mxu0 0.0
      %10453 = vmatprep.subr.mxu0 0.0
      %10454 = vmatpush2.msra.mxu0 0.0
      %10455 = vmatprep.subr.mxu0 0.0
      %10456 = vmatpush2.msra.mxu0 0.0
      %10457 = vmatprep.subr.mxu0 0.0
      %10458 = vmatpush2.msra.mxu0 0.0
      %10459 = vmatprep.subr.mxu0 0.0
      %10460 = vmatpush2.msra.mxu0 0.0
      %10461 = vmatprep.subr.mxu0 0.0
      %10462 = vmatpush2.msra.mxu0 0.0
      %10463 = vmatprep.subr.mxu0 0.0
      %10464 = vmatpush2.msra.mxu0 0.0
      %10465 = vmatprep.subr.mxu0 0.0
      %10466 = vmatpush2.msra.mxu0 0.0
      %10467 = vmatprep.subr.mxu0 0.0
      %10468 = vmatpush2.msra.mxu0 0.0
      %10469 = vmatprep.subr.mxu0 0.0
      %10470 = vmatpush2.msra.mxu0 0.0
      %10471 = vmatprep.subr.mxu0 0.0
      %10472 = vmatpush2.msra.mxu0 0.0
      %10473 = vmatprep.subr.mxu0 0.0
      %10474 = vmatpush2.msra.mxu0 0.0
      %10475 = vmatprep.mubr.f32.mxu0 0.0
      %10476 = vmatmul.mubr.f32.gmra.mxu0 %v10358
      %v10477 = vpop.f32.mrf.mxu0
      %v10478 = vadd.f32 0.0, %v10477
      %v10479 = vpop.f32.mrf.mxu0
      %10480 = vmatprep.mubr.f32.mxu0 0.0
      %10481 = vmatmul.mubr.f32.gmra.mxu0 %v10361
      %v10482 = vpop.f32.mrf.mxu0
      %v10483 = vadd.f32 0.0, %v10482
      %v10484 = vpop.f32.mrf.mxu0
      %10485 = vmatprep.mubr.f32.mxu0 0.0
      %10486 = vmatmul.mubr.f32.gmra.mxu0 %v10364
      %v10487 = vpop.f32.mrf.mxu0
      %v10488 = vadd.f32 0.0, %v10487
      %v10489 = vpop.f32.mrf.mxu0
      %10490 = vmatprep.mubr.f32.mxu0 0.0
      %10491 = vmatmul.mubr.f32.gmra.mxu0 %v10367
      %v10492 = vpop.f32.mrf.mxu0
      %v10493 = vadd.f32 0.0, %v10492
      %v10494 = vpop.f32.mrf.mxu0
      %10495 = vmatprep.mubr.f32.mxu0 0.0
      %10496 = vmatmul.mubr.f32.gmra.mxu0 %v10370
      %v10497 = vpop.f32.mrf.mxu0
      %v10498 = vadd.f32 0.0, %v10497
      %v10499 = vpop.f32.mrf.mxu0
      %10500 = vmatprep.mubr.f32.mxu0 0.0
      %10501 = vmatmul.mubr.f32.gmra.mxu0 %v10373
      %v10502 = vpop.f32.mrf.mxu0
      %v10503 = vadd.f32 0.0, %v10502
      %v10504 = vpop.f32.mrf.mxu0
      %10505 = vmatprep.mubr.f32.mxu0 0.0
      %10506 = vmatmul.mubr.f32.gmra.mxu0 %v10376
      %v10507 = vpop.f32.mrf.mxu0
      %v10508 = vadd.f32 0.0, %v10507
      %v10509 = vpop.f32.mrf.mxu0
      %10510 = vmatprep.mubr.f32.mxu0 0.0
      %10511 = vmatmul.mubr.f32.gmra.mxu0 %v10379
      %v10512 = vpop.f32.mrf.mxu0
      %v10513 = vadd.f32 0.0, %v10512
      %v10514 = vpop.f32.mrf.mxu0
      %10515 = vmatprep.mubr.f32.mxu0 0.0
      %10516 = vmatmul.mubr.f32.gmra.mxu0 %v10382
      %v10517 = vpop.f32.mrf.mxu0
      %v10518 = vadd.f32 0.0, %v10517
      %v10519 = vpop.f32.mrf.mxu0
      %10520 = vmatprep.mubr.f32.mxu0 0.0
      %10521 = vmatmul.mubr.f32.gmra.mxu0 %v10385
      %v10522 = vpop.f32.mrf.mxu0
      %v10523 = vadd.f32 0.0, %v10522
      %v10524 = vpop.f32.mrf.mxu0
      %10525 = vmatprep.mubr.f32.mxu0 0.0
      %10526 = vmatmul.mubr.f32.gmra.mxu0 %v10388
      %v10527 = vpop.f32.mrf.mxu0
      %v10528 = vadd.f32 0.0, %v10527
      %v10529 = vpop.f32.mrf.mxu0
      %10530 = vmatprep.mubr.f32.mxu0 0.0
      %10531 = vmatmul.mubr.f32.gmra.mxu0 %v10391
      %v10532 = vpop.f32.mrf.mxu0
      %v10533 = vadd.f32 0.0, %v10532
      %v10534 = vpop.f32.mrf.mxu0
      %10535 = vmatprep.mubr.f32.mxu0 0.0
      %10536 = vmatmul.mubr.f32.gmra.mxu0 %v10394
      %v10537 = vpop.f32.mrf.mxu0
      %v10538 = vadd.f32 0.0, %v10537
      %v10539 = vpop.f32.mrf.mxu0
      %10540 = vmatprep.mubr.f32.mxu0 0.0
      %10541 = vmatmul.mubr.f32.gmra.mxu0 %v10397
      %v10542 = vpop.f32.mrf.mxu0
      %v10543 = vadd.f32 0.0, %v10542
      %v10544 = vpop.f32.mrf.mxu0
      %10545 = vmatprep.mubr.f32.mxu0 0.0
      %10546 = vmatmul.mubr.f32.gmra.mxu0 %v10400
      %v10547 = vpop.f32.mrf.mxu0
      %v10548 = vadd.f32 0.0, %v10547
      %v10549 = vpop.f32.mrf.mxu0
      %10550 = vmatprep.mubr.f32.mxu0 0.0
      %10551 = vmatmul.mubr.f32.gmra.mxu0 %v10403
      %v10552 = vpop.f32.mrf.mxu0
      %v10553 = vadd.f32 0.0, %v10552
      %v10554 = vpop.f32.mrf.mxu0
      %10555 = vmatprep.mubr.f32.mxu0 0.0
      %10556 = vmatmul.mubr.f32.gmra.mxu0 %v10406
      %v10557 = vpop.f32.mrf.mxu0
      %v10558 = vadd.f32 0.0, %v10557
      %v10559 = vpop.f32.mrf.mxu0
      %10560 = vdwg.mxu0
      %v10561 = vadd.f32 %v10316, %v10478
      %v10562 = vadd.f32 %v10317, %v10483
      %v10563 = vadd.f32 %v10318, %v10488
      %v10564 = vadd.f32 %v10319, %v10493
      %v10565 = vadd.f32 %v10320, %v10498
      %v10566 = vadd.f32 %v10321, %v10503
      %v10567 = vadd.f32 %v10322, %v10508
      %v10568 = vadd.f32 %v10323, %v10513
      %v10569 = vadd.f32 %v10324, %v10518
      %v10570 = vadd.f32 %v10325, %v10523
      %v10571 = vadd.f32 %v10326, %v10528
      %v10572 = vadd.f32 %v10327, %v10533
      %v10573 = vadd.f32 %v10328, %v10538
      %v10574 = vadd.f32 %v10329, %v10543
      %v10575 = vadd.f32 %v10330, %v10548
      %v10576 = vadd.f32 %v10331, %v10553
      %v10577 = vadd.f32 %v10332, %v10558
      %v10578 = vadd.f32 %v10561, %v8316
      %v10579 = vadd.f32 %v10562, %v8316
      %v10580 = vadd.f32 %v10563, %v8316
      %v10581 = vadd.f32 %v10564, %v8316
      %v10582 = vadd.f32 %v10565, %v8316
      %v10583 = vadd.f32 %v10566, %v8316
      %v10584 = vadd.f32 %v10567, %v8316
      %v10585 = vadd.f32 %v10568, %v8316
      %v10586 = vadd.f32 %v10569, %v8316
      %v10587 = vadd.f32 %v10570, %v8316
      %v10588 = vadd.f32 %v10571, %v8316
      %v10589 = vadd.f32 %v10572, %v8316
      %v10590 = vadd.f32 %v10573, %v8316
      %v10591 = vadd.f32 %v10574, %v8316
      %v10592 = vadd.f32 %v10575, %v8316
      %v10593 = vadd.f32 %v10576, %v8316
      %v10594 = vadd.f32 %v10577, %v8316
      %vm10595 = vcmp.ge.f32.partialorder %v10578, 0.0
      %vm10596 = vcmp.ge.f32.partialorder %v10579, 0.0
      %vm10597 = vcmp.ge.f32.partialorder %v10580, 0.0
      %vm10598 = vcmp.ge.f32.partialorder %v10581, 0.0
      %vm10599 = vcmp.ge.f32.partialorder %v10582, 0.0
      %vm10600 = vcmp.ge.f32.partialorder %v10583, 0.0
      %vm10601 = vcmp.ge.f32.partialorder %v10584, 0.0
      %vm10602 = vcmp.ge.f32.partialorder %v10585, 0.0
      %vm10603 = vcmp.ge.f32.partialorder %v10586, 0.0
      %vm10604 = vcmp.ge.f32.partialorder %v10587, 0.0
      %vm10605 = vcmp.ge.f32.partialorder %v10588, 0.0
      %vm10606 = vcmp.ge.f32.partialorder %v10589, 0.0
      %vm10607 = vcmp.ge.f32.partialorder %v10590, 0.0
      %vm10608 = vcmp.ge.f32.partialorder %v10591, 0.0
      %vm10609 = vcmp.ge.f32.partialorder %v10592, 0.0
      %vm10610 = vcmp.ge.f32.partialorder %v10593, 0.0
      %vm10611 = vcmp.ge.f32.partialorder %v10594, 0.0
      %v10612 = vmul.f32 %v10578, 0.01
      %v10613 = vmul.f32 %v10579, 0.01
      %v10614 = vmul.f32 %v10580, 0.01
      %v10615 = vmul.f32 %v10581, 0.01
      %v10616 = vmul.f32 %v10582, 0.01
      %v10617 = vmul.f32 %v10583, 0.01
      %v10618 = vmul.f32 %v10584, 0.01
      %v10619 = vmul.f32 %v10585, 0.01
      %v10620 = vmul.f32 %v10586, 0.01
      %v10621 = vmul.f32 %v10587, 0.01
      %v10622 = vmul.f32 %v10588, 0.01
      %v10623 = vmul.f32 %v10589, 0.01
      %v10624 = vmul.f32 %v10590, 0.01
      %v10625 = vmul.f32 %v10591, 0.01
      %v10626 = vmul.f32 %v10592, 0.01
      %v10627 = vmul.f32 %v10593, 0.01
      %v10628 = vmul.f32 %v10594, 0.01
      %v10629 = vsel %vm10595, %v10578, %v10612
      %v10630 = vsel %vm10596, %v10579, %v10613
      %v10631 = vsel %vm10597, %v10580, %v10614
      %v10632 = vsel %vm10598, %v10581, %v10615
      %v10633 = vsel %vm10599, %v10582, %v10616
      %v10634 = vsel %vm10600, %v10583, %v10617
      %v10635 = vsel %vm10601, %v10584, %v10618
      %v10636 = vsel %vm10602, %v10585, %v10619
      %v10637 = vsel %vm10603, %v10586, %v10620
      %v10638 = vsel %vm10604, %v10587, %v10621
      %v10639 = vsel %vm10605, %v10588, %v10622
      %v10640 = vsel %vm10606, %v10589, %v10623
      %v10641 = vsel %vm10607, %v10590, %v10624
      %v10642 = vsel %vm10608, %v10591, %v10625
      %v10643 = vsel %vm10609, %v10592, %v10626
      %v10644 = vsel %vm10610, %v10593, %v10627
      %v10645 = vsel %vm10611, %v10594, %v10628
      %10646 = vst.msk [vmem:[#allocation4 + $0x90] sm:$0xff] %vm522, %v10629
      %10647 = vst.msk [vmem:[#allocation4 + $0x98] sm:$0xff] %vm522, %v10630
      %10648 = vst.msk [vmem:[#allocation4 + $0xa0] sm:$0xff] %vm522, %v10631
      %10649 = vst.msk [vmem:[#allocation4 + $0xa8] sm:$0xff] %vm522, %v10632
      %10650 = vst.msk [vmem:[#allocation4 + $0xb0] sm:$0xff] %vm522, %v10633
      %10651 = vst.msk [vmem:[#allocation4 + $0xb8] sm:$0xff] %vm522, %v10634
      %10652 = vst.msk [vmem:[#allocation4 + $0xc0] sm:$0xff] %vm522, %v10635
      %10653 = vst.msk [vmem:[#allocation4 + $0xc8] sm:$0xff] %vm522, %v10636
      %10654 = vst.msk [vmem:[#allocation4 + $0xd0] sm:$0xff] %vm522, %v10637
      %10655 = vst.msk [vmem:[#allocation4 + $0xd8] sm:$0xff] %vm522, %v10638
      %10656 = vst.msk [vmem:[#allocation4 + $0xe0] sm:$0xff] %vm522, %v10639
      %10657 = vst.msk [vmem:[#allocation4 + $0xe8] sm:$0xff] %vm522, %v10640
      %10658 = vst.msk [vmem:[#allocation4 + $0xf0] sm:$0xff] %vm522, %v10641
      %10659 = vst.msk [vmem:[#allocation4 + $0xf8] sm:$0xff] %vm522, %v10642
      %10660 = vst.msk [vmem:[#allocation4 + $0x100] sm:$0xff] %vm522, %v10643
      %10661 = vst.msk [vmem:[#allocation4 + $0x108] sm:$0xff] %vm522, %v10644
      %10662 = vst.msk [vmem:[#allocation4 + $0x110] sm:$0xff] %vm522, %v10645
      %v10663 = vld [vmem:[#allocation4] ss:$2 sm:$0xff]
      %s10664 = scalar_lea.vmem [#allocation4], 16
      %v10665 = vld [vmem:[%s10664] ss:$2 sm:$0xff]
      %s10666 = scalar_lea.vmem [#allocation4], 32
      %v10667 = vld [vmem:[%s10666] ss:$2 sm:$0xff]
      %s10668 = scalar_lea.vmem [#allocation4], 48
      %v10669 = vld [vmem:[%s10668] ss:$2 sm:$0xff]
      %s10670 = scalar_lea.vmem [#allocation4], 64
      %v10671 = vld [vmem:[%s10670] ss:$2 sm:$0xff]
      %s10672 = scalar_lea.vmem [#allocation4], 80
      %v10673 = vld [vmem:[%s10672] ss:$2 sm:$0xff]
      %s10674 = scalar_lea.vmem [#allocation4], 96
      %v10675 = vld [vmem:[%s10674] ss:$2 sm:$0xff]
      %s10676 = scalar_lea.vmem [#allocation4], 112
      %v10677 = vld [vmem:[%s10676] ss:$2 sm:$0xff]
      %s10678 = scalar_lea.vmem [#allocation4], 128
      %v10679 = vld [vmem:[%s10678] ss:$2 sm:$0xf]
      %s10680 = scalar_lea.vmem [#allocation4], 1
      %v10681 = vld [vmem:[%s10680] ss:$2 sm:$0xff]
      %s10682 = scalar_lea.vmem [#allocation4], 17
      %v10683 = vld [vmem:[%s10682] ss:$2 sm:$0xff]
      %s10684 = scalar_lea.vmem [#allocation4], 33
      %v10685 = vld [vmem:[%s10684] ss:$2 sm:$0xff]
      %s10686 = scalar_lea.vmem [#allocation4], 49
      %v10687 = vld [vmem:[%s10686] ss:$2 sm:$0xff]
      %s10688 = scalar_lea.vmem [#allocation4], 65
      %v10689 = vld [vmem:[%s10688] ss:$2 sm:$0xff]
      %s10690 = scalar_lea.vmem [#allocation4], 81
      %v10691 = vld [vmem:[%s10690] ss:$2 sm:$0xff]
      %s10692 = scalar_lea.vmem [#allocation4], 97
      %v10693 = vld [vmem:[%s10692] ss:$2 sm:$0xff]
      %s10694 = scalar_lea.vmem [#allocation4], 113
      %v10695 = vld [vmem:[%s10694] ss:$2 sm:$0xff]
      %s10696 = scalar_lea.vmem [#allocation4], 129
      %v10697 = vld [vmem:[%s10696] ss:$2 sm:$0xf]
      %v10698 = vmax.f32 %v10663, %v10681
      %v10699 = vmax.f32 %v10665, %v10683
      %v10700 = vmax.f32 %v10667, %v10685
      %v10701 = vmax.f32 %v10669, %v10687
      %v10702 = vmax.f32 %v10671, %v10689
      %v10703 = vmax.f32 %v10673, %v10691
      %v10704 = vmax.f32 %v10675, %v10693
      %v10705 = vmax.f32 %v10677, %v10695
      %v10706 = vmax.f32 %v10679, %v10697
      %s10707 = scalar_lea.vmem [#allocation4], 138
      %v10708 = vld [vmem:[%s10707] ss:$2 sm:$0xff]
      %s10709 = scalar_lea.vmem [#allocation4], 154
      %v10710 = vld [vmem:[%s10709] ss:$2 sm:$0xff]
      %s10711 = scalar_lea.vmem [#allocation4], 170
      %v10712 = vld [vmem:[%s10711] ss:$2 sm:$0xff]
      %s10713 = scalar_lea.vmem [#allocation4], 186
      %v10714 = vld [vmem:[%s10713] ss:$2 sm:$0xff]
      %s10715 = scalar_lea.vmem [#allocation4], 202
      %v10716 = vld [vmem:[%s10715] ss:$2 sm:$0xff]
      %s10717 = scalar_lea.vmem [#allocation4], 218
      %v10718 = vld [vmem:[%s10717] ss:$2 sm:$0xff]
      %s10719 = scalar_lea.vmem [#allocation4], 234
      %v10720 = vld [vmem:[%s10719] ss:$2 sm:$0xff]
      %s10721 = scalar_lea.vmem [#allocation4], 250
      %v10722 = vld [vmem:[%s10721] ss:$2 sm:$0xff]
      %s10723 = scalar_lea.vmem [#allocation4], 266
      %v10724 = vld [vmem:[%s10723] ss:$2 sm:$0xf]
      %s10725 = scalar_lea.vmem [#allocation4], 139
      %v10726 = vld [vmem:[%s10725] ss:$2 sm:$0xff]
      %s10727 = scalar_lea.vmem [#allocation4], 155
      %v10728 = vld [vmem:[%s10727] ss:$2 sm:$0xff]
      %s10729 = scalar_lea.vmem [#allocation4], 171
      %v10730 = vld [vmem:[%s10729] ss:$2 sm:$0xff]
      %s10731 = scalar_lea.vmem [#allocation4], 187
      %v10732 = vld [vmem:[%s10731] ss:$2 sm:$0xff]
      %s10733 = scalar_lea.vmem [#allocation4], 203
      %v10734 = vld [vmem:[%s10733] ss:$2 sm:$0xff]
      %s10735 = scalar_lea.vmem [#allocation4], 219
      %v10736 = vld [vmem:[%s10735] ss:$2 sm:$0xff]
      %s10737 = scalar_lea.vmem [#allocation4], 235
      %v10738 = vld [vmem:[%s10737] ss:$2 sm:$0xff]
      %s10739 = scalar_lea.vmem [#allocation4], 251
      %v10740 = vld [vmem:[%s10739] ss:$2 sm:$0xff]
      %s10741 = scalar_lea.vmem [#allocation4], 267
      %v10742 = vld [vmem:[%s10741] ss:$2 sm:$0xf]
      %v10743 = vmax.f32 %v10708, %v10726
      %v10744 = vmax.f32 %v10710, %v10728
      %v10745 = vmax.f32 %v10712, %v10730
      %v10746 = vmax.f32 %v10714, %v10732
      %v10747 = vmax.f32 %v10716, %v10734
      %v10748 = vmax.f32 %v10718, %v10736
      %v10749 = vmax.f32 %v10720, %v10738
      %v10750 = vmax.f32 %v10722, %v10740
      %v10751 = vmax.f32 %v10724, %v10742
      %v10752 = vmax.f32 %v10698, %v10743
      %v10753 = vmax.f32 %v10699, %v10744
      %v10754 = vmax.f32 %v10700, %v10745
      %v10755 = vmax.f32 %v10701, %v10746
      %v10756 = vmax.f32 %v10702, %v10747
      %v10757 = vmax.f32 %v10703, %v10748
      %v10758 = vmax.f32 %v10704, %v10749
      %v10759 = vmax.f32 %v10705, %v10750
      %v10760 = vmax.f32 %v10706, %v10751
      %v10761 = vld [vmem:[%s4] sm:$0xff]
      %v10762 = vld [vmem:[%s4 + $0x8] sm:$0xff]
      %v10763 = vld [vmem:[%s4 + $0x10] sm:$0xff]
      %v10764 = vld [vmem:[%s4 + $0x18] sm:$0xff]
      %v10765 = vld [vmem:[%s4 + $0x20] sm:$0xff]
      %v10766 = vld [vmem:[%s4 + $0x28] sm:$0xff]
      %v10767 = vld [vmem:[%s4 + $0x30] sm:$0xff]
      %v10768 = vld [vmem:[%s4 + $0x38] sm:$0xff]
      %v10769 = vld [vmem:[%s4 + $0x40] sm:$0xf]
      %v10770 = vmul.f32 %v10752, %v10761
      %v10771 = vmul.f32 %v10753, %v10762
      %v10772 = vmul.f32 %v10754, %v10763
      %v10773 = vmul.f32 %v10755, %v10764
      %v10774 = vmul.f32 %v10756, %v10765
      %v10775 = vmul.f32 %v10757, %v10766
      %v10776 = vmul.f32 %v10758, %v10767
      %v10777 = vmul.f32 %v10759, %v10768
      %v10778 = vmul.f32 %v10760, %v10769
      %v10779 = vsel %vm522, %v10770, 0.0
      %v10780 = vsel %vm522, %v10771, 0.0
      %v10781 = vadd.f32 %v10779, %v10780
      %v10782 = vsel %vm522, %v10772, 0.0
      %v10783 = vadd.f32 %v10781, %v10782
      %v10784 = vsel %vm522, %v10773, 0.0
      %v10785 = vadd.f32 %v10783, %v10784
      %v10786 = vsel %vm522, %v10774, 0.0
      %v10787 = vadd.f32 %v10785, %v10786
      %v10788 = vsel %vm522, %v10775, 0.0
      %v10789 = vadd.f32 %v10787, %v10788
      %v10790 = vsel %vm522, %v10776, 0.0
      %v10791 = vadd.f32 %v10789, %v10790
      %v10792 = vsel %vm522, %v10777, 0.0
      %v10793 = vadd.f32 %v10791, %v10792
      %vm10794 = vcmask 404480
      %v10795 = vsel %vm10794, %v10778, 0.0
      %v10796 = vadd.f32 %v10793, %v10795
      %v10797 = vrot.slane %v10796, 4
      %v10798 = vadd.f32 %v10796, %v10797
      %v10799 = vrot.slane %v10798, 2
      %v10800 = vadd.f32 %v10798, %v10799
      %v10801 = vrot.slane %v10800, 1
      %v10802 = vadd.f32 %v10800, %v10801
      %s10803 = scalar_lea.vmem %s4, 72
      %v10804 = vld [vmem:[%s10803] sm:$0xff]
      %v10805 = vld [vmem:[%s10803 + $0x8] sm:$0xff]
      %v10806 = vld [vmem:[%s10803 + $0x10] sm:$0xff]
      %v10807 = vld [vmem:[%s10803 + $0x18] sm:$0xff]
      %v10808 = vld [vmem:[%s10803 + $0x20] sm:$0xff]
      %v10809 = vld [vmem:[%s10803 + $0x28] sm:$0xff]
      %v10810 = vld [vmem:[%s10803 + $0x30] sm:$0xff]
      %v10811 = vld [vmem:[%s10803 + $0x38] sm:$0xff]
      %v10812 = vld [vmem:[%s10803 + $0x40] sm:$0xf]
      %v10813 = vmul.f32 %v10752, %v10804
      %v10814 = vmul.f32 %v10753, %v10805
      %v10815 = vmul.f32 %v10754, %v10806
      %v10816 = vmul.f32 %v10755, %v10807
      %v10817 = vmul.f32 %v10756, %v10808
      %v10818 = vmul.f32 %v10757, %v10809
      %v10819 = vmul.f32 %v10758, %v10810
      %v10820 = vmul.f32 %v10759, %v10811
      %v10821 = vmul.f32 %v10760, %v10812
      %v10822 = vsel %vm522, %v10813, 0.0
      %v10823 = vsel %vm522, %v10814, 0.0
      %v10824 = vadd.f32 %v10822, %v10823
      %v10825 = vsel %vm522, %v10815, 0.0
      %v10826 = vadd.f32 %v10824, %v10825
      %v10827 = vsel %vm522, %v10816, 0.0
      %v10828 = vadd.f32 %v10826, %v10827
      %v10829 = vsel %vm522, %v10817, 0.0
      %v10830 = vadd.f32 %v10828, %v10829
      %v10831 = vsel %vm522, %v10818, 0.0
      %v10832 = vadd.f32 %v10830, %v10831
      %v10833 = vsel %vm522, %v10819, 0.0
      %v10834 = vadd.f32 %v10832, %v10833
      %v10835 = vsel %vm522, %v10820, 0.0
      %v10836 = vadd.f32 %v10834, %v10835
      %v10837 = vsel %vm10794, %v10821, 0.0
      %v10838 = vadd.f32 %v10836, %v10837
      %v10839 = vrot.slane %v10838, 4
      %v10840 = vadd.f32 %v10838, %v10839
      %v10841 = vrot.slane %v10840, 2
      %v10842 = vadd.f32 %v10840, %v10841
      %v10843 = vrot.slane %v10842, 1
      %v10844 = vadd.f32 %v10842, %v10843
      %vm10845 = vcmask 1040384
      %v10846 = vsel %vm10845, %v10802, %v10844
      %v10847 = vsel %vm5395, %v10846, 0.0
      %10848 = vadd.xlane.f32.xlu0 %v10847
      %v10849 = vpop.xlane.xlu0 %10848
      %v10850 = vld [vmem:[%s5] sm:$0x3]
      %v10851 = vadd.f32 %v10849, %v10850
      %vm10852 = vcmask 1024
      %v10853 = vsel %vm10852, %v10851, -inf
      %v10854 = vrot.slane %v10853, 4
      %v10855 = vmax.f32 %v10853, %v10854
      %v10856 = vrot.slane %v10855, 2
      %v10857 = vmax.f32 %v10855, %v10856
      %v10858 = vrot.slane %v10857, 1
      %v10859 = vmax.f32 %v10857, %v10858
      %v10860 = vsub.f32 %v10851, %v10859
      %v10861 = vmul.f32 %v10860, 1.442695
      %v10862 = vpow.pop %v10861
      %v10863 = vsel %vm10852, %v10862, 0.0
      %v10864 = vrot.slane %v10863, 4
      %v10865 = vadd.f32 %v10863, %v10864
      %v10866 = vrot.slane %v10865, 2
      %v10867 = vadd.f32 %v10865, %v10866
      %v10868 = vrot.slane %v10867, 1
      %v10869 = vadd.f32 %v10867, %v10868
      %v10870 = vlog2.pop %v10869
      %v10871 = vmul.f32 %v10870, 0.6931472
      %v10872 = vsub.f32 %v10860, %v10871
      %10873 = vst.msk [vmem:[%s249] sm:$0x3] %vm10852, %v10872
      %p10874 = scmp.lt.s32.totalorder %s17, 1
      %s10875 = scalar_select %p10874, %s17, 1
      %s10876 = smul.addr %s10875, 2
      %s10877 = scalar_lea.vmem %s6, %s10876
      // Predicated region
      $region45: #{cnn_forward.1} parent=43 // pred_check
        %p10878 = pneg %p166
      $region46: #{cnn_forward.1} parent=43 // pred_check_branch
        %10880 = sbr.rel (%p10878) target = $region48
      $region47: #{cnn_forward.1} parent=43 // pred_region
        _
      $region48: #{cnn_forward.1} parent=43 // pred_fallthru
        _
    $region44: #{cnn_forward.1} parent=5 // pred_fallthru
      _
    %p10881 = scmp.le.s32.totalorder 2, %s12
    // Predicated region
    $region49: #{cnn_forward.1} parent=5 // pred_check
      %p10882 = pneg %p10881
    $region50: #{cnn_forward.1} parent=5 // pred_check_branch
      %10884 = sbr.rel (%p10882) target = $region52
    $region51: #{cnn_forward.1} parent=5 // pred_region
      %s10885 = ssub.s32 %s12, 2
      // Predicated region
      $region53: #{cnn_forward.1} parent=51 // pred_check
        %p10886 = pneg %p172
      $region54: #{cnn_forward.1} parent=51 // pred_check_branch
        %10888 = sbr.rel (%p10886) target = $region56
      $region55: #{cnn_forward.1} parent=51 // pred_region
        %p10889 = scmp.lt.s32.totalorder %s18, 1
        %s10890 = scalar_select %p10889, %s18, 1
        %s10891 = smul.addr %s10890, 2
        %s10892 = scalar_lea.vmem %s6, %s10891
      $region56: #{cnn_forward.1} parent=51 // pred_fallthru
        _
    $region52: #{cnn_forward.1} parent=5 // pred_fallthru
      _
  $region6: #{cnn_forward.1} parent=0 // loop_footer
    %s16 = sadd.s32 1, %s12
  $region7: #{cnn_forward.1} parent=0 // loop_footer_branch
    %11 = sbr.rel target = $region3
  $region8: #{cnn_forward.1} parent=0 // loop_exit
    _

</llo_original>
